<compile_context>
chip_gen: v5e
topology: v5e:2x2
jax: 0.10.0
libtpu: 0.0.40
codegen_flags: <defaults>
</compile_context>

<pallas_src>
import functools

import jax
import jax.numpy as jnp
from jax import lax
from jax.experimental import pallas as pl
from jax.experimental.pallas import tpu as pltpu
import numpy as np


# ---------------- Pallas kernel ----------------

def _conv3x3_bias_relu_kernel(x_ref, w_ref, b_ref, o_ref, *, H, W, Wp, pool):
    """3x3 SAME conv + bias + ReLU (optionally fused 2x2/2 maxpool), one image.

    x_ref: (1, Lf, Cin)   bf16 zero-padded image, spatially flattened,
                          Lf = (H+3)*Wp >= H*Wp + 2*Wp + 2 so every tap fits
    w_ref: (9, Cin, tn)   bf16, one (Cin, tn) slice per conv tap
    b_ref: (1, tn)        f32
    o_ref: (1, H, W, tn)  or  (1, H//2, W//2, tn) when pool=True
    """
    tn = o_ref.shape[-1]
    mrows = H * Wp

    # 9 shifted-window matmuls on the MXU, accumulated in f32.
    acc = jnp.zeros((mrows, tn), jnp.float32)
    for dh in range(3):
        for dw in range(3):
            off = dh * Wp + dw
            xs = x_ref[0, off:off + mrows, :]              # (mrows, Cin) bf16
            acc = acc + jnp.dot(xs, w_ref[dh * 3 + dw],
                                preferred_element_type=jnp.float32)

    y = jnp.maximum(acc + b_ref[...], 0.0)                 # bias + ReLU in f32

    if pool:
        Ho, Wo, Wp2 = H // 2, W // 2, Wp // 2
        # 2x2 max pool fused into the epilogue; the halo columns of the
        # flattened accumulator are garbage and are dropped by the final slice.
        y = jnp.max(y.reshape(H * Wp2, 2, tn), axis=1)     # max over W pairs
        y = jnp.max(y.reshape(Ho, 2, Wp2, tn), axis=1)     # max over H pairs
        o_ref[0] = y[:, :Wo, :].astype(o_ref.dtype)
    else:
        y = y.reshape(H, Wp, tn)
        o_ref[0] = y[:, :W, :].astype(o_ref.dtype)         # drop halo columns


# ---------------- wrappers ----------------

def conv3x3_relu(x_nhwc, w_hwio, b, *, pool=False, tn_max=128):
    """Conv2d(3x3, pad=1) + bias + ReLU (+ optional fused MaxPool2d(2,2))."""
    N, H, W, Cin = x_nhwc.shape
    kh, kw, _, Cout = w_hwio.shape
    assert (kh, kw) == (3, 3)
    if pool:
        assert H % 2 == 0 and W % 2 == 0, "fused 2x2 pool needs even H, W"
    Wp = W + 2
    Lf = (H + 3) * Wp                       # extra zero row so all taps fit
    tn = min(Cout, tn_max)
    assert Cout % tn == 0, "Cout must be a multiple of the Cout tile"

    # Layout glue (~1x the activation bytes): zero-pad (1 extra bottom row),
    # flatten spatial, bf16.
    xpad = jnp.pad(x_nhwc, ((0, 0), (1, 2), (1, 1), (0, 0)))
    xf = xpad.reshape(N, Lf, Cin).astype(jnp.bfloat16)
    wmat = w_hwio.reshape(kh * kw, Cin, Cout).astype(jnp.bfloat16)
    bias = b.reshape(1, Cout).astype(jnp.float32)

    if pool:
        Ho, Wo = H // 2, W // 2
        out_shape = jax.ShapeDtypeStruct((N, Ho, Wo, Cout), x_nhwc.dtype)
        out_spec = pl.BlockSpec((1, Ho, Wo, tn), lambda n, j: (n, 0, 0, j))
    else:
        out_shape = jax.ShapeDtypeStruct((N, H, W, Cout), x_nhwc.dtype)
        out_spec = pl.BlockSpec((1, H, W, tn), lambda n, j: (n, 0, 0, j))

    kernel = functools.partial(_conv3x3_bias_relu_kernel,
                               H=H, W=W, Wp=Wp, pool=pool)
    return pl.pallas_call(
        kernel,
        out_shape=out_shape,
        grid_spec=pltpu.PrefetchScalarGridSpec(
            num_scalar_prefetch=0,
            grid=(N, Cout // tn),
            in_specs=[
                pl.BlockSpec((1, Lf, Cin), lambda n, j: (n, 0, 0)),
                pl.BlockSpec((kh * kw, Cin, tn), lambda n, j: (0, 0, j)),
                pl.BlockSpec((1, tn), lambda n, j: (0, j)),
            ],
            out_specs=out_spec,
        ),
        compiler_params=pltpu.CompilerParams(
            dimension_semantics=("parallel", "parallel")),
    )(xf, wmat, bias)


def vgg_forward(x_nchw, params):
    """VGG.forward: x = self.features(x).

    features = [Conv3x3+ReLU, Conv3x3+ReLU, MaxPool2d(2,2)]; the pool is fused
    into the second conv's epilogue.
    """
    x = jnp.transpose(x_nchw, (0, 2, 3, 1))                        # NCHW -> NHWC
    x = conv3x3_relu(x, params["w1"], params["b1"], pool=False)    # Cin  -> Cmid
    x = conv3x3_relu(x, params["w2"], params["b2"], pool=True)     # Cmid -> Cmid, + 2x2 pool
    return jnp.transpose(x, (0, 3, 1, 2))                          # NHWC -> NCHW


# ---------------- pure-JAX reference (for self-check) ----------------

def vgg_ref(x_nchw, params):
    # Mirror the kernel's bf16 input rounding (f32 accumulation) so the
    # comparison isolates logic errors rather than dtype policy.
    x = jnp.transpose(x_nchw, (0, 2, 3, 1))
    for w, b in ((params["w1"], params["b1"]), (params["w2"], params["b2"])):
        xb = x.astype(jnp.bfloat16).astype(jnp.float32)
        wb = w.astype(jnp.bfloat16).astype(jnp.float32)
        x = lax.conv_general_dilated(
            xb, wb, (1, 1), "SAME",
            dimension_numbers=("NHWC", "HWIO", "NHWC"),
            precision=lax.Precision.HIGHEST)
        x = jnp.maximum(x + b, 0.0)
    x = lax.reduce_window(x, -jnp.inf, lax.max,
                          (1, 2, 2, 1), (1, 2, 2, 1), "VALID")
    return jnp.transpose(x, (0, 3, 1, 2))


# ---------------- deterministic param init ----------------

def init_params(key, cin, cmid):
    k1, k2, k3, k4 = jax.random.split(key, 4)

    def conv_w(k, ci, co):
        fan = 3 * 3 * co
        return (jax.random.normal(k, (3, 3, ci, co), jnp.float32)
                * jnp.sqrt(2.0 / fan))

    return {
        "w1": conv_w(k1, cin, cmid),
        "b1": 0.01 * jax.random.normal(k2, (cmid,), jnp.float32),
        "w2": conv_w(k3, cmid, cmid),
        "b2": 0.01 * jax.random.normal(k4, (cmid,), jnp.float32),
    }


if __name__ == "__main__":
    key = jax.random.PRNGKey(0)
    kx, kp = jax.random.split(key)

    N, Cin, H, W = 2, 4, 16, 16
    Cmid = 8
    x = jax.random.normal(kx, (N, Cin, H, W), jnp.float32)
    params = init_params(kp, Cin, Cmid)

    out = jax.block_until_ready(jax.jit(vgg_forward)(x, params))
    ref = jax.block_until_ready(vgg_ref(x, params))

    assert out.shape == (N, Cmid, H // 2, W // 2), out.shape
    np.testing.assert_allclose(np.asarray(out), np.asarray(ref),
                               rtol=1e-2, atol=1e-2)
    print("KERNEL_OK")
</pallas_src>

<mosaic_0001>
module attributes {stable_mosaic.version = 11 : i64} {
  func.func @_conv3x3_bias_relu_kernel(%arg0: i32, %arg1: i32, %arg2: memref<1x342x4xbf16, #tpu.memory_space<vmem>>, %arg3: memref<9x4x8xbf16, #tpu.memory_space<vmem>>, %arg4: memref<1x8xf32, #tpu.memory_space<vmem>>, %arg5: memref<1x16x16x8xf32, #tpu.memory_space<vmem>>) attributes {dimension_semantics = [#tpu.dimension_semantics<parallel>, #tpu.dimension_semantics<parallel>], iteration_bounds = array<i64: 2, 1>, scalar_prefetch = 0 : i64, scratch_operands = 0 : i64, tpu.core_type = #tpu.core_type<tc>, window_params = [{transform_indices = @transform_0, window_bounds = array<i64: 1, 342, 4>}, {transform_indices = @transform_1, window_bounds = array<i64: 9, 4, 8>}, {transform_indices = @transform_2, window_bounds = array<i64: 1, 8>}, {transform_indices = @transform_3, window_bounds = array<i64: 1, 16, 16, 8>}]} {
    %cst = arith.constant 0.000000e+00 : f32
    %0 = vector.broadcast %cst : f32 to vector<288x8xf32>
    %c0 = arith.constant 0 : index
    %c0_0 = arith.constant 0 : index
    %c0_1 = arith.constant 0 : index
    %1 = vector.load %arg2[%c0, %c0_0, %c0_1] : memref<1x342x4xbf16, #tpu.memory_space<vmem>>, vector<1x288x4xbf16>
    %2 = vector.shape_cast %1 : vector<1x288x4xbf16> to vector<288x4xbf16>
    %c0_2 = arith.constant 0 : index
    %c0_3 = arith.constant 0 : index
    %c0_4 = arith.constant 0 : index
    %3 = vector.load %arg3[%c0_2, %c0_3, %c0_4] : memref<9x4x8xbf16, #tpu.memory_space<vmem>>, vector<1x4x8xbf16>
    %4 = vector.shape_cast %3 : vector<1x4x8xbf16> to vector<4x8xbf16>
    %cst_5 = arith.constant dense<0.000000e+00> : vector<288x8xf32>
    %5 = tpu.matmul %2, %4, %cst_5 {dimension_numbers = #tpu.dot_dimension_numbers<[1], [0], [0], [1], [0, 0, 1, 1], [], []>} : vector<288x4xbf16>, vector<4x8xbf16>, vector<288x8xf32> -> vector<288x8xf32>
    %6 = arith.addf %0, %5 : vector<288x8xf32>
    %c0_6 = arith.constant 0 : index
    %c1 = arith.constant 1 : index
    %c0_7 = arith.constant 0 : index
    %7 = vector.load %arg2[%c0_6, %c1, %c0_7] : memref<1x342x4xbf16, #tpu.memory_space<vmem>>, vector<1x288x4xbf16>
    %8 = vector.shape_cast %7 : vector<1x288x4xbf16> to vector<288x4xbf16>
    %c1_8 = arith.constant 1 : index
    %c0_9 = arith.constant 0 : index
    %c0_10 = arith.constant 0 : index
    %9 = vector.load %arg3[%c1_8, %c0_9, %c0_10] : memref<9x4x8xbf16, #tpu.memory_space<vmem>>, vector<1x4x8xbf16>
    %10 = vector.shape_cast %9 : vector<1x4x8xbf16> to vector<4x8xbf16>
    %cst_11 = arith.constant dense<0.000000e+00> : vector<288x8xf32>
    %11 = tpu.matmul %8, %10, %cst_11 {dimension_numbers = #tpu.dot_dimension_numbers<[1], [0], [0], [1], [0, 0, 1, 1], [], []>} : vector<288x4xbf16>, vector<4x8xbf16>, vector<288x8xf32> -> vector<288x8xf32>
    %12 = arith.addf %6, %11 : vector<288x8xf32>
    %c0_12 = arith.constant 0 : index
    %c2 = arith.constant 2 : index
    %c0_13 = arith.constant 0 : index
    %13 = vector.load %arg2[%c0_12, %c2, %c0_13] : memref<1x342x4xbf16, #tpu.memory_space<vmem>>, vector<1x288x4xbf16>
    %14 = vector.shape_cast %13 : vector<1x288x4xbf16> to vector<288x4xbf16>
    %c2_14 = arith.constant 2 : index
    %c0_15 = arith.constant 0 : index
    %c0_16 = arith.constant 0 : index
    %15 = vector.load %arg3[%c2_14, %c0_15, %c0_16] : memref<9x4x8xbf16, #tpu.memory_space<vmem>>, vector<1x4x8xbf16>
    %16 = vector.shape_cast %15 : vector<1x4x8xbf16> to vector<4x8xbf16>
    %cst_17 = arith.constant dense<0.000000e+00> : vector<288x8xf32>
    %17 = tpu.matmul %14, %16, %cst_17 {dimension_numbers = #tpu.dot_dimension_numbers<[1], [0], [0], [1], [0, 0, 1, 1], [], []>} : vector<288x4xbf16>, vector<4x8xbf16>, vector<288x8xf32> -> vector<288x8xf32>
    %18 = arith.addf %12, %17 : vector<288x8xf32>
    %c0_18 = arith.constant 0 : index
    %c18 = arith.constant 18 : index
    %c0_19 = arith.constant 0 : index
    %19 = vector.load %arg2[%c0_18, %c18, %c0_19] : memref<1x342x4xbf16, #tpu.memory_space<vmem>>, vector<1x288x4xbf16>
    %20 = vector.shape_cast %19 : vector<1x288x4xbf16> to vector<288x4xbf16>
    %c3 = arith.constant 3 : index
    %c0_20 = arith.constant 0 : index
    %c0_21 = arith.constant 0 : index
    %21 = vector.load %arg3[%c3, %c0_20, %c0_21] : memref<9x4x8xbf16, #tpu.memory_space<vmem>>, vector<1x4x8xbf16>
    %22 = vector.shape_cast %21 : vector<1x4x8xbf16> to vector<4x8xbf16>
    %cst_22 = arith.constant dense<0.000000e+00> : vector<288x8xf32>
    %23 = tpu.matmul %20, %22, %cst_22 {dimension_numbers = #tpu.dot_dimension_numbers<[1], [0], [0], [1], [0, 0, 1, 1], [], []>} : vector<288x4xbf16>, vector<4x8xbf16>, vector<288x8xf32> -> vector<288x8xf32>
    %24 = arith.addf %18, %23 : vector<288x8xf32>
    %c0_23 = arith.constant 0 : index
    %c19 = arith.constant 19 : index
    %c0_24 = arith.constant 0 : index
    %25 = vector.load %arg2[%c0_23, %c19, %c0_24] : memref<1x342x4xbf16, #tpu.memory_space<vmem>>, vector<1x288x4xbf16>
    %26 = vector.shape_cast %25 : vector<1x288x4xbf16> to vector<288x4xbf16>
    %c4 = arith.constant 4 : index
    %c0_25 = arith.constant 0 : index
    %c0_26 = arith.constant 0 : index
    %27 = vector.load %arg3[%c4, %c0_25, %c0_26] : memref<9x4x8xbf16, #tpu.memory_space<vmem>>, vector<1x4x8xbf16>
    %28 = vector.shape_cast %27 : vector<1x4x8xbf16> to vector<4x8xbf16>
    %cst_27 = arith.constant dense<0.000000e+00> : vector<288x8xf32>
    %29 = tpu.matmul %26, %28, %cst_27 {dimension_numbers = #tpu.dot_dimension_numbers<[1], [0], [0], [1], [0, 0, 1, 1], [], []>} : vector<288x4xbf16>, vector<4x8xbf16>, vector<288x8xf32> -> vector<288x8xf32>
    %30 = arith.addf %24, %29 : vector<288x8xf32>
    %c0_28 = arith.constant 0 : index
    %c20 = arith.constant 20 : index
    %c0_29 = arith.constant 0 : index
    %31 = vector.load %arg2[%c0_28, %c20, %c0_29] : memref<1x342x4xbf16, #tpu.memory_space<vmem>>, vector<1x288x4xbf16>
    %32 = vector.shape_cast %31 : vector<1x288x4xbf16> to vector<288x4xbf16>
    %c5 = arith.constant 5 : index
    %c0_30 = arith.constant 0 : index
    %c0_31 = arith.constant 0 : index
    %33 = vector.load %arg3[%c5, %c0_30, %c0_31] : memref<9x4x8xbf16, #tpu.memory_space<vmem>>, vector<1x4x8xbf16>
    %34 = vector.shape_cast %33 : vector<1x4x8xbf16> to vector<4x8xbf16>
    %cst_32 = arith.constant dense<0.000000e+00> : vector<288x8xf32>
    %35 = tpu.matmul %32, %34, %cst_32 {dimension_numbers = #tpu.dot_dimension_numbers<[1], [0], [0], [1], [0, 0, 1, 1], [], []>} : vector<288x4xbf16>, vector<4x8xbf16>, vector<288x8xf32> -> vector<288x8xf32>
    %36 = arith.addf %30, %35 : vector<288x8xf32>
    %c0_33 = arith.constant 0 : index
    %c36 = arith.constant 36 : index
    %c0_34 = arith.constant 0 : index
    %37 = vector.load %arg2[%c0_33, %c36, %c0_34] : memref<1x342x4xbf16, #tpu.memory_space<vmem>>, vector<1x288x4xbf16>
    %38 = vector.shape_cast %37 : vector<1x288x4xbf16> to vector<288x4xbf16>
    %c6 = arith.constant 6 : index
    %c0_35 = arith.constant 0 : index
    %c0_36 = arith.constant 0 : index
    %39 = vector.load %arg3[%c6, %c0_35, %c0_36] : memref<9x4x8xbf16, #tpu.memory_space<vmem>>, vector<1x4x8xbf16>
    %40 = vector.shape_cast %39 : vector<1x4x8xbf16> to vector<4x8xbf16>
    %cst_37 = arith.constant dense<0.000000e+00> : vector<288x8xf32>
    %41 = tpu.matmul %38, %40, %cst_37 {dimension_numbers = #tpu.dot_dimension_numbers<[1], [0], [0], [1], [0, 0, 1, 1], [], []>} : vector<288x4xbf16>, vector<4x8xbf16>, vector<288x8xf32> -> vector<288x8xf32>
    %42 = arith.addf %36, %41 : vector<288x8xf32>
    %c0_38 = arith.constant 0 : index
    %c37 = arith.constant 37 : index
    %c0_39 = arith.constant 0 : index
    %43 = vector.load %arg2[%c0_38, %c37, %c0_39] : memref<1x342x4xbf16, #tpu.memory_space<vmem>>, vector<1x288x4xbf16>
    %44 = vector.shape_cast %43 : vector<1x288x4xbf16> to vector<288x4xbf16>
    %c7 = arith.constant 7 : index
    %c0_40 = arith.constant 0 : index
    %c0_41 = arith.constant 0 : index
    %45 = vector.load %arg3[%c7, %c0_40, %c0_41] : memref<9x4x8xbf16, #tpu.memory_space<vmem>>, vector<1x4x8xbf16>
    %46 = vector.shape_cast %45 : vector<1x4x8xbf16> to vector<4x8xbf16>
    %cst_42 = arith.constant dense<0.000000e+00> : vector<288x8xf32>
    %47 = tpu.matmul %44, %46, %cst_42 {dimension_numbers = #tpu.dot_dimension_numbers<[1], [0], [0], [1], [0, 0, 1, 1], [], []>} : vector<288x4xbf16>, vector<4x8xbf16>, vector<288x8xf32> -> vector<288x8xf32>
    %48 = arith.addf %42, %47 : vector<288x8xf32>
    %c0_43 = arith.constant 0 : index
    %c38 = arith.constant 38 : index
    %c0_44 = arith.constant 0 : index
    %49 = vector.load %arg2[%c0_43, %c38, %c0_44] : memref<1x342x4xbf16, #tpu.memory_space<vmem>>, vector<1x288x4xbf16>
    %50 = vector.shape_cast %49 : vector<1x288x4xbf16> to vector<288x4xbf16>
    %c8 = arith.constant 8 : index
    %c0_45 = arith.constant 0 : index
    %c0_46 = arith.constant 0 : index
    %51 = vector.load %arg3[%c8, %c0_45, %c0_46] : memref<9x4x8xbf16, #tpu.memory_space<vmem>>, vector<1x4x8xbf16>
    %52 = vector.shape_cast %51 : vector<1x4x8xbf16> to vector<4x8xbf16>
    %cst_47 = arith.constant dense<0.000000e+00> : vector<288x8xf32>
    %53 = tpu.matmul %50, %52, %cst_47 {dimension_numbers = #tpu.dot_dimension_numbers<[1], [0], [0], [1], [0, 0, 1, 1], [], []>} : vector<288x4xbf16>, vector<4x8xbf16>, vector<288x8xf32> -> vector<288x8xf32>
    %54 = arith.addf %48, %53 : vector<288x8xf32>
    %c0_48 = arith.constant 0 : index
    %c0_49 = arith.constant 0 : index
    %55 = vector.load %arg4[%c0_48, %c0_49] : memref<1x8xf32, #tpu.memory_space<vmem>>, vector<1x8xf32>
    %56 = vector.broadcast %55 : vector<1x8xf32> to vector<288x8xf32>
    %57 = arith.addf %54, %56 : vector<288x8xf32>
    %cst_50 = arith.constant 0.000000e+00 : f32
    %58 = vector.broadcast %cst_50 : f32 to vector<288x8xf32>
    %59 = arith.maximumf %57, %58 : vector<288x8xf32>
    %60 = vector.shape_cast %59 : vector<288x8xf32> to vector<16x18x8xf32>
    %61 = vector.extract_strided_slice %60 {offsets = [0, 0, 0], sizes = [16, 16, 8], strides = [1, 1, 1]} : vector<16x18x8xf32> to vector<16x16x8xf32>
    %c0_51 = arith.constant 0 : index
    %c0_52 = arith.constant 0 : index
    %c0_53 = arith.constant 0 : index
    %c0_54 = arith.constant 0 : index
    %62 = vector.load %arg5[%c0_51, %c0_52, %c0_53, %c0_54] : memref<1x16x16x8xf32, #tpu.memory_space<vmem>>, vector<1x16x16x8xf32>
    %63 = vector.shape_cast %62 : vector<1x16x16x8xf32> to vector<16x16x8xf32>
    %64 = vector.shape_cast %61 : vector<16x16x8xf32> to vector<1x16x16x8xf32>
    tpu.vector_store %arg5[%c0_51, %c0_52, %c0_53, %c0_54], %64 {strides = array<i32>} : memref<1x16x16x8xf32, #tpu.memory_space<vmem>>, vector<1x16x16x8xf32>,
    return
  }
  func.func @transform_0(%arg0: i32, %arg1: i32) -> (i32, i32, i32) {
    %c0_i32 = arith.constant 0 : i32
    %c0_i32_0 = arith.constant 0 : i32
    %c0_i32_1 = arith.constant 0 : i32
    return %arg0, %c0_i32, %c0_i32_0 : i32, i32, i32
  }
  func.func @transform_1(%arg0: i32, %arg1: i32) -> (i32, i32, i32) {
    %c0_i32 = arith.constant 0 : i32
    %c0_i32_0 = arith.constant 0 : i32
    %c0_i32_1 = arith.constant 0 : i32
    return %c0_i32, %c0_i32_0, %arg1 : i32, i32, i32
  }
  func.func @transform_2(%arg0: i32, %arg1: i32) -> (i32, i32) {
    %c0_i32 = arith.constant 0 : i32
    %c0_i32_0 = arith.constant 0 : i32
    return %c0_i32, %arg1 : i32, i32
  }
  func.func @transform_3(%arg0: i32, %arg1: i32) -> (i32, i32, i32, i32) {
    %c0_i32 = arith.constant 0 : i32
    %c0_i32_0 = arith.constant 0 : i32
    %c0_i32_1 = arith.constant 0 : i32
    return %arg0, %c0_i32, %c0_i32_0, %arg1 : i32, i32, i32, i32
  }
}

module attributes {stable_mosaic.version = 11 : i64} {
  func.func @_conv3x3_bias_relu_kernel(%arg0: i32, %arg1: i32, %arg2: memref<1x342x8xbf16, #tpu.memory_space<vmem>>, %arg3: memref<9x8x8xbf16, #tpu.memory_space<vmem>>, %arg4: memref<1x8xf32, #tpu.memory_space<vmem>>, %arg5: memref<1x8x8x8xf32, #tpu.memory_space<vmem>>) attributes {dimension_semantics = [#tpu.dimension_semantics<parallel>, #tpu.dimension_semantics<parallel>], iteration_bounds = array<i64: 2, 1>, scalar_prefetch = 0 : i64, scratch_operands = 0 : i64, tpu.core_type = #tpu.core_type<tc>, window_params = [{transform_indices = @transform_0, window_bounds = array<i64: 1, 342, 8>}, {transform_indices = @transform_1, window_bounds = array<i64: 9, 8, 8>}, {transform_indices = @transform_2, window_bounds = array<i64: 1, 8>}, {transform_indices = @transform_3, window_bounds = array<i64: 1, 8, 8, 8>}]} {
    %cst = arith.constant 0.000000e+00 : f32
    %0 = vector.broadcast %cst : f32 to vector<288x8xf32>
    %c0 = arith.constant 0 : index
    %c0_0 = arith.constant 0 : index
    %c0_1 = arith.constant 0 : index
    %1 = vector.load %arg2[%c0, %c0_0, %c0_1] : memref<1x342x8xbf16, #tpu.memory_space<vmem>>, vector<1x288x8xbf16>
    %2 = vector.shape_cast %1 : vector<1x288x8xbf16> to vector<288x8xbf16>
    %c0_2 = arith.constant 0 : index
    %c0_3 = arith.constant 0 : index
    %c0_4 = arith.constant 0 : index
    %3 = vector.load %arg3[%c0_2, %c0_3, %c0_4] : memref<9x8x8xbf16, #tpu.memory_space<vmem>>, vector<1x8x8xbf16>
    %4 = vector.shape_cast %3 : vector<1x8x8xbf16> to vector<8x8xbf16>
    %cst_5 = arith.constant dense<0.000000e+00> : vector<288x8xf32>
    %5 = tpu.matmul %2, %4, %cst_5 {dimension_numbers = #tpu.dot_dimension_numbers<[1], [0], [0], [1], [0, 0, 1, 1], [], []>} : vector<288x8xbf16>, vector<8x8xbf16>, vector<288x8xf32> -> vector<288x8xf32>
    %6 = arith.addf %0, %5 : vector<288x8xf32>
    %c0_6 = arith.constant 0 : index
    %c1 = arith.constant 1 : index
    %c0_7 = arith.constant 0 : index
    %7 = vector.load %arg2[%c0_6, %c1, %c0_7] : memref<1x342x8xbf16, #tpu.memory_space<vmem>>, vector<1x288x8xbf16>
    %8 = vector.shape_cast %7 : vector<1x288x8xbf16> to vector<288x8xbf16>
    %c1_8 = arith.constant 1 : index
    %c0_9 = arith.constant 0 : index
    %c0_10 = arith.constant 0 : index
    %9 = vector.load %arg3[%c1_8, %c0_9, %c0_10] : memref<9x8x8xbf16, #tpu.memory_space<vmem>>, vector<1x8x8xbf16>
    %10 = vector.shape_cast %9 : vector<1x8x8xbf16> to vector<8x8xbf16>
    %cst_11 = arith.constant dense<0.000000e+00> : vector<288x8xf32>
    %11 = tpu.matmul %8, %10, %cst_11 {dimension_numbers = #tpu.dot_dimension_numbers<[1], [0], [0], [1], [0, 0, 1, 1], [], []>} : vector<288x8xbf16>, vector<8x8xbf16>, vector<288x8xf32> -> vector<288x8xf32>
    %12 = arith.addf %6, %11 : vector<288x8xf32>
    %c0_12 = arith.constant 0 : index
    %c2 = arith.constant 2 : index
    %c0_13 = arith.constant 0 : index
    %13 = vector.load %arg2[%c0_12, %c2, %c0_13] : memref<1x342x8xbf16, #tpu.memory_space<vmem>>, vector<1x288x8xbf16>
    %14 = vector.shape_cast %13 : vector<1x288x8xbf16> to vector<288x8xbf16>
    %c2_14 = arith.constant 2 : index
    %c0_15 = arith.constant 0 : index
    %c0_16 = arith.constant 0 : index
    %15 = vector.load %arg3[%c2_14, %c0_15, %c0_16] : memref<9x8x8xbf16, #tpu.memory_space<vmem>>, vector<1x8x8xbf16>
    %16 = vector.shape_cast %15 : vector<1x8x8xbf16> to vector<8x8xbf16>
    %cst_17 = arith.constant dense<0.000000e+00> : vector<288x8xf32>
    %17 = tpu.matmul %14, %16, %cst_17 {dimension_numbers = #tpu.dot_dimension_numbers<[1], [0], [0], [1], [0, 0, 1, 1], [], []>} : vector<288x8xbf16>, vector<8x8xbf16>, vector<288x8xf32> -> vector<288x8xf32>
    %18 = arith.addf %12, %17 : vector<288x8xf32>
    %c0_18 = arith.constant 0 : index
    %c18 = arith.constant 18 : index
    %c0_19 = arith.constant 0 : index
    %19 = vector.load %arg2[%c0_18, %c18, %c0_19] : memref<1x342x8xbf16, #tpu.memory_space<vmem>>, vector<1x288x8xbf16>
    %20 = vector.shape_cast %19 : vector<1x288x8xbf16> to vector<288x8xbf16>
    %c3 = arith.constant 3 : index
    %c0_20 = arith.constant 0 : index
    %c0_21 = arith.constant 0 : index
    %21 = vector.load %arg3[%c3, %c0_20, %c0_21] : memref<9x8x8xbf16, #tpu.memory_space<vmem>>, vector<1x8x8xbf16>
    %22 = vector.shape_cast %21 : vector<1x8x8xbf16> to vector<8x8xbf16>
    %cst_22 = arith.constant dense<0.000000e+00> : vector<288x8xf32>
    %23 = tpu.matmul %20, %22, %cst_22 {dimension_numbers = #tpu.dot_dimension_numbers<[1], [0], [0], [1], [0, 0, 1, 1], [], []>} : vector<288x8xbf16>, vector<8x8xbf16>, vector<288x8xf32> -> vector<288x8xf32>
    %24 = arith.addf %18, %23 : vector<288x8xf32>
    %c0_23 = arith.constant 0 : index
    %c19 = arith.constant 19 : index
    %c0_24 = arith.constant 0 : index
    %25 = vector.load %arg2[%c0_23, %c19, %c0_24] : memref<1x342x8xbf16, #tpu.memory_space<vmem>>, vector<1x288x8xbf16>
    %26 = vector.shape_cast %25 : vector<1x288x8xbf16> to vector<288x8xbf16>
    %c4 = arith.constant 4 : index
    %c0_25 = arith.constant 0 : index
    %c0_26 = arith.constant 0 : index
    %27 = vector.load %arg3[%c4, %c0_25, %c0_26] : memref<9x8x8xbf16, #tpu.memory_space<vmem>>, vector<1x8x8xbf16>
    %28 = vector.shape_cast %27 : vector<1x8x8xbf16> to vector<8x8xbf16>
    %cst_27 = arith.constant dense<0.000000e+00> : vector<288x8xf32>
    %29 = tpu.matmul %26, %28, %cst_27 {dimension_numbers = #tpu.dot_dimension_numbers<[1], [0], [0], [1], [0, 0, 1, 1], [], []>} : vector<288x8xbf16>, vector<8x8xbf16>, vector<288x8xf32> -> vector<288x8xf32>
    %30 = arith.addf %24, %29 : vector<288x8xf32>
    %c0_28 = arith.constant 0 : index
    %c20 = arith.constant 20 : index
    %c0_29 = arith.constant 0 : index
    %31 = vector.load %arg2[%c0_28, %c20, %c0_29] : memref<1x342x8xbf16, #tpu.memory_space<vmem>>, vector<1x288x8xbf16>
    %32 = vector.shape_cast %31 : vector<1x288x8xbf16> to vector<288x8xbf16>
    %c5 = arith.constant 5 : index
    %c0_30 = arith.constant 0 : index
    %c0_31 = arith.constant 0 : index
    %33 = vector.load %arg3[%c5, %c0_30, %c0_31] : memref<9x8x8xbf16, #tpu.memory_space<vmem>>, vector<1x8x8xbf16>
    %34 = vector.shape_cast %33 : vector<1x8x8xbf16> to vector<8x8xbf16>
    %cst_32 = arith.constant dense<0.000000e+00> : vector<288x8xf32>
    %35 = tpu.matmul %32, %34, %cst_32 {dimension_numbers = #tpu.dot_dimension_numbers<[1], [0], [0], [1], [0, 0, 1, 1], [], []>} : vector<288x8xbf16>, vector<8x8xbf16>, vector<288x8xf32> -> vector<288x8xf32>
    %36 = arith.addf %30, %35 : vector<288x8xf32>
    %c0_33 = arith.constant 0 : index
    %c36 = arith.constant 36 : index
    %c0_34 = arith.constant 0 : index
    %37 = vector.load %arg2[%c0_33, %c36, %c0_34] : memref<1x342x8xbf16, #tpu.memory_space<vmem>>, vector<1x288x8xbf16>
    %38 = vector.shape_cast %37 : vector<1x288x8xbf16> to vector<288x8xbf16>
    %c6 = arith.constant 6 : index
    %c0_35 = arith.constant 0 : index
    %c0_36 = arith.constant 0 : index
    %39 = vector.load %arg3[%c6, %c0_35, %c0_36] : memref<9x8x8xbf16, #tpu.memory_space<vmem>>, vector<1x8x8xbf16>
    %40 = vector.shape_cast %39 : vector<1x8x8xbf16> to vector<8x8xbf16>
    %cst_37 = arith.constant dense<0.000000e+00> : vector<288x8xf32>
    %41 = tpu.matmul %38, %40, %cst_37 {dimension_numbers = #tpu.dot_dimension_numbers<[1], [0], [0], [1], [0, 0, 1, 1], [], []>} : vector<288x8xbf16>, vector<8x8xbf16>, vector<288x8xf32> -> vector<288x8xf32>
    %42 = arith.addf %36, %41 : vector<288x8xf32>
    %c0_38 = arith.constant 0 : index
    %c37 = arith.constant 37 : index
    %c0_39 = arith.constant 0 : index
    %43 = vector.load %arg2[%c0_38, %c37, %c0_39] : memref<1x342x8xbf16, #tpu.memory_space<vmem>>, vector<1x288x8xbf16>
    %44 = vector.shape_cast %43 : vector<1x288x8xbf16> to vector<288x8xbf16>
    %c7 = arith.constant 7 : index
    %c0_40 = arith.constant 0 : index
    %c0_41 = arith.constant 0 : index
    %45 = vector.load %arg3[%c7, %c0_40, %c0_41] : memref<9x8x8xbf16, #tpu.memory_space<vmem>>, vector<1x8x8xbf16>
    %46 = vector.shape_cast %45 : vector<1x8x8xbf16> to vector<8x8xbf16>
    %cst_42 = arith.constant dense<0.000000e+00> : vector<288x8xf32>
    %47 = tpu.matmul %44, %46, %cst_42 {dimension_numbers = #tpu.dot_dimension_numbers<[1], [0], [0], [1], [0, 0, 1, 1], [], []>} : vector<288x8xbf16>, vector<8x8xbf16>, vector<288x8xf32> -> vector<288x8xf32>
    %48 = arith.addf %42, %47 : vector<288x8xf32>
    %c0_43 = arith.constant 0 : index
    %c38 = arith.constant 38 : index
    %c0_44 = arith.constant 0 : index
    %49 = vector.load %arg2[%c0_43, %c38, %c0_44] : memref<1x342x8xbf16, #tpu.memory_space<vmem>>, vector<1x288x8xbf16>
    %50 = vector.shape_cast %49 : vector<1x288x8xbf16> to vector<288x8xbf16>
    %c8 = arith.constant 8 : index
    %c0_45 = arith.constant 0 : index
    %c0_46 = arith.constant 0 : index
    %51 = vector.load %arg3[%c8, %c0_45, %c0_46] : memref<9x8x8xbf16, #tpu.memory_space<vmem>>, vector<1x8x8xbf16>
    %52 = vector.shape_cast %51 : vector<1x8x8xbf16> to vector<8x8xbf16>
    %cst_47 = arith.constant dense<0.000000e+00> : vector<288x8xf32>
    %53 = tpu.matmul %50, %52, %cst_47 {dimension_numbers = #tpu.dot_dimension_numbers<[1], [0], [0], [1], [0, 0, 1, 1], [], []>} : vector<288x8xbf16>, vector<8x8xbf16>, vector<288x8xf32> -> vector<288x8xf32>
    %54 = arith.addf %48, %53 : vector<288x8xf32>
    %c0_48 = arith.constant 0 : index
    %c0_49 = arith.constant 0 : index
    %55 = vector.load %arg4[%c0_48, %c0_49] : memref<1x8xf32, #tpu.memory_space<vmem>>, vector<1x8xf32>
    %56 = vector.broadcast %55 : vector<1x8xf32> to vector<288x8xf32>
    %57 = arith.addf %54, %56 : vector<288x8xf32>
    %cst_50 = arith.constant 0.000000e+00 : f32
    %58 = vector.broadcast %cst_50 : f32 to vector<288x8xf32>
    %59 = arith.maximumf %57, %58 : vector<288x8xf32>
    %60 = vector.shape_cast %59 : vector<288x8xf32> to vector<144x2x8xf32>
    %cst_51 = arith.constant dense<0xFF800000> : vector<144x8xf32>
    %61 = vector.multi_reduction <maximumf>, %60, %cst_51 [1] : vector<144x2x8xf32> to vector<144x8xf32>
    %62 = vector.shape_cast %61 : vector<144x8xf32> to vector<8x2x9x8xf32>
    %cst_52 = arith.constant dense<0xFF800000> : vector<8x9x8xf32>
    %63 = vector.multi_reduction <maximumf>, %62, %cst_52 [1] : vector<8x2x9x8xf32> to vector<8x9x8xf32>
    %64 = vector.extract_strided_slice %63 {offsets = [0, 0, 0], sizes = [8, 8, 8], strides = [1, 1, 1]} : vector<8x9x8xf32> to vector<8x8x8xf32>
    %c0_53 = arith.constant 0 : index
    %c0_54 = arith.constant 0 : index
    %c0_55 = arith.constant 0 : index
    %c0_56 = arith.constant 0 : index
    %65 = vector.load %arg5[%c0_53, %c0_54, %c0_55, %c0_56] : memref<1x8x8x8xf32, #tpu.memory_space<vmem>>, vector<1x8x8x8xf32>
    %66 = vector.shape_cast %65 : vector<1x8x8x8xf32> to vector<8x8x8xf32>
    %67 = vector.shape_cast %64 : vector<8x8x8xf32> to vector<1x8x8x8xf32>
    tpu.vector_store %arg5[%c0_53, %c0_54, %c0_55, %c0_56], %67 {strides = array<i32>} : memref<1x8x8x8xf32, #tpu.memory_space<vmem>>, vector<1x8x8x8xf32>,
    return
  }
  func.func @transform_0(%arg0: i32, %arg1: i32) -> (i32, i32, i32) {
    %c0_i32 = arith.constant 0 : i32
    %c0_i32_0 = arith.constant 0 : i32
    %c0_i32_1 = arith.constant 0 : i32
    return %arg0, %c0_i32, %c0_i32_0 : i32, i32, i32
  }
  func.func @transform_1(%arg0: i32, %arg1: i32) -> (i32, i32, i32) {
    %c0_i32 = arith.constant 0 : i32
    %c0_i32_0 = arith.constant 0 : i32
    %c0_i32_1 = arith.constant 0 : i32
    return %c0_i32, %c0_i32_0, %arg1 : i32, i32, i32
  }
  func.func @transform_2(%arg0: i32, %arg1: i32) -> (i32, i32) {
    %c0_i32 = arith.constant 0 : i32
    %c0_i32_0 = arith.constant 0 : i32
    return %c0_i32, %arg1 : i32, i32
  }
  func.func @transform_3(%arg0: i32, %arg1: i32) -> (i32, i32, i32, i32) {
    %c0_i32 = arith.constant 0 : i32
    %c0_i32_0 = arith.constant 0 : i32
    %c0_i32_1 = arith.constant 0 : i32
    return %arg0, %c0_i32, %c0_i32_0, %arg1 : i32, i32, i32, i32
  }
}

</mosaic_0001>

<llo_original>
// kernel: vgg_forward.3
$region0: #{vgg_forward.3}
  #allocation0 [shape = 'u32[]', space=smem, size = 0x4, offset = 0x4, fixed_abs, tag = 'smem constant byte address 0x4 - core index']
  #allocation1 [shape = 'u32[72,128]{1,0:T(1,128)}', space=vmem, size = 0x9000, scoped, tag = 'internal scratch']
  %s0 = inlined_call_operand.vmem [shape: bf16[2,342,8], index: 0, kind: input, shape index: {}]
  %s1 = inlined_call_operand.vmem [shape: bf16[9,8,8], index: 1, kind: input, shape index: {}]
  %s2 = inlined_call_operand.vmem [shape: f32[1,8], index: 2, kind: input, shape index: {}]
  %s3 = inlined_call_operand.vmem [shape: f32[2,8,8,8], index: 3, kind: output, shape index: {}]
  %s4 = sld [smem:[#allocation0]]
  $region45: #{vgg_forward.3} parent=0
    _
  %s6 = ssub.s32 1, %s4
  %s7 = scalar_select 0, %s6, %s4
  loop: start=0, step=1, limit=4
  $region2: #{vgg_forward.3} parent=0 // loop_pre_header
    _
  $region3: #{vgg_forward.3} parent=0 // loop_header
    %s9 = sphi 0, %s13
    %p10 = scmp.ge.s32.totalorder %s9, 4
    %s16 = sphi 0, %s28
    %s17 = sphi 0, %s24
    %s18 = sphi 0, %s16
    %s19 = sphi 0, %s17
    %s20 = sphi 0, %s18
    %s21 = sphi 0, %s19
    %s31 = sphi 0, %s33
    %s34 = sphi 0, %s31
    %s35 = sphi 0, %s34
    %s51 = sphi 0, %s35
    %s57 = sphi 0, %s59
    %s60 = sphi 0, %s57
    %s61 = sphi 0, %s60
    %s77 = sphi 0, %s61
    %s83 = sphi 0, %s85
    %s86 = sphi 0, %s83
    %s87 = sphi 0, %s86
    %s103 = sphi 0, %s87
    %s111 = sphi 0, %s113
    %s114 = sphi 0, %s111
    %s115 = sphi 0, %s114
    %s131 = sphi 0, %s115
  $region4: #{vgg_forward.3} parent=0 // loop_header_branch
    %12 = sbr.rel (%p10) target = $region8
  $region5: #{vgg_forward.3} parent=0 // loop_body
    %s14 = ssub.s32 %s9, 1
    %s15 = ssub.s32 %s9, 2
    %s22 = sadd.s32 1, %s17
    %p23 = scmp.ge.s32.totalorder %s22, 1
    %s24 = scalar_select %p23, 0, %s22
    %s25 = sadd.s32 1, %s16
    %s26 = scalar_select %p23, %s25, %s16
    %p27 = scmp.ge.s32.totalorder %s26, 2
    %s28 = scalar_select %p27, 0, %s26
    %s29 = ssub.s32 %s16, %s28
    %p30 = scmp.eq.s32.totalorder %s29, 0
    %s32 = sadd.s32 %s31, 1
    %s33 = scalar_select %p30, %s31, %s32
    %p36 = pneg %p30
    %p37 = scmp.eq.s32.totalorder %s9, 1
    %p38 = por %p36, %p37
    %p39 = scmp.ne.s32.totalorder %s31, %s34
    %p40 = scmp.eq.s32.totalorder %s9, 0
    %p41 = por %p39, %p40
    %p42 = scmp.ne.s32.totalorder %s31, %s34
    %p43 = scmp.eq.s32.totalorder %s14, 1
    %p44 = por %p42, %p43
    %p45 = scmp.ne.s32.totalorder %s34, %s35
    %p46 = scmp.eq.s32.totalorder %s14, 0
    %p47 = por %p45, %p46
    %p48 = scmp.ne.s32.totalorder %s34, %s35
    %p49 = scmp.eq.s32.totalorder %s15, 1
    %p50 = por %p48, %p49
    %p52 = scmp.ne.s32.totalorder %s35, %s51
    %p53 = scmp.eq.s32.totalorder %s15, 0
    %p54 = por %p52, %p53
    %s55 = ssub.s32 %s17, %s24
    %p56 = scmp.eq.s32.totalorder %s55, 0
    %s58 = sadd.s32 %s57, 1
    %s59 = scalar_select %p56, %s57, %s58
    %p62 = pneg %p56
    %p63 = scmp.eq.s32.totalorder %s9, 1
    %p64 = por %p62, %p63
    %p65 = scmp.ne.s32.totalorder %s57, %s60
    %p66 = scmp.eq.s32.totalorder %s9, 0
    %p67 = por %p65, %p66
    %p68 = scmp.ne.s32.totalorder %s57, %s60
    %p69 = scmp.eq.s32.totalorder %s14, 1
    %p70 = por %p68, %p69
    %p71 = scmp.ne.s32.totalorder %s60, %s61
    %p72 = scmp.eq.s32.totalorder %s14, 0
    %p73 = por %p71, %p72
    %p74 = scmp.ne.s32.totalorder %s60, %s61
    %p75 = scmp.eq.s32.totalorder %s15, 1
    %p76 = por %p74, %p75
    %p78 = scmp.ne.s32.totalorder %s61, %s77
    %p79 = scmp.eq.s32.totalorder %s15, 0
    %p80 = por %p78, %p79
    %s81 = ssub.s32 %s17, %s24
    %p82 = scmp.eq.s32.totalorder %s81, 0
    %s84 = sadd.s32 %s83, 1
    %s85 = scalar_select %p82, %s83, %s84
    %p88 = pneg %p82
    %p89 = scmp.eq.s32.totalorder %s9, 1
    %p90 = por %p88, %p89
    %p91 = scmp.ne.s32.totalorder %s83, %s86
    %p92 = scmp.eq.s32.totalorder %s9, 0
    %p93 = por %p91, %p92
    %p94 = scmp.ne.s32.totalorder %s83, %s86
    %p95 = scmp.eq.s32.totalorder %s14, 1
    %p96 = por %p94, %p95
    %p97 = scmp.ne.s32.totalorder %s86, %s87
    %p98 = scmp.eq.s32.totalorder %s14, 0
    %p99 = por %p97, %p98
    %p100 = scmp.ne.s32.totalorder %s86, %s87
    %p101 = scmp.eq.s32.totalorder %s15, 1
    %p102 = por %p100, %p101
    %p104 = scmp.ne.s32.totalorder %s87, %s103
    %p105 = scmp.eq.s32.totalorder %s15, 0
    %p106 = por %p104, %p105
    %s107 = ssub.s32 %s16, %s28
    %s108 = ssub.s32 %s17, %s24
    %s109 = sor.u32 %s107, %s108
    %p110 = scmp.eq.s32.totalorder %s109, 0
    %s112 = sadd.s32 %s111, 1
    %s113 = scalar_select %p110, %s111, %s112
    %p116 = pneg %p110
    %p117 = scmp.eq.s32.totalorder %s9, 1
    %p118 = por %p116, %p117
    %p119 = scmp.ne.s32.totalorder %s111, %s114
    %p120 = scmp.eq.s32.totalorder %s9, 0
    %p121 = por %p119, %p120
    %p122 = scmp.ne.s32.totalorder %s111, %s114
    %p123 = scmp.eq.s32.totalorder %s14, 1
    %p124 = por %p122, %p123
    %p125 = scmp.ne.s32.totalorder %s114, %s115
    %p126 = scmp.eq.s32.totalorder %s14, 0
    %p127 = por %p125, %p126
    %p128 = scmp.ne.s32.totalorder %s114, %s115
    %p129 = scmp.eq.s32.totalorder %s15, 1
    %p130 = por %p128, %p129
    %p132 = scmp.ne.s32.totalorder %s115, %s131
    %p133 = scmp.eq.s32.totalorder %s15, 0
    %p134 = por %p132, %p133
    %p135 = scmp.le.s32.totalorder 1, %s9
    %p136 = scmp.lt.s32.totalorder %s9, 3
    %p137 = pnand %p135, %p136
    %p138 = pneg %p137
    // Predicated region
    $region9: #{vgg_forward.3} parent=5 // pred_check
      _
    $region10: #{vgg_forward.3} parent=5 // pred_check_branch
      %140 = sbr.rel (%p137) target = $region12
    $region11: #{vgg_forward.3} parent=5 // pred_region
      %s141 = ssub.s32 %s9, 1
      // Predicated region
      $region13: #{vgg_forward.3} parent=11 // pred_check
        %p142 = pneg %p73
      $region14: #{vgg_forward.3} parent=11 // pred_check_branch
        %144 = sbr.rel (%p142) target = $region16
      $region15: #{vgg_forward.3} parent=11 // pred_region
        %p145 = scmp.lt.s32.totalorder %s19, 0
        %s146 = scalar_select %p145, %s19, 0
        %s147 = smul.addr %s146, 4
        %s148 = scalar_lea.vmem %s1, %s147
      $region16: #{vgg_forward.3} parent=11 // pred_fallthru
        _
      // Predicated region
      $region17: #{vgg_forward.3} parent=11 // pred_check
        %p149 = pneg %p99
      $region18: #{vgg_forward.3} parent=11 // pred_check_branch
        %151 = sbr.rel (%p149) target = $region20
      $region19: #{vgg_forward.3} parent=11 // pred_region
        %p152 = scmp.lt.s32.totalorder %s19, 0
        %s153 = scalar_select %p152, %s19, 0
        %s154 = scalar_lea.vmem %s2, %s153
      $region20: #{vgg_forward.3} parent=11 // pred_fallthru
        _
    $region12: #{vgg_forward.3} parent=5 // pred_fallthru
      _
    %p155 = scmp.lt.s32.totalorder %s9, 2
    // Predicated region
    $region21: #{vgg_forward.3} parent=5 // pred_check
      %p156 = pneg %p155
    $region22: #{vgg_forward.3} parent=5 // pred_check_branch
      %158 = sbr.rel (%p156) target = $region24
    $region23: #{vgg_forward.3} parent=5 // pred_region
      // Predicated region
      $region25: #{vgg_forward.3} parent=23 // pred_check
        %p159 = pneg %p41
      $region26: #{vgg_forward.3} parent=23 // pred_check_branch
        %161 = sbr.rel (%p159) target = $region28
      $region27: #{vgg_forward.3} parent=23 // pred_region
        %p162 = scmp.lt.s32.totalorder %s16, 1
        %s163 = scalar_select %p162, %s16, 1
        %s164 = smul.addr %s163, 43
        %s165 = smul.addr %s164, 4
        %s166 = scalar_lea.vmem %s0, %s165
      $region28: #{vgg_forward.3} parent=23 // pred_fallthru
        _
    $region24: #{vgg_forward.3} parent=5 // pred_fallthru
      _
    %p167 = scmp.le.s32.totalorder 1, %s9
    %p168 = scmp.lt.s32.totalorder %s9, 3
    %p169 = pnand %p167, %p168
    %p170 = pneg %p169
    // Predicated region
    $region29: #{vgg_forward.3} parent=5 // pred_check
      _
    $region30: #{vgg_forward.3} parent=5 // pred_check_branch
      %172 = sbr.rel (%p169) target = $region32
    $region31: #{vgg_forward.3} parent=5 // pred_region
      %s173 = ssub.s32 %s9, 1
      %p174 = scmp.lt.s32.totalorder %s18, 1
      %s175 = scalar_select %p174, %s18, 1
      %s176 = smul.addr %s175, 43
      %s177 = smul.addr %s176, 4
      %s178 = scalar_lea.vmem %s0, %s177
      %p179 = pneg %p47
      %p180 = pneg %p44
      %p181 = scmp.lt.s32.totalorder %s19, 0
      %s182 = scalar_select %p181, %s19, 0
      %s183 = smul.addr %s182, 4
      %s184 = scalar_lea.vmem %s1, %s183
      %p185 = pneg %p73
      %p186 = pneg %p70
      %p187 = scmp.lt.s32.totalorder %s19, 0
      %s188 = scalar_select %p187, %s19, 0
      %s189 = scalar_lea.vmem %s2, %s188
      %p190 = pneg %p99
      %p191 = pneg %p96
      %p192 = pneg %p127
      %p193 = pneg %p124
      %p194 = scmp.lt.s32.totalorder %s18, 1
      %s195 = scalar_select %p194, %s18, 1
      %p196 = scmp.lt.s32.totalorder %s19, 0
      %s197 = scalar_select %p196, %s19, 0
      %s198 = smul.addr %s195, 8
      %s199 = sadd.s32 %s197, %s198
      %s200 = smul.addr %s199, 8
      %s201 = scalar_lea.vmem %s3, %s200
      %p202 = scmp.lt.s32.totalorder %s18, 1
      %s203 = scalar_select %p202, %s18, 1
      %s204 = smul.addr %s203, 43
      %s205 = smul.addr %s204, 4
      %s206 = scalar_lea.vmem %s0, %s205
      %p207 = scmp.lt.s32.totalorder %s19, 0
      %s208 = scalar_select %p207, %s19, 0
      %s209 = smul.addr %s208, 4
      %s210 = scalar_lea.vmem %s1, %s209
      %p211 = scmp.lt.s32.totalorder %s19, 0
      %s212 = scalar_select %p211, %s19, 0
      %s213 = scalar_lea.vmem %s2, %s212
      %p214 = scmp.lt.s32.totalorder %s18, 1
      %s215 = scalar_select %p214, %s18, 1
      %p216 = scmp.lt.s32.totalorder %s19, 0
      %s217 = scalar_select %p216, %s19, 0
      %s218 = smul.addr %s215, 8
      %s219 = sadd.s32 %s217, %s218
      %s220 = smul.addr %s219, 8
      %s221 = scalar_lea.vmem %s3, %s220
      %v223 = vld [vmem:[%s206] sm:$0xf]
      %v224 = vld [vmem:[%s206 + $0x4] sm:$0xf]
      %v225 = vld [vmem:[%s206 + $0x8] sm:$0xf]
      %v226 = vld [vmem:[%s206 + $0xc] sm:$0xf]
      %v227 = vld [vmem:[%s206 + $0x10] sm:$0xf]
      %v228 = vld [vmem:[%s206 + $0x14] sm:$0xf]
      %v229 = vld [vmem:[%s206 + $0x18] sm:$0xf]
      %v230 = vld [vmem:[%s206 + $0x1c] sm:$0xf]
      %v231 = vld [vmem:[%s206 + $0x20] sm:$0xf]
      %v232 = vld [vmem:[%s206 + $0x24] sm:$0xf]
      %v233 = vld [vmem:[%s206 + $0x28] sm:$0xf]
      %v234 = vld [vmem:[%s206 + $0x2c] sm:$0xf]
      %v235 = vld [vmem:[%s206 + $0x30] sm:$0xf]
      %v236 = vld [vmem:[%s206 + $0x34] sm:$0xf]
      %v237 = vld [vmem:[%s206 + $0x38] sm:$0xf]
      %v238 = vld [vmem:[%s206 + $0x3c] sm:$0xf]
      %v239 = vld [vmem:[%s206 + $0x40] sm:$0xf]
      %v240 = vld [vmem:[%s206 + $0x44] sm:$0xf]
      %v241 = vld [vmem:[%s206 + $0x48] sm:$0xf]
      %v242 = vld [vmem:[%s206 + $0x4c] sm:$0xf]
      %v243 = vld [vmem:[%s206 + $0x50] sm:$0xf]
      %v244 = vld [vmem:[%s206 + $0x54] sm:$0xf]
      %v245 = vld [vmem:[%s206 + $0x58] sm:$0xf]
      %v246 = vld [vmem:[%s206 + $0x5c] sm:$0xf]
      %v247 = vld [vmem:[%s206 + $0x60] sm:$0xf]
      %v248 = vld [vmem:[%s206 + $0x64] sm:$0xf]
      %v249 = vld [vmem:[%s206 + $0x68] sm:$0xf]
      %v250 = vld [vmem:[%s206 + $0x6c] sm:$0xf]
      %v251 = vld [vmem:[%s206 + $0x70] sm:$0xf]
      %v252 = vld [vmem:[%s206 + $0x74] sm:$0xf]
      %v253 = vld [vmem:[%s206 + $0x78] sm:$0xf]
      %v254 = vld [vmem:[%s206 + $0x7c] sm:$0xf]
      %v255 = vld [vmem:[%s206 + $0x80] sm:$0xf]
      %v256 = vld [vmem:[%s206 + $0x84] sm:$0xf]
      %v257 = vld [vmem:[%s206 + $0x88] sm:$0xf]
      %v258 = vld [vmem:[%s206 + $0x8c] sm:$0xf]
      %v259 = vld [vmem:[%s210] sm:$0xf]
      %v260 = vld [vmem:[%s206 + $0x90] sm:$0x1]
      %s261 = scalar_lea.vmem %s210, 4
      %v262 = vld [vmem:[%s261] sm:$0xf]
      %v300 = vunpack.c.l.b16 %v223
      %v301 = vunpack.c.l.b16 %v224
      %v302 = vunpack.c.l.b16 %v225
      %v303 = vunpack.c.l.b16 %v226
      %v304 = vunpack.c.l.b16 %v227
      %v305 = vunpack.c.l.b16 %v228
      %v306 = vunpack.c.l.b16 %v229
      %v307 = vunpack.c.l.b16 %v230
      %v308 = vunpack.c.l.b16 %v231
      %v309 = vunpack.c.l.b16 %v232
      %v310 = vunpack.c.l.b16 %v233
      %v311 = vunpack.c.l.b16 %v234
      %v312 = vunpack.c.l.b16 %v235
      %v313 = vunpack.c.l.b16 %v236
      %v314 = vunpack.c.l.b16 %v237
      %v315 = vunpack.c.l.b16 %v238
      %v316 = vunpack.c.l.b16 %v239
      %v317 = vunpack.c.l.b16 %v240
      %v318 = vunpack.c.l.b16 %v241
      %v319 = vunpack.c.l.b16 %v242
      %v320 = vunpack.c.l.b16 %v243
      %v321 = vunpack.c.l.b16 %v244
      %v322 = vunpack.c.l.b16 %v245
      %v323 = vunpack.c.l.b16 %v246
      %v324 = vunpack.c.l.b16 %v247
      %v325 = vunpack.c.l.b16 %v248
      %v326 = vunpack.c.l.b16 %v249
      %v327 = vunpack.c.l.b16 %v250
      %v328 = vunpack.c.l.b16 %v251
      %v329 = vunpack.c.l.b16 %v252
      %v330 = vunpack.c.l.b16 %v253
      %v331 = vunpack.c.l.b16 %v254
      %v332 = vunpack.c.l.b16 %v255
      %v333 = vunpack.c.l.b16 %v256
      %v334 = vunpack.c.l.b16 %v257
      %v335 = vunpack.c.l.b16 %v258
      %v336 = vunpack.c.l.b16 %v260
      %v337 = vpack.c.b16 %v301, %v300
      %v338 = vpack.c.b16 %v303, %v302
      %v339 = vpack.c.b16 %v305, %v304
      %v340 = vpack.c.b16 %v307, %v306
      %v341 = vpack.c.b16 %v309, %v308
      %v342 = vpack.c.b16 %v311, %v310
      %v343 = vpack.c.b16 %v313, %v312
      %v344 = vpack.c.b16 %v315, %v314
      %v345 = vpack.c.b16 %v317, %v316
      %v346 = vpack.c.b16 %v319, %v318
      %v347 = vpack.c.b16 %v321, %v320
      %v348 = vpack.c.b16 %v323, %v322
      %v349 = vpack.c.b16 %v325, %v324
      %v350 = vpack.c.b16 %v327, %v326
      %v351 = vpack.c.b16 %v329, %v328
      %v352 = vpack.c.b16 %v331, %v330
      %v353 = vpack.c.b16 %v333, %v332
      %v354 = vpack.c.b16 %v335, %v334
      %v355 = vpack.c.b16 %v336, %v336
      %vm356 = vsmask.f32 7424
      %v358 = vshrl.u32 %v337, 16
      %v360 = vshll.u32 %v337, 16
      %v362 = vrot.slane %v360, 1
      %v363 = vor.u32 %v358, %v362
      %v365 = vshll.u32 %v338, 16
      %v367 = vrot.slane %v365, 1
      %v368 = vsel %vm356, %v363, %v367
      %v369 = vshrl.u32 %v338, 16
      %v371 = vor.u32 %v369, %v367
      %v373 = vshll.u32 %v339, 16
      %v375 = vrot.slane %v373, 1
      %v376 = vsel %vm356, %v371, %v375
      %v377 = vshrl.u32 %v339, 16
      %v379 = vor.u32 %v377, %v375
      %v381 = vshll.u32 %v340, 16
      %v383 = vrot.slane %v381, 1
      %v384 = vsel %vm356, %v379, %v383
      %v385 = vshrl.u32 %v340, 16
      %v387 = vor.u32 %v385, %v383
      %v389 = vshll.u32 %v341, 16
      %v391 = vrot.slane %v389, 1
      %v392 = vsel %vm356, %v387, %v391
      %v393 = vshrl.u32 %v341, 16
      %v395 = vor.u32 %v393, %v391
      %v397 = vshll.u32 %v342, 16
      %v399 = vrot.slane %v397, 1
      %v400 = vsel %vm356, %v395, %v399
      %v401 = vshrl.u32 %v342, 16
      %v403 = vor.u32 %v401, %v399
      %v405 = vshll.u32 %v343, 16
      %v407 = vrot.slane %v405, 1
      %v408 = vsel %vm356, %v403, %v407
      %v409 = vshrl.u32 %v343, 16
      %v411 = vor.u32 %v409, %v407
      %v413 = vshll.u32 %v344, 16
      %v415 = vrot.slane %v413, 1
      %v416 = vsel %vm356, %v411, %v415
      %v417 = vshrl.u32 %v344, 16
      %v419 = vor.u32 %v417, %v415
      %v421 = vshll.u32 %v345, 16
      %v423 = vrot.slane %v421, 1
      %v424 = vsel %vm356, %v419, %v423
      %v425 = vshrl.u32 %v345, 16
      %v427 = vor.u32 %v425, %v423
      %v429 = vshll.u32 %v346, 16
      %v431 = vrot.slane %v429, 1
      %v432 = vsel %vm356, %v427, %v431
      %v433 = vshrl.u32 %v346, 16
      %v435 = vor.u32 %v433, %v431
      %v437 = vshll.u32 %v347, 16
      %v439 = vrot.slane %v437, 1
      %v440 = vsel %vm356, %v435, %v439
      %v441 = vshrl.u32 %v347, 16
      %v443 = vor.u32 %v441, %v439
      %v445 = vshll.u32 %v348, 16
      %v447 = vrot.slane %v445, 1
      %v448 = vsel %vm356, %v443, %v447
      %v449 = vshrl.u32 %v348, 16
      %v451 = vor.u32 %v449, %v447
      %v453 = vshll.u32 %v349, 16
      %v455 = vrot.slane %v453, 1
      %v456 = vsel %vm356, %v451, %v455
      %v457 = vshrl.u32 %v349, 16
      %v459 = vor.u32 %v457, %v455
      %v461 = vshll.u32 %v350, 16
      %v463 = vrot.slane %v461, 1
      %v464 = vsel %vm356, %v459, %v463
      %v465 = vshrl.u32 %v350, 16
      %v467 = vor.u32 %v465, %v463
      %v469 = vshll.u32 %v351, 16
      %v471 = vrot.slane %v469, 1
      %v472 = vsel %vm356, %v467, %v471
      %v473 = vshrl.u32 %v351, 16
      %v475 = vor.u32 %v473, %v471
      %v477 = vshll.u32 %v352, 16
      %v479 = vrot.slane %v477, 1
      %v480 = vsel %vm356, %v475, %v479
      %v481 = vshrl.u32 %v352, 16
      %v483 = vor.u32 %v481, %v479
      %v485 = vshll.u32 %v353, 16
      %v487 = vrot.slane %v485, 1
      %v488 = vsel %vm356, %v483, %v487
      %v489 = vshrl.u32 %v353, 16
      %v491 = vor.u32 %v489, %v487
      %v493 = vshll.u32 %v354, 16
      %v495 = vrot.slane %v493, 1
      %v496 = vsel %vm356, %v491, %v495
      %v497 = vshrl.u32 %v354, 16
      %v499 = vor.u32 %v497, %v495
      %v501 = vshll.u32 %v355, 16
      %v503 = vrot.slane %v501, 1
      %v504 = vsel %vm356, %v499, %v503
      %vm505 = vcmask 64512
      %v507 = vsel %vm505, %v368, 0
      %v510 = vsel %vm505, %v376, 0
      %v513 = vsel %vm505, %v384, 0
      %v516 = vsel %vm505, %v392, 0
      %v519 = vsel %vm505, %v400, 0
      %v522 = vsel %vm505, %v408, 0
      %v525 = vsel %vm505, %v416, 0
      %v528 = vsel %vm505, %v424, 0
      %v531 = vsel %vm505, %v432, 0
      %v534 = vsel %vm505, %v440, 0
      %v537 = vsel %vm505, %v448, 0
      %v540 = vsel %vm505, %v456, 0
      %v543 = vsel %vm505, %v464, 0
      %v546 = vsel %vm505, %v472, 0
      %v549 = vsel %vm505, %v480, 0
      %v552 = vsel %vm505, %v488, 0
      %v555 = vsel %vm505, %v496, 0
      %v558 = vsel %vm505, %v504, 0
      %vm560 = vcmask 1043456
      %v562 = vsel %vm560, %v262, 0
      %564 = vmatpush.bf16.msra.mxu0 0
      %565 = vmatpush.bf16.msra.mxu0 0
      %566 = vmatpush.bf16.msra.mxu0 0
      %567 = vmatpush.bf16.msra.mxu0 0
      %568 = vmatpush.bf16.msra.mxu0 0
      %569 = vmatpush.bf16.msra.mxu0 0
      %570 = vmatpush.bf16.msra.mxu0 0
      %571 = vmatpush.bf16.msra.mxu0 %v562
      %572 = vmatmul.bf16.gmra.mxu0 %v507
      %v573 = vpop.f32.mrf.mxu0
      %v574 = vadd.f32 0.0, %v573
      %v575 = vpop.f32.mrf.mxu0
      %v576 = vadd.f32 0.0, %v575
      %577 = vmatmul.bf16.gmra.mxu0 %v510
      %v578 = vpop.f32.mrf.mxu0
      %v579 = vadd.f32 0.0, %v578
      %v580 = vpop.f32.mrf.mxu0
      %v581 = vadd.f32 0.0, %v580
      %582 = vmatmul.bf16.gmra.mxu0 %v513
      %v583 = vpop.f32.mrf.mxu0
      %v584 = vadd.f32 0.0, %v583
      %v585 = vpop.f32.mrf.mxu0
      %v586 = vadd.f32 0.0, %v585
      %587 = vmatmul.bf16.gmra.mxu0 %v516
      %v588 = vpop.f32.mrf.mxu0
      %v589 = vadd.f32 0.0, %v588
      %v590 = vpop.f32.mrf.mxu0
      %v591 = vadd.f32 0.0, %v590
      %592 = vmatmul.bf16.gmra.mxu0 %v519
      %v593 = vpop.f32.mrf.mxu0
      %v594 = vadd.f32 0.0, %v593
      %v595 = vpop.f32.mrf.mxu0
      %v596 = vadd.f32 0.0, %v595
      %597 = vmatmul.bf16.gmra.mxu0 %v522
      %v598 = vpop.f32.mrf.mxu0
      %v599 = vadd.f32 0.0, %v598
      %v600 = vpop.f32.mrf.mxu0
      %v601 = vadd.f32 0.0, %v600
      %602 = vmatmul.bf16.gmra.mxu0 %v525
      %v603 = vpop.f32.mrf.mxu0
      %v604 = vadd.f32 0.0, %v603
      %v605 = vpop.f32.mrf.mxu0
      %v606 = vadd.f32 0.0, %v605
      %607 = vmatmul.bf16.gmra.mxu0 %v528
      %v608 = vpop.f32.mrf.mxu0
      %v609 = vadd.f32 0.0, %v608
      %v610 = vpop.f32.mrf.mxu0
      %v611 = vadd.f32 0.0, %v610
      %612 = vmatmul.bf16.gmra.mxu0 %v531
      %v613 = vpop.f32.mrf.mxu0
      %v614 = vadd.f32 0.0, %v613
      %v615 = vpop.f32.mrf.mxu0
      %v616 = vadd.f32 0.0, %v615
      %617 = vmatmul.bf16.gmra.mxu0 %v534
      %v618 = vpop.f32.mrf.mxu0
      %v619 = vadd.f32 0.0, %v618
      %v620 = vpop.f32.mrf.mxu0
      %v621 = vadd.f32 0.0, %v620
      %622 = vmatmul.bf16.gmra.mxu0 %v537
      %v623 = vpop.f32.mrf.mxu0
      %v624 = vadd.f32 0.0, %v623
      %v625 = vpop.f32.mrf.mxu0
      %v626 = vadd.f32 0.0, %v625
      %627 = vmatmul.bf16.gmra.mxu0 %v540
      %v628 = vpop.f32.mrf.mxu0
      %v629 = vadd.f32 0.0, %v628
      %v630 = vpop.f32.mrf.mxu0
      %v631 = vadd.f32 0.0, %v630
      %632 = vmatmul.bf16.gmra.mxu0 %v543
      %v633 = vpop.f32.mrf.mxu0
      %v634 = vadd.f32 0.0, %v633
      %v635 = vpop.f32.mrf.mxu0
      %v636 = vadd.f32 0.0, %v635
      %637 = vmatmul.bf16.gmra.mxu0 %v546
      %v638 = vpop.f32.mrf.mxu0
      %v639 = vadd.f32 0.0, %v638
      %v640 = vpop.f32.mrf.mxu0
      %v641 = vadd.f32 0.0, %v640
      %642 = vmatmul.bf16.gmra.mxu0 %v549
      %v643 = vpop.f32.mrf.mxu0
      %v644 = vadd.f32 0.0, %v643
      %v645 = vpop.f32.mrf.mxu0
      %v646 = vadd.f32 0.0, %v645
      %647 = vmatmul.bf16.gmra.mxu0 %v552
      %v648 = vpop.f32.mrf.mxu0
      %v649 = vadd.f32 0.0, %v648
      %v650 = vpop.f32.mrf.mxu0
      %v651 = vadd.f32 0.0, %v650
      %652 = vmatmul.bf16.gmra.mxu0 %v555
      %v653 = vpop.f32.mrf.mxu0
      %v654 = vadd.f32 0.0, %v653
      %v655 = vpop.f32.mrf.mxu0
      %v656 = vadd.f32 0.0, %v655
      %657 = vmatmul.bf16.gmra.mxu0 %v558
      %v658 = vpop.f32.mrf.mxu0
      %v659 = vadd.f32 0.0, %v658
      %v660 = vpop.f32.mrf.mxu0
      %v661 = vadd.f32 0.0, %v660
      %662 = vdwg.mxu0
      %v663 = vsel %vm505, %v337, 0
      %v665 = vsel %vm505, %v338, 0
      %v667 = vsel %vm505, %v339, 0
      %v669 = vsel %vm505, %v340, 0
      %v671 = vsel %vm505, %v341, 0
      %v673 = vsel %vm505, %v342, 0
      %v675 = vsel %vm505, %v343, 0
      %v677 = vsel %vm505, %v344, 0
      %v679 = vsel %vm505, %v345, 0
      %v681 = vsel %vm505, %v346, 0
      %v683 = vsel %vm505, %v347, 0
      %v685 = vsel %vm505, %v348, 0
      %v687 = vsel %vm505, %v349, 0
      %v689 = vsel %vm505, %v350, 0
      %v691 = vsel %vm505, %v351, 0
      %v693 = vsel %vm505, %v352, 0
      %v695 = vsel %vm505, %v353, 0
      %v697 = vsel %vm505, %v354, 0
      %v700 = vsel %vm560, %v259, 0
      %702 = vmatpush.bf16.msra.mxu0 0
      %703 = vmatpush.bf16.msra.mxu0 0
      %704 = vmatpush.bf16.msra.mxu0 0
      %705 = vmatpush.bf16.msra.mxu0 0
      %706 = vmatpush.bf16.msra.mxu0 0
      %707 = vmatpush.bf16.msra.mxu0 0
      %708 = vmatpush.bf16.msra.mxu0 0
      %709 = vmatpush.bf16.msra.mxu0 %v700
      %710 = vmatmul.bf16.gmra.mxu0 %v663
      %v711 = vpop.f32.mrf.mxu0
      %v712 = vadd.f32 %v574, %v711
      %v713 = vpop.f32.mrf.mxu0
      %v714 = vadd.f32 %v576, %v713
      %715 = vmatmul.bf16.gmra.mxu0 %v665
      %v716 = vpop.f32.mrf.mxu0
      %v717 = vadd.f32 %v579, %v716
      %v718 = vpop.f32.mrf.mxu0
      %v719 = vadd.f32 %v581, %v718
      %720 = vmatmul.bf16.gmra.mxu0 %v667
      %v721 = vpop.f32.mrf.mxu0
      %v722 = vadd.f32 %v584, %v721
      %v723 = vpop.f32.mrf.mxu0
      %v724 = vadd.f32 %v586, %v723
      %725 = vmatmul.bf16.gmra.mxu0 %v669
      %v726 = vpop.f32.mrf.mxu0
      %v727 = vadd.f32 %v589, %v726
      %v728 = vpop.f32.mrf.mxu0
      %v729 = vadd.f32 %v591, %v728
      %730 = vmatmul.bf16.gmra.mxu0 %v671
      %v731 = vpop.f32.mrf.mxu0
      %v732 = vadd.f32 %v594, %v731
      %v733 = vpop.f32.mrf.mxu0
      %v734 = vadd.f32 %v596, %v733
      %735 = vmatmul.bf16.gmra.mxu0 %v673
      %v736 = vpop.f32.mrf.mxu0
      %v737 = vadd.f32 %v599, %v736
      %v738 = vpop.f32.mrf.mxu0
      %v739 = vadd.f32 %v601, %v738
      %740 = vmatmul.bf16.gmra.mxu0 %v675
      %v741 = vpop.f32.mrf.mxu0
      %v742 = vadd.f32 %v604, %v741
      %v743 = vpop.f32.mrf.mxu0
      %v744 = vadd.f32 %v606, %v743
      %745 = vmatmul.bf16.gmra.mxu0 %v677
      %v746 = vpop.f32.mrf.mxu0
      %v747 = vadd.f32 %v609, %v746
      %v748 = vpop.f32.mrf.mxu0
      %v749 = vadd.f32 %v611, %v748
      %750 = vmatmul.bf16.gmra.mxu0 %v679
      %v751 = vpop.f32.mrf.mxu0
      %v752 = vadd.f32 %v614, %v751
      %v753 = vpop.f32.mrf.mxu0
      %v754 = vadd.f32 %v616, %v753
      %755 = vmatmul.bf16.gmra.mxu0 %v681
      %v756 = vpop.f32.mrf.mxu0
      %v757 = vadd.f32 %v619, %v756
      %v758 = vpop.f32.mrf.mxu0
      %v759 = vadd.f32 %v621, %v758
      %760 = vmatmul.bf16.gmra.mxu0 %v683
      %v761 = vpop.f32.mrf.mxu0
      %v762 = vadd.f32 %v624, %v761
      %v763 = vpop.f32.mrf.mxu0
      %v764 = vadd.f32 %v626, %v763
      %765 = vmatmul.bf16.gmra.mxu0 %v685
      %v766 = vpop.f32.mrf.mxu0
      %v767 = vadd.f32 %v629, %v766
      %v768 = vpop.f32.mrf.mxu0
      %v769 = vadd.f32 %v631, %v768
      %770 = vmatmul.bf16.gmra.mxu0 %v687
      %v771 = vpop.f32.mrf.mxu0
      %v772 = vadd.f32 %v634, %v771
      %v773 = vpop.f32.mrf.mxu0
      %v774 = vadd.f32 %v636, %v773
      %775 = vmatmul.bf16.gmra.mxu0 %v689
      %v776 = vpop.f32.mrf.mxu0
      %v777 = vadd.f32 %v639, %v776
      %v778 = vpop.f32.mrf.mxu0
      %v779 = vadd.f32 %v641, %v778
      %780 = vmatmul.bf16.gmra.mxu0 %v691
      %v781 = vpop.f32.mrf.mxu0
      %v782 = vadd.f32 %v644, %v781
      %v783 = vpop.f32.mrf.mxu0
      %v784 = vadd.f32 %v646, %v783
      %785 = vmatmul.bf16.gmra.mxu0 %v693
      %v786 = vpop.f32.mrf.mxu0
      %v787 = vadd.f32 %v649, %v786
      %v788 = vpop.f32.mrf.mxu0
      %v789 = vadd.f32 %v651, %v788
      %790 = vmatmul.bf16.gmra.mxu0 %v695
      %v791 = vpop.f32.mrf.mxu0
      %v792 = vadd.f32 %v654, %v791
      %v793 = vpop.f32.mrf.mxu0
      %v794 = vadd.f32 %v656, %v793
      %795 = vmatmul.bf16.gmra.mxu0 %v697
      %v796 = vpop.f32.mrf.mxu0
      %v797 = vadd.f32 %v659, %v796
      %v798 = vpop.f32.mrf.mxu0
      %v799 = vadd.f32 %v661, %v798
      %800 = vdwg.mxu0
      %v801 = vld [vmem:[%s206] sm:$0xe]
      %s802 = scalar_lea.vmem %s210, 8
      %v803 = vld [vmem:[%s802] sm:$0xf]
      %v805 = vunpack.c.l.b16 %v801
      %v806 = vpack.c.b16 %v301, %v805
      %vm807 = vcmask 1046528
      %v808 = vrot.slane %v806, 1
      %v809 = vrot.slane %v338, 1
      %v810 = vsel %vm807, %v808, %v809
      %v811 = vrot.slane %v339, 1
      %v812 = vsel %vm807, %v809, %v811
      %v813 = vrot.slane %v340, 1
      %v814 = vsel %vm807, %v811, %v813
      %v815 = vrot.slane %v341, 1
      %v816 = vsel %vm807, %v813, %v815
      %v817 = vrot.slane %v342, 1
      %v818 = vsel %vm807, %v815, %v817
      %v819 = vrot.slane %v343, 1
      %v820 = vsel %vm807, %v817, %v819
      %v821 = vrot.slane %v344, 1
      %v822 = vsel %vm807, %v819, %v821
      %v823 = vrot.slane %v345, 1
      %v824 = vsel %vm807, %v821, %v823
      %v825 = vrot.slane %v346, 1
      %v826 = vsel %vm807, %v823, %v825
      %v827 = vrot.slane %v347, 1
      %v828 = vsel %vm807, %v825, %v827
      %v829 = vrot.slane %v348, 1
      %v830 = vsel %vm807, %v827, %v829
      %v831 = vrot.slane %v349, 1
      %v832 = vsel %vm807, %v829, %v831
      %v833 = vrot.slane %v350, 1
      %v834 = vsel %vm807, %v831, %v833
      %v835 = vrot.slane %v351, 1
      %v836 = vsel %vm807, %v833, %v835
      %v837 = vrot.slane %v352, 1
      %v838 = vsel %vm807, %v835, %v837
      %v839 = vrot.slane %v353, 1
      %v840 = vsel %vm807, %v837, %v839
      %v841 = vrot.slane %v354, 1
      %v842 = vsel %vm807, %v839, %v841
      %v843 = vrot.slane %v355, 1
      %v844 = vsel %vm807, %v841, %v843
      %v846 = vsel %vm505, %v810, 0
      %v849 = vsel %vm505, %v812, 0
      %v852 = vsel %vm505, %v814, 0
      %v855 = vsel %vm505, %v816, 0
      %v858 = vsel %vm505, %v818, 0
      %v861 = vsel %vm505, %v820, 0
      %v864 = vsel %vm505, %v822, 0
      %v867 = vsel %vm505, %v824, 0
      %v870 = vsel %vm505, %v826, 0
      %v873 = vsel %vm505, %v828, 0
      %v876 = vsel %vm505, %v830, 0
      %v879 = vsel %vm505, %v832, 0
      %v882 = vsel %vm505, %v834, 0
      %v885 = vsel %vm505, %v836, 0
      %v888 = vsel %vm505, %v838, 0
      %v891 = vsel %vm505, %v840, 0
      %v894 = vsel %vm505, %v842, 0
      %v897 = vsel %vm505, %v844, 0
      %v900 = vsel %vm560, %v803, 0
      %902 = vmatpush.bf16.msra.mxu0 0
      %903 = vmatpush.bf16.msra.mxu0 0
      %904 = vmatpush.bf16.msra.mxu0 0
      %905 = vmatpush.bf16.msra.mxu0 0
      %906 = vmatpush.bf16.msra.mxu0 0
      %907 = vmatpush.bf16.msra.mxu0 0
      %908 = vmatpush.bf16.msra.mxu0 0
      %909 = vmatpush.bf16.msra.mxu0 %v900
      %910 = vmatmul.bf16.gmra.mxu0 %v846
      %v911 = vpop.f32.mrf.mxu0
      %v912 = vadd.f32 0.0, %v911
      %v913 = vpop.f32.mrf.mxu0
      %v914 = vadd.f32 0.0, %v913
      %915 = vmatmul.bf16.gmra.mxu0 %v849
      %v916 = vpop.f32.mrf.mxu0
      %v917 = vadd.f32 0.0, %v916
      %v918 = vpop.f32.mrf.mxu0
      %v919 = vadd.f32 0.0, %v918
      %920 = vmatmul.bf16.gmra.mxu0 %v852
      %v921 = vpop.f32.mrf.mxu0
      %v922 = vadd.f32 0.0, %v921
      %v923 = vpop.f32.mrf.mxu0
      %v924 = vadd.f32 0.0, %v923
      %925 = vmatmul.bf16.gmra.mxu0 %v855
      %v926 = vpop.f32.mrf.mxu0
      %v927 = vadd.f32 0.0, %v926
      %v928 = vpop.f32.mrf.mxu0
      %v929 = vadd.f32 0.0, %v928
      %930 = vmatmul.bf16.gmra.mxu0 %v858
      %v931 = vpop.f32.mrf.mxu0
      %v932 = vadd.f32 0.0, %v931
      %v933 = vpop.f32.mrf.mxu0
      %v934 = vadd.f32 0.0, %v933
      %935 = vmatmul.bf16.gmra.mxu0 %v861
      %v936 = vpop.f32.mrf.mxu0
      %v937 = vadd.f32 0.0, %v936
      %v938 = vpop.f32.mrf.mxu0
      %v939 = vadd.f32 0.0, %v938
      %940 = vmatmul.bf16.gmra.mxu0 %v864
      %v941 = vpop.f32.mrf.mxu0
      %v942 = vadd.f32 0.0, %v941
      %v943 = vpop.f32.mrf.mxu0
      %v944 = vadd.f32 0.0, %v943
      %945 = vmatmul.bf16.gmra.mxu0 %v867
      %v946 = vpop.f32.mrf.mxu0
      %v947 = vadd.f32 0.0, %v946
      %v948 = vpop.f32.mrf.mxu0
      %v949 = vadd.f32 0.0, %v948
      %950 = vmatmul.bf16.gmra.mxu0 %v870
      %v951 = vpop.f32.mrf.mxu0
      %v952 = vadd.f32 0.0, %v951
      %v953 = vpop.f32.mrf.mxu0
      %v954 = vadd.f32 0.0, %v953
      %955 = vmatmul.bf16.gmra.mxu0 %v873
      %v956 = vpop.f32.mrf.mxu0
      %v957 = vadd.f32 0.0, %v956
      %v958 = vpop.f32.mrf.mxu0
      %v959 = vadd.f32 0.0, %v958
      %960 = vmatmul.bf16.gmra.mxu0 %v876
      %v961 = vpop.f32.mrf.mxu0
      %v962 = vadd.f32 0.0, %v961
      %v963 = vpop.f32.mrf.mxu0
      %v964 = vadd.f32 0.0, %v963
      %965 = vmatmul.bf16.gmra.mxu0 %v879
      %v966 = vpop.f32.mrf.mxu0
      %v967 = vadd.f32 0.0, %v966
      %v968 = vpop.f32.mrf.mxu0
      %v969 = vadd.f32 0.0, %v968
      %970 = vmatmul.bf16.gmra.mxu0 %v882
      %v971 = vpop.f32.mrf.mxu0
      %v972 = vadd.f32 0.0, %v971
      %v973 = vpop.f32.mrf.mxu0
      %v974 = vadd.f32 0.0, %v973
      %975 = vmatmul.bf16.gmra.mxu0 %v885
      %v976 = vpop.f32.mrf.mxu0
      %v977 = vadd.f32 0.0, %v976
      %v978 = vpop.f32.mrf.mxu0
      %v979 = vadd.f32 0.0, %v978
      %980 = vmatmul.bf16.gmra.mxu0 %v888
      %v981 = vpop.f32.mrf.mxu0
      %v982 = vadd.f32 0.0, %v981
      %v983 = vpop.f32.mrf.mxu0
      %v984 = vadd.f32 0.0, %v983
      %985 = vmatmul.bf16.gmra.mxu0 %v891
      %v986 = vpop.f32.mrf.mxu0
      %v987 = vadd.f32 0.0, %v986
      %v988 = vpop.f32.mrf.mxu0
      %v989 = vadd.f32 0.0, %v988
      %990 = vmatmul.bf16.gmra.mxu0 %v894
      %v991 = vpop.f32.mrf.mxu0
      %v992 = vadd.f32 0.0, %v991
      %v993 = vpop.f32.mrf.mxu0
      %v994 = vadd.f32 0.0, %v993
      %995 = vmatmul.bf16.gmra.mxu0 %v897
      %v996 = vpop.f32.mrf.mxu0
      %v997 = vadd.f32 0.0, %v996
      %v998 = vpop.f32.mrf.mxu0
      %v999 = vadd.f32 0.0, %v998
      %1000 = vdwg.mxu0
      %v1001 = vadd.f32 %v712, %v912
      %v1002 = vadd.f32 %v714, %v914
      %v1003 = vadd.f32 %v717, %v917
      %v1004 = vadd.f32 %v719, %v919
      %v1005 = vadd.f32 %v722, %v922
      %v1006 = vadd.f32 %v724, %v924
      %v1007 = vadd.f32 %v727, %v927
      %v1008 = vadd.f32 %v729, %v929
      %v1009 = vadd.f32 %v732, %v932
      %v1010 = vadd.f32 %v734, %v934
      %v1011 = vadd.f32 %v737, %v937
      %v1012 = vadd.f32 %v739, %v939
      %v1013 = vadd.f32 %v742, %v942
      %v1014 = vadd.f32 %v744, %v944
      %v1015 = vadd.f32 %v747, %v947
      %v1016 = vadd.f32 %v749, %v949
      %v1017 = vadd.f32 %v752, %v952
      %v1018 = vadd.f32 %v754, %v954
      %v1019 = vadd.f32 %v757, %v957
      %v1020 = vadd.f32 %v759, %v959
      %v1021 = vadd.f32 %v762, %v962
      %v1022 = vadd.f32 %v764, %v964
      %v1023 = vadd.f32 %v767, %v967
      %v1024 = vadd.f32 %v769, %v969
      %v1025 = vadd.f32 %v772, %v972
      %v1026 = vadd.f32 %v774, %v974
      %v1027 = vadd.f32 %v777, %v977
      %v1028 = vadd.f32 %v779, %v979
      %v1029 = vadd.f32 %v782, %v982
      %v1030 = vadd.f32 %v784, %v984
      %v1031 = vadd.f32 %v787, %v987
      %v1032 = vadd.f32 %v789, %v989
      %v1033 = vadd.f32 %v792, %v992
      %v1034 = vadd.f32 %v794, %v994
      %v1035 = vadd.f32 %v797, %v997
      %v1036 = vadd.f32 %v799, %v999
      %v1037 = vld [vmem:[%s206 + $0x8] sm:$0xe]
      %v1038 = vld [vmem:[%s206 + $0xc] sm:$0xf]
      %v1039 = vld [vmem:[%s206 + $0x10] sm:$0xf]
      %v1040 = vld [vmem:[%s206 + $0x14] sm:$0xf]
      %v1041 = vld [vmem:[%s206 + $0x18] sm:$0xf]
      %v1042 = vld [vmem:[%s206 + $0x1c] sm:$0xf]
      %v1043 = vld [vmem:[%s206 + $0x20] sm:$0xf]
      %v1044 = vld [vmem:[%s206 + $0x24] sm:$0xf]
      %v1045 = vld [vmem:[%s206 + $0x28] sm:$0xf]
      %v1046 = vld [vmem:[%s206 + $0x2c] sm:$0xf]
      %v1047 = vld [vmem:[%s206 + $0x30] sm:$0xf]
      %v1048 = vld [vmem:[%s206 + $0x34] sm:$0xf]
      %v1049 = vld [vmem:[%s206 + $0x38] sm:$0xf]
      %v1050 = vld [vmem:[%s206 + $0x3c] sm:$0xf]
      %v1051 = vld [vmem:[%s206 + $0x40] sm:$0xf]
      %v1052 = vld [vmem:[%s206 + $0x44] sm:$0xf]
      %v1053 = vld [vmem:[%s206 + $0x48] sm:$0xf]
      %v1054 = vld [vmem:[%s206 + $0x4c] sm:$0xf]
      %v1055 = vld [vmem:[%s206 + $0x50] sm:$0xf]
      %v1056 = vld [vmem:[%s206 + $0x54] sm:$0xf]
      %v1057 = vld [vmem:[%s206 + $0x58] sm:$0xf]
      %v1058 = vld [vmem:[%s206 + $0x5c] sm:$0xf]
      %v1059 = vld [vmem:[%s206 + $0x60] sm:$0xf]
      %v1060 = vld [vmem:[%s206 + $0x64] sm:$0xf]
      %v1061 = vld [vmem:[%s206 + $0x68] sm:$0xf]
      %v1062 = vld [vmem:[%s206 + $0x6c] sm:$0xf]
      %v1063 = vld [vmem:[%s206 + $0x70] sm:$0xf]
      %v1064 = vld [vmem:[%s206 + $0x74] sm:$0xf]
      %v1065 = vld [vmem:[%s206 + $0x78] sm:$0xf]
      %v1066 = vld [vmem:[%s206 + $0x7c] sm:$0xf]
      %v1067 = vld [vmem:[%s206 + $0x80] sm:$0xf]
      %v1068 = vld [vmem:[%s206 + $0x84] sm:$0xf]
      %v1069 = vld [vmem:[%s206 + $0x88] sm:$0xf]
      %v1070 = vld [vmem:[%s206 + $0x8c] sm:$0xf]
      %v1071 = vld [vmem:[%s206 + $0x90] sm:$0xf]
      %v1072 = vld [vmem:[%s206 + $0x94] sm:$0xf]
      %v1073 = vld [vmem:[%s206 + $0x98] sm:$0x1]
      %s1074 = scalar_lea.vmem %s210, 12
      %v1075 = vld [vmem:[%s1074] sm:$0xf]
      %v1113 = vunpack.c.l.b16 %v1037
      %v1114 = vunpack.c.l.b16 %v1038
      %v1115 = vunpack.c.l.b16 %v1039
      %v1116 = vunpack.c.l.b16 %v1040
      %v1117 = vunpack.c.l.b16 %v1041
      %v1118 = vunpack.c.l.b16 %v1042
      %v1119 = vunpack.c.l.b16 %v1043
      %v1120 = vunpack.c.l.b16 %v1044
      %v1121 = vunpack.c.l.b16 %v1045
      %v1122 = vunpack.c.l.b16 %v1046
      %v1123 = vunpack.c.l.b16 %v1047
      %v1124 = vunpack.c.l.b16 %v1048
      %v1125 = vunpack.c.l.b16 %v1049
      %v1126 = vunpack.c.l.b16 %v1050
      %v1127 = vunpack.c.l.b16 %v1051
      %v1128 = vunpack.c.l.b16 %v1052
      %v1129 = vunpack.c.l.b16 %v1053
      %v1130 = vunpack.c.l.b16 %v1054
      %v1131 = vunpack.c.l.b16 %v1055
      %v1132 = vunpack.c.l.b16 %v1056
      %v1133 = vunpack.c.l.b16 %v1057
      %v1134 = vunpack.c.l.b16 %v1058
      %v1135 = vunpack.c.l.b16 %v1059
      %v1136 = vunpack.c.l.b16 %v1060
      %v1137 = vunpack.c.l.b16 %v1061
      %v1138 = vunpack.c.l.b16 %v1062
      %v1139 = vunpack.c.l.b16 %v1063
      %v1140 = vunpack.c.l.b16 %v1064
      %v1141 = vunpack.c.l.b16 %v1065
      %v1142 = vunpack.c.l.b16 %v1066
      %v1143 = vunpack.c.l.b16 %v1067
      %v1144 = vunpack.c.l.b16 %v1068
      %v1145 = vunpack.c.l.b16 %v1069
      %v1146 = vunpack.c.l.b16 %v1070
      %v1147 = vunpack.c.l.b16 %v1071
      %v1148 = vunpack.c.l.b16 %v1072
      %v1149 = vunpack.c.l.b16 %v1073
      %v1150 = vpack.c.b16 %v1114, %v1113
      %v1151 = vpack.c.b16 %v1116, %v1115
      %v1152 = vpack.c.b16 %v1118, %v1117
      %v1153 = vpack.c.b16 %v1120, %v1119
      %v1154 = vpack.c.b16 %v1122, %v1121
      %v1155 = vpack.c.b16 %v1124, %v1123
      %v1156 = vpack.c.b16 %v1126, %v1125
      %v1157 = vpack.c.b16 %v1128, %v1127
      %v1158 = vpack.c.b16 %v1130, %v1129
      %v1159 = vpack.c.b16 %v1132, %v1131
      %v1160 = vpack.c.b16 %v1134, %v1133
      %v1161 = vpack.c.b16 %v1136, %v1135
      %v1162 = vpack.c.b16 %v1138, %v1137
      %v1163 = vpack.c.b16 %v1140, %v1139
      %v1164 = vpack.c.b16 %v1142, %v1141
      %v1165 = vpack.c.b16 %v1144, %v1143
      %v1166 = vpack.c.b16 %v1146, %v1145
      %v1167 = vpack.c.b16 %v1148, %v1147
      %v1168 = vpack.c.b16 %v1149, %v1149
      %v1169 = vrot.slane %v1150, 1
      %v1170 = vrot.slane %v1151, 1
      %v1171 = vsel %vm807, %v1169, %v1170
      %v1172 = vrot.slane %v1152, 1
      %v1173 = vsel %vm807, %v1170, %v1172
      %v1174 = vrot.slane %v1153, 1
      %v1175 = vsel %vm807, %v1172, %v1174
      %v1176 = vrot.slane %v1154, 1
      %v1177 = vsel %vm807, %v1174, %v1176
      %v1178 = vrot.slane %v1155, 1
      %v1179 = vsel %vm807, %v1176, %v1178
      %v1180 = vrot.slane %v1156, 1
      %v1181 = vsel %vm807, %v1178, %v1180
      %v1182 = vrot.slane %v1157, 1
      %v1183 = vsel %vm807, %v1180, %v1182
      %v1184 = vrot.slane %v1158, 1
      %v1185 = vsel %vm807, %v1182, %v1184
      %v1186 = vrot.slane %v1159, 1
      %v1187 = vsel %vm807, %v1184, %v1186
      %v1188 = vrot.slane %v1160, 1
      %v1189 = vsel %vm807, %v1186, %v1188
      %v1190 = vrot.slane %v1161, 1
      %v1191 = vsel %vm807, %v1188, %v1190
      %v1192 = vrot.slane %v1162, 1
      %v1193 = vsel %vm807, %v1190, %v1192
      %v1194 = vrot.slane %v1163, 1
      %v1195 = vsel %vm807, %v1192, %v1194
      %v1196 = vrot.slane %v1164, 1
      %v1197 = vsel %vm807, %v1194, %v1196
      %v1198 = vrot.slane %v1165, 1
      %v1199 = vsel %vm807, %v1196, %v1198
      %v1200 = vrot.slane %v1166, 1
      %v1201 = vsel %vm807, %v1198, %v1200
      %v1202 = vrot.slane %v1167, 1
      %v1203 = vsel %vm807, %v1200, %v1202
      %v1204 = vrot.slane %v1168, 1
      %v1205 = vsel %vm807, %v1202, %v1204
      %v1207 = vsel %vm505, %v1171, 0
      %v1210 = vsel %vm505, %v1173, 0
      %v1213 = vsel %vm505, %v1175, 0
      %v1216 = vsel %vm505, %v1177, 0
      %v1219 = vsel %vm505, %v1179, 0
      %v1222 = vsel %vm505, %v1181, 0
      %v1225 = vsel %vm505, %v1183, 0
      %v1228 = vsel %vm505, %v1185, 0
      %v1231 = vsel %vm505, %v1187, 0
      %v1234 = vsel %vm505, %v1189, 0
      %v1237 = vsel %vm505, %v1191, 0
      %v1240 = vsel %vm505, %v1193, 0
      %v1243 = vsel %vm505, %v1195, 0
      %v1246 = vsel %vm505, %v1197, 0
      %v1249 = vsel %vm505, %v1199, 0
      %v1252 = vsel %vm505, %v1201, 0
      %v1255 = vsel %vm505, %v1203, 0
      %v1258 = vsel %vm505, %v1205, 0
      %v1261 = vsel %vm560, %v1075, 0
      %1263 = vmatpush.bf16.msra.mxu0 0
      %1264 = vmatpush.bf16.msra.mxu0 0
      %1265 = vmatpush.bf16.msra.mxu0 0
      %1266 = vmatpush.bf16.msra.mxu0 0
      %1267 = vmatpush.bf16.msra.mxu0 0
      %1268 = vmatpush.bf16.msra.mxu0 0
      %1269 = vmatpush.bf16.msra.mxu0 0
      %1270 = vmatpush.bf16.msra.mxu0 %v1261
      %1271 = vmatmul.bf16.gmra.mxu0 %v1207
      %v1272 = vpop.f32.mrf.mxu0
      %v1273 = vadd.f32 0.0, %v1272
      %v1274 = vpop.f32.mrf.mxu0
      %v1275 = vadd.f32 0.0, %v1274
      %1276 = vmatmul.bf16.gmra.mxu0 %v1210
      %v1277 = vpop.f32.mrf.mxu0
      %v1278 = vadd.f32 0.0, %v1277
      %v1279 = vpop.f32.mrf.mxu0
      %v1280 = vadd.f32 0.0, %v1279
      %1281 = vmatmul.bf16.gmra.mxu0 %v1213
      %v1282 = vpop.f32.mrf.mxu0
      %v1283 = vadd.f32 0.0, %v1282
      %v1284 = vpop.f32.mrf.mxu0
      %v1285 = vadd.f32 0.0, %v1284
      %1286 = vmatmul.bf16.gmra.mxu0 %v1216
      %v1287 = vpop.f32.mrf.mxu0
      %v1288 = vadd.f32 0.0, %v1287
      %v1289 = vpop.f32.mrf.mxu0
      %v1290 = vadd.f32 0.0, %v1289
      %1291 = vmatmul.bf16.gmra.mxu0 %v1219
      %v1292 = vpop.f32.mrf.mxu0
      %v1293 = vadd.f32 0.0, %v1292
      %v1294 = vpop.f32.mrf.mxu0
      %v1295 = vadd.f32 0.0, %v1294
      %1296 = vmatmul.bf16.gmra.mxu0 %v1222
      %v1297 = vpop.f32.mrf.mxu0
      %v1298 = vadd.f32 0.0, %v1297
      %v1299 = vpop.f32.mrf.mxu0
      %v1300 = vadd.f32 0.0, %v1299
      %1301 = vmatmul.bf16.gmra.mxu0 %v1225
      %v1302 = vpop.f32.mrf.mxu0
      %v1303 = vadd.f32 0.0, %v1302
      %v1304 = vpop.f32.mrf.mxu0
      %v1305 = vadd.f32 0.0, %v1304
      %1306 = vmatmul.bf16.gmra.mxu0 %v1228
      %v1307 = vpop.f32.mrf.mxu0
      %v1308 = vadd.f32 0.0, %v1307
      %v1309 = vpop.f32.mrf.mxu0
      %v1310 = vadd.f32 0.0, %v1309
      %1311 = vmatmul.bf16.gmra.mxu0 %v1231
      %v1312 = vpop.f32.mrf.mxu0
      %v1313 = vadd.f32 0.0, %v1312
      %v1314 = vpop.f32.mrf.mxu0
      %v1315 = vadd.f32 0.0, %v1314
      %1316 = vmatmul.bf16.gmra.mxu0 %v1234
      %v1317 = vpop.f32.mrf.mxu0
      %v1318 = vadd.f32 0.0, %v1317
      %v1319 = vpop.f32.mrf.mxu0
      %v1320 = vadd.f32 0.0, %v1319
      %1321 = vmatmul.bf16.gmra.mxu0 %v1237
      %v1322 = vpop.f32.mrf.mxu0
      %v1323 = vadd.f32 0.0, %v1322
      %v1324 = vpop.f32.mrf.mxu0
      %v1325 = vadd.f32 0.0, %v1324
      %1326 = vmatmul.bf16.gmra.mxu0 %v1240
      %v1327 = vpop.f32.mrf.mxu0
      %v1328 = vadd.f32 0.0, %v1327
      %v1329 = vpop.f32.mrf.mxu0
      %v1330 = vadd.f32 0.0, %v1329
      %1331 = vmatmul.bf16.gmra.mxu0 %v1243
      %v1332 = vpop.f32.mrf.mxu0
      %v1333 = vadd.f32 0.0, %v1332
      %v1334 = vpop.f32.mrf.mxu0
      %v1335 = vadd.f32 0.0, %v1334
      %1336 = vmatmul.bf16.gmra.mxu0 %v1246
      %v1337 = vpop.f32.mrf.mxu0
      %v1338 = vadd.f32 0.0, %v1337
      %v1339 = vpop.f32.mrf.mxu0
      %v1340 = vadd.f32 0.0, %v1339
      %1341 = vmatmul.bf16.gmra.mxu0 %v1249
      %v1342 = vpop.f32.mrf.mxu0
      %v1343 = vadd.f32 0.0, %v1342
      %v1344 = vpop.f32.mrf.mxu0
      %v1345 = vadd.f32 0.0, %v1344
      %1346 = vmatmul.bf16.gmra.mxu0 %v1252
      %v1347 = vpop.f32.mrf.mxu0
      %v1348 = vadd.f32 0.0, %v1347
      %v1349 = vpop.f32.mrf.mxu0
      %v1350 = vadd.f32 0.0, %v1349
      %1351 = vmatmul.bf16.gmra.mxu0 %v1255
      %v1352 = vpop.f32.mrf.mxu0
      %v1353 = vadd.f32 0.0, %v1352
      %v1354 = vpop.f32.mrf.mxu0
      %v1355 = vadd.f32 0.0, %v1354
      %1356 = vmatmul.bf16.gmra.mxu0 %v1258
      %v1357 = vpop.f32.mrf.mxu0
      %v1358 = vadd.f32 0.0, %v1357
      %v1359 = vpop.f32.mrf.mxu0
      %v1360 = vadd.f32 0.0, %v1359
      %1361 = vdwg.mxu0
      %v1362 = vadd.f32 %v1001, %v1273
      %v1363 = vadd.f32 %v1002, %v1275
      %v1364 = vadd.f32 %v1003, %v1278
      %v1365 = vadd.f32 %v1004, %v1280
      %v1366 = vadd.f32 %v1005, %v1283
      %v1367 = vadd.f32 %v1006, %v1285
      %v1368 = vadd.f32 %v1007, %v1288
      %v1369 = vadd.f32 %v1008, %v1290
      %v1370 = vadd.f32 %v1009, %v1293
      %v1371 = vadd.f32 %v1010, %v1295
      %v1372 = vadd.f32 %v1011, %v1298
      %v1373 = vadd.f32 %v1012, %v1300
      %v1374 = vadd.f32 %v1013, %v1303
      %v1375 = vadd.f32 %v1014, %v1305
      %v1376 = vadd.f32 %v1015, %v1308
      %v1377 = vadd.f32 %v1016, %v1310
      %v1378 = vadd.f32 %v1017, %v1313
      %v1379 = vadd.f32 %v1018, %v1315
      %v1380 = vadd.f32 %v1019, %v1318
      %v1381 = vadd.f32 %v1020, %v1320
      %v1382 = vadd.f32 %v1021, %v1323
      %v1383 = vadd.f32 %v1022, %v1325
      %v1384 = vadd.f32 %v1023, %v1328
      %v1385 = vadd.f32 %v1024, %v1330
      %v1386 = vadd.f32 %v1025, %v1333
      %v1387 = vadd.f32 %v1026, %v1335
      %v1388 = vadd.f32 %v1027, %v1338
      %v1389 = vadd.f32 %v1028, %v1340
      %v1390 = vadd.f32 %v1029, %v1343
      %v1391 = vadd.f32 %v1030, %v1345
      %v1392 = vadd.f32 %v1031, %v1348
      %v1393 = vadd.f32 %v1032, %v1350
      %v1394 = vadd.f32 %v1033, %v1353
      %v1395 = vadd.f32 %v1034, %v1355
      %v1396 = vadd.f32 %v1035, %v1358
      %v1397 = vadd.f32 %v1036, %v1360
      %v1398 = vld [vmem:[%s206 + $0x98] sm:$0x3]
      %s1399 = scalar_lea.vmem %s210, 16
      %v1400 = vld [vmem:[%s1399] sm:$0xf]
      %v1402 = vunpack.c.l.b16 %v1398
      %v1403 = vpack.c.b16 %v1402, %v1402
      %vm1404 = vsmask.f32 6400
      %v1406 = vshrl.u32 %v1150, 16
      %v1408 = vrot.slane %v1406, 1
      %v1409 = vshll.u32 %v1150, 16
      %v1411 = vrot.slane %v1409, 2
      %v1412 = vor.u32 %v1408, %v1411
      %v1414 = vshrl.u32 %v1151, 16
      %v1416 = vrot.slane %v1414, 1
      %v1417 = vshll.u32 %v1151, 16
      %v1419 = vrot.slane %v1417, 2
      %v1420 = vor.u32 %v1416, %v1419
      %v1421 = vsel %vm1404, %v1412, %v1420
      %v1423 = vshrl.u32 %v1152, 16
      %v1425 = vrot.slane %v1423, 1
      %v1426 = vshll.u32 %v1152, 16
      %v1428 = vrot.slane %v1426, 2
      %v1429 = vor.u32 %v1425, %v1428
      %v1430 = vsel %vm1404, %v1420, %v1429
      %v1432 = vshrl.u32 %v1153, 16
      %v1434 = vrot.slane %v1432, 1
      %v1435 = vshll.u32 %v1153, 16
      %v1437 = vrot.slane %v1435, 2
      %v1438 = vor.u32 %v1434, %v1437
      %v1439 = vsel %vm1404, %v1429, %v1438
      %v1441 = vshrl.u32 %v1154, 16
      %v1443 = vrot.slane %v1441, 1
      %v1444 = vshll.u32 %v1154, 16
      %v1446 = vrot.slane %v1444, 2
      %v1447 = vor.u32 %v1443, %v1446
      %v1448 = vsel %vm1404, %v1438, %v1447
      %v1450 = vshrl.u32 %v1155, 16
      %v1452 = vrot.slane %v1450, 1
      %v1453 = vshll.u32 %v1155, 16
      %v1455 = vrot.slane %v1453, 2
      %v1456 = vor.u32 %v1452, %v1455
      %v1457 = vsel %vm1404, %v1447, %v1456
      %v1459 = vshrl.u32 %v1156, 16
      %v1461 = vrot.slane %v1459, 1
      %v1462 = vshll.u32 %v1156, 16
      %v1464 = vrot.slane %v1462, 2
      %v1465 = vor.u32 %v1461, %v1464
      %v1466 = vsel %vm1404, %v1456, %v1465
      %v1468 = vshrl.u32 %v1157, 16
      %v1470 = vrot.slane %v1468, 1
      %v1471 = vshll.u32 %v1157, 16
      %v1473 = vrot.slane %v1471, 2
      %v1474 = vor.u32 %v1470, %v1473
      %v1475 = vsel %vm1404, %v1465, %v1474
      %v1477 = vshrl.u32 %v1158, 16
      %v1479 = vrot.slane %v1477, 1
      %v1480 = vshll.u32 %v1158, 16
      %v1482 = vrot.slane %v1480, 2
      %v1483 = vor.u32 %v1479, %v1482
      %v1484 = vsel %vm1404, %v1474, %v1483
      %v1486 = vshrl.u32 %v1159, 16
      %v1488 = vrot.slane %v1486, 1
      %v1489 = vshll.u32 %v1159, 16
      %v1491 = vrot.slane %v1489, 2
      %v1492 = vor.u32 %v1488, %v1491
      %v1493 = vsel %vm1404, %v1483, %v1492
      %v1495 = vshrl.u32 %v1160, 16
      %v1497 = vrot.slane %v1495, 1
      %v1498 = vshll.u32 %v1160, 16
      %v1500 = vrot.slane %v1498, 2
      %v1501 = vor.u32 %v1497, %v1500
      %v1502 = vsel %vm1404, %v1492, %v1501
      %v1504 = vshrl.u32 %v1161, 16
      %v1506 = vrot.slane %v1504, 1
      %v1507 = vshll.u32 %v1161, 16
      %v1509 = vrot.slane %v1507, 2
      %v1510 = vor.u32 %v1506, %v1509
      %v1511 = vsel %vm1404, %v1501, %v1510
      %v1513 = vshrl.u32 %v1162, 16
      %v1515 = vrot.slane %v1513, 1
      %v1516 = vshll.u32 %v1162, 16
      %v1518 = vrot.slane %v1516, 2
      %v1519 = vor.u32 %v1515, %v1518
      %v1520 = vsel %vm1404, %v1510, %v1519
      %v1522 = vshrl.u32 %v1163, 16
      %v1524 = vrot.slane %v1522, 1
      %v1525 = vshll.u32 %v1163, 16
      %v1527 = vrot.slane %v1525, 2
      %v1528 = vor.u32 %v1524, %v1527
      %v1529 = vsel %vm1404, %v1519, %v1528
      %v1531 = vshrl.u32 %v1164, 16
      %v1533 = vrot.slane %v1531, 1
      %v1534 = vshll.u32 %v1164, 16
      %v1536 = vrot.slane %v1534, 2
      %v1537 = vor.u32 %v1533, %v1536
      %v1538 = vsel %vm1404, %v1528, %v1537
      %v1540 = vshrl.u32 %v1165, 16
      %v1542 = vrot.slane %v1540, 1
      %v1543 = vshll.u32 %v1165, 16
      %v1545 = vrot.slane %v1543, 2
      %v1546 = vor.u32 %v1542, %v1545
      %v1547 = vsel %vm1404, %v1537, %v1546
      %v1549 = vshrl.u32 %v1166, 16
      %v1551 = vrot.slane %v1549, 1
      %v1552 = vshll.u32 %v1166, 16
      %v1554 = vrot.slane %v1552, 2
      %v1555 = vor.u32 %v1551, %v1554
      %v1556 = vsel %vm1404, %v1546, %v1555
      %v1558 = vshrl.u32 %v1167, 16
      %v1560 = vrot.slane %v1558, 1
      %v1561 = vshll.u32 %v1167, 16
      %v1563 = vrot.slane %v1561, 2
      %v1564 = vor.u32 %v1560, %v1563
      %v1565 = vsel %vm1404, %v1555, %v1564
      %v1567 = vshrl.u32 %v1403, 16
      %v1569 = vrot.slane %v1567, 1
      %v1570 = vshll.u32 %v1403, 16
      %v1572 = vrot.slane %v1570, 2
      %v1573 = vor.u32 %v1569, %v1572
      %v1574 = vsel %vm1404, %v1564, %v1573
      %v1576 = vsel %vm505, %v1421, 0
      %v1579 = vsel %vm505, %v1430, 0
      %v1582 = vsel %vm505, %v1439, 0
      %v1585 = vsel %vm505, %v1448, 0
      %v1588 = vsel %vm505, %v1457, 0
      %v1591 = vsel %vm505, %v1466, 0
      %v1594 = vsel %vm505, %v1475, 0
      %v1597 = vsel %vm505, %v1484, 0
      %v1600 = vsel %vm505, %v1493, 0
      %v1603 = vsel %vm505, %v1502, 0
      %v1606 = vsel %vm505, %v1511, 0
      %v1609 = vsel %vm505, %v1520, 0
      %v1612 = vsel %vm505, %v1529, 0
      %v1615 = vsel %vm505, %v1538, 0
      %v1618 = vsel %vm505, %v1547, 0
      %v1621 = vsel %vm505, %v1556, 0
      %v1624 = vsel %vm505, %v1565, 0
      %v1627 = vsel %vm505, %v1574, 0
      %v1630 = vsel %vm560, %v1400, 0
      %1632 = vmatpush.bf16.msra.mxu0 0
      %1633 = vmatpush.bf16.msra.mxu0 0
      %1634 = vmatpush.bf16.msra.mxu0 0
      %1635 = vmatpush.bf16.msra.mxu0 0
      %1636 = vmatpush.bf16.msra.mxu0 0
      %1637 = vmatpush.bf16.msra.mxu0 0
      %1638 = vmatpush.bf16.msra.mxu0 0
      %1639 = vmatpush.bf16.msra.mxu0 %v1630
      %1640 = vmatmul.bf16.gmra.mxu0 %v1576
      %v1641 = vpop.f32.mrf.mxu0
      %v1642 = vadd.f32 0.0, %v1641
      %v1643 = vpop.f32.mrf.mxu0
      %v1644 = vadd.f32 0.0, %v1643
      %1645 = vmatmul.bf16.gmra.mxu0 %v1579
      %v1646 = vpop.f32.mrf.mxu0
      %v1647 = vadd.f32 0.0, %v1646
      %v1648 = vpop.f32.mrf.mxu0
      %v1649 = vadd.f32 0.0, %v1648
      %1650 = vmatmul.bf16.gmra.mxu0 %v1582
      %v1651 = vpop.f32.mrf.mxu0
      %v1652 = vadd.f32 0.0, %v1651
      %v1653 = vpop.f32.mrf.mxu0
      %v1654 = vadd.f32 0.0, %v1653
      %1655 = vmatmul.bf16.gmra.mxu0 %v1585
      %v1656 = vpop.f32.mrf.mxu0
      %v1657 = vadd.f32 0.0, %v1656
      %v1658 = vpop.f32.mrf.mxu0
      %v1659 = vadd.f32 0.0, %v1658
      %1660 = vmatmul.bf16.gmra.mxu0 %v1588
      %v1661 = vpop.f32.mrf.mxu0
      %v1662 = vadd.f32 0.0, %v1661
      %v1663 = vpop.f32.mrf.mxu0
      %v1664 = vadd.f32 0.0, %v1663
      %1665 = vmatmul.bf16.gmra.mxu0 %v1591
      %v1666 = vpop.f32.mrf.mxu0
      %v1667 = vadd.f32 0.0, %v1666
      %v1668 = vpop.f32.mrf.mxu0
      %v1669 = vadd.f32 0.0, %v1668
      %1670 = vmatmul.bf16.gmra.mxu0 %v1594
      %v1671 = vpop.f32.mrf.mxu0
      %v1672 = vadd.f32 0.0, %v1671
      %v1673 = vpop.f32.mrf.mxu0
      %v1674 = vadd.f32 0.0, %v1673
      %1675 = vmatmul.bf16.gmra.mxu0 %v1597
      %v1676 = vpop.f32.mrf.mxu0
      %v1677 = vadd.f32 0.0, %v1676
      %v1678 = vpop.f32.mrf.mxu0
      %v1679 = vadd.f32 0.0, %v1678
      %1680 = vmatmul.bf16.gmra.mxu0 %v1600
      %v1681 = vpop.f32.mrf.mxu0
      %v1682 = vadd.f32 0.0, %v1681
      %v1683 = vpop.f32.mrf.mxu0
      %v1684 = vadd.f32 0.0, %v1683
      %1685 = vmatmul.bf16.gmra.mxu0 %v1603
      %v1686 = vpop.f32.mrf.mxu0
      %v1687 = vadd.f32 0.0, %v1686
      %v1688 = vpop.f32.mrf.mxu0
      %v1689 = vadd.f32 0.0, %v1688
      %1690 = vmatmul.bf16.gmra.mxu0 %v1606
      %v1691 = vpop.f32.mrf.mxu0
      %v1692 = vadd.f32 0.0, %v1691
      %v1693 = vpop.f32.mrf.mxu0
      %v1694 = vadd.f32 0.0, %v1693
      %1695 = vmatmul.bf16.gmra.mxu0 %v1609
      %v1696 = vpop.f32.mrf.mxu0
      %v1697 = vadd.f32 0.0, %v1696
      %v1698 = vpop.f32.mrf.mxu0
      %v1699 = vadd.f32 0.0, %v1698
      %1700 = vmatmul.bf16.gmra.mxu0 %v1612
      %v1701 = vpop.f32.mrf.mxu0
      %v1702 = vadd.f32 0.0, %v1701
      %v1703 = vpop.f32.mrf.mxu0
      %v1704 = vadd.f32 0.0, %v1703
      %1705 = vmatmul.bf16.gmra.mxu0 %v1615
      %v1706 = vpop.f32.mrf.mxu0
      %v1707 = vadd.f32 0.0, %v1706
      %v1708 = vpop.f32.mrf.mxu0
      %v1709 = vadd.f32 0.0, %v1708
      %1710 = vmatmul.bf16.gmra.mxu0 %v1618
      %v1711 = vpop.f32.mrf.mxu0
      %v1712 = vadd.f32 0.0, %v1711
      %v1713 = vpop.f32.mrf.mxu0
      %v1714 = vadd.f32 0.0, %v1713
      %1715 = vmatmul.bf16.gmra.mxu0 %v1621
      %v1716 = vpop.f32.mrf.mxu0
      %v1717 = vadd.f32 0.0, %v1716
      %v1718 = vpop.f32.mrf.mxu0
      %v1719 = vadd.f32 0.0, %v1718
      %1720 = vmatmul.bf16.gmra.mxu0 %v1624
      %v1721 = vpop.f32.mrf.mxu0
      %v1722 = vadd.f32 0.0, %v1721
      %v1723 = vpop.f32.mrf.mxu0
      %v1724 = vadd.f32 0.0, %v1723
      %1725 = vmatmul.bf16.gmra.mxu0 %v1627
      %v1726 = vpop.f32.mrf.mxu0
      %v1727 = vadd.f32 0.0, %v1726
      %v1728 = vpop.f32.mrf.mxu0
      %v1729 = vadd.f32 0.0, %v1728
      %1730 = vdwg.mxu0
      %v1731 = vadd.f32 %v1362, %v1642
      %v1732 = vadd.f32 %v1363, %v1644
      %v1733 = vadd.f32 %v1364, %v1647
      %v1734 = vadd.f32 %v1365, %v1649
      %v1735 = vadd.f32 %v1366, %v1652
      %v1736 = vadd.f32 %v1367, %v1654
      %v1737 = vadd.f32 %v1368, %v1657
      %v1738 = vadd.f32 %v1369, %v1659
      %v1739 = vadd.f32 %v1370, %v1662
      %v1740 = vadd.f32 %v1371, %v1664
      %v1741 = vadd.f32 %v1372, %v1667
      %v1742 = vadd.f32 %v1373, %v1669
      %v1743 = vadd.f32 %v1374, %v1672
      %v1744 = vadd.f32 %v1375, %v1674
      %v1745 = vadd.f32 %v1376, %v1677
      %v1746 = vadd.f32 %v1377, %v1679
      %v1747 = vadd.f32 %v1378, %v1682
      %v1748 = vadd.f32 %v1379, %v1684
      %v1749 = vadd.f32 %v1380, %v1687
      %v1750 = vadd.f32 %v1381, %v1689
      %v1751 = vadd.f32 %v1382, %v1692
      %v1752 = vadd.f32 %v1383, %v1694
      %v1753 = vadd.f32 %v1384, %v1697
      %v1754 = vadd.f32 %v1385, %v1699
      %v1755 = vadd.f32 %v1386, %v1702
      %v1756 = vadd.f32 %v1387, %v1704
      %v1757 = vadd.f32 %v1388, %v1707
      %v1758 = vadd.f32 %v1389, %v1709
      %v1759 = vadd.f32 %v1390, %v1712
      %v1760 = vadd.f32 %v1391, %v1714
      %v1761 = vadd.f32 %v1392, %v1717
      %v1762 = vadd.f32 %v1393, %v1719
      %v1763 = vadd.f32 %v1394, %v1722
      %v1764 = vadd.f32 %v1395, %v1724
      %v1765 = vadd.f32 %v1396, %v1727
      %v1766 = vadd.f32 %v1397, %v1729
      %v1767 = vld [vmem:[%s206 + $0x8] sm:$0xc]
      %s1768 = scalar_lea.vmem %s210, 20
      %v1769 = vld [vmem:[%s1768] sm:$0xf]
      %v1771 = vunpack.c.l.b16 %v1767
      %v1772 = vpack.c.b16 %v1114, %v1771
      %vm1773 = vcmask 1045504
      %v1774 = vrot.slane %v1772, 2
      %v1775 = vrot.slane %v1151, 2
      %v1776 = vsel %vm1773, %v1774, %v1775
      %v1777 = vrot.slane %v1152, 2
      %v1778 = vsel %vm1773, %v1775, %v1777
      %v1779 = vrot.slane %v1153, 2
      %v1780 = vsel %vm1773, %v1777, %v1779
      %v1781 = vrot.slane %v1154, 2
      %v1782 = vsel %vm1773, %v1779, %v1781
      %v1783 = vrot.slane %v1155, 2
      %v1784 = vsel %vm1773, %v1781, %v1783
      %v1785 = vrot.slane %v1156, 2
      %v1786 = vsel %vm1773, %v1783, %v1785
      %v1787 = vrot.slane %v1157, 2
      %v1788 = vsel %vm1773, %v1785, %v1787
      %v1789 = vrot.slane %v1158, 2
      %v1790 = vsel %vm1773, %v1787, %v1789
      %v1791 = vrot.slane %v1159, 2
      %v1792 = vsel %vm1773, %v1789, %v1791
      %v1793 = vrot.slane %v1160, 2
      %v1794 = vsel %vm1773, %v1791, %v1793
      %v1795 = vrot.slane %v1161, 2
      %v1796 = vsel %vm1773, %v1793, %v1795
      %v1797 = vrot.slane %v1162, 2
      %v1798 = vsel %vm1773, %v1795, %v1797
      %v1799 = vrot.slane %v1163, 2
      %v1800 = vsel %vm1773, %v1797, %v1799
      %v1801 = vrot.slane %v1164, 2
      %v1802 = vsel %vm1773, %v1799, %v1801
      %v1803 = vrot.slane %v1165, 2
      %v1804 = vsel %vm1773, %v1801, %v1803
      %v1805 = vrot.slane %v1166, 2
      %v1806 = vsel %vm1773, %v1803, %v1805
      %v1807 = vrot.slane %v1167, 2
      %v1808 = vsel %vm1773, %v1805, %v1807
      %v1809 = vrot.slane %v1403, 2
      %v1810 = vsel %vm1773, %v1807, %v1809
      %v1812 = vsel %vm505, %v1776, 0
      %v1815 = vsel %vm505, %v1778, 0
      %v1818 = vsel %vm505, %v1780, 0
      %v1821 = vsel %vm505, %v1782, 0
      %v1824 = vsel %vm505, %v1784, 0
      %v1827 = vsel %vm505, %v1786, 0
      %v1830 = vsel %vm505, %v1788, 0
      %v1833 = vsel %vm505, %v1790, 0
      %v1836 = vsel %vm505, %v1792, 0
      %v1839 = vsel %vm505, %v1794, 0
      %v1842 = vsel %vm505, %v1796, 0
      %v1845 = vsel %vm505, %v1798, 0
      %v1848 = vsel %vm505, %v1800, 0
      %v1851 = vsel %vm505, %v1802, 0
      %v1854 = vsel %vm505, %v1804, 0
      %v1857 = vsel %vm505, %v1806, 0
      %v1860 = vsel %vm505, %v1808, 0
      %v1863 = vsel %vm505, %v1810, 0
      %v1866 = vsel %vm560, %v1769, 0
      %1868 = vmatpush.bf16.msra.mxu0 0
      %1869 = vmatpush.bf16.msra.mxu0 0
      %1870 = vmatpush.bf16.msra.mxu0 0
      %1871 = vmatpush.bf16.msra.mxu0 0
      %1872 = vmatpush.bf16.msra.mxu0 0
      %1873 = vmatpush.bf16.msra.mxu0 0
      %1874 = vmatpush.bf16.msra.mxu0 0
      %1875 = vmatpush.bf16.msra.mxu0 %v1866
      %1876 = vmatmul.bf16.gmra.mxu0 %v1812
      %v1877 = vpop.f32.mrf.mxu0
      %v1878 = vadd.f32 0.0, %v1877
      %v1879 = vpop.f32.mrf.mxu0
      %v1880 = vadd.f32 0.0, %v1879
      %1881 = vmatmul.bf16.gmra.mxu0 %v1815
      %v1882 = vpop.f32.mrf.mxu0
      %v1883 = vadd.f32 0.0, %v1882
      %v1884 = vpop.f32.mrf.mxu0
      %v1885 = vadd.f32 0.0, %v1884
      %1886 = vmatmul.bf16.gmra.mxu0 %v1818
      %v1887 = vpop.f32.mrf.mxu0
      %v1888 = vadd.f32 0.0, %v1887
      %v1889 = vpop.f32.mrf.mxu0
      %v1890 = vadd.f32 0.0, %v1889
      %1891 = vmatmul.bf16.gmra.mxu0 %v1821
      %v1892 = vpop.f32.mrf.mxu0
      %v1893 = vadd.f32 0.0, %v1892
      %v1894 = vpop.f32.mrf.mxu0
      %v1895 = vadd.f32 0.0, %v1894
      %1896 = vmatmul.bf16.gmra.mxu0 %v1824
      %v1897 = vpop.f32.mrf.mxu0
      %v1898 = vadd.f32 0.0, %v1897
      %v1899 = vpop.f32.mrf.mxu0
      %v1900 = vadd.f32 0.0, %v1899
      %1901 = vmatmul.bf16.gmra.mxu0 %v1827
      %v1902 = vpop.f32.mrf.mxu0
      %v1903 = vadd.f32 0.0, %v1902
      %v1904 = vpop.f32.mrf.mxu0
      %v1905 = vadd.f32 0.0, %v1904
      %1906 = vmatmul.bf16.gmra.mxu0 %v1830
      %v1907 = vpop.f32.mrf.mxu0
      %v1908 = vadd.f32 0.0, %v1907
      %v1909 = vpop.f32.mrf.mxu0
      %v1910 = vadd.f32 0.0, %v1909
      %1911 = vmatmul.bf16.gmra.mxu0 %v1833
      %v1912 = vpop.f32.mrf.mxu0
      %v1913 = vadd.f32 0.0, %v1912
      %v1914 = vpop.f32.mrf.mxu0
      %v1915 = vadd.f32 0.0, %v1914
      %1916 = vmatmul.bf16.gmra.mxu0 %v1836
      %v1917 = vpop.f32.mrf.mxu0
      %v1918 = vadd.f32 0.0, %v1917
      %v1919 = vpop.f32.mrf.mxu0
      %v1920 = vadd.f32 0.0, %v1919
      %1921 = vmatmul.bf16.gmra.mxu0 %v1839
      %v1922 = vpop.f32.mrf.mxu0
      %v1923 = vadd.f32 0.0, %v1922
      %v1924 = vpop.f32.mrf.mxu0
      %v1925 = vadd.f32 0.0, %v1924
      %1926 = vmatmul.bf16.gmra.mxu0 %v1842
      %v1927 = vpop.f32.mrf.mxu0
      %v1928 = vadd.f32 0.0, %v1927
      %v1929 = vpop.f32.mrf.mxu0
      %v1930 = vadd.f32 0.0, %v1929
      %1931 = vmatmul.bf16.gmra.mxu0 %v1845
      %v1932 = vpop.f32.mrf.mxu0
      %v1933 = vadd.f32 0.0, %v1932
      %v1934 = vpop.f32.mrf.mxu0
      %v1935 = vadd.f32 0.0, %v1934
      %1936 = vmatmul.bf16.gmra.mxu0 %v1848
      %v1937 = vpop.f32.mrf.mxu0
      %v1938 = vadd.f32 0.0, %v1937
      %v1939 = vpop.f32.mrf.mxu0
      %v1940 = vadd.f32 0.0, %v1939
      %1941 = vmatmul.bf16.gmra.mxu0 %v1851
      %v1942 = vpop.f32.mrf.mxu0
      %v1943 = vadd.f32 0.0, %v1942
      %v1944 = vpop.f32.mrf.mxu0
      %v1945 = vadd.f32 0.0, %v1944
      %1946 = vmatmul.bf16.gmra.mxu0 %v1854
      %v1947 = vpop.f32.mrf.mxu0
      %v1948 = vadd.f32 0.0, %v1947
      %v1949 = vpop.f32.mrf.mxu0
      %v1950 = vadd.f32 0.0, %v1949
      %1951 = vmatmul.bf16.gmra.mxu0 %v1857
      %v1952 = vpop.f32.mrf.mxu0
      %v1953 = vadd.f32 0.0, %v1952
      %v1954 = vpop.f32.mrf.mxu0
      %v1955 = vadd.f32 0.0, %v1954
      %1956 = vmatmul.bf16.gmra.mxu0 %v1860
      %v1957 = vpop.f32.mrf.mxu0
      %v1958 = vadd.f32 0.0, %v1957
      %v1959 = vpop.f32.mrf.mxu0
      %v1960 = vadd.f32 0.0, %v1959
      %1961 = vmatmul.bf16.gmra.mxu0 %v1863
      %v1962 = vpop.f32.mrf.mxu0
      %v1963 = vadd.f32 0.0, %v1962
      %v1964 = vpop.f32.mrf.mxu0
      %v1965 = vadd.f32 0.0, %v1964
      %1966 = vdwg.mxu0
      %v1967 = vadd.f32 %v1731, %v1878
      %v1968 = vadd.f32 %v1732, %v1880
      %v1969 = vadd.f32 %v1733, %v1883
      %v1970 = vadd.f32 %v1734, %v1885
      %v1971 = vadd.f32 %v1735, %v1888
      %v1972 = vadd.f32 %v1736, %v1890
      %v1973 = vadd.f32 %v1737, %v1893
      %v1974 = vadd.f32 %v1738, %v1895
      %v1975 = vadd.f32 %v1739, %v1898
      %v1976 = vadd.f32 %v1740, %v1900
      %v1977 = vadd.f32 %v1741, %v1903
      %v1978 = vadd.f32 %v1742, %v1905
      %v1979 = vadd.f32 %v1743, %v1908
      %v1980 = vadd.f32 %v1744, %v1910
      %v1981 = vadd.f32 %v1745, %v1913
      %v1982 = vadd.f32 %v1746, %v1915
      %v1983 = vadd.f32 %v1747, %v1918
      %v1984 = vadd.f32 %v1748, %v1920
      %v1985 = vadd.f32 %v1749, %v1923
      %v1986 = vadd.f32 %v1750, %v1925
      %v1987 = vadd.f32 %v1751, %v1928
      %v1988 = vadd.f32 %v1752, %v1930
      %v1989 = vadd.f32 %v1753, %v1933
      %v1990 = vadd.f32 %v1754, %v1935
      %v1991 = vadd.f32 %v1755, %v1938
      %v1992 = vadd.f32 %v1756, %v1940
      %v1993 = vadd.f32 %v1757, %v1943
      %v1994 = vadd.f32 %v1758, %v1945
      %v1995 = vadd.f32 %v1759, %v1948
      %v1996 = vadd.f32 %v1760, %v1950
      %v1997 = vadd.f32 %v1761, %v1953
      %v1998 = vadd.f32 %v1762, %v1955
      %v1999 = vadd.f32 %v1763, %v1958
      %v2000 = vadd.f32 %v1764, %v1960
      %v2001 = vadd.f32 %v1765, %v1963
      %v2002 = vadd.f32 %v1766, %v1965
      %v2003 = vld [vmem:[%s206 + $0x10] sm:$0xc]
      %v2004 = vld [vmem:[%s206 + $0x14] sm:$0xf]
      %v2005 = vld [vmem:[%s206 + $0x18] sm:$0xf]
      %v2006 = vld [vmem:[%s206 + $0x1c] sm:$0xf]
      %v2007 = vld [vmem:[%s206 + $0x20] sm:$0xf]
      %v2008 = vld [vmem:[%s206 + $0x24] sm:$0xf]
      %v2009 = vld [vmem:[%s206 + $0x28] sm:$0xf]
      %v2010 = vld [vmem:[%s206 + $0x2c] sm:$0xf]
      %v2011 = vld [vmem:[%s206 + $0x30] sm:$0xf]
      %v2012 = vld [vmem:[%s206 + $0x34] sm:$0xf]
      %v2013 = vld [vmem:[%s206 + $0x38] sm:$0xf]
      %v2014 = vld [vmem:[%s206 + $0x3c] sm:$0xf]
      %v2015 = vld [vmem:[%s206 + $0x40] sm:$0xf]
      %v2016 = vld [vmem:[%s206 + $0x44] sm:$0xf]
      %v2017 = vld [vmem:[%s206 + $0x48] sm:$0xf]
      %v2018 = vld [vmem:[%s206 + $0x4c] sm:$0xf]
      %v2019 = vld [vmem:[%s206 + $0x50] sm:$0xf]
      %v2020 = vld [vmem:[%s206 + $0x54] sm:$0xf]
      %v2021 = vld [vmem:[%s206 + $0x58] sm:$0xf]
      %v2022 = vld [vmem:[%s206 + $0x5c] sm:$0xf]
      %v2023 = vld [vmem:[%s206 + $0x60] sm:$0xf]
      %v2024 = vld [vmem:[%s206 + $0x64] sm:$0xf]
      %v2025 = vld [vmem:[%s206 + $0x68] sm:$0xf]
      %v2026 = vld [vmem:[%s206 + $0x6c] sm:$0xf]
      %v2027 = vld [vmem:[%s206 + $0x70] sm:$0xf]
      %v2028 = vld [vmem:[%s206 + $0x74] sm:$0xf]
      %v2029 = vld [vmem:[%s206 + $0x78] sm:$0xf]
      %v2030 = vld [vmem:[%s206 + $0x7c] sm:$0xf]
      %v2031 = vld [vmem:[%s206 + $0x80] sm:$0xf]
      %v2032 = vld [vmem:[%s206 + $0x84] sm:$0xf]
      %v2033 = vld [vmem:[%s206 + $0x88] sm:$0xf]
      %v2034 = vld [vmem:[%s206 + $0x8c] sm:$0xf]
      %v2035 = vld [vmem:[%s206 + $0x90] sm:$0xf]
      %v2036 = vld [vmem:[%s206 + $0x94] sm:$0xf]
      %v2037 = vld [vmem:[%s206 + $0x98] sm:$0xf]
      %v2038 = vld [vmem:[%s206 + $0x9c] sm:$0xf]
      %v2039 = vld [vmem:[%s206 + $0xa0] sm:$0x3]
      %s2040 = scalar_lea.vmem %s210, 24
      %v2041 = vld [vmem:[%s2040] sm:$0xf]
      %v2079 = vunpack.c.l.b16 %v2003
      %v2080 = vunpack.c.l.b16 %v2004
      %v2081 = vunpack.c.l.b16 %v2005
      %v2082 = vunpack.c.l.b16 %v2006
      %v2083 = vunpack.c.l.b16 %v2007
      %v2084 = vunpack.c.l.b16 %v2008
      %v2085 = vunpack.c.l.b16 %v2009
      %v2086 = vunpack.c.l.b16 %v2010
      %v2087 = vunpack.c.l.b16 %v2011
      %v2088 = vunpack.c.l.b16 %v2012
      %v2089 = vunpack.c.l.b16 %v2013
      %v2090 = vunpack.c.l.b16 %v2014
      %v2091 = vunpack.c.l.b16 %v2015
      %v2092 = vunpack.c.l.b16 %v2016
      %v2093 = vunpack.c.l.b16 %v2017
      %v2094 = vunpack.c.l.b16 %v2018
      %v2095 = vunpack.c.l.b16 %v2019
      %v2096 = vunpack.c.l.b16 %v2020
      %v2097 = vunpack.c.l.b16 %v2021
      %v2098 = vunpack.c.l.b16 %v2022
      %v2099 = vunpack.c.l.b16 %v2023
      %v2100 = vunpack.c.l.b16 %v2024
      %v2101 = vunpack.c.l.b16 %v2025
      %v2102 = vunpack.c.l.b16 %v2026
      %v2103 = vunpack.c.l.b16 %v2027
      %v2104 = vunpack.c.l.b16 %v2028
      %v2105 = vunpack.c.l.b16 %v2029
      %v2106 = vunpack.c.l.b16 %v2030
      %v2107 = vunpack.c.l.b16 %v2031
      %v2108 = vunpack.c.l.b16 %v2032
      %v2109 = vunpack.c.l.b16 %v2033
      %v2110 = vunpack.c.l.b16 %v2034
      %v2111 = vunpack.c.l.b16 %v2035
      %v2112 = vunpack.c.l.b16 %v2036
      %v2113 = vunpack.c.l.b16 %v2037
      %v2114 = vunpack.c.l.b16 %v2038
      %v2115 = vunpack.c.l.b16 %v2039
      %v2116 = vpack.c.b16 %v2080, %v2079
      %v2117 = vpack.c.b16 %v2082, %v2081
      %v2118 = vpack.c.b16 %v2084, %v2083
      %v2119 = vpack.c.b16 %v2086, %v2085
      %v2120 = vpack.c.b16 %v2088, %v2087
      %v2121 = vpack.c.b16 %v2090, %v2089
      %v2122 = vpack.c.b16 %v2092, %v2091
      %v2123 = vpack.c.b16 %v2094, %v2093
      %v2124 = vpack.c.b16 %v2096, %v2095
      %v2125 = vpack.c.b16 %v2098, %v2097
      %v2126 = vpack.c.b16 %v2100, %v2099
      %v2127 = vpack.c.b16 %v2102, %v2101
      %v2128 = vpack.c.b16 %v2104, %v2103
      %v2129 = vpack.c.b16 %v2106, %v2105
      %v2130 = vpack.c.b16 %v2108, %v2107
      %v2131 = vpack.c.b16 %v2110, %v2109
      %v2132 = vpack.c.b16 %v2112, %v2111
      %v2133 = vpack.c.b16 %v2114, %v2113
      %v2134 = vpack.c.b16 %v2115, %v2115
      %v2135 = vrot.slane %v2116, 2
      %v2136 = vrot.slane %v2117, 2
      %v2137 = vsel %vm1773, %v2135, %v2136
      %v2138 = vrot.slane %v2118, 2
      %v2139 = vsel %vm1773, %v2136, %v2138
      %v2140 = vrot.slane %v2119, 2
      %v2141 = vsel %vm1773, %v2138, %v2140
      %v2142 = vrot.slane %v2120, 2
      %v2143 = vsel %vm1773, %v2140, %v2142
      %v2144 = vrot.slane %v2121, 2
      %v2145 = vsel %vm1773, %v2142, %v2144
      %v2146 = vrot.slane %v2122, 2
      %v2147 = vsel %vm1773, %v2144, %v2146
      %v2148 = vrot.slane %v2123, 2
      %v2149 = vsel %vm1773, %v2146, %v2148
      %v2150 = vrot.slane %v2124, 2
      %v2151 = vsel %vm1773, %v2148, %v2150
      %v2152 = vrot.slane %v2125, 2
      %v2153 = vsel %vm1773, %v2150, %v2152
      %v2154 = vrot.slane %v2126, 2
      %v2155 = vsel %vm1773, %v2152, %v2154
      %v2156 = vrot.slane %v2127, 2
      %v2157 = vsel %vm1773, %v2154, %v2156
      %v2158 = vrot.slane %v2128, 2
      %v2159 = vsel %vm1773, %v2156, %v2158
      %v2160 = vrot.slane %v2129, 2
      %v2161 = vsel %vm1773, %v2158, %v2160
      %v2162 = vrot.slane %v2130, 2
      %v2163 = vsel %vm1773, %v2160, %v2162
      %v2164 = vrot.slane %v2131, 2
      %v2165 = vsel %vm1773, %v2162, %v2164
      %v2166 = vrot.slane %v2132, 2
      %v2167 = vsel %vm1773, %v2164, %v2166
      %v2168 = vrot.slane %v2133, 2
      %v2169 = vsel %vm1773, %v2166, %v2168
      %v2170 = vrot.slane %v2134, 2
      %v2171 = vsel %vm1773, %v2168, %v2170
      %v2173 = vsel %vm505, %v2137, 0
      %v2176 = vsel %vm505, %v2139, 0
      %v2179 = vsel %vm505, %v2141, 0
      %v2182 = vsel %vm505, %v2143, 0
      %v2185 = vsel %vm505, %v2145, 0
      %v2188 = vsel %vm505, %v2147, 0
      %v2191 = vsel %vm505, %v2149, 0
      %v2194 = vsel %vm505, %v2151, 0
      %v2197 = vsel %vm505, %v2153, 0
      %v2200 = vsel %vm505, %v2155, 0
      %v2203 = vsel %vm505, %v2157, 0
      %v2206 = vsel %vm505, %v2159, 0
      %v2209 = vsel %vm505, %v2161, 0
      %v2212 = vsel %vm505, %v2163, 0
      %v2215 = vsel %vm505, %v2165, 0
      %v2218 = vsel %vm505, %v2167, 0
      %v2221 = vsel %vm505, %v2169, 0
      %v2224 = vsel %vm505, %v2171, 0
      %v2227 = vsel %vm560, %v2041, 0
      %2229 = vmatpush.bf16.msra.mxu0 0
      %2230 = vmatpush.bf16.msra.mxu0 0
      %2231 = vmatpush.bf16.msra.mxu0 0
      %2232 = vmatpush.bf16.msra.mxu0 0
      %2233 = vmatpush.bf16.msra.mxu0 0
      %2234 = vmatpush.bf16.msra.mxu0 0
      %2235 = vmatpush.bf16.msra.mxu0 0
      %2236 = vmatpush.bf16.msra.mxu0 %v2227
      %2237 = vmatmul.bf16.gmra.mxu0 %v2173
      %v2238 = vpop.f32.mrf.mxu0
      %v2239 = vadd.f32 0.0, %v2238
      %v2240 = vpop.f32.mrf.mxu0
      %v2241 = vadd.f32 0.0, %v2240
      %2242 = vmatmul.bf16.gmra.mxu0 %v2176
      %v2243 = vpop.f32.mrf.mxu0
      %v2244 = vadd.f32 0.0, %v2243
      %v2245 = vpop.f32.mrf.mxu0
      %v2246 = vadd.f32 0.0, %v2245
      %2247 = vmatmul.bf16.gmra.mxu0 %v2179
      %v2248 = vpop.f32.mrf.mxu0
      %v2249 = vadd.f32 0.0, %v2248
      %v2250 = vpop.f32.mrf.mxu0
      %v2251 = vadd.f32 0.0, %v2250
      %2252 = vmatmul.bf16.gmra.mxu0 %v2182
      %v2253 = vpop.f32.mrf.mxu0
      %v2254 = vadd.f32 0.0, %v2253
      %v2255 = vpop.f32.mrf.mxu0
      %v2256 = vadd.f32 0.0, %v2255
      %2257 = vmatmul.bf16.gmra.mxu0 %v2185
      %v2258 = vpop.f32.mrf.mxu0
      %v2259 = vadd.f32 0.0, %v2258
      %v2260 = vpop.f32.mrf.mxu0
      %v2261 = vadd.f32 0.0, %v2260
      %2262 = vmatmul.bf16.gmra.mxu0 %v2188
      %v2263 = vpop.f32.mrf.mxu0
      %v2264 = vadd.f32 0.0, %v2263
      %v2265 = vpop.f32.mrf.mxu0
      %v2266 = vadd.f32 0.0, %v2265
      %2267 = vmatmul.bf16.gmra.mxu0 %v2191
      %v2268 = vpop.f32.mrf.mxu0
      %v2269 = vadd.f32 0.0, %v2268
      %v2270 = vpop.f32.mrf.mxu0
      %v2271 = vadd.f32 0.0, %v2270
      %2272 = vmatmul.bf16.gmra.mxu0 %v2194
      %v2273 = vpop.f32.mrf.mxu0
      %v2274 = vadd.f32 0.0, %v2273
      %v2275 = vpop.f32.mrf.mxu0
      %v2276 = vadd.f32 0.0, %v2275
      %2277 = vmatmul.bf16.gmra.mxu0 %v2197
      %v2278 = vpop.f32.mrf.mxu0
      %v2279 = vadd.f32 0.0, %v2278
      %v2280 = vpop.f32.mrf.mxu0
      %v2281 = vadd.f32 0.0, %v2280
      %2282 = vmatmul.bf16.gmra.mxu0 %v2200
      %v2283 = vpop.f32.mrf.mxu0
      %v2284 = vadd.f32 0.0, %v2283
      %v2285 = vpop.f32.mrf.mxu0
      %v2286 = vadd.f32 0.0, %v2285
      %2287 = vmatmul.bf16.gmra.mxu0 %v2203
      %v2288 = vpop.f32.mrf.mxu0
      %v2289 = vadd.f32 0.0, %v2288
      %v2290 = vpop.f32.mrf.mxu0
      %v2291 = vadd.f32 0.0, %v2290
      %2292 = vmatmul.bf16.gmra.mxu0 %v2206
      %v2293 = vpop.f32.mrf.mxu0
      %v2294 = vadd.f32 0.0, %v2293
      %v2295 = vpop.f32.mrf.mxu0
      %v2296 = vadd.f32 0.0, %v2295
      %2297 = vmatmul.bf16.gmra.mxu0 %v2209
      %v2298 = vpop.f32.mrf.mxu0
      %v2299 = vadd.f32 0.0, %v2298
      %v2300 = vpop.f32.mrf.mxu0
      %v2301 = vadd.f32 0.0, %v2300
      %2302 = vmatmul.bf16.gmra.mxu0 %v2212
      %v2303 = vpop.f32.mrf.mxu0
      %v2304 = vadd.f32 0.0, %v2303
      %v2305 = vpop.f32.mrf.mxu0
      %v2306 = vadd.f32 0.0, %v2305
      %2307 = vmatmul.bf16.gmra.mxu0 %v2215
      %v2308 = vpop.f32.mrf.mxu0
      %v2309 = vadd.f32 0.0, %v2308
      %v2310 = vpop.f32.mrf.mxu0
      %v2311 = vadd.f32 0.0, %v2310
      %2312 = vmatmul.bf16.gmra.mxu0 %v2218
      %v2313 = vpop.f32.mrf.mxu0
      %v2314 = vadd.f32 0.0, %v2313
      %v2315 = vpop.f32.mrf.mxu0
      %v2316 = vadd.f32 0.0, %v2315
      %2317 = vmatmul.bf16.gmra.mxu0 %v2221
      %v2318 = vpop.f32.mrf.mxu0
      %v2319 = vadd.f32 0.0, %v2318
      %v2320 = vpop.f32.mrf.mxu0
      %v2321 = vadd.f32 0.0, %v2320
      %2322 = vmatmul.bf16.gmra.mxu0 %v2224
      %v2323 = vpop.f32.mrf.mxu0
      %v2324 = vadd.f32 0.0, %v2323
      %v2325 = vpop.f32.mrf.mxu0
      %v2326 = vadd.f32 0.0, %v2325
      %2327 = vdwg.mxu0
      %v2328 = vadd.f32 %v1967, %v2239
      %v2329 = vadd.f32 %v1968, %v2241
      %v2330 = vadd.f32 %v1969, %v2244
      %v2331 = vadd.f32 %v1970, %v2246
      %v2332 = vadd.f32 %v1971, %v2249
      %v2333 = vadd.f32 %v1972, %v2251
      %v2334 = vadd.f32 %v1973, %v2254
      %v2335 = vadd.f32 %v1974, %v2256
      %v2336 = vadd.f32 %v1975, %v2259
      %v2337 = vadd.f32 %v1976, %v2261
      %v2338 = vadd.f32 %v1977, %v2264
      %v2339 = vadd.f32 %v1978, %v2266
      %v2340 = vadd.f32 %v1979, %v2269
      %v2341 = vadd.f32 %v1980, %v2271
      %v2342 = vadd.f32 %v1981, %v2274
      %v2343 = vadd.f32 %v1982, %v2276
      %v2344 = vadd.f32 %v1983, %v2279
      %v2345 = vadd.f32 %v1984, %v2281
      %v2346 = vadd.f32 %v1985, %v2284
      %v2347 = vadd.f32 %v1986, %v2286
      %v2348 = vadd.f32 %v1987, %v2289
      %v2349 = vadd.f32 %v1988, %v2291
      %v2350 = vadd.f32 %v1989, %v2294
      %v2351 = vadd.f32 %v1990, %v2296
      %v2352 = vadd.f32 %v1991, %v2299
      %v2353 = vadd.f32 %v1992, %v2301
      %v2354 = vadd.f32 %v1993, %v2304
      %v2355 = vadd.f32 %v1994, %v2306
      %v2356 = vadd.f32 %v1995, %v2309
      %v2357 = vadd.f32 %v1996, %v2311
      %v2358 = vadd.f32 %v1997, %v2314
      %v2359 = vadd.f32 %v1998, %v2316
      %v2360 = vadd.f32 %v1999, %v2319
      %v2361 = vadd.f32 %v2000, %v2321
      %v2362 = vadd.f32 %v2001, %v2324
      %v2363 = vadd.f32 %v2002, %v2326
      %v2364 = vld [vmem:[%s206 + $0xa0] sm:$0x7]
      %s2365 = scalar_lea.vmem %s210, 28
      %v2366 = vld [vmem:[%s2365] sm:$0xf]
      %v2368 = vunpack.c.l.b16 %v2364
      %v2369 = vpack.c.b16 %v2368, %v2368
      %vm2370 = vsmask.f32 5376
      %v2372 = vshrl.u32 %v2116, 16
      %v2374 = vrot.slane %v2372, 2
      %v2375 = vshll.u32 %v2116, 16
      %v2377 = vrot.slane %v2375, 3
      %v2378 = vor.u32 %v2374, %v2377
      %v2380 = vshrl.u32 %v2117, 16
      %v2382 = vrot.slane %v2380, 2
      %v2383 = vshll.u32 %v2117, 16
      %v2385 = vrot.slane %v2383, 3
      %v2386 = vor.u32 %v2382, %v2385
      %v2387 = vsel %vm2370, %v2378, %v2386
      %v2389 = vshrl.u32 %v2118, 16
      %v2391 = vrot.slane %v2389, 2
      %v2392 = vshll.u32 %v2118, 16
      %v2394 = vrot.slane %v2392, 3
      %v2395 = vor.u32 %v2391, %v2394
      %v2396 = vsel %vm2370, %v2386, %v2395
      %v2398 = vshrl.u32 %v2119, 16
      %v2400 = vrot.slane %v2398, 2
      %v2401 = vshll.u32 %v2119, 16
      %v2403 = vrot.slane %v2401, 3
      %v2404 = vor.u32 %v2400, %v2403
      %v2405 = vsel %vm2370, %v2395, %v2404
      %v2407 = vshrl.u32 %v2120, 16
      %v2409 = vrot.slane %v2407, 2
      %v2410 = vshll.u32 %v2120, 16
      %v2412 = vrot.slane %v2410, 3
      %v2413 = vor.u32 %v2409, %v2412
      %v2414 = vsel %vm2370, %v2404, %v2413
      %v2416 = vshrl.u32 %v2121, 16
      %v2418 = vrot.slane %v2416, 2
      %v2419 = vshll.u32 %v2121, 16
      %v2421 = vrot.slane %v2419, 3
      %v2422 = vor.u32 %v2418, %v2421
      %v2423 = vsel %vm2370, %v2413, %v2422
      %v2425 = vshrl.u32 %v2122, 16
      %v2427 = vrot.slane %v2425, 2
      %v2428 = vshll.u32 %v2122, 16
      %v2430 = vrot.slane %v2428, 3
      %v2431 = vor.u32 %v2427, %v2430
      %v2432 = vsel %vm2370, %v2422, %v2431
      %v2434 = vshrl.u32 %v2123, 16
      %v2436 = vrot.slane %v2434, 2
      %v2437 = vshll.u32 %v2123, 16
      %v2439 = vrot.slane %v2437, 3
      %v2440 = vor.u32 %v2436, %v2439
      %v2441 = vsel %vm2370, %v2431, %v2440
      %v2443 = vshrl.u32 %v2124, 16
      %v2445 = vrot.slane %v2443, 2
      %v2446 = vshll.u32 %v2124, 16
      %v2448 = vrot.slane %v2446, 3
      %v2449 = vor.u32 %v2445, %v2448
      %v2450 = vsel %vm2370, %v2440, %v2449
      %v2452 = vshrl.u32 %v2125, 16
      %v2454 = vrot.slane %v2452, 2
      %v2455 = vshll.u32 %v2125, 16
      %v2457 = vrot.slane %v2455, 3
      %v2458 = vor.u32 %v2454, %v2457
      %v2459 = vsel %vm2370, %v2449, %v2458
      %v2461 = vshrl.u32 %v2126, 16
      %v2463 = vrot.slane %v2461, 2
      %v2464 = vshll.u32 %v2126, 16
      %v2466 = vrot.slane %v2464, 3
      %v2467 = vor.u32 %v2463, %v2466
      %v2468 = vsel %vm2370, %v2458, %v2467
      %v2470 = vshrl.u32 %v2127, 16
      %v2472 = vrot.slane %v2470, 2
      %v2473 = vshll.u32 %v2127, 16
      %v2475 = vrot.slane %v2473, 3
      %v2476 = vor.u32 %v2472, %v2475
      %v2477 = vsel %vm2370, %v2467, %v2476
      %v2479 = vshrl.u32 %v2128, 16
      %v2481 = vrot.slane %v2479, 2
      %v2482 = vshll.u32 %v2128, 16
      %v2484 = vrot.slane %v2482, 3
      %v2485 = vor.u32 %v2481, %v2484
      %v2486 = vsel %vm2370, %v2476, %v2485
      %v2488 = vshrl.u32 %v2129, 16
      %v2490 = vrot.slane %v2488, 2
      %v2491 = vshll.u32 %v2129, 16
      %v2493 = vrot.slane %v2491, 3
      %v2494 = vor.u32 %v2490, %v2493
      %v2495 = vsel %vm2370, %v2485, %v2494
      %v2497 = vshrl.u32 %v2130, 16
      %v2499 = vrot.slane %v2497, 2
      %v2500 = vshll.u32 %v2130, 16
      %v2502 = vrot.slane %v2500, 3
      %v2503 = vor.u32 %v2499, %v2502
      %v2504 = vsel %vm2370, %v2494, %v2503
      %v2506 = vshrl.u32 %v2131, 16
      %v2508 = vrot.slane %v2506, 2
      %v2509 = vshll.u32 %v2131, 16
      %v2511 = vrot.slane %v2509, 3
      %v2512 = vor.u32 %v2508, %v2511
      %v2513 = vsel %vm2370, %v2503, %v2512
      %v2515 = vshrl.u32 %v2132, 16
      %v2517 = vrot.slane %v2515, 2
      %v2518 = vshll.u32 %v2132, 16
      %v2520 = vrot.slane %v2518, 3
      %v2521 = vor.u32 %v2517, %v2520
      %v2522 = vsel %vm2370, %v2512, %v2521
      %v2524 = vshrl.u32 %v2133, 16
      %v2526 = vrot.slane %v2524, 2
      %v2527 = vshll.u32 %v2133, 16
      %v2529 = vrot.slane %v2527, 3
      %v2530 = vor.u32 %v2526, %v2529
      %v2531 = vsel %vm2370, %v2521, %v2530
      %v2533 = vshrl.u32 %v2369, 16
      %v2535 = vrot.slane %v2533, 2
      %v2536 = vshll.u32 %v2369, 16
      %v2538 = vrot.slane %v2536, 3
      %v2539 = vor.u32 %v2535, %v2538
      %v2540 = vsel %vm2370, %v2530, %v2539
      %v2542 = vsel %vm505, %v2387, 0
      %v2545 = vsel %vm505, %v2396, 0
      %v2548 = vsel %vm505, %v2405, 0
      %v2551 = vsel %vm505, %v2414, 0
      %v2554 = vsel %vm505, %v2423, 0
      %v2557 = vsel %vm505, %v2432, 0
      %v2560 = vsel %vm505, %v2441, 0
      %v2563 = vsel %vm505, %v2450, 0
      %v2566 = vsel %vm505, %v2459, 0
      %v2569 = vsel %vm505, %v2468, 0
      %v2572 = vsel %vm505, %v2477, 0
      %v2575 = vsel %vm505, %v2486, 0
      %v2578 = vsel %vm505, %v2495, 0
      %v2581 = vsel %vm505, %v2504, 0
      %v2584 = vsel %vm505, %v2513, 0
      %v2587 = vsel %vm505, %v2522, 0
      %v2590 = vsel %vm505, %v2531, 0
      %v2593 = vsel %vm505, %v2540, 0
      %v2596 = vsel %vm560, %v2366, 0
      %2598 = vmatpush.bf16.msra.mxu0 0
      %2599 = vmatpush.bf16.msra.mxu0 0
      %2600 = vmatpush.bf16.msra.mxu0 0
      %2601 = vmatpush.bf16.msra.mxu0 0
      %2602 = vmatpush.bf16.msra.mxu0 0
      %2603 = vmatpush.bf16.msra.mxu0 0
      %2604 = vmatpush.bf16.msra.mxu0 0
      %2605 = vmatpush.bf16.msra.mxu0 %v2596
      %2606 = vmatmul.bf16.gmra.mxu0 %v2542
      %v2607 = vpop.f32.mrf.mxu0
      %v2608 = vadd.f32 0.0, %v2607
      %v2609 = vpop.f32.mrf.mxu0
      %v2610 = vadd.f32 0.0, %v2609
      %2611 = vmatmul.bf16.gmra.mxu0 %v2545
      %v2612 = vpop.f32.mrf.mxu0
      %v2613 = vadd.f32 0.0, %v2612
      %v2614 = vpop.f32.mrf.mxu0
      %v2615 = vadd.f32 0.0, %v2614
      %2616 = vmatmul.bf16.gmra.mxu0 %v2548
      %v2617 = vpop.f32.mrf.mxu0
      %v2618 = vadd.f32 0.0, %v2617
      %v2619 = vpop.f32.mrf.mxu0
      %v2620 = vadd.f32 0.0, %v2619
      %2621 = vmatmul.bf16.gmra.mxu0 %v2551
      %v2622 = vpop.f32.mrf.mxu0
      %v2623 = vadd.f32 0.0, %v2622
      %v2624 = vpop.f32.mrf.mxu0
      %v2625 = vadd.f32 0.0, %v2624
      %2626 = vmatmul.bf16.gmra.mxu0 %v2554
      %v2627 = vpop.f32.mrf.mxu0
      %v2628 = vadd.f32 0.0, %v2627
      %v2629 = vpop.f32.mrf.mxu0
      %v2630 = vadd.f32 0.0, %v2629
      %2631 = vmatmul.bf16.gmra.mxu0 %v2557
      %v2632 = vpop.f32.mrf.mxu0
      %v2633 = vadd.f32 0.0, %v2632
      %v2634 = vpop.f32.mrf.mxu0
      %v2635 = vadd.f32 0.0, %v2634
      %2636 = vmatmul.bf16.gmra.mxu0 %v2560
      %v2637 = vpop.f32.mrf.mxu0
      %v2638 = vadd.f32 0.0, %v2637
      %v2639 = vpop.f32.mrf.mxu0
      %v2640 = vadd.f32 0.0, %v2639
      %2641 = vmatmul.bf16.gmra.mxu0 %v2563
      %v2642 = vpop.f32.mrf.mxu0
      %v2643 = vadd.f32 0.0, %v2642
      %v2644 = vpop.f32.mrf.mxu0
      %v2645 = vadd.f32 0.0, %v2644
      %2646 = vmatmul.bf16.gmra.mxu0 %v2566
      %v2647 = vpop.f32.mrf.mxu0
      %v2648 = vadd.f32 0.0, %v2647
      %v2649 = vpop.f32.mrf.mxu0
      %v2650 = vadd.f32 0.0, %v2649
      %2651 = vmatmul.bf16.gmra.mxu0 %v2569
      %v2652 = vpop.f32.mrf.mxu0
      %v2653 = vadd.f32 0.0, %v2652
      %v2654 = vpop.f32.mrf.mxu0
      %v2655 = vadd.f32 0.0, %v2654
      %2656 = vmatmul.bf16.gmra.mxu0 %v2572
      %v2657 = vpop.f32.mrf.mxu0
      %v2658 = vadd.f32 0.0, %v2657
      %v2659 = vpop.f32.mrf.mxu0
      %v2660 = vadd.f32 0.0, %v2659
      %2661 = vmatmul.bf16.gmra.mxu0 %v2575
      %v2662 = vpop.f32.mrf.mxu0
      %v2663 = vadd.f32 0.0, %v2662
      %v2664 = vpop.f32.mrf.mxu0
      %v2665 = vadd.f32 0.0, %v2664
      %2666 = vmatmul.bf16.gmra.mxu0 %v2578
      %v2667 = vpop.f32.mrf.mxu0
      %v2668 = vadd.f32 0.0, %v2667
      %v2669 = vpop.f32.mrf.mxu0
      %v2670 = vadd.f32 0.0, %v2669
      %2671 = vmatmul.bf16.gmra.mxu0 %v2581
      %v2672 = vpop.f32.mrf.mxu0
      %v2673 = vadd.f32 0.0, %v2672
      %v2674 = vpop.f32.mrf.mxu0
      %v2675 = vadd.f32 0.0, %v2674
      %2676 = vmatmul.bf16.gmra.mxu0 %v2584
      %v2677 = vpop.f32.mrf.mxu0
      %v2678 = vadd.f32 0.0, %v2677
      %v2679 = vpop.f32.mrf.mxu0
      %v2680 = vadd.f32 0.0, %v2679
      %2681 = vmatmul.bf16.gmra.mxu0 %v2587
      %v2682 = vpop.f32.mrf.mxu0
      %v2683 = vadd.f32 0.0, %v2682
      %v2684 = vpop.f32.mrf.mxu0
      %v2685 = vadd.f32 0.0, %v2684
      %2686 = vmatmul.bf16.gmra.mxu0 %v2590
      %v2687 = vpop.f32.mrf.mxu0
      %v2688 = vadd.f32 0.0, %v2687
      %v2689 = vpop.f32.mrf.mxu0
      %v2690 = vadd.f32 0.0, %v2689
      %2691 = vmatmul.bf16.gmra.mxu0 %v2593
      %v2692 = vpop.f32.mrf.mxu0
      %v2693 = vadd.f32 0.0, %v2692
      %v2694 = vpop.f32.mrf.mxu0
      %v2695 = vadd.f32 0.0, %v2694
      %2696 = vdwg.mxu0
      %v2697 = vadd.f32 %v2328, %v2608
      %v2698 = vadd.f32 %v2329, %v2610
      %v2699 = vadd.f32 %v2330, %v2613
      %v2700 = vadd.f32 %v2331, %v2615
      %v2701 = vadd.f32 %v2332, %v2618
      %v2702 = vadd.f32 %v2333, %v2620
      %v2703 = vadd.f32 %v2334, %v2623
      %v2704 = vadd.f32 %v2335, %v2625
      %v2705 = vadd.f32 %v2336, %v2628
      %v2706 = vadd.f32 %v2337, %v2630
      %v2707 = vadd.f32 %v2338, %v2633
      %v2708 = vadd.f32 %v2339, %v2635
      %v2709 = vadd.f32 %v2340, %v2638
      %v2710 = vadd.f32 %v2341, %v2640
      %v2711 = vadd.f32 %v2342, %v2643
      %v2712 = vadd.f32 %v2343, %v2645
      %v2713 = vadd.f32 %v2344, %v2648
      %v2714 = vadd.f32 %v2345, %v2650
      %v2715 = vadd.f32 %v2346, %v2653
      %v2716 = vadd.f32 %v2347, %v2655
      %v2717 = vadd.f32 %v2348, %v2658
      %v2718 = vadd.f32 %v2349, %v2660
      %v2719 = vadd.f32 %v2350, %v2663
      %v2720 = vadd.f32 %v2351, %v2665
      %v2721 = vadd.f32 %v2352, %v2668
      %v2722 = vadd.f32 %v2353, %v2670
      %v2723 = vadd.f32 %v2354, %v2673
      %v2724 = vadd.f32 %v2355, %v2675
      %v2725 = vadd.f32 %v2356, %v2678
      %v2726 = vadd.f32 %v2357, %v2680
      %v2727 = vadd.f32 %v2358, %v2683
      %v2728 = vadd.f32 %v2359, %v2685
      %v2729 = vadd.f32 %v2360, %v2688
      %v2730 = vadd.f32 %v2361, %v2690
      %v2731 = vadd.f32 %v2362, %v2693
      %v2732 = vadd.f32 %v2363, %v2695
      %v2733 = vld [vmem:[%s206 + $0x10] sm:$0x8]
      %s2734 = scalar_lea.vmem %s210, 32
      %v2735 = vld [vmem:[%s2734] sm:$0xf]
      %v2737 = vunpack.c.l.b16 %v2733
      %v2738 = vpack.c.b16 %v2080, %v2737
      %vm2739 = vcmask 1044480
      %v2740 = vrot.slane %v2738, 3
      %v2741 = vrot.slane %v2117, 3
      %v2742 = vsel %vm2739, %v2740, %v2741
      %v2743 = vrot.slane %v2118, 3
      %v2744 = vsel %vm2739, %v2741, %v2743
      %v2745 = vrot.slane %v2119, 3
      %v2746 = vsel %vm2739, %v2743, %v2745
      %v2747 = vrot.slane %v2120, 3
      %v2748 = vsel %vm2739, %v2745, %v2747
      %v2749 = vrot.slane %v2121, 3
      %v2750 = vsel %vm2739, %v2747, %v2749
      %v2751 = vrot.slane %v2122, 3
      %v2752 = vsel %vm2739, %v2749, %v2751
      %v2753 = vrot.slane %v2123, 3
      %v2754 = vsel %vm2739, %v2751, %v2753
      %v2755 = vrot.slane %v2124, 3
      %v2756 = vsel %vm2739, %v2753, %v2755
      %v2757 = vrot.slane %v2125, 3
      %v2758 = vsel %vm2739, %v2755, %v2757
      %v2759 = vrot.slane %v2126, 3
      %v2760 = vsel %vm2739, %v2757, %v2759
      %v2761 = vrot.slane %v2127, 3
      %v2762 = vsel %vm2739, %v2759, %v2761
      %v2763 = vrot.slane %v2128, 3
      %v2764 = vsel %vm2739, %v2761, %v2763
      %v2765 = vrot.slane %v2129, 3
      %v2766 = vsel %vm2739, %v2763, %v2765
      %v2767 = vrot.slane %v2130, 3
      %v2768 = vsel %vm2739, %v2765, %v2767
      %v2769 = vrot.slane %v2131, 3
      %v2770 = vsel %vm2739, %v2767, %v2769
      %v2771 = vrot.slane %v2132, 3
      %v2772 = vsel %vm2739, %v2769, %v2771
      %v2773 = vrot.slane %v2133, 3
      %v2774 = vsel %vm2739, %v2771, %v2773
      %v2775 = vrot.slane %v2369, 3
      %v2776 = vsel %vm2739, %v2773, %v2775
      %v2778 = vsel %vm505, %v2742, 0
      %v2781 = vsel %vm505, %v2744, 0
      %v2784 = vsel %vm505, %v2746, 0
      %v2787 = vsel %vm505, %v2748, 0
      %v2790 = vsel %vm505, %v2750, 0
      %v2793 = vsel %vm505, %v2752, 0
      %v2796 = vsel %vm505, %v2754, 0
      %v2799 = vsel %vm505, %v2756, 0
      %v2802 = vsel %vm505, %v2758, 0
      %v2805 = vsel %vm505, %v2760, 0
      %v2808 = vsel %vm505, %v2762, 0
      %v2811 = vsel %vm505, %v2764, 0
      %v2814 = vsel %vm505, %v2766, 0
      %v2817 = vsel %vm505, %v2768, 0
      %v2820 = vsel %vm505, %v2770, 0
      %v2823 = vsel %vm505, %v2772, 0
      %v2826 = vsel %vm505, %v2774, 0
      %v2829 = vsel %vm505, %v2776, 0
      %v2832 = vsel %vm560, %v2735, 0
      %2834 = vmatpush.bf16.msra.mxu0 0
      %2835 = vmatpush.bf16.msra.mxu0 0
      %2836 = vmatpush.bf16.msra.mxu0 0
      %2837 = vmatpush.bf16.msra.mxu0 0
      %2838 = vmatpush.bf16.msra.mxu0 0
      %2839 = vmatpush.bf16.msra.mxu0 0
      %2840 = vmatpush.bf16.msra.mxu0 0
      %2841 = vmatpush.bf16.msra.mxu0 %v2832
      %2842 = vmatmul.bf16.gmra.mxu0 %v2778
      %v2843 = vpop.f32.mrf.mxu0
      %v2844 = vadd.f32 0.0, %v2843
      %v2845 = vpop.f32.mrf.mxu0
      %v2846 = vadd.f32 0.0, %v2845
      %2847 = vmatmul.bf16.gmra.mxu0 %v2781
      %v2848 = vpop.f32.mrf.mxu0
      %v2849 = vadd.f32 0.0, %v2848
      %v2850 = vpop.f32.mrf.mxu0
      %v2851 = vadd.f32 0.0, %v2850
      %2852 = vmatmul.bf16.gmra.mxu0 %v2784
      %v2853 = vpop.f32.mrf.mxu0
      %v2854 = vadd.f32 0.0, %v2853
      %v2855 = vpop.f32.mrf.mxu0
      %v2856 = vadd.f32 0.0, %v2855
      %2857 = vmatmul.bf16.gmra.mxu0 %v2787
      %v2858 = vpop.f32.mrf.mxu0
      %v2859 = vadd.f32 0.0, %v2858
      %v2860 = vpop.f32.mrf.mxu0
      %v2861 = vadd.f32 0.0, %v2860
      %2862 = vmatmul.bf16.gmra.mxu0 %v2790
      %v2863 = vpop.f32.mrf.mxu0
      %v2864 = vadd.f32 0.0, %v2863
      %v2865 = vpop.f32.mrf.mxu0
      %v2866 = vadd.f32 0.0, %v2865
      %2867 = vmatmul.bf16.gmra.mxu0 %v2793
      %v2868 = vpop.f32.mrf.mxu0
      %v2869 = vadd.f32 0.0, %v2868
      %v2870 = vpop.f32.mrf.mxu0
      %v2871 = vadd.f32 0.0, %v2870
      %2872 = vmatmul.bf16.gmra.mxu0 %v2796
      %v2873 = vpop.f32.mrf.mxu0
      %v2874 = vadd.f32 0.0, %v2873
      %v2875 = vpop.f32.mrf.mxu0
      %v2876 = vadd.f32 0.0, %v2875
      %2877 = vmatmul.bf16.gmra.mxu0 %v2799
      %v2878 = vpop.f32.mrf.mxu0
      %v2879 = vadd.f32 0.0, %v2878
      %v2880 = vpop.f32.mrf.mxu0
      %v2881 = vadd.f32 0.0, %v2880
      %2882 = vmatmul.bf16.gmra.mxu0 %v2802
      %v2883 = vpop.f32.mrf.mxu0
      %v2884 = vadd.f32 0.0, %v2883
      %v2885 = vpop.f32.mrf.mxu0
      %v2886 = vadd.f32 0.0, %v2885
      %2887 = vmatmul.bf16.gmra.mxu0 %v2805
      %v2888 = vpop.f32.mrf.mxu0
      %v2889 = vadd.f32 0.0, %v2888
      %v2890 = vpop.f32.mrf.mxu0
      %v2891 = vadd.f32 0.0, %v2890
      %2892 = vmatmul.bf16.gmra.mxu0 %v2808
      %v2893 = vpop.f32.mrf.mxu0
      %v2894 = vadd.f32 0.0, %v2893
      %v2895 = vpop.f32.mrf.mxu0
      %v2896 = vadd.f32 0.0, %v2895
      %2897 = vmatmul.bf16.gmra.mxu0 %v2811
      %v2898 = vpop.f32.mrf.mxu0
      %v2899 = vadd.f32 0.0, %v2898
      %v2900 = vpop.f32.mrf.mxu0
      %v2901 = vadd.f32 0.0, %v2900
      %2902 = vmatmul.bf16.gmra.mxu0 %v2814
      %v2903 = vpop.f32.mrf.mxu0
      %v2904 = vadd.f32 0.0, %v2903
      %v2905 = vpop.f32.mrf.mxu0
      %v2906 = vadd.f32 0.0, %v2905
      %2907 = vmatmul.bf16.gmra.mxu0 %v2817
      %v2908 = vpop.f32.mrf.mxu0
      %v2909 = vadd.f32 0.0, %v2908
      %v2910 = vpop.f32.mrf.mxu0
      %v2911 = vadd.f32 0.0, %v2910
      %2912 = vmatmul.bf16.gmra.mxu0 %v2820
      %v2913 = vpop.f32.mrf.mxu0
      %v2914 = vadd.f32 0.0, %v2913
      %v2915 = vpop.f32.mrf.mxu0
      %v2916 = vadd.f32 0.0, %v2915
      %2917 = vmatmul.bf16.gmra.mxu0 %v2823
      %v2918 = vpop.f32.mrf.mxu0
      %v2919 = vadd.f32 0.0, %v2918
      %v2920 = vpop.f32.mrf.mxu0
      %v2921 = vadd.f32 0.0, %v2920
      %2922 = vmatmul.bf16.gmra.mxu0 %v2826
      %v2923 = vpop.f32.mrf.mxu0
      %v2924 = vadd.f32 0.0, %v2923
      %v2925 = vpop.f32.mrf.mxu0
      %v2926 = vadd.f32 0.0, %v2925
      %2927 = vmatmul.bf16.gmra.mxu0 %v2829
      %v2928 = vpop.f32.mrf.mxu0
      %v2929 = vadd.f32 0.0, %v2928
      %v2930 = vpop.f32.mrf.mxu0
      %v2931 = vadd.f32 0.0, %v2930
      %2932 = vdwg.mxu0
      %v2933 = vadd.f32 %v2697, %v2844
      %v2934 = vadd.f32 %v2698, %v2846
      %v2935 = vadd.f32 %v2699, %v2849
      %v2936 = vadd.f32 %v2700, %v2851
      %v2937 = vadd.f32 %v2701, %v2854
      %v2938 = vadd.f32 %v2702, %v2856
      %v2939 = vadd.f32 %v2703, %v2859
      %v2940 = vadd.f32 %v2704, %v2861
      %v2941 = vadd.f32 %v2705, %v2864
      %v2942 = vadd.f32 %v2706, %v2866
      %v2943 = vadd.f32 %v2707, %v2869
      %v2944 = vadd.f32 %v2708, %v2871
      %v2945 = vadd.f32 %v2709, %v2874
      %v2946 = vadd.f32 %v2710, %v2876
      %v2947 = vadd.f32 %v2711, %v2879
      %v2948 = vadd.f32 %v2712, %v2881
      %v2949 = vadd.f32 %v2713, %v2884
      %v2950 = vadd.f32 %v2714, %v2886
      %v2951 = vadd.f32 %v2715, %v2889
      %v2952 = vadd.f32 %v2716, %v2891
      %v2953 = vadd.f32 %v2717, %v2894
      %v2954 = vadd.f32 %v2718, %v2896
      %v2955 = vadd.f32 %v2719, %v2899
      %v2956 = vadd.f32 %v2720, %v2901
      %v2957 = vadd.f32 %v2721, %v2904
      %v2958 = vadd.f32 %v2722, %v2906
      %v2959 = vadd.f32 %v2723, %v2909
      %v2960 = vadd.f32 %v2724, %v2911
      %v2961 = vadd.f32 %v2725, %v2914
      %v2962 = vadd.f32 %v2726, %v2916
      %v2963 = vadd.f32 %v2727, %v2919
      %v2964 = vadd.f32 %v2728, %v2921
      %v2965 = vadd.f32 %v2729, %v2924
      %v2966 = vadd.f32 %v2730, %v2926
      %v2967 = vadd.f32 %v2731, %v2929
      %v2968 = vadd.f32 %v2732, %v2931
      %v2969 = vld [vmem:[%s213] sm:$0x1]
      %v2971 = vperm.slane %v2969, 0
      %v2973 = vadd.f32 %v2933, %v2971
      %v2974 = vadd.f32 %v2934, %v2971
      %v2975 = vadd.f32 %v2935, %v2971
      %v2976 = vadd.f32 %v2936, %v2971
      %v2977 = vadd.f32 %v2937, %v2971
      %v2978 = vadd.f32 %v2938, %v2971
      %v2979 = vadd.f32 %v2939, %v2971
      %v2980 = vadd.f32 %v2940, %v2971
      %v2981 = vadd.f32 %v2941, %v2971
      %v2982 = vadd.f32 %v2942, %v2971
      %v2983 = vadd.f32 %v2943, %v2971
      %v2984 = vadd.f32 %v2944, %v2971
      %v2985 = vadd.f32 %v2945, %v2971
      %v2986 = vadd.f32 %v2946, %v2971
      %v2987 = vadd.f32 %v2947, %v2971
      %v2988 = vadd.f32 %v2948, %v2971
      %v2989 = vadd.f32 %v2949, %v2971
      %v2990 = vadd.f32 %v2950, %v2971
      %v2991 = vadd.f32 %v2951, %v2971
      %v2992 = vadd.f32 %v2952, %v2971
      %v2993 = vadd.f32 %v2953, %v2971
      %v2994 = vadd.f32 %v2954, %v2971
      %v2995 = vadd.f32 %v2955, %v2971
      %v2996 = vadd.f32 %v2956, %v2971
      %v2997 = vadd.f32 %v2957, %v2971
      %v2998 = vadd.f32 %v2958, %v2971
      %v2999 = vadd.f32 %v2959, %v2971
      %v3000 = vadd.f32 %v2960, %v2971
      %v3001 = vadd.f32 %v2961, %v2971
      %v3002 = vadd.f32 %v2962, %v2971
      %v3003 = vadd.f32 %v2963, %v2971
      %v3004 = vadd.f32 %v2964, %v2971
      %v3005 = vadd.f32 %v2965, %v2971
      %v3006 = vadd.f32 %v2966, %v2971
      %v3007 = vadd.f32 %v2967, %v2971
      %v3008 = vadd.f32 %v2968, %v2971
      %v3009 = vmax.f32 %v2973, 0.0
      %v3010 = vmax.f32 %v2974, 0.0
      %v3011 = vmax.f32 %v2975, 0.0
      %v3012 = vmax.f32 %v2976, 0.0
      %v3013 = vmax.f32 %v2977, 0.0
      %v3014 = vmax.f32 %v2978, 0.0
      %v3015 = vmax.f32 %v2979, 0.0
      %v3016 = vmax.f32 %v2980, 0.0
      %v3017 = vmax.f32 %v2981, 0.0
      %v3018 = vmax.f32 %v2982, 0.0
      %v3019 = vmax.f32 %v2983, 0.0
      %v3020 = vmax.f32 %v2984, 0.0
      %v3021 = vmax.f32 %v2985, 0.0
      %v3022 = vmax.f32 %v2986, 0.0
      %v3023 = vmax.f32 %v2987, 0.0
      %v3024 = vmax.f32 %v2988, 0.0
      %v3025 = vmax.f32 %v2989, 0.0
      %v3026 = vmax.f32 %v2990, 0.0
      %v3027 = vmax.f32 %v2991, 0.0
      %v3028 = vmax.f32 %v2992, 0.0
      %v3029 = vmax.f32 %v2993, 0.0
      %v3030 = vmax.f32 %v2994, 0.0
      %v3031 = vmax.f32 %v2995, 0.0
      %v3032 = vmax.f32 %v2996, 0.0
      %v3033 = vmax.f32 %v2997, 0.0
      %v3034 = vmax.f32 %v2998, 0.0
      %v3035 = vmax.f32 %v2999, 0.0
      %v3036 = vmax.f32 %v3000, 0.0
      %v3037 = vmax.f32 %v3001, 0.0
      %v3038 = vmax.f32 %v3002, 0.0
      %v3039 = vmax.f32 %v3003, 0.0
      %v3040 = vmax.f32 %v3004, 0.0
      %v3041 = vmax.f32 %v3005, 0.0
      %v3042 = vmax.f32 %v3006, 0.0
      %v3043 = vmax.f32 %v3007, 0.0
      %v3044 = vmax.f32 %v3008, 0.0
      %v3081 = vrot.slane %v3009, 2
      %v3082 = vrot.slane %v3009, 4
      %v3083 = vrot.slane %v3009, 6
      %v3084 = vrot.slane %v3010, 2
      %v3085 = vrot.slane %v3010, 4
      %v3086 = vrot.slane %v3010, 6
      %v3087 = vrot.slane %v3011, 2
      %v3088 = vrot.slane %v3011, 4
      %v3089 = vrot.slane %v3011, 6
      %v3090 = vrot.slane %v3012, 2
      %v3091 = vrot.slane %v3012, 4
      %v3092 = vrot.slane %v3012, 6
      %v3093 = vrot.slane %v3013, 4
      %v3094 = vrot.slane %v3013, 6
      %v3095 = vrot.slane %v3014, 2
      %v3096 = vrot.slane %v3014, 4
      %v3097 = vrot.slane %v3014, 6
      %v3098 = vrot.slane %v3015, 2
      %v3099 = vrot.slane %v3015, 6
      %v3100 = vrot.slane %v3016, 2
      %v3101 = vrot.slane %v3016, 4
      %v3102 = vrot.slane %v3016, 6
      %v3103 = vrot.slane %v3017, 2
      %v3104 = vrot.slane %v3017, 4
      %v3105 = vrot.slane %v3018, 2
      %v3106 = vrot.slane %v3018, 4
      %v3107 = vrot.slane %v3018, 6
      %v3108 = vrot.slane %v3019, 2
      %v3109 = vrot.slane %v3019, 4
      %v3110 = vrot.slane %v3019, 6
      %v3111 = vrot.slane %v3020, 2
      %v3112 = vrot.slane %v3020, 4
      %v3113 = vrot.slane %v3020, 6
      %v3114 = vrot.slane %v3021, 2
      %v3115 = vrot.slane %v3021, 4
      %v3116 = vrot.slane %v3021, 6
      %v3117 = vrot.slane %v3022, 4
      %v3118 = vrot.slane %v3022, 6
      %v3119 = vrot.slane %v3023, 2
      %v3120 = vrot.slane %v3023, 4
      %v3121 = vrot.slane %v3023, 6
      %v3122 = vrot.slane %v3024, 2
      %v3123 = vrot.slane %v3024, 6
      %v3124 = vrot.slane %v3025, 2
      %v3125 = vrot.slane %v3025, 4
      %v3126 = vrot.slane %v3025, 6
      %v3127 = vrot.slane %v3026, 2
      %v3128 = vrot.slane %v3026, 4
      %v3129 = vrot.slane %v3027, 2
      %v3130 = vrot.slane %v3027, 4
      %v3131 = vrot.slane %v3027, 6
      %v3132 = vrot.slane %v3028, 2
      %v3133 = vrot.slane %v3028, 4
      %v3134 = vrot.slane %v3028, 6
      %v3135 = vrot.slane %v3029, 2
      %v3136 = vrot.slane %v3029, 4
      %v3137 = vrot.slane %v3029, 6
      %v3138 = vrot.slane %v3030, 2
      %v3139 = vrot.slane %v3030, 4
      %v3140 = vrot.slane %v3030, 6
      %v3141 = vrot.slane %v3031, 4
      %v3142 = vrot.slane %v3031, 6
      %v3143 = vrot.slane %v3032, 2
      %v3144 = vrot.slane %v3032, 4
      %v3145 = vrot.slane %v3032, 6
      %v3146 = vrot.slane %v3033, 2
      %v3147 = vrot.slane %v3033, 6
      %v3148 = vrot.slane %v3034, 2
      %v3149 = vrot.slane %v3034, 4
      %v3150 = vrot.slane %v3034, 6
      %v3151 = vrot.slane %v3035, 2
      %v3152 = vrot.slane %v3035, 4
      %v3153 = vrot.slane %v3036, 2
      %v3154 = vrot.slane %v3036, 4
      %v3155 = vrot.slane %v3036, 6
      %v3156 = vrot.slane %v3037, 2
      %v3157 = vrot.slane %v3037, 4
      %v3158 = vrot.slane %v3037, 6
      %v3159 = vrot.slane %v3038, 2
      %v3160 = vrot.slane %v3038, 4
      %v3161 = vrot.slane %v3038, 6
      %v3162 = vrot.slane %v3039, 2
      %v3163 = vrot.slane %v3039, 4
      %v3164 = vrot.slane %v3039, 6
      %v3165 = vrot.slane %v3040, 4
      %v3166 = vrot.slane %v3040, 6
      %v3167 = vrot.slane %v3041, 2
      %v3168 = vrot.slane %v3041, 4
      %v3169 = vrot.slane %v3041, 6
      %v3170 = vrot.slane %v3042, 2
      %v3171 = vrot.slane %v3042, 6
      %v3172 = vrot.slane %v3043, 2
      %v3173 = vrot.slane %v3043, 4
      %v3174 = vrot.slane %v3043, 6
      %v3175 = vrot.slane %v3044, 2
      %v3176 = vrot.slane %v3044, 4
      %vm3273 = vcmask 58368
      %v3274 = vsel %vm3273, %v3009, -inf
      %v3275 = vrot.slane %v3274, 4
      %v3276 = vmax.f32 %v3274, %v3275
      %v3277 = vrot.slane %v3276, 2
      %v3278 = vmax.f32 %v3276, %v3277
      %v3279 = vrot.slane %v3278, 1
      %v3280 = vmax.f32 %v3278, %v3279
      %v3281 = vsel %vm3273, %v3081, -inf
      %v3282 = vrot.slane %v3281, 4
      %v3283 = vmax.f32 %v3281, %v3282
      %v3284 = vrot.slane %v3283, 2
      %v3285 = vmax.f32 %v3283, %v3284
      %v3286 = vrot.slane %v3285, 1
      %v3287 = vmax.f32 %v3285, %v3286
      %v3288 = vsel %vm3273, %v3082, -inf
      %v3289 = vrot.slane %v3288, 4
      %v3290 = vmax.f32 %v3288, %v3289
      %v3291 = vrot.slane %v3290, 2
      %v3292 = vmax.f32 %v3290, %v3291
      %v3293 = vrot.slane %v3292, 1
      %v3294 = vmax.f32 %v3292, %v3293
      %v3295 = vsel %vm3273, %v3083, -inf
      %v3296 = vrot.slane %v3295, 4
      %v3297 = vmax.f32 %v3295, %v3296
      %v3298 = vrot.slane %v3297, 2
      %v3299 = vmax.f32 %v3297, %v3298
      %v3300 = vrot.slane %v3299, 1
      %v3301 = vmax.f32 %v3299, %v3300
      %v3302 = vsel %vm3273, %v3010, -inf
      %v3303 = vrot.slane %v3302, 4
      %v3304 = vmax.f32 %v3302, %v3303
      %v3305 = vrot.slane %v3304, 2
      %v3306 = vmax.f32 %v3304, %v3305
      %v3307 = vrot.slane %v3306, 1
      %v3308 = vmax.f32 %v3306, %v3307
      %v3309 = vsel %vm3273, %v3084, -inf
      %v3310 = vrot.slane %v3309, 4
      %v3311 = vmax.f32 %v3309, %v3310
      %v3312 = vrot.slane %v3311, 2
      %v3313 = vmax.f32 %v3311, %v3312
      %v3314 = vrot.slane %v3313, 1
      %v3315 = vmax.f32 %v3313, %v3314
      %v3316 = vsel %vm3273, %v3085, -inf
      %v3317 = vrot.slane %v3316, 4
      %v3318 = vmax.f32 %v3316, %v3317
      %v3319 = vrot.slane %v3318, 2
      %v3320 = vmax.f32 %v3318, %v3319
      %v3321 = vrot.slane %v3320, 1
      %v3322 = vmax.f32 %v3320, %v3321
      %v3323 = vsel %vm3273, %v3086, -inf
      %v3324 = vrot.slane %v3323, 4
      %v3325 = vmax.f32 %v3323, %v3324
      %v3326 = vrot.slane %v3325, 2
      %v3327 = vmax.f32 %v3325, %v3326
      %v3328 = vrot.slane %v3327, 1
      %v3329 = vmax.f32 %v3327, %v3328
      %v3330 = vsel %vm3273, %v3087, -inf
      %v3331 = vrot.slane %v3330, 4
      %v3332 = vmax.f32 %v3330, %v3331
      %v3333 = vrot.slane %v3332, 2
      %v3334 = vmax.f32 %v3332, %v3333
      %v3335 = vrot.slane %v3334, 1
      %v3336 = vmax.f32 %v3334, %v3335
      %v3337 = vsel %vm3273, %v3088, -inf
      %v3338 = vrot.slane %v3337, 4
      %v3339 = vmax.f32 %v3337, %v3338
      %v3340 = vrot.slane %v3339, 2
      %v3341 = vmax.f32 %v3339, %v3340
      %v3342 = vrot.slane %v3341, 1
      %v3343 = vmax.f32 %v3341, %v3342
      %v3344 = vsel %vm3273, %v3089, -inf
      %v3345 = vrot.slane %v3344, 4
      %v3346 = vmax.f32 %v3344, %v3345
      %v3347 = vrot.slane %v3346, 2
      %v3348 = vmax.f32 %v3346, %v3347
      %v3349 = vrot.slane %v3348, 1
      %v3350 = vmax.f32 %v3348, %v3349
      %v3351 = vsel %vm3273, %v3012, -inf
      %v3352 = vrot.slane %v3351, 4
      %v3353 = vmax.f32 %v3351, %v3352
      %v3354 = vrot.slane %v3353, 2
      %v3355 = vmax.f32 %v3353, %v3354
      %v3356 = vrot.slane %v3355, 1
      %v3357 = vmax.f32 %v3355, %v3356
      %v3358 = vsel %vm3273, %v3090, -inf
      %v3359 = vrot.slane %v3358, 4
      %v3360 = vmax.f32 %v3358, %v3359
      %v3361 = vrot.slane %v3360, 2
      %v3362 = vmax.f32 %v3360, %v3361
      %v3363 = vrot.slane %v3362, 1
      %v3364 = vmax.f32 %v3362, %v3363
      %v3365 = vsel %vm3273, %v3091, -inf
      %v3366 = vrot.slane %v3365, 4
      %v3367 = vmax.f32 %v3365, %v3366
      %v3368 = vrot.slane %v3367, 2
      %v3369 = vmax.f32 %v3367, %v3368
      %v3370 = vrot.slane %v3369, 1
      %v3371 = vmax.f32 %v3369, %v3370
      %v3372 = vsel %vm3273, %v3092, -inf
      %v3373 = vrot.slane %v3372, 4
      %v3374 = vmax.f32 %v3372, %v3373
      %v3375 = vrot.slane %v3374, 2
      %v3376 = vmax.f32 %v3374, %v3375
      %v3377 = vrot.slane %v3376, 1
      %v3378 = vmax.f32 %v3376, %v3377
      %v3379 = vsel %vm3273, %v3013, -inf
      %v3380 = vrot.slane %v3379, 4
      %v3381 = vmax.f32 %v3379, %v3380
      %v3382 = vrot.slane %v3381, 2
      %v3383 = vmax.f32 %v3381, %v3382
      %v3384 = vrot.slane %v3383, 1
      %v3385 = vmax.f32 %v3383, %v3384
      %v3386 = vsel %vm3273, %v3093, -inf
      %v3387 = vrot.slane %v3386, 4
      %v3388 = vmax.f32 %v3386, %v3387
      %v3389 = vrot.slane %v3388, 2
      %v3390 = vmax.f32 %v3388, %v3389
      %v3391 = vrot.slane %v3390, 1
      %v3392 = vmax.f32 %v3390, %v3391
      %v3393 = vsel %vm3273, %v3094, -inf
      %v3394 = vrot.slane %v3393, 4
      %v3395 = vmax.f32 %v3393, %v3394
      %v3396 = vrot.slane %v3395, 2
      %v3397 = vmax.f32 %v3395, %v3396
      %v3398 = vrot.slane %v3397, 1
      %v3399 = vmax.f32 %v3397, %v3398
      %v3400 = vsel %vm3273, %v3014, -inf
      %v3401 = vrot.slane %v3400, 4
      %v3402 = vmax.f32 %v3400, %v3401
      %v3403 = vrot.slane %v3402, 2
      %v3404 = vmax.f32 %v3402, %v3403
      %v3405 = vrot.slane %v3404, 1
      %v3406 = vmax.f32 %v3404, %v3405
      %v3407 = vsel %vm3273, %v3095, -inf
      %v3408 = vrot.slane %v3407, 4
      %v3409 = vmax.f32 %v3407, %v3408
      %v3410 = vrot.slane %v3409, 2
      %v3411 = vmax.f32 %v3409, %v3410
      %v3412 = vrot.slane %v3411, 1
      %v3413 = vmax.f32 %v3411, %v3412
      %v3414 = vsel %vm3273, %v3096, -inf
      %v3415 = vrot.slane %v3414, 4
      %v3416 = vmax.f32 %v3414, %v3415
      %v3417 = vrot.slane %v3416, 2
      %v3418 = vmax.f32 %v3416, %v3417
      %v3419 = vrot.slane %v3418, 1
      %v3420 = vmax.f32 %v3418, %v3419
      %v3421 = vsel %vm3273, %v3097, -inf
      %v3422 = vrot.slane %v3421, 4
      %v3423 = vmax.f32 %v3421, %v3422
      %v3424 = vrot.slane %v3423, 2
      %v3425 = vmax.f32 %v3423, %v3424
      %v3426 = vrot.slane %v3425, 1
      %v3427 = vmax.f32 %v3425, %v3426
      %v3428 = vsel %vm3273, %v3015, -inf
      %v3429 = vrot.slane %v3428, 4
      %v3430 = vmax.f32 %v3428, %v3429
      %v3431 = vrot.slane %v3430, 2
      %v3432 = vmax.f32 %v3430, %v3431
      %v3433 = vrot.slane %v3432, 1
      %v3434 = vmax.f32 %v3432, %v3433
      %v3435 = vsel %vm3273, %v3098, -inf
      %v3436 = vrot.slane %v3435, 4
      %v3437 = vmax.f32 %v3435, %v3436
      %v3438 = vrot.slane %v3437, 2
      %v3439 = vmax.f32 %v3437, %v3438
      %v3440 = vrot.slane %v3439, 1
      %v3441 = vmax.f32 %v3439, %v3440
      %v3442 = vsel %vm3273, %v3099, -inf
      %v3443 = vrot.slane %v3442, 4
      %v3444 = vmax.f32 %v3442, %v3443
      %v3445 = vrot.slane %v3444, 2
      %v3446 = vmax.f32 %v3444, %v3445
      %v3447 = vrot.slane %v3446, 1
      %v3448 = vmax.f32 %v3446, %v3447
      %v3449 = vsel %vm3273, %v3016, -inf
      %v3450 = vrot.slane %v3449, 4
      %v3451 = vmax.f32 %v3449, %v3450
      %v3452 = vrot.slane %v3451, 2
      %v3453 = vmax.f32 %v3451, %v3452
      %v3454 = vrot.slane %v3453, 1
      %v3455 = vmax.f32 %v3453, %v3454
      %v3456 = vsel %vm3273, %v3100, -inf
      %v3457 = vrot.slane %v3456, 4
      %v3458 = vmax.f32 %v3456, %v3457
      %v3459 = vrot.slane %v3458, 2
      %v3460 = vmax.f32 %v3458, %v3459
      %v3461 = vrot.slane %v3460, 1
      %v3462 = vmax.f32 %v3460, %v3461
      %v3463 = vsel %vm3273, %v3101, -inf
      %v3464 = vrot.slane %v3463, 4
      %v3465 = vmax.f32 %v3463, %v3464
      %v3466 = vrot.slane %v3465, 2
      %v3467 = vmax.f32 %v3465, %v3466
      %v3468 = vrot.slane %v3467, 1
      %v3469 = vmax.f32 %v3467, %v3468
      %v3470 = vsel %vm3273, %v3102, -inf
      %v3471 = vrot.slane %v3470, 4
      %v3472 = vmax.f32 %v3470, %v3471
      %v3473 = vrot.slane %v3472, 2
      %v3474 = vmax.f32 %v3472, %v3473
      %v3475 = vrot.slane %v3474, 1
      %v3476 = vmax.f32 %v3474, %v3475
      %v3477 = vsel %vm3273, %v3017, -inf
      %v3478 = vrot.slane %v3477, 4
      %v3479 = vmax.f32 %v3477, %v3478
      %v3480 = vrot.slane %v3479, 2
      %v3481 = vmax.f32 %v3479, %v3480
      %v3482 = vrot.slane %v3481, 1
      %v3483 = vmax.f32 %v3481, %v3482
      %v3484 = vsel %vm3273, %v3103, -inf
      %v3485 = vrot.slane %v3484, 4
      %v3486 = vmax.f32 %v3484, %v3485
      %v3487 = vrot.slane %v3486, 2
      %v3488 = vmax.f32 %v3486, %v3487
      %v3489 = vrot.slane %v3488, 1
      %v3490 = vmax.f32 %v3488, %v3489
      %v3491 = vsel %vm3273, %v3104, -inf
      %v3492 = vrot.slane %v3491, 4
      %v3493 = vmax.f32 %v3491, %v3492
      %v3494 = vrot.slane %v3493, 2
      %v3495 = vmax.f32 %v3493, %v3494
      %v3496 = vrot.slane %v3495, 1
      %v3497 = vmax.f32 %v3495, %v3496
      %v3498 = vsel %vm3273, %v3018, -inf
      %v3499 = vrot.slane %v3498, 4
      %v3500 = vmax.f32 %v3498, %v3499
      %v3501 = vrot.slane %v3500, 2
      %v3502 = vmax.f32 %v3500, %v3501
      %v3503 = vrot.slane %v3502, 1
      %v3504 = vmax.f32 %v3502, %v3503
      %v3505 = vsel %vm3273, %v3105, -inf
      %v3506 = vrot.slane %v3505, 4
      %v3507 = vmax.f32 %v3505, %v3506
      %v3508 = vrot.slane %v3507, 2
      %v3509 = vmax.f32 %v3507, %v3508
      %v3510 = vrot.slane %v3509, 1
      %v3511 = vmax.f32 %v3509, %v3510
      %v3512 = vsel %vm3273, %v3106, -inf
      %v3513 = vrot.slane %v3512, 4
      %v3514 = vmax.f32 %v3512, %v3513
      %v3515 = vrot.slane %v3514, 2
      %v3516 = vmax.f32 %v3514, %v3515
      %v3517 = vrot.slane %v3516, 1
      %v3518 = vmax.f32 %v3516, %v3517
      %v3519 = vsel %vm3273, %v3107, -inf
      %v3520 = vrot.slane %v3519, 4
      %v3521 = vmax.f32 %v3519, %v3520
      %v3522 = vrot.slane %v3521, 2
      %v3523 = vmax.f32 %v3521, %v3522
      %v3524 = vrot.slane %v3523, 1
      %v3525 = vmax.f32 %v3523, %v3524
      %v3526 = vsel %vm3273, %v3019, -inf
      %v3527 = vrot.slane %v3526, 4
      %v3528 = vmax.f32 %v3526, %v3527
      %v3529 = vrot.slane %v3528, 2
      %v3530 = vmax.f32 %v3528, %v3529
      %v3531 = vrot.slane %v3530, 1
      %v3532 = vmax.f32 %v3530, %v3531
      %v3533 = vsel %vm3273, %v3108, -inf
      %v3534 = vrot.slane %v3533, 4
      %v3535 = vmax.f32 %v3533, %v3534
      %v3536 = vrot.slane %v3535, 2
      %v3537 = vmax.f32 %v3535, %v3536
      %v3538 = vrot.slane %v3537, 1
      %v3539 = vmax.f32 %v3537, %v3538
      %v3540 = vsel %vm3273, %v3109, -inf
      %v3541 = vrot.slane %v3540, 4
      %v3542 = vmax.f32 %v3540, %v3541
      %v3543 = vrot.slane %v3542, 2
      %v3544 = vmax.f32 %v3542, %v3543
      %v3545 = vrot.slane %v3544, 1
      %v3546 = vmax.f32 %v3544, %v3545
      %v3547 = vsel %vm3273, %v3110, -inf
      %v3548 = vrot.slane %v3547, 4
      %v3549 = vmax.f32 %v3547, %v3548
      %v3550 = vrot.slane %v3549, 2
      %v3551 = vmax.f32 %v3549, %v3550
      %v3552 = vrot.slane %v3551, 1
      %v3553 = vmax.f32 %v3551, %v3552
      %v3554 = vsel %vm3273, %v3111, -inf
      %v3555 = vrot.slane %v3554, 4
      %v3556 = vmax.f32 %v3554, %v3555
      %v3557 = vrot.slane %v3556, 2
      %v3558 = vmax.f32 %v3556, %v3557
      %v3559 = vrot.slane %v3558, 1
      %v3560 = vmax.f32 %v3558, %v3559
      %v3561 = vsel %vm3273, %v3112, -inf
      %v3562 = vrot.slane %v3561, 4
      %v3563 = vmax.f32 %v3561, %v3562
      %v3564 = vrot.slane %v3563, 2
      %v3565 = vmax.f32 %v3563, %v3564
      %v3566 = vrot.slane %v3565, 1
      %v3567 = vmax.f32 %v3565, %v3566
      %v3568 = vsel %vm3273, %v3113, -inf
      %v3569 = vrot.slane %v3568, 4
      %v3570 = vmax.f32 %v3568, %v3569
      %v3571 = vrot.slane %v3570, 2
      %v3572 = vmax.f32 %v3570, %v3571
      %v3573 = vrot.slane %v3572, 1
      %v3574 = vmax.f32 %v3572, %v3573
      %v3575 = vsel %vm3273, %v3021, -inf
      %v3576 = vrot.slane %v3575, 4
      %v3577 = vmax.f32 %v3575, %v3576
      %v3578 = vrot.slane %v3577, 2
      %v3579 = vmax.f32 %v3577, %v3578
      %v3580 = vrot.slane %v3579, 1
      %v3581 = vmax.f32 %v3579, %v3580
      %v3582 = vsel %vm3273, %v3114, -inf
      %v3583 = vrot.slane %v3582, 4
      %v3584 = vmax.f32 %v3582, %v3583
      %v3585 = vrot.slane %v3584, 2
      %v3586 = vmax.f32 %v3584, %v3585
      %v3587 = vrot.slane %v3586, 1
      %v3588 = vmax.f32 %v3586, %v3587
      %v3589 = vsel %vm3273, %v3115, -inf
      %v3590 = vrot.slane %v3589, 4
      %v3591 = vmax.f32 %v3589, %v3590
      %v3592 = vrot.slane %v3591, 2
      %v3593 = vmax.f32 %v3591, %v3592
      %v3594 = vrot.slane %v3593, 1
      %v3595 = vmax.f32 %v3593, %v3594
      %v3596 = vsel %vm3273, %v3116, -inf
      %v3597 = vrot.slane %v3596, 4
      %v3598 = vmax.f32 %v3596, %v3597
      %v3599 = vrot.slane %v3598, 2
      %v3600 = vmax.f32 %v3598, %v3599
      %v3601 = vrot.slane %v3600, 1
      %v3602 = vmax.f32 %v3600, %v3601
      %v3603 = vsel %vm3273, %v3022, -inf
      %v3604 = vrot.slane %v3603, 4
      %v3605 = vmax.f32 %v3603, %v3604
      %v3606 = vrot.slane %v3605, 2
      %v3607 = vmax.f32 %v3605, %v3606
      %v3608 = vrot.slane %v3607, 1
      %v3609 = vmax.f32 %v3607, %v3608
      %v3610 = vsel %vm3273, %v3117, -inf
      %v3611 = vrot.slane %v3610, 4
      %v3612 = vmax.f32 %v3610, %v3611
      %v3613 = vrot.slane %v3612, 2
      %v3614 = vmax.f32 %v3612, %v3613
      %v3615 = vrot.slane %v3614, 1
      %v3616 = vmax.f32 %v3614, %v3615
      %v3617 = vsel %vm3273, %v3118, -inf
      %v3618 = vrot.slane %v3617, 4
      %v3619 = vmax.f32 %v3617, %v3618
      %v3620 = vrot.slane %v3619, 2
      %v3621 = vmax.f32 %v3619, %v3620
      %v3622 = vrot.slane %v3621, 1
      %v3623 = vmax.f32 %v3621, %v3622
      %v3624 = vsel %vm3273, %v3023, -inf
      %v3625 = vrot.slane %v3624, 4
      %v3626 = vmax.f32 %v3624, %v3625
      %v3627 = vrot.slane %v3626, 2
      %v3628 = vmax.f32 %v3626, %v3627
      %v3629 = vrot.slane %v3628, 1
      %v3630 = vmax.f32 %v3628, %v3629
      %v3631 = vsel %vm3273, %v3119, -inf
      %v3632 = vrot.slane %v3631, 4
      %v3633 = vmax.f32 %v3631, %v3632
      %v3634 = vrot.slane %v3633, 2
      %v3635 = vmax.f32 %v3633, %v3634
      %v3636 = vrot.slane %v3635, 1
      %v3637 = vmax.f32 %v3635, %v3636
      %v3638 = vsel %vm3273, %v3120, -inf
      %v3639 = vrot.slane %v3638, 4
      %v3640 = vmax.f32 %v3638, %v3639
      %v3641 = vrot.slane %v3640, 2
      %v3642 = vmax.f32 %v3640, %v3641
      %v3643 = vrot.slane %v3642, 1
      %v3644 = vmax.f32 %v3642, %v3643
      %v3645 = vsel %vm3273, %v3121, -inf
      %v3646 = vrot.slane %v3645, 4
      %v3647 = vmax.f32 %v3645, %v3646
      %v3648 = vrot.slane %v3647, 2
      %v3649 = vmax.f32 %v3647, %v3648
      %v3650 = vrot.slane %v3649, 1
      %v3651 = vmax.f32 %v3649, %v3650
      %v3652 = vsel %vm3273, %v3024, -inf
      %v3653 = vrot.slane %v3652, 4
      %v3654 = vmax.f32 %v3652, %v3653
      %v3655 = vrot.slane %v3654, 2
      %v3656 = vmax.f32 %v3654, %v3655
      %v3657 = vrot.slane %v3656, 1
      %v3658 = vmax.f32 %v3656, %v3657
      %v3659 = vsel %vm3273, %v3122, -inf
      %v3660 = vrot.slane %v3659, 4
      %v3661 = vmax.f32 %v3659, %v3660
      %v3662 = vrot.slane %v3661, 2
      %v3663 = vmax.f32 %v3661, %v3662
      %v3664 = vrot.slane %v3663, 1
      %v3665 = vmax.f32 %v3663, %v3664
      %v3666 = vsel %vm3273, %v3123, -inf
      %v3667 = vrot.slane %v3666, 4
      %v3668 = vmax.f32 %v3666, %v3667
      %v3669 = vrot.slane %v3668, 2
      %v3670 = vmax.f32 %v3668, %v3669
      %v3671 = vrot.slane %v3670, 1
      %v3672 = vmax.f32 %v3670, %v3671
      %v3673 = vsel %vm3273, %v3025, -inf
      %v3674 = vrot.slane %v3673, 4
      %v3675 = vmax.f32 %v3673, %v3674
      %v3676 = vrot.slane %v3675, 2
      %v3677 = vmax.f32 %v3675, %v3676
      %v3678 = vrot.slane %v3677, 1
      %v3679 = vmax.f32 %v3677, %v3678
      %v3680 = vsel %vm3273, %v3124, -inf
      %v3681 = vrot.slane %v3680, 4
      %v3682 = vmax.f32 %v3680, %v3681
      %v3683 = vrot.slane %v3682, 2
      %v3684 = vmax.f32 %v3682, %v3683
      %v3685 = vrot.slane %v3684, 1
      %v3686 = vmax.f32 %v3684, %v3685
      %v3687 = vsel %vm3273, %v3125, -inf
      %v3688 = vrot.slane %v3687, 4
      %v3689 = vmax.f32 %v3687, %v3688
      %v3690 = vrot.slane %v3689, 2
      %v3691 = vmax.f32 %v3689, %v3690
      %v3692 = vrot.slane %v3691, 1
      %v3693 = vmax.f32 %v3691, %v3692
      %v3694 = vsel %vm3273, %v3126, -inf
      %v3695 = vrot.slane %v3694, 4
      %v3696 = vmax.f32 %v3694, %v3695
      %v3697 = vrot.slane %v3696, 2
      %v3698 = vmax.f32 %v3696, %v3697
      %v3699 = vrot.slane %v3698, 1
      %v3700 = vmax.f32 %v3698, %v3699
      %v3701 = vsel %vm3273, %v3026, -inf
      %v3702 = vrot.slane %v3701, 4
      %v3703 = vmax.f32 %v3701, %v3702
      %v3704 = vrot.slane %v3703, 2
      %v3705 = vmax.f32 %v3703, %v3704
      %v3706 = vrot.slane %v3705, 1
      %v3707 = vmax.f32 %v3705, %v3706
      %v3708 = vsel %vm3273, %v3127, -inf
      %v3709 = vrot.slane %v3708, 4
      %v3710 = vmax.f32 %v3708, %v3709
      %v3711 = vrot.slane %v3710, 2
      %v3712 = vmax.f32 %v3710, %v3711
      %v3713 = vrot.slane %v3712, 1
      %v3714 = vmax.f32 %v3712, %v3713
      %v3715 = vsel %vm3273, %v3128, -inf
      %v3716 = vrot.slane %v3715, 4
      %v3717 = vmax.f32 %v3715, %v3716
      %v3718 = vrot.slane %v3717, 2
      %v3719 = vmax.f32 %v3717, %v3718
      %v3720 = vrot.slane %v3719, 1
      %v3721 = vmax.f32 %v3719, %v3720
      %v3722 = vsel %vm3273, %v3027, -inf
      %v3723 = vrot.slane %v3722, 4
      %v3724 = vmax.f32 %v3722, %v3723
      %v3725 = vrot.slane %v3724, 2
      %v3726 = vmax.f32 %v3724, %v3725
      %v3727 = vrot.slane %v3726, 1
      %v3728 = vmax.f32 %v3726, %v3727
      %v3729 = vsel %vm3273, %v3129, -inf
      %v3730 = vrot.slane %v3729, 4
      %v3731 = vmax.f32 %v3729, %v3730
      %v3732 = vrot.slane %v3731, 2
      %v3733 = vmax.f32 %v3731, %v3732
      %v3734 = vrot.slane %v3733, 1
      %v3735 = vmax.f32 %v3733, %v3734
      %v3736 = vsel %vm3273, %v3130, -inf
      %v3737 = vrot.slane %v3736, 4
      %v3738 = vmax.f32 %v3736, %v3737
      %v3739 = vrot.slane %v3738, 2
      %v3740 = vmax.f32 %v3738, %v3739
      %v3741 = vrot.slane %v3740, 1
      %v3742 = vmax.f32 %v3740, %v3741
      %v3743 = vsel %vm3273, %v3131, -inf
      %v3744 = vrot.slane %v3743, 4
      %v3745 = vmax.f32 %v3743, %v3744
      %v3746 = vrot.slane %v3745, 2
      %v3747 = vmax.f32 %v3745, %v3746
      %v3748 = vrot.slane %v3747, 1
      %v3749 = vmax.f32 %v3747, %v3748
      %v3750 = vsel %vm3273, %v3028, -inf
      %v3751 = vrot.slane %v3750, 4
      %v3752 = vmax.f32 %v3750, %v3751
      %v3753 = vrot.slane %v3752, 2
      %v3754 = vmax.f32 %v3752, %v3753
      %v3755 = vrot.slane %v3754, 1
      %v3756 = vmax.f32 %v3754, %v3755
      %v3757 = vsel %vm3273, %v3132, -inf
      %v3758 = vrot.slane %v3757, 4
      %v3759 = vmax.f32 %v3757, %v3758
      %v3760 = vrot.slane %v3759, 2
      %v3761 = vmax.f32 %v3759, %v3760
      %v3762 = vrot.slane %v3761, 1
      %v3763 = vmax.f32 %v3761, %v3762
      %v3764 = vsel %vm3273, %v3133, -inf
      %v3765 = vrot.slane %v3764, 4
      %v3766 = vmax.f32 %v3764, %v3765
      %v3767 = vrot.slane %v3766, 2
      %v3768 = vmax.f32 %v3766, %v3767
      %v3769 = vrot.slane %v3768, 1
      %v3770 = vmax.f32 %v3768, %v3769
      %v3771 = vsel %vm3273, %v3134, -inf
      %v3772 = vrot.slane %v3771, 4
      %v3773 = vmax.f32 %v3771, %v3772
      %v3774 = vrot.slane %v3773, 2
      %v3775 = vmax.f32 %v3773, %v3774
      %v3776 = vrot.slane %v3775, 1
      %v3777 = vmax.f32 %v3775, %v3776
      %v3778 = vsel %vm3273, %v3135, -inf
      %v3779 = vrot.slane %v3778, 4
      %v3780 = vmax.f32 %v3778, %v3779
      %v3781 = vrot.slane %v3780, 2
      %v3782 = vmax.f32 %v3780, %v3781
      %v3783 = vrot.slane %v3782, 1
      %v3784 = vmax.f32 %v3782, %v3783
      %v3785 = vsel %vm3273, %v3136, -inf
      %v3786 = vrot.slane %v3785, 4
      %v3787 = vmax.f32 %v3785, %v3786
      %v3788 = vrot.slane %v3787, 2
      %v3789 = vmax.f32 %v3787, %v3788
      %v3790 = vrot.slane %v3789, 1
      %v3791 = vmax.f32 %v3789, %v3790
      %v3792 = vsel %vm3273, %v3137, -inf
      %v3793 = vrot.slane %v3792, 4
      %v3794 = vmax.f32 %v3792, %v3793
      %v3795 = vrot.slane %v3794, 2
      %v3796 = vmax.f32 %v3794, %v3795
      %v3797 = vrot.slane %v3796, 1
      %v3798 = vmax.f32 %v3796, %v3797
      %v3799 = vsel %vm3273, %v3030, -inf
      %v3800 = vrot.slane %v3799, 4
      %v3801 = vmax.f32 %v3799, %v3800
      %v3802 = vrot.slane %v3801, 2
      %v3803 = vmax.f32 %v3801, %v3802
      %v3804 = vrot.slane %v3803, 1
      %v3805 = vmax.f32 %v3803, %v3804
      %v3806 = vsel %vm3273, %v3138, -inf
      %v3807 = vrot.slane %v3806, 4
      %v3808 = vmax.f32 %v3806, %v3807
      %v3809 = vrot.slane %v3808, 2
      %v3810 = vmax.f32 %v3808, %v3809
      %v3811 = vrot.slane %v3810, 1
      %v3812 = vmax.f32 %v3810, %v3811
      %v3813 = vsel %vm3273, %v3139, -inf
      %v3814 = vrot.slane %v3813, 4
      %v3815 = vmax.f32 %v3813, %v3814
      %v3816 = vrot.slane %v3815, 2
      %v3817 = vmax.f32 %v3815, %v3816
      %v3818 = vrot.slane %v3817, 1
      %v3819 = vmax.f32 %v3817, %v3818
      %v3820 = vsel %vm3273, %v3140, -inf
      %v3821 = vrot.slane %v3820, 4
      %v3822 = vmax.f32 %v3820, %v3821
      %v3823 = vrot.slane %v3822, 2
      %v3824 = vmax.f32 %v3822, %v3823
      %v3825 = vrot.slane %v3824, 1
      %v3826 = vmax.f32 %v3824, %v3825
      %v3827 = vsel %vm3273, %v3031, -inf
      %v3828 = vrot.slane %v3827, 4
      %v3829 = vmax.f32 %v3827, %v3828
      %v3830 = vrot.slane %v3829, 2
      %v3831 = vmax.f32 %v3829, %v3830
      %v3832 = vrot.slane %v3831, 1
      %v3833 = vmax.f32 %v3831, %v3832
      %v3834 = vsel %vm3273, %v3141, -inf
      %v3835 = vrot.slane %v3834, 4
      %v3836 = vmax.f32 %v3834, %v3835
      %v3837 = vrot.slane %v3836, 2
      %v3838 = vmax.f32 %v3836, %v3837
      %v3839 = vrot.slane %v3838, 1
      %v3840 = vmax.f32 %v3838, %v3839
      %v3841 = vsel %vm3273, %v3142, -inf
      %v3842 = vrot.slane %v3841, 4
      %v3843 = vmax.f32 %v3841, %v3842
      %v3844 = vrot.slane %v3843, 2
      %v3845 = vmax.f32 %v3843, %v3844
      %v3846 = vrot.slane %v3845, 1
      %v3847 = vmax.f32 %v3845, %v3846
      %v3848 = vsel %vm3273, %v3032, -inf
      %v3849 = vrot.slane %v3848, 4
      %v3850 = vmax.f32 %v3848, %v3849
      %v3851 = vrot.slane %v3850, 2
      %v3852 = vmax.f32 %v3850, %v3851
      %v3853 = vrot.slane %v3852, 1
      %v3854 = vmax.f32 %v3852, %v3853
      %v3855 = vsel %vm3273, %v3143, -inf
      %v3856 = vrot.slane %v3855, 4
      %v3857 = vmax.f32 %v3855, %v3856
      %v3858 = vrot.slane %v3857, 2
      %v3859 = vmax.f32 %v3857, %v3858
      %v3860 = vrot.slane %v3859, 1
      %v3861 = vmax.f32 %v3859, %v3860
      %v3862 = vsel %vm3273, %v3144, -inf
      %v3863 = vrot.slane %v3862, 4
      %v3864 = vmax.f32 %v3862, %v3863
      %v3865 = vrot.slane %v3864, 2
      %v3866 = vmax.f32 %v3864, %v3865
      %v3867 = vrot.slane %v3866, 1
      %v3868 = vmax.f32 %v3866, %v3867
      %v3869 = vsel %vm3273, %v3145, -inf
      %v3870 = vrot.slane %v3869, 4
      %v3871 = vmax.f32 %v3869, %v3870
      %v3872 = vrot.slane %v3871, 2
      %v3873 = vmax.f32 %v3871, %v3872
      %v3874 = vrot.slane %v3873, 1
      %v3875 = vmax.f32 %v3873, %v3874
      %v3876 = vsel %vm3273, %v3033, -inf
      %v3877 = vrot.slane %v3876, 4
      %v3878 = vmax.f32 %v3876, %v3877
      %v3879 = vrot.slane %v3878, 2
      %v3880 = vmax.f32 %v3878, %v3879
      %v3881 = vrot.slane %v3880, 1
      %v3882 = vmax.f32 %v3880, %v3881
      %v3883 = vsel %vm3273, %v3146, -inf
      %v3884 = vrot.slane %v3883, 4
      %v3885 = vmax.f32 %v3883, %v3884
      %v3886 = vrot.slane %v3885, 2
      %v3887 = vmax.f32 %v3885, %v3886
      %v3888 = vrot.slane %v3887, 1
      %v3889 = vmax.f32 %v3887, %v3888
      %v3890 = vsel %vm3273, %v3147, -inf
      %v3891 = vrot.slane %v3890, 4
      %v3892 = vmax.f32 %v3890, %v3891
      %v3893 = vrot.slane %v3892, 2
      %v3894 = vmax.f32 %v3892, %v3893
      %v3895 = vrot.slane %v3894, 1
      %v3896 = vmax.f32 %v3894, %v3895
      %v3897 = vsel %vm3273, %v3034, -inf
      %v3898 = vrot.slane %v3897, 4
      %v3899 = vmax.f32 %v3897, %v3898
      %v3900 = vrot.slane %v3899, 2
      %v3901 = vmax.f32 %v3899, %v3900
      %v3902 = vrot.slane %v3901, 1
      %v3903 = vmax.f32 %v3901, %v3902
      %v3904 = vsel %vm3273, %v3148, -inf
      %v3905 = vrot.slane %v3904, 4
      %v3906 = vmax.f32 %v3904, %v3905
      %v3907 = vrot.slane %v3906, 2
      %v3908 = vmax.f32 %v3906, %v3907
      %v3909 = vrot.slane %v3908, 1
      %v3910 = vmax.f32 %v3908, %v3909
      %v3911 = vsel %vm3273, %v3149, -inf
      %v3912 = vrot.slane %v3911, 4
      %v3913 = vmax.f32 %v3911, %v3912
      %v3914 = vrot.slane %v3913, 2
      %v3915 = vmax.f32 %v3913, %v3914
      %v3916 = vrot.slane %v3915, 1
      %v3917 = vmax.f32 %v3915, %v3916
      %v3918 = vsel %vm3273, %v3150, -inf
      %v3919 = vrot.slane %v3918, 4
      %v3920 = vmax.f32 %v3918, %v3919
      %v3921 = vrot.slane %v3920, 2
      %v3922 = vmax.f32 %v3920, %v3921
      %v3923 = vrot.slane %v3922, 1
      %v3924 = vmax.f32 %v3922, %v3923
      %v3925 = vsel %vm3273, %v3035, -inf
      %v3926 = vrot.slane %v3925, 4
      %v3927 = vmax.f32 %v3925, %v3926
      %v3928 = vrot.slane %v3927, 2
      %v3929 = vmax.f32 %v3927, %v3928
      %v3930 = vrot.slane %v3929, 1
      %v3931 = vmax.f32 %v3929, %v3930
      %v3932 = vsel %vm3273, %v3151, -inf
      %v3933 = vrot.slane %v3932, 4
      %v3934 = vmax.f32 %v3932, %v3933
      %v3935 = vrot.slane %v3934, 2
      %v3936 = vmax.f32 %v3934, %v3935
      %v3937 = vrot.slane %v3936, 1
      %v3938 = vmax.f32 %v3936, %v3937
      %v3939 = vsel %vm3273, %v3152, -inf
      %v3940 = vrot.slane %v3939, 4
      %v3941 = vmax.f32 %v3939, %v3940
      %v3942 = vrot.slane %v3941, 2
      %v3943 = vmax.f32 %v3941, %v3942
      %v3944 = vrot.slane %v3943, 1
      %v3945 = vmax.f32 %v3943, %v3944
      %v3946 = vsel %vm3273, %v3036, -inf
      %v3947 = vrot.slane %v3946, 4
      %v3948 = vmax.f32 %v3946, %v3947
      %v3949 = vrot.slane %v3948, 2
      %v3950 = vmax.f32 %v3948, %v3949
      %v3951 = vrot.slane %v3950, 1
      %v3952 = vmax.f32 %v3950, %v3951
      %v3953 = vsel %vm3273, %v3153, -inf
      %v3954 = vrot.slane %v3953, 4
      %v3955 = vmax.f32 %v3953, %v3954
      %v3956 = vrot.slane %v3955, 2
      %v3957 = vmax.f32 %v3955, %v3956
      %v3958 = vrot.slane %v3957, 1
      %v3959 = vmax.f32 %v3957, %v3958
      %v3960 = vsel %vm3273, %v3154, -inf
      %v3961 = vrot.slane %v3960, 4
      %v3962 = vmax.f32 %v3960, %v3961
      %v3963 = vrot.slane %v3962, 2
      %v3964 = vmax.f32 %v3962, %v3963
      %v3965 = vrot.slane %v3964, 1
      %v3966 = vmax.f32 %v3964, %v3965
      %v3967 = vsel %vm3273, %v3155, -inf
      %v3968 = vrot.slane %v3967, 4
      %v3969 = vmax.f32 %v3967, %v3968
      %v3970 = vrot.slane %v3969, 2
      %v3971 = vmax.f32 %v3969, %v3970
      %v3972 = vrot.slane %v3971, 1
      %v3973 = vmax.f32 %v3971, %v3972
      %v3974 = vsel %vm3273, %v3037, -inf
      %v3975 = vrot.slane %v3974, 4
      %v3976 = vmax.f32 %v3974, %v3975
      %v3977 = vrot.slane %v3976, 2
      %v3978 = vmax.f32 %v3976, %v3977
      %v3979 = vrot.slane %v3978, 1
      %v3980 = vmax.f32 %v3978, %v3979
      %v3981 = vsel %vm3273, %v3156, -inf
      %v3982 = vrot.slane %v3981, 4
      %v3983 = vmax.f32 %v3981, %v3982
      %v3984 = vrot.slane %v3983, 2
      %v3985 = vmax.f32 %v3983, %v3984
      %v3986 = vrot.slane %v3985, 1
      %v3987 = vmax.f32 %v3985, %v3986
      %v3988 = vsel %vm3273, %v3157, -inf
      %v3989 = vrot.slane %v3988, 4
      %v3990 = vmax.f32 %v3988, %v3989
      %v3991 = vrot.slane %v3990, 2
      %v3992 = vmax.f32 %v3990, %v3991
      %v3993 = vrot.slane %v3992, 1
      %v3994 = vmax.f32 %v3992, %v3993
      %v3995 = vsel %vm3273, %v3158, -inf
      %v3996 = vrot.slane %v3995, 4
      %v3997 = vmax.f32 %v3995, %v3996
      %v3998 = vrot.slane %v3997, 2
      %v3999 = vmax.f32 %v3997, %v3998
      %v4000 = vrot.slane %v3999, 1
      %v4001 = vmax.f32 %v3999, %v4000
      %v4002 = vsel %vm3273, %v3159, -inf
      %v4003 = vrot.slane %v4002, 4
      %v4004 = vmax.f32 %v4002, %v4003
      %v4005 = vrot.slane %v4004, 2
      %v4006 = vmax.f32 %v4004, %v4005
      %v4007 = vrot.slane %v4006, 1
      %v4008 = vmax.f32 %v4006, %v4007
      %v4009 = vsel %vm3273, %v3160, -inf
      %v4010 = vrot.slane %v4009, 4
      %v4011 = vmax.f32 %v4009, %v4010
      %v4012 = vrot.slane %v4011, 2
      %v4013 = vmax.f32 %v4011, %v4012
      %v4014 = vrot.slane %v4013, 1
      %v4015 = vmax.f32 %v4013, %v4014
      %v4016 = vsel %vm3273, %v3161, -inf
      %v4017 = vrot.slane %v4016, 4
      %v4018 = vmax.f32 %v4016, %v4017
      %v4019 = vrot.slane %v4018, 2
      %v4020 = vmax.f32 %v4018, %v4019
      %v4021 = vrot.slane %v4020, 1
      %v4022 = vmax.f32 %v4020, %v4021
      %v4023 = vsel %vm3273, %v3039, -inf
      %v4024 = vrot.slane %v4023, 4
      %v4025 = vmax.f32 %v4023, %v4024
      %v4026 = vrot.slane %v4025, 2
      %v4027 = vmax.f32 %v4025, %v4026
      %v4028 = vrot.slane %v4027, 1
      %v4029 = vmax.f32 %v4027, %v4028
      %v4030 = vsel %vm3273, %v3162, -inf
      %v4031 = vrot.slane %v4030, 4
      %v4032 = vmax.f32 %v4030, %v4031
      %v4033 = vrot.slane %v4032, 2
      %v4034 = vmax.f32 %v4032, %v4033
      %v4035 = vrot.slane %v4034, 1
      %v4036 = vmax.f32 %v4034, %v4035
      %v4037 = vsel %vm3273, %v3163, -inf
      %v4038 = vrot.slane %v4037, 4
      %v4039 = vmax.f32 %v4037, %v4038
      %v4040 = vrot.slane %v4039, 2
      %v4041 = vmax.f32 %v4039, %v4040
      %v4042 = vrot.slane %v4041, 1
      %v4043 = vmax.f32 %v4041, %v4042
      %v4044 = vsel %vm3273, %v3164, -inf
      %v4045 = vrot.slane %v4044, 4
      %v4046 = vmax.f32 %v4044, %v4045
      %v4047 = vrot.slane %v4046, 2
      %v4048 = vmax.f32 %v4046, %v4047
      %v4049 = vrot.slane %v4048, 1
      %v4050 = vmax.f32 %v4048, %v4049
      %v4051 = vsel %vm3273, %v3040, -inf
      %v4052 = vrot.slane %v4051, 4
      %v4053 = vmax.f32 %v4051, %v4052
      %v4054 = vrot.slane %v4053, 2
      %v4055 = vmax.f32 %v4053, %v4054
      %v4056 = vrot.slane %v4055, 1
      %v4057 = vmax.f32 %v4055, %v4056
      %v4058 = vsel %vm3273, %v3165, -inf
      %v4059 = vrot.slane %v4058, 4
      %v4060 = vmax.f32 %v4058, %v4059
      %v4061 = vrot.slane %v4060, 2
      %v4062 = vmax.f32 %v4060, %v4061
      %v4063 = vrot.slane %v4062, 1
      %v4064 = vmax.f32 %v4062, %v4063
      %v4065 = vsel %vm3273, %v3166, -inf
      %v4066 = vrot.slane %v4065, 4
      %v4067 = vmax.f32 %v4065, %v4066
      %v4068 = vrot.slane %v4067, 2
      %v4069 = vmax.f32 %v4067, %v4068
      %v4070 = vrot.slane %v4069, 1
      %v4071 = vmax.f32 %v4069, %v4070
      %v4072 = vsel %vm3273, %v3041, -inf
      %v4073 = vrot.slane %v4072, 4
      %v4074 = vmax.f32 %v4072, %v4073
      %v4075 = vrot.slane %v4074, 2
      %v4076 = vmax.f32 %v4074, %v4075
      %v4077 = vrot.slane %v4076, 1
      %v4078 = vmax.f32 %v4076, %v4077
      %v4079 = vsel %vm3273, %v3167, -inf
      %v4080 = vrot.slane %v4079, 4
      %v4081 = vmax.f32 %v4079, %v4080
      %v4082 = vrot.slane %v4081, 2
      %v4083 = vmax.f32 %v4081, %v4082
      %v4084 = vrot.slane %v4083, 1
      %v4085 = vmax.f32 %v4083, %v4084
      %v4086 = vsel %vm3273, %v3168, -inf
      %v4087 = vrot.slane %v4086, 4
      %v4088 = vmax.f32 %v4086, %v4087
      %v4089 = vrot.slane %v4088, 2
      %v4090 = vmax.f32 %v4088, %v4089
      %v4091 = vrot.slane %v4090, 1
      %v4092 = vmax.f32 %v4090, %v4091
      %v4093 = vsel %vm3273, %v3169, -inf
      %v4094 = vrot.slane %v4093, 4
      %v4095 = vmax.f32 %v4093, %v4094
      %v4096 = vrot.slane %v4095, 2
      %v4097 = vmax.f32 %v4095, %v4096
      %v4098 = vrot.slane %v4097, 1
      %v4099 = vmax.f32 %v4097, %v4098
      %v4100 = vsel %vm3273, %v3042, -inf
      %v4101 = vrot.slane %v4100, 4
      %v4102 = vmax.f32 %v4100, %v4101
      %v4103 = vrot.slane %v4102, 2
      %v4104 = vmax.f32 %v4102, %v4103
      %v4105 = vrot.slane %v4104, 1
      %v4106 = vmax.f32 %v4104, %v4105
      %v4107 = vsel %vm3273, %v3170, -inf
      %v4108 = vrot.slane %v4107, 4
      %v4109 = vmax.f32 %v4107, %v4108
      %v4110 = vrot.slane %v4109, 2
      %v4111 = vmax.f32 %v4109, %v4110
      %v4112 = vrot.slane %v4111, 1
      %v4113 = vmax.f32 %v4111, %v4112
      %v4114 = vsel %vm3273, %v3171, -inf
      %v4115 = vrot.slane %v4114, 4
      %v4116 = vmax.f32 %v4114, %v4115
      %v4117 = vrot.slane %v4116, 2
      %v4118 = vmax.f32 %v4116, %v4117
      %v4119 = vrot.slane %v4118, 1
      %v4120 = vmax.f32 %v4118, %v4119
      %v4121 = vsel %vm3273, %v3043, -inf
      %v4122 = vrot.slane %v4121, 4
      %v4123 = vmax.f32 %v4121, %v4122
      %v4124 = vrot.slane %v4123, 2
      %v4125 = vmax.f32 %v4123, %v4124
      %v4126 = vrot.slane %v4125, 1
      %v4127 = vmax.f32 %v4125, %v4126
      %v4128 = vsel %vm3273, %v3172, -inf
      %v4129 = vrot.slane %v4128, 4
      %v4130 = vmax.f32 %v4128, %v4129
      %v4131 = vrot.slane %v4130, 2
      %v4132 = vmax.f32 %v4130, %v4131
      %v4133 = vrot.slane %v4132, 1
      %v4134 = vmax.f32 %v4132, %v4133
      %v4135 = vsel %vm3273, %v3173, -inf
      %v4136 = vrot.slane %v4135, 4
      %v4137 = vmax.f32 %v4135, %v4136
      %v4138 = vrot.slane %v4137, 2
      %v4139 = vmax.f32 %v4137, %v4138
      %v4140 = vrot.slane %v4139, 1
      %v4141 = vmax.f32 %v4139, %v4140
      %v4142 = vsel %vm3273, %v3174, -inf
      %v4143 = vrot.slane %v4142, 4
      %v4144 = vmax.f32 %v4142, %v4143
      %v4145 = vrot.slane %v4144, 2
      %v4146 = vmax.f32 %v4144, %v4145
      %v4147 = vrot.slane %v4146, 1
      %v4148 = vmax.f32 %v4146, %v4147
      %v4149 = vsel %vm3273, %v3044, -inf
      %v4150 = vrot.slane %v4149, 4
      %v4151 = vmax.f32 %v4149, %v4150
      %v4152 = vrot.slane %v4151, 2
      %v4153 = vmax.f32 %v4151, %v4152
      %v4154 = vrot.slane %v4153, 1
      %v4155 = vmax.f32 %v4153, %v4154
      %v4156 = vsel %vm3273, %v3175, -inf
      %v4157 = vrot.slane %v4156, 4
      %v4158 = vmax.f32 %v4156, %v4157
      %v4159 = vrot.slane %v4158, 2
      %v4160 = vmax.f32 %v4158, %v4159
      %v4161 = vrot.slane %v4160, 1
      %v4162 = vmax.f32 %v4160, %v4161
      %v4163 = vsel %vm3273, %v3176, -inf
      %v4164 = vrot.slane %v4163, 4
      %v4165 = vmax.f32 %v4163, %v4164
      %v4166 = vrot.slane %v4165, 2
      %v4167 = vmax.f32 %v4165, %v4166
      %v4168 = vrot.slane %v4167, 1
      %v4169 = vmax.f32 %v4167, %v4168
      %v4170 = vsel %vm505, %v3280, -inf
      %v4171 = vsel %vm505, %v3336, -inf
      %v4172 = vmax.f32 %v4170, %v4171
      %v4173 = vsel %vm505, %v3287, -inf
      %v4174 = vsel %vm505, %v3343, -inf
      %v4175 = vmax.f32 %v4173, %v4174
      %v4176 = vsel %vm505, %v3294, -inf
      %v4177 = vsel %vm505, %v3350, -inf
      %v4178 = vmax.f32 %v4176, %v4177
      %v4179 = vsel %vm505, %v3301, -inf
      %v4180 = vsel %vm505, %v3357, -inf
      %v4181 = vmax.f32 %v4179, %v4180
      %v4182 = vsel %vm505, %v3308, -inf
      %v4183 = vsel %vm505, %v3364, -inf
      %v4184 = vmax.f32 %v4182, %v4183
      %v4185 = vsel %vm505, %v3315, -inf
      %v4186 = vsel %vm505, %v3371, -inf
      %v4187 = vmax.f32 %v4185, %v4186
      %v4188 = vsel %vm505, %v3322, -inf
      %v4189 = vsel %vm505, %v3378, -inf
      %v4190 = vmax.f32 %v4188, %v4189
      %v4191 = vsel %vm505, %v3329, -inf
      %v4192 = vsel %vm505, %v3385, -inf
      %v4193 = vmax.f32 %v4191, %v4192
      %v4194 = vsel %vm505, %v3392, -inf
      %v4195 = vsel %vm505, %v3448, -inf
      %v4196 = vmax.f32 %v4194, %v4195
      %v4197 = vsel %vm505, %v3399, -inf
      %v4198 = vsel %vm505, %v3455, -inf
      %v4199 = vmax.f32 %v4197, %v4198
      %v4200 = vsel %vm505, %v3406, -inf
      %v4201 = vsel %vm505, %v3462, -inf
      %v4202 = vmax.f32 %v4200, %v4201
      %v4203 = vsel %vm505, %v3413, -inf
      %v4204 = vsel %vm505, %v3469, -inf
      %v4205 = vmax.f32 %v4203, %v4204
      %v4206 = vsel %vm505, %v3420, -inf
      %v4207 = vsel %vm505, %v3476, -inf
      %v4208 = vmax.f32 %v4206, %v4207
      %v4209 = vsel %vm505, %v3427, -inf
      %v4210 = vsel %vm505, %v3483, -inf
      %v4211 = vmax.f32 %v4209, %v4210
      %v4212 = vsel %vm505, %v3434, -inf
      %v4213 = vsel %vm505, %v3490, -inf
      %v4214 = vmax.f32 %v4212, %v4213
      %v4215 = vsel %vm505, %v3441, -inf
      %v4216 = vsel %vm505, %v3497, -inf
      %v4217 = vmax.f32 %v4215, %v4216
      %v4218 = vsel %vm505, %v3504, -inf
      %v4219 = vsel %vm505, %v3560, -inf
      %v4220 = vmax.f32 %v4218, %v4219
      %v4221 = vsel %vm505, %v3511, -inf
      %v4222 = vsel %vm505, %v3567, -inf
      %v4223 = vmax.f32 %v4221, %v4222
      %v4224 = vsel %vm505, %v3518, -inf
      %v4225 = vsel %vm505, %v3574, -inf
      %v4226 = vmax.f32 %v4224, %v4225
      %v4227 = vsel %vm505, %v3525, -inf
      %v4228 = vsel %vm505, %v3581, -inf
      %v4229 = vmax.f32 %v4227, %v4228
      %v4230 = vsel %vm505, %v3532, -inf
      %v4231 = vsel %vm505, %v3588, -inf
      %v4232 = vmax.f32 %v4230, %v4231
      %v4233 = vsel %vm505, %v3539, -inf
      %v4234 = vsel %vm505, %v3595, -inf
      %v4235 = vmax.f32 %v4233, %v4234
      %v4236 = vsel %vm505, %v3546, -inf
      %v4237 = vsel %vm505, %v3602, -inf
      %v4238 = vmax.f32 %v4236, %v4237
      %v4239 = vsel %vm505, %v3553, -inf
      %v4240 = vsel %vm505, %v3609, -inf
      %v4241 = vmax.f32 %v4239, %v4240
      %v4242 = vsel %vm505, %v3616, -inf
      %v4243 = vsel %vm505, %v3672, -inf
      %v4244 = vmax.f32 %v4242, %v4243
      %v4245 = vsel %vm505, %v3623, -inf
      %v4246 = vsel %vm505, %v3679, -inf
      %v4247 = vmax.f32 %v4245, %v4246
      %v4248 = vsel %vm505, %v3630, -inf
      %v4249 = vsel %vm505, %v3686, -inf
      %v4250 = vmax.f32 %v4248, %v4249
      %v4251 = vsel %vm505, %v3637, -inf
      %v4252 = vsel %vm505, %v3693, -inf
      %v4253 = vmax.f32 %v4251, %v4252
      %v4254 = vsel %vm505, %v3644, -inf
      %v4255 = vsel %vm505, %v3700, -inf
      %v4256 = vmax.f32 %v4254, %v4255
      %v4257 = vsel %vm505, %v3651, -inf
      %v4258 = vsel %vm505, %v3707, -inf
      %v4259 = vmax.f32 %v4257, %v4258
      %v4260 = vsel %vm505, %v3658, -inf
      %v4261 = vsel %vm505, %v3714, -inf
      %v4262 = vmax.f32 %v4260, %v4261
      %v4263 = vsel %vm505, %v3665, -inf
      %v4264 = vsel %vm505, %v3721, -inf
      %v4265 = vmax.f32 %v4263, %v4264
      %v4266 = vsel %vm505, %v3728, -inf
      %v4267 = vsel %vm505, %v3784, -inf
      %v4268 = vmax.f32 %v4266, %v4267
      %v4269 = vsel %vm505, %v3735, -inf
      %v4270 = vsel %vm505, %v3791, -inf
      %v4271 = vmax.f32 %v4269, %v4270
      %v4272 = vsel %vm505, %v3742, -inf
      %v4273 = vsel %vm505, %v3798, -inf
      %v4274 = vmax.f32 %v4272, %v4273
      %v4275 = vsel %vm505, %v3749, -inf
      %v4276 = vsel %vm505, %v3805, -inf
      %v4277 = vmax.f32 %v4275, %v4276
      %v4278 = vsel %vm505, %v3756, -inf
      %v4279 = vsel %vm505, %v3812, -inf
      %v4280 = vmax.f32 %v4278, %v4279
      %v4281 = vsel %vm505, %v3763, -inf
      %v4282 = vsel %vm505, %v3819, -inf
      %v4283 = vmax.f32 %v4281, %v4282
      %v4284 = vsel %vm505, %v3770, -inf
      %v4285 = vsel %vm505, %v3826, -inf
      %v4286 = vmax.f32 %v4284, %v4285
      %v4287 = vsel %vm505, %v3777, -inf
      %v4288 = vsel %vm505, %v3833, -inf
      %v4289 = vmax.f32 %v4287, %v4288
      %v4290 = vsel %vm505, %v3840, -inf
      %v4291 = vsel %vm505, %v3896, -inf
      %v4292 = vmax.f32 %v4290, %v4291
      %v4293 = vsel %vm505, %v3847, -inf
      %v4294 = vsel %vm505, %v3903, -inf
      %v4295 = vmax.f32 %v4293, %v4294
      %v4296 = vsel %vm505, %v3854, -inf
      %v4297 = vsel %vm505, %v3910, -inf
      %v4298 = vmax.f32 %v4296, %v4297
      %v4299 = vsel %vm505, %v3861, -inf
      %v4300 = vsel %vm505, %v3917, -inf
      %v4301 = vmax.f32 %v4299, %v4300
      %v4302 = vsel %vm505, %v3868, -inf
      %v4303 = vsel %vm505, %v3924, -inf
      %v4304 = vmax.f32 %v4302, %v4303
      %v4305 = vsel %vm505, %v3875, -inf
      %v4306 = vsel %vm505, %v3931, -inf
      %v4307 = vmax.f32 %v4305, %v4306
      %v4308 = vsel %vm505, %v3882, -inf
      %v4309 = vsel %vm505, %v3938, -inf
      %v4310 = vmax.f32 %v4308, %v4309
      %v4311 = vsel %vm505, %v3889, -inf
      %v4312 = vsel %vm505, %v3945, -inf
      %v4313 = vmax.f32 %v4311, %v4312
      %v4314 = vsel %vm505, %v3952, -inf
      %v4315 = vsel %vm505, %v4008, -inf
      %v4316 = vmax.f32 %v4314, %v4315
      %v4317 = vsel %vm505, %v3959, -inf
      %v4318 = vsel %vm505, %v4015, -inf
      %v4319 = vmax.f32 %v4317, %v4318
      %v4320 = vsel %vm505, %v3966, -inf
      %v4321 = vsel %vm505, %v4022, -inf
      %v4322 = vmax.f32 %v4320, %v4321
      %v4323 = vsel %vm505, %v3973, -inf
      %v4324 = vsel %vm505, %v4029, -inf
      %v4325 = vmax.f32 %v4323, %v4324
      %v4326 = vsel %vm505, %v3980, -inf
      %v4327 = vsel %vm505, %v4036, -inf
      %v4328 = vmax.f32 %v4326, %v4327
      %v4329 = vsel %vm505, %v3987, -inf
      %v4330 = vsel %vm505, %v4043, -inf
      %v4331 = vmax.f32 %v4329, %v4330
      %v4332 = vsel %vm505, %v3994, -inf
      %v4333 = vsel %vm505, %v4050, -inf
      %v4334 = vmax.f32 %v4332, %v4333
      %v4335 = vsel %vm505, %v4001, -inf
      %v4336 = vsel %vm505, %v4057, -inf
      %v4337 = vmax.f32 %v4335, %v4336
      %v4338 = vsel %vm505, %v4064, -inf
      %v4339 = vsel %vm505, %v4120, -inf
      %v4340 = vmax.f32 %v4338, %v4339
      %v4341 = vsel %vm505, %v4071, -inf
      %v4342 = vsel %vm505, %v4127, -inf
      %v4343 = vmax.f32 %v4341, %v4342
      %v4344 = vsel %vm505, %v4078, -inf
      %v4345 = vsel %vm505, %v4134, -inf
      %v4346 = vmax.f32 %v4344, %v4345
      %v4347 = vsel %vm505, %v4085, -inf
      %v4348 = vsel %vm505, %v4141, -inf
      %v4349 = vmax.f32 %v4347, %v4348
      %v4350 = vsel %vm505, %v4092, -inf
      %v4351 = vsel %vm505, %v4148, -inf
      %v4352 = vmax.f32 %v4350, %v4351
      %v4353 = vsel %vm505, %v4099, -inf
      %v4354 = vsel %vm505, %v4155, -inf
      %v4355 = vmax.f32 %v4353, %v4354
      %v4356 = vsel %vm505, %v4106, -inf
      %v4357 = vsel %vm505, %v4162, -inf
      %v4358 = vmax.f32 %v4356, %v4357
      %v4359 = vsel %vm505, %v4113, -inf
      %v4360 = vsel %vm505, %v4169, -inf
      %v4361 = vmax.f32 %v4359, %v4360
      %vm4426 = vcmask 1041409
      %v4427 = vsel %vm4426, %v4175, %v4172
      %vm4428 = vcmask 1042434
      %v4429 = vsel %vm4428, %v4178, %v4427
      %vm4430 = vcmask 1043459
      %v4431 = vsel %vm4430, %v4181, %v4429
      %vm4432 = vcmask 1044484
      %v4433 = vsel %vm4432, %v4184, %v4431
      %vm4434 = vcmask 1045509
      %v4435 = vsel %vm4434, %v4187, %v4433
      %vm4436 = vcmask 1046534
      %v4437 = vsel %vm4436, %v4190, %v4435
      %vm4438 = vcmask 1047559
      %v4439 = vsel %vm4438, %v4193, %v4437
      %v4440 = vsel %vm4426, %v4199, %v4196
      %v4441 = vsel %vm4428, %v4202, %v4440
      %v4442 = vsel %vm4430, %v4205, %v4441
      %v4443 = vsel %vm4432, %v4208, %v4442
      %v4444 = vsel %vm4434, %v4211, %v4443
      %v4445 = vsel %vm4436, %v4214, %v4444
      %v4446 = vsel %vm4438, %v4217, %v4445
      %v4447 = vsel %vm4426, %v4223, %v4220
      %v4448 = vsel %vm4428, %v4226, %v4447
      %v4449 = vsel %vm4430, %v4229, %v4448
      %v4450 = vsel %vm4432, %v4232, %v4449
      %v4451 = vsel %vm4434, %v4235, %v4450
      %v4452 = vsel %vm4436, %v4238, %v4451
      %v4453 = vsel %vm4438, %v4241, %v4452
      %v4454 = vsel %vm4426, %v4247, %v4244
      %v4455 = vsel %vm4428, %v4250, %v4454
      %v4456 = vsel %vm4430, %v4253, %v4455
      %v4457 = vsel %vm4432, %v4256, %v4456
      %v4458 = vsel %vm4434, %v4259, %v4457
      %v4459 = vsel %vm4436, %v4262, %v4458
      %v4460 = vsel %vm4438, %v4265, %v4459
      %v4461 = vsel %vm4426, %v4271, %v4268
      %v4462 = vsel %vm4428, %v4274, %v4461
      %v4463 = vsel %vm4430, %v4277, %v4462
      %v4464 = vsel %vm4432, %v4280, %v4463
      %v4465 = vsel %vm4434, %v4283, %v4464
      %v4466 = vsel %vm4436, %v4286, %v4465
      %v4467 = vsel %vm4438, %v4289, %v4466
      %v4468 = vsel %vm4426, %v4295, %v4292
      %v4469 = vsel %vm4428, %v4298, %v4468
      %v4470 = vsel %vm4430, %v4301, %v4469
      %v4471 = vsel %vm4432, %v4304, %v4470
      %v4472 = vsel %vm4434, %v4307, %v4471
      %v4473 = vsel %vm4436, %v4310, %v4472
      %v4474 = vsel %vm4438, %v4313, %v4473
      %v4475 = vsel %vm4426, %v4319, %v4316
      %v4476 = vsel %vm4428, %v4322, %v4475
      %v4477 = vsel %vm4430, %v4325, %v4476
      %v4478 = vsel %vm4432, %v4328, %v4477
      %v4479 = vsel %vm4434, %v4331, %v4478
      %v4480 = vsel %vm4436, %v4334, %v4479
      %v4481 = vsel %vm4438, %v4337, %v4480
      %v4482 = vsel %vm4426, %v4343, %v4340
      %v4483 = vsel %vm4428, %v4346, %v4482
      %v4484 = vsel %vm4430, %v4349, %v4483
      %v4485 = vsel %vm4432, %v4352, %v4484
      %v4486 = vsel %vm4434, %v4355, %v4485
      %v4487 = vsel %vm4436, %v4358, %v4486
      %v4488 = vsel %vm4438, %v4361, %v4487
      %4497 = vst.msk [vmem:[%s221] sm:$0xff] %vm505, %v4439
      %4498 = vst.msk [vmem:[%s221 + $0x8] sm:$0xff] %vm505, %v4446
      %4499 = vst.msk [vmem:[%s221 + $0x10] sm:$0xff] %vm505, %v4453
      %4500 = vst.msk [vmem:[%s221 + $0x18] sm:$0xff] %vm505, %v4460
      %4501 = vst.msk [vmem:[%s221 + $0x20] sm:$0xff] %vm505, %v4467
      %4502 = vst.msk [vmem:[%s221 + $0x28] sm:$0xff] %vm505, %v4474
      %4503 = vst.msk [vmem:[%s221 + $0x30] sm:$0xff] %vm505, %v4481
      %4504 = vst.msk [vmem:[%s221 + $0x38] sm:$0xff] %vm505, %v4488
      %p4505 = scmp.lt.s32.totalorder %s18, 1
      %s4506 = scalar_select %p4505, %s18, 1
      %p4507 = scmp.lt.s32.totalorder %s19, 0
      %s4508 = scalar_select %p4507, %s19, 0
      %s4509 = smul.addr %s4506, 8
      %s4510 = sadd.s32 %s4508, %s4509
      %s4511 = smul.addr %s4510, 8
      %s4512 = scalar_lea.vmem %s3, %s4511
      // Predicated region
      $region33: #{vgg_forward.3} parent=31 // pred_check
        %p4513 = pneg %p124
      $region34: #{vgg_forward.3} parent=31 // pred_check_branch
        %4515 = sbr.rel (%p4513) target = $region36
      $region35: #{vgg_forward.3} parent=31 // pred_region
        _
      $region36: #{vgg_forward.3} parent=31 // pred_fallthru
        _
    $region32: #{vgg_forward.3} parent=5 // pred_fallthru
      _
    %p4516 = scmp.le.s32.totalorder 2, %s9
    // Predicated region
    $region37: #{vgg_forward.3} parent=5 // pred_check
      %p4517 = pneg %p4516
    $region38: #{vgg_forward.3} parent=5 // pred_check_branch
      %4519 = sbr.rel (%p4517) target = $region40
    $region39: #{vgg_forward.3} parent=5 // pred_region
      %s4520 = ssub.s32 %s9, 2
      // Predicated region
      $region41: #{vgg_forward.3} parent=39 // pred_check
        %p4521 = pneg %p130
      $region42: #{vgg_forward.3} parent=39 // pred_check_branch
        %4523 = sbr.rel (%p4521) target = $region44
      $region43: #{vgg_forward.3} parent=39 // pred_region
        %p4524 = scmp.lt.s32.totalorder %s20, 1
        %s4525 = scalar_select %p4524, %s20, 1
        %p4526 = scmp.lt.s32.totalorder %s21, 0
        %s4527 = scalar_select %p4526, %s21, 0
        %s4528 = smul.addr %s4525, 8
        %s4529 = sadd.s32 %s4527, %s4528
        %s4530 = smul.addr %s4529, 8
        %s4531 = scalar_lea.vmem %s3, %s4530
      $region44: #{vgg_forward.3} parent=39 // pred_fallthru
        _
    $region40: #{vgg_forward.3} parent=5 // pred_fallthru
      _
  $region6: #{vgg_forward.3} parent=0 // loop_footer
    %s13 = sadd.s32 1, %s9
  $region7: #{vgg_forward.3} parent=0 // loop_footer_branch
    %8 = sbr.rel target = $region3
  $region8: #{vgg_forward.3} parent=0 // loop_exit
    _

// kernel: vgg_forward.2
$region0: #{vgg_forward.2}
  #allocation0 [shape = 'u32[]', space=smem, size = 0x4, offset = 0x4, fixed_abs, tag = 'smem constant byte address 0x4 - core index']
  #allocation1 [shape = 'u32[72,128]{1,0:T(1,128)}', space=vmem, size = 0x9000, scoped, tag = 'internal scratch']
  %s0 = inlined_call_operand.vmem [shape: bf16[2,342,4], index: 0, kind: input, shape index: {}]
  %s1 = inlined_call_operand.vmem [shape: bf16[9,4,8], index: 1, kind: input, shape index: {}]
  %s2 = inlined_call_operand.vmem [shape: f32[1,8], index: 2, kind: input, shape index: {}]
  %s3 = inlined_call_operand.vmem [shape: f32[2,16,16,8], index: 3, kind: output, shape index: {}]
  %s4 = sld [smem:[#allocation0]]
  $region45: #{vgg_forward.2} parent=0
    _
  %s6 = ssub.s32 1, %s4
  %s7 = scalar_select 0, %s6, %s4
  loop: start=0, step=1, limit=4
  $region2: #{vgg_forward.2} parent=0 // loop_pre_header
    _
  $region3: #{vgg_forward.2} parent=0 // loop_header
    %s9 = sphi 0, %s13
    %p10 = scmp.ge.s32.totalorder %s9, 4
    %s16 = sphi 0, %s28
    %s17 = sphi 0, %s24
    %s18 = sphi 0, %s16
    %s19 = sphi 0, %s17
    %s20 = sphi 0, %s18
    %s21 = sphi 0, %s19
    %s31 = sphi 0, %s33
    %s34 = sphi 0, %s31
    %s35 = sphi 0, %s34
    %s51 = sphi 0, %s35
    %s57 = sphi 0, %s59
    %s60 = sphi 0, %s57
    %s61 = sphi 0, %s60
    %s77 = sphi 0, %s61
    %s83 = sphi 0, %s85
    %s86 = sphi 0, %s83
    %s87 = sphi 0, %s86
    %s103 = sphi 0, %s87
    %s111 = sphi 0, %s113
    %s114 = sphi 0, %s111
    %s115 = sphi 0, %s114
    %s131 = sphi 0, %s115
  $region4: #{vgg_forward.2} parent=0 // loop_header_branch
    %12 = sbr.rel (%p10) target = $region8
  $region5: #{vgg_forward.2} parent=0 // loop_body
    %s14 = ssub.s32 %s9, 1
    %s15 = ssub.s32 %s9, 2
    %s22 = sadd.s32 1, %s17
    %p23 = scmp.ge.s32.totalorder %s22, 1
    %s24 = scalar_select %p23, 0, %s22
    %s25 = sadd.s32 1, %s16
    %s26 = scalar_select %p23, %s25, %s16
    %p27 = scmp.ge.s32.totalorder %s26, 2
    %s28 = scalar_select %p27, 0, %s26
    %s29 = ssub.s32 %s16, %s28
    %p30 = scmp.eq.s32.totalorder %s29, 0
    %s32 = sadd.s32 %s31, 1
    %s33 = scalar_select %p30, %s31, %s32
    %p36 = pneg %p30
    %p37 = scmp.eq.s32.totalorder %s9, 1
    %p38 = por %p36, %p37
    %p39 = scmp.ne.s32.totalorder %s31, %s34
    %p40 = scmp.eq.s32.totalorder %s9, 0
    %p41 = por %p39, %p40
    %p42 = scmp.ne.s32.totalorder %s31, %s34
    %p43 = scmp.eq.s32.totalorder %s14, 1
    %p44 = por %p42, %p43
    %p45 = scmp.ne.s32.totalorder %s34, %s35
    %p46 = scmp.eq.s32.totalorder %s14, 0
    %p47 = por %p45, %p46
    %p48 = scmp.ne.s32.totalorder %s34, %s35
    %p49 = scmp.eq.s32.totalorder %s15, 1
    %p50 = por %p48, %p49
    %p52 = scmp.ne.s32.totalorder %s35, %s51
    %p53 = scmp.eq.s32.totalorder %s15, 0
    %p54 = por %p52, %p53
    %s55 = ssub.s32 %s17, %s24
    %p56 = scmp.eq.s32.totalorder %s55, 0
    %s58 = sadd.s32 %s57, 1
    %s59 = scalar_select %p56, %s57, %s58
    %p62 = pneg %p56
    %p63 = scmp.eq.s32.totalorder %s9, 1
    %p64 = por %p62, %p63
    %p65 = scmp.ne.s32.totalorder %s57, %s60
    %p66 = scmp.eq.s32.totalorder %s9, 0
    %p67 = por %p65, %p66
    %p68 = scmp.ne.s32.totalorder %s57, %s60
    %p69 = scmp.eq.s32.totalorder %s14, 1
    %p70 = por %p68, %p69
    %p71 = scmp.ne.s32.totalorder %s60, %s61
    %p72 = scmp.eq.s32.totalorder %s14, 0
    %p73 = por %p71, %p72
    %p74 = scmp.ne.s32.totalorder %s60, %s61
    %p75 = scmp.eq.s32.totalorder %s15, 1
    %p76 = por %p74, %p75
    %p78 = scmp.ne.s32.totalorder %s61, %s77
    %p79 = scmp.eq.s32.totalorder %s15, 0
    %p80 = por %p78, %p79
    %s81 = ssub.s32 %s17, %s24
    %p82 = scmp.eq.s32.totalorder %s81, 0
    %s84 = sadd.s32 %s83, 1
    %s85 = scalar_select %p82, %s83, %s84
    %p88 = pneg %p82
    %p89 = scmp.eq.s32.totalorder %s9, 1
    %p90 = por %p88, %p89
    %p91 = scmp.ne.s32.totalorder %s83, %s86
    %p92 = scmp.eq.s32.totalorder %s9, 0
    %p93 = por %p91, %p92
    %p94 = scmp.ne.s32.totalorder %s83, %s86
    %p95 = scmp.eq.s32.totalorder %s14, 1
    %p96 = por %p94, %p95
    %p97 = scmp.ne.s32.totalorder %s86, %s87
    %p98 = scmp.eq.s32.totalorder %s14, 0
    %p99 = por %p97, %p98
    %p100 = scmp.ne.s32.totalorder %s86, %s87
    %p101 = scmp.eq.s32.totalorder %s15, 1
    %p102 = por %p100, %p101
    %p104 = scmp.ne.s32.totalorder %s87, %s103
    %p105 = scmp.eq.s32.totalorder %s15, 0
    %p106 = por %p104, %p105
    %s107 = ssub.s32 %s16, %s28
    %s108 = ssub.s32 %s17, %s24
    %s109 = sor.u32 %s107, %s108
    %p110 = scmp.eq.s32.totalorder %s109, 0
    %s112 = sadd.s32 %s111, 1
    %s113 = scalar_select %p110, %s111, %s112
    %p116 = pneg %p110
    %p117 = scmp.eq.s32.totalorder %s9, 1
    %p118 = por %p116, %p117
    %p119 = scmp.ne.s32.totalorder %s111, %s114
    %p120 = scmp.eq.s32.totalorder %s9, 0
    %p121 = por %p119, %p120
    %p122 = scmp.ne.s32.totalorder %s111, %s114
    %p123 = scmp.eq.s32.totalorder %s14, 1
    %p124 = por %p122, %p123
    %p125 = scmp.ne.s32.totalorder %s114, %s115
    %p126 = scmp.eq.s32.totalorder %s14, 0
    %p127 = por %p125, %p126
    %p128 = scmp.ne.s32.totalorder %s114, %s115
    %p129 = scmp.eq.s32.totalorder %s15, 1
    %p130 = por %p128, %p129
    %p132 = scmp.ne.s32.totalorder %s115, %s131
    %p133 = scmp.eq.s32.totalorder %s15, 0
    %p134 = por %p132, %p133
    %p135 = scmp.le.s32.totalorder 1, %s9
    %p136 = scmp.lt.s32.totalorder %s9, 3
    %p137 = pnand %p135, %p136
    %p138 = pneg %p137
    // Predicated region
    $region9: #{vgg_forward.2} parent=5 // pred_check
      _
    $region10: #{vgg_forward.2} parent=5 // pred_check_branch
      %140 = sbr.rel (%p137) target = $region12
    $region11: #{vgg_forward.2} parent=5 // pred_region
      %s141 = ssub.s32 %s9, 1
      // Predicated region
      $region13: #{vgg_forward.2} parent=11 // pred_check
        %p142 = pneg %p73
      $region14: #{vgg_forward.2} parent=11 // pred_check_branch
        %144 = sbr.rel (%p142) target = $region16
      $region15: #{vgg_forward.2} parent=11 // pred_region
        %p145 = scmp.lt.s32.totalorder %s19, 0
        %s146 = scalar_select %p145, %s19, 0
        %s147 = smul.addr %s146, 2
        %s148 = scalar_lea.vmem %s1, %s147
      $region16: #{vgg_forward.2} parent=11 // pred_fallthru
        _
      // Predicated region
      $region17: #{vgg_forward.2} parent=11 // pred_check
        %p149 = pneg %p99
      $region18: #{vgg_forward.2} parent=11 // pred_check_branch
        %151 = sbr.rel (%p149) target = $region20
      $region19: #{vgg_forward.2} parent=11 // pred_region
        %p152 = scmp.lt.s32.totalorder %s19, 0
        %s153 = scalar_select %p152, %s19, 0
        %s154 = scalar_lea.vmem %s2, %s153
      $region20: #{vgg_forward.2} parent=11 // pred_fallthru
        _
    $region12: #{vgg_forward.2} parent=5 // pred_fallthru
      _
    %p155 = scmp.lt.s32.totalorder %s9, 2
    // Predicated region
    $region21: #{vgg_forward.2} parent=5 // pred_check
      %p156 = pneg %p155
    $region22: #{vgg_forward.2} parent=5 // pred_check_branch
      %158 = sbr.rel (%p156) target = $region24
    $region23: #{vgg_forward.2} parent=5 // pred_region
      // Predicated region
      $region25: #{vgg_forward.2} parent=23 // pred_check
        %p159 = pneg %p41
      $region26: #{vgg_forward.2} parent=23 // pred_check_branch
        %161 = sbr.rel (%p159) target = $region28
      $region27: #{vgg_forward.2} parent=23 // pred_region
        %p162 = scmp.lt.s32.totalorder %s16, 1
        %s163 = scalar_select %p162, %s16, 1
        %s164 = smul.addr %s163, 43
        %s165 = smul.addr %s164, 4
        %s166 = scalar_lea.vmem %s0, %s165
      $region28: #{vgg_forward.2} parent=23 // pred_fallthru
        _
    $region24: #{vgg_forward.2} parent=5 // pred_fallthru
      _
    %p167 = scmp.le.s32.totalorder 1, %s9
    %p168 = scmp.lt.s32.totalorder %s9, 3
    %p169 = pnand %p167, %p168
    %p170 = pneg %p169
    // Predicated region
    $region29: #{vgg_forward.2} parent=5 // pred_check
      _
    $region30: #{vgg_forward.2} parent=5 // pred_check_branch
      %172 = sbr.rel (%p169) target = $region32
    $region31: #{vgg_forward.2} parent=5 // pred_region
      %s173 = ssub.s32 %s9, 1
      %p174 = scmp.lt.s32.totalorder %s18, 1
      %s175 = scalar_select %p174, %s18, 1
      %s176 = smul.addr %s175, 43
      %s177 = smul.addr %s176, 4
      %s178 = scalar_lea.vmem %s0, %s177
      %p179 = pneg %p47
      %p180 = pneg %p44
      %p181 = scmp.lt.s32.totalorder %s19, 0
      %s182 = scalar_select %p181, %s19, 0
      %s183 = smul.addr %s182, 2
      %s184 = scalar_lea.vmem %s1, %s183
      %p185 = pneg %p73
      %p186 = pneg %p70
      %p187 = scmp.lt.s32.totalorder %s19, 0
      %s188 = scalar_select %p187, %s19, 0
      %s189 = scalar_lea.vmem %s2, %s188
      %p190 = pneg %p99
      %p191 = pneg %p96
      %p192 = pneg %p127
      %p193 = pneg %p124
      %p194 = scmp.lt.s32.totalorder %s18, 1
      %s195 = scalar_select %p194, %s18, 1
      %p196 = scmp.lt.s32.totalorder %s19, 0
      %s197 = scalar_select %p196, %s19, 0
      %s198 = smul.addr %s195, 32
      %s199 = sadd.s32 %s197, %s198
      %s200 = smul.addr %s199, 8
      %s201 = scalar_lea.vmem %s3, %s200
      %p202 = scmp.lt.s32.totalorder %s18, 1
      %s203 = scalar_select %p202, %s18, 1
      %s204 = smul.addr %s203, 43
      %s205 = smul.addr %s204, 4
      %s206 = scalar_lea.vmem %s0, %s205
      %p207 = scmp.lt.s32.totalorder %s19, 0
      %s208 = scalar_select %p207, %s19, 0
      %s209 = smul.addr %s208, 2
      %s210 = scalar_lea.vmem %s1, %s209
      %p211 = scmp.lt.s32.totalorder %s19, 0
      %s212 = scalar_select %p211, %s19, 0
      %s213 = scalar_lea.vmem %s2, %s212
      %p214 = scmp.lt.s32.totalorder %s18, 1
      %s215 = scalar_select %p214, %s18, 1
      %p216 = scmp.lt.s32.totalorder %s19, 0
      %s217 = scalar_select %p216, %s19, 0
      %s218 = smul.addr %s215, 32
      %s219 = sadd.s32 %s217, %s218
      %s220 = smul.addr %s219, 8
      %s221 = scalar_lea.vmem %s3, %s220
      %v223 = vld [vmem:[%s206] sm:$0xf]
      %v224 = vld [vmem:[%s206 + $0x4] sm:$0xf]
      %v225 = vld [vmem:[%s206 + $0x8] sm:$0xf]
      %v226 = vld [vmem:[%s206 + $0xc] sm:$0xf]
      %v227 = vld [vmem:[%s206 + $0x10] sm:$0xf]
      %v228 = vld [vmem:[%s206 + $0x14] sm:$0xf]
      %v229 = vld [vmem:[%s206 + $0x18] sm:$0xf]
      %v230 = vld [vmem:[%s206 + $0x1c] sm:$0xf]
      %v231 = vld [vmem:[%s206 + $0x20] sm:$0xf]
      %v232 = vld [vmem:[%s206 + $0x24] sm:$0xf]
      %v233 = vld [vmem:[%s206 + $0x28] sm:$0xf]
      %v234 = vld [vmem:[%s206 + $0x2c] sm:$0xf]
      %v235 = vld [vmem:[%s206 + $0x30] sm:$0xf]
      %v236 = vld [vmem:[%s206 + $0x34] sm:$0xf]
      %v237 = vld [vmem:[%s206 + $0x38] sm:$0xf]
      %v238 = vld [vmem:[%s206 + $0x3c] sm:$0xf]
      %v239 = vld [vmem:[%s206 + $0x40] sm:$0xf]
      %v240 = vld [vmem:[%s206 + $0x44] sm:$0xf]
      %v241 = vld [vmem:[%s206 + $0x48] sm:$0xf]
      %v242 = vld [vmem:[%s206 + $0x4c] sm:$0xf]
      %v243 = vld [vmem:[%s206 + $0x50] sm:$0xf]
      %v244 = vld [vmem:[%s206 + $0x54] sm:$0xf]
      %v245 = vld [vmem:[%s206 + $0x58] sm:$0xf]
      %v246 = vld [vmem:[%s206 + $0x5c] sm:$0xf]
      %v247 = vld [vmem:[%s206 + $0x60] sm:$0xf]
      %v248 = vld [vmem:[%s206 + $0x64] sm:$0xf]
      %v249 = vld [vmem:[%s206 + $0x68] sm:$0xf]
      %v250 = vld [vmem:[%s206 + $0x6c] sm:$0xf]
      %v251 = vld [vmem:[%s206 + $0x70] sm:$0xf]
      %v252 = vld [vmem:[%s206 + $0x74] sm:$0xf]
      %v253 = vld [vmem:[%s206 + $0x78] sm:$0xf]
      %v254 = vld [vmem:[%s206 + $0x7c] sm:$0xf]
      %v255 = vld [vmem:[%s206 + $0x80] sm:$0xf]
      %v256 = vld [vmem:[%s206 + $0x84] sm:$0xf]
      %v257 = vld [vmem:[%s206 + $0x88] sm:$0xf]
      %v258 = vld [vmem:[%s206 + $0x8c] sm:$0xf]
      %v259 = vld [vmem:[%s210] sm:$0x3]
      %v260 = vld [vmem:[%s206 + $0x90] sm:$0x1]
      %s261 = scalar_lea.vmem %s210, 2
      %v262 = vld [vmem:[%s261] sm:$0x3]
      %v300 = vunpack.c.l.b16 %v223
      %v301 = vunpack.c.l.b16 %v224
      %v302 = vunpack.c.l.b16 %v225
      %v303 = vunpack.c.l.b16 %v226
      %v304 = vunpack.c.l.b16 %v227
      %v305 = vunpack.c.l.b16 %v228
      %v306 = vunpack.c.l.b16 %v229
      %v307 = vunpack.c.l.b16 %v230
      %v308 = vunpack.c.l.b16 %v231
      %v309 = vunpack.c.l.b16 %v232
      %v310 = vunpack.c.l.b16 %v233
      %v311 = vunpack.c.l.b16 %v234
      %v312 = vunpack.c.l.b16 %v235
      %v313 = vunpack.c.l.b16 %v236
      %v314 = vunpack.c.l.b16 %v237
      %v315 = vunpack.c.l.b16 %v238
      %v316 = vunpack.c.l.b16 %v239
      %v317 = vunpack.c.l.b16 %v240
      %v318 = vunpack.c.l.b16 %v241
      %v319 = vunpack.c.l.b16 %v242
      %v320 = vunpack.c.l.b16 %v243
      %v321 = vunpack.c.l.b16 %v244
      %v322 = vunpack.c.l.b16 %v245
      %v323 = vunpack.c.l.b16 %v246
      %v324 = vunpack.c.l.b16 %v247
      %v325 = vunpack.c.l.b16 %v248
      %v326 = vunpack.c.l.b16 %v249
      %v327 = vunpack.c.l.b16 %v250
      %v328 = vunpack.c.l.b16 %v251
      %v329 = vunpack.c.l.b16 %v252
      %v330 = vunpack.c.l.b16 %v253
      %v331 = vunpack.c.l.b16 %v254
      %v332 = vunpack.c.l.b16 %v255
      %v333 = vunpack.c.l.b16 %v256
      %v334 = vunpack.c.l.b16 %v257
      %v335 = vunpack.c.l.b16 %v258
      %v336 = vunpack.c.l.b16 %v260
      %v337 = vpack.c.b16 %v301, %v300
      %v338 = vpack.c.b16 %v303, %v302
      %v339 = vpack.c.b16 %v305, %v304
      %v340 = vpack.c.b16 %v307, %v306
      %v341 = vpack.c.b16 %v309, %v308
      %v342 = vpack.c.b16 %v311, %v310
      %v343 = vpack.c.b16 %v313, %v312
      %v344 = vpack.c.b16 %v315, %v314
      %v345 = vpack.c.b16 %v317, %v316
      %v346 = vpack.c.b16 %v319, %v318
      %v347 = vpack.c.b16 %v321, %v320
      %v348 = vpack.c.b16 %v323, %v322
      %v349 = vpack.c.b16 %v325, %v324
      %v350 = vpack.c.b16 %v327, %v326
      %v351 = vpack.c.b16 %v329, %v328
      %v352 = vpack.c.b16 %v331, %v330
      %v353 = vpack.c.b16 %v333, %v332
      %v354 = vpack.c.b16 %v335, %v334
      %v355 = vpack.c.b16 %v336, %v336
      %vm356 = vsmask.f32 7424
      %v358 = vshrl.u32 %v337, 16
      %v360 = vshll.u32 %v337, 16
      %v362 = vrot.slane %v360, 1
      %v363 = vor.u32 %v358, %v362
      %v365 = vshll.u32 %v338, 16
      %v367 = vrot.slane %v365, 1
      %v368 = vsel %vm356, %v363, %v367
      %v369 = vshrl.u32 %v338, 16
      %v371 = vor.u32 %v369, %v367
      %v373 = vshll.u32 %v339, 16
      %v375 = vrot.slane %v373, 1
      %v376 = vsel %vm356, %v371, %v375
      %v377 = vshrl.u32 %v339, 16
      %v379 = vor.u32 %v377, %v375
      %v381 = vshll.u32 %v340, 16
      %v383 = vrot.slane %v381, 1
      %v384 = vsel %vm356, %v379, %v383
      %v385 = vshrl.u32 %v340, 16
      %v387 = vor.u32 %v385, %v383
      %v389 = vshll.u32 %v341, 16
      %v391 = vrot.slane %v389, 1
      %v392 = vsel %vm356, %v387, %v391
      %v393 = vshrl.u32 %v341, 16
      %v395 = vor.u32 %v393, %v391
      %v397 = vshll.u32 %v342, 16
      %v399 = vrot.slane %v397, 1
      %v400 = vsel %vm356, %v395, %v399
      %v401 = vshrl.u32 %v342, 16
      %v403 = vor.u32 %v401, %v399
      %v405 = vshll.u32 %v343, 16
      %v407 = vrot.slane %v405, 1
      %v408 = vsel %vm356, %v403, %v407
      %v409 = vshrl.u32 %v343, 16
      %v411 = vor.u32 %v409, %v407
      %v413 = vshll.u32 %v344, 16
      %v415 = vrot.slane %v413, 1
      %v416 = vsel %vm356, %v411, %v415
      %v417 = vshrl.u32 %v344, 16
      %v419 = vor.u32 %v417, %v415
      %v421 = vshll.u32 %v345, 16
      %v423 = vrot.slane %v421, 1
      %v424 = vsel %vm356, %v419, %v423
      %v425 = vshrl.u32 %v345, 16
      %v427 = vor.u32 %v425, %v423
      %v429 = vshll.u32 %v346, 16
      %v431 = vrot.slane %v429, 1
      %v432 = vsel %vm356, %v427, %v431
      %v433 = vshrl.u32 %v346, 16
      %v435 = vor.u32 %v433, %v431
      %v437 = vshll.u32 %v347, 16
      %v439 = vrot.slane %v437, 1
      %v440 = vsel %vm356, %v435, %v439
      %v441 = vshrl.u32 %v347, 16
      %v443 = vor.u32 %v441, %v439
      %v445 = vshll.u32 %v348, 16
      %v447 = vrot.slane %v445, 1
      %v448 = vsel %vm356, %v443, %v447
      %v449 = vshrl.u32 %v348, 16
      %v451 = vor.u32 %v449, %v447
      %v453 = vshll.u32 %v349, 16
      %v455 = vrot.slane %v453, 1
      %v456 = vsel %vm356, %v451, %v455
      %v457 = vshrl.u32 %v349, 16
      %v459 = vor.u32 %v457, %v455
      %v461 = vshll.u32 %v350, 16
      %v463 = vrot.slane %v461, 1
      %v464 = vsel %vm356, %v459, %v463
      %v465 = vshrl.u32 %v350, 16
      %v467 = vor.u32 %v465, %v463
      %v469 = vshll.u32 %v351, 16
      %v471 = vrot.slane %v469, 1
      %v472 = vsel %vm356, %v467, %v471
      %v473 = vshrl.u32 %v351, 16
      %v475 = vor.u32 %v473, %v471
      %v477 = vshll.u32 %v352, 16
      %v479 = vrot.slane %v477, 1
      %v480 = vsel %vm356, %v475, %v479
      %v481 = vshrl.u32 %v352, 16
      %v483 = vor.u32 %v481, %v479
      %v485 = vshll.u32 %v353, 16
      %v487 = vrot.slane %v485, 1
      %v488 = vsel %vm356, %v483, %v487
      %v489 = vshrl.u32 %v353, 16
      %v491 = vor.u32 %v489, %v487
      %v493 = vshll.u32 %v354, 16
      %v495 = vrot.slane %v493, 1
      %v496 = vsel %vm356, %v491, %v495
      %v497 = vshrl.u32 %v354, 16
      %v499 = vor.u32 %v497, %v495
      %v501 = vshll.u32 %v355, 16
      %v503 = vrot.slane %v501, 1
      %v504 = vsel %vm356, %v499, %v503
      %vm505 = vcmask 31744
      %v507 = vsel %vm505, %v368, 0
      %v510 = vsel %vm505, %v376, 0
      %v513 = vsel %vm505, %v384, 0
      %v516 = vsel %vm505, %v392, 0
      %v519 = vsel %vm505, %v400, 0
      %v522 = vsel %vm505, %v408, 0
      %v525 = vsel %vm505, %v416, 0
      %v528 = vsel %vm505, %v424, 0
      %v531 = vsel %vm505, %v432, 0
      %v534 = vsel %vm505, %v440, 0
      %v537 = vsel %vm505, %v448, 0
      %v540 = vsel %vm505, %v456, 0
      %v543 = vsel %vm505, %v464, 0
      %v546 = vsel %vm505, %v472, 0
      %v549 = vsel %vm505, %v480, 0
      %v552 = vsel %vm505, %v488, 0
      %v555 = vsel %vm505, %v496, 0
      %v558 = vsel %vm505, %v504, 0
      %vm560 = vcmask 1041408
      %v562 = vsel %vm560, %v262, 0
      %564 = vmatpush.bf16.msra.mxu0 0
      %565 = vmatpush.bf16.msra.mxu0 0
      %566 = vmatpush.bf16.msra.mxu0 0
      %567 = vmatpush.bf16.msra.mxu0 0
      %568 = vmatpush.bf16.msra.mxu0 0
      %569 = vmatpush.bf16.msra.mxu0 0
      %570 = vmatpush.bf16.msra.mxu0 0
      %571 = vmatpush.bf16.msra.mxu0 %v562
      %572 = vmatmul.bf16.gmra.mxu0 %v507
      %v573 = vpop.f32.mrf.mxu0
      %v574 = vadd.f32 0.0, %v573
      %v575 = vpop.f32.mrf.mxu0
      %v576 = vadd.f32 0.0, %v575
      %577 = vmatmul.bf16.gmra.mxu0 %v510
      %v578 = vpop.f32.mrf.mxu0
      %v579 = vadd.f32 0.0, %v578
      %v580 = vpop.f32.mrf.mxu0
      %v581 = vadd.f32 0.0, %v580
      %582 = vmatmul.bf16.gmra.mxu0 %v513
      %v583 = vpop.f32.mrf.mxu0
      %v584 = vadd.f32 0.0, %v583
      %v585 = vpop.f32.mrf.mxu0
      %v586 = vadd.f32 0.0, %v585
      %587 = vmatmul.bf16.gmra.mxu0 %v516
      %v588 = vpop.f32.mrf.mxu0
      %v589 = vadd.f32 0.0, %v588
      %v590 = vpop.f32.mrf.mxu0
      %v591 = vadd.f32 0.0, %v590
      %592 = vmatmul.bf16.gmra.mxu0 %v519
      %v593 = vpop.f32.mrf.mxu0
      %v594 = vadd.f32 0.0, %v593
      %v595 = vpop.f32.mrf.mxu0
      %v596 = vadd.f32 0.0, %v595
      %597 = vmatmul.bf16.gmra.mxu0 %v522
      %v598 = vpop.f32.mrf.mxu0
      %v599 = vadd.f32 0.0, %v598
      %v600 = vpop.f32.mrf.mxu0
      %v601 = vadd.f32 0.0, %v600
      %602 = vmatmul.bf16.gmra.mxu0 %v525
      %v603 = vpop.f32.mrf.mxu0
      %v604 = vadd.f32 0.0, %v603
      %v605 = vpop.f32.mrf.mxu0
      %v606 = vadd.f32 0.0, %v605
      %607 = vmatmul.bf16.gmra.mxu0 %v528
      %v608 = vpop.f32.mrf.mxu0
      %v609 = vadd.f32 0.0, %v608
      %v610 = vpop.f32.mrf.mxu0
      %v611 = vadd.f32 0.0, %v610
      %612 = vmatmul.bf16.gmra.mxu0 %v531
      %v613 = vpop.f32.mrf.mxu0
      %v614 = vadd.f32 0.0, %v613
      %v615 = vpop.f32.mrf.mxu0
      %v616 = vadd.f32 0.0, %v615
      %617 = vmatmul.bf16.gmra.mxu0 %v534
      %v618 = vpop.f32.mrf.mxu0
      %v619 = vadd.f32 0.0, %v618
      %v620 = vpop.f32.mrf.mxu0
      %v621 = vadd.f32 0.0, %v620
      %622 = vmatmul.bf16.gmra.mxu0 %v537
      %v623 = vpop.f32.mrf.mxu0
      %v624 = vadd.f32 0.0, %v623
      %v625 = vpop.f32.mrf.mxu0
      %v626 = vadd.f32 0.0, %v625
      %627 = vmatmul.bf16.gmra.mxu0 %v540
      %v628 = vpop.f32.mrf.mxu0
      %v629 = vadd.f32 0.0, %v628
      %v630 = vpop.f32.mrf.mxu0
      %v631 = vadd.f32 0.0, %v630
      %632 = vmatmul.bf16.gmra.mxu0 %v543
      %v633 = vpop.f32.mrf.mxu0
      %v634 = vadd.f32 0.0, %v633
      %v635 = vpop.f32.mrf.mxu0
      %v636 = vadd.f32 0.0, %v635
      %637 = vmatmul.bf16.gmra.mxu0 %v546
      %v638 = vpop.f32.mrf.mxu0
      %v639 = vadd.f32 0.0, %v638
      %v640 = vpop.f32.mrf.mxu0
      %v641 = vadd.f32 0.0, %v640
      %642 = vmatmul.bf16.gmra.mxu0 %v549
      %v643 = vpop.f32.mrf.mxu0
      %v644 = vadd.f32 0.0, %v643
      %v645 = vpop.f32.mrf.mxu0
      %v646 = vadd.f32 0.0, %v645
      %647 = vmatmul.bf16.gmra.mxu0 %v552
      %v648 = vpop.f32.mrf.mxu0
      %v649 = vadd.f32 0.0, %v648
      %v650 = vpop.f32.mrf.mxu0
      %v651 = vadd.f32 0.0, %v650
      %652 = vmatmul.bf16.gmra.mxu0 %v555
      %v653 = vpop.f32.mrf.mxu0
      %v654 = vadd.f32 0.0, %v653
      %v655 = vpop.f32.mrf.mxu0
      %v656 = vadd.f32 0.0, %v655
      %657 = vmatmul.bf16.gmra.mxu0 %v558
      %v658 = vpop.f32.mrf.mxu0
      %v659 = vadd.f32 0.0, %v658
      %v660 = vpop.f32.mrf.mxu0
      %v661 = vadd.f32 0.0, %v660
      %662 = vdwg.mxu0
      %v663 = vsel %vm505, %v337, 0
      %v665 = vsel %vm505, %v338, 0
      %v667 = vsel %vm505, %v339, 0
      %v669 = vsel %vm505, %v340, 0
      %v671 = vsel %vm505, %v341, 0
      %v673 = vsel %vm505, %v342, 0
      %v675 = vsel %vm505, %v343, 0
      %v677 = vsel %vm505, %v344, 0
      %v679 = vsel %vm505, %v345, 0
      %v681 = vsel %vm505, %v346, 0
      %v683 = vsel %vm505, %v347, 0
      %v685 = vsel %vm505, %v348, 0
      %v687 = vsel %vm505, %v349, 0
      %v689 = vsel %vm505, %v350, 0
      %v691 = vsel %vm505, %v351, 0
      %v693 = vsel %vm505, %v352, 0
      %v695 = vsel %vm505, %v353, 0
      %v697 = vsel %vm505, %v354, 0
      %v700 = vsel %vm560, %v259, 0
      %702 = vmatpush.bf16.msra.mxu0 0
      %703 = vmatpush.bf16.msra.mxu0 0
      %704 = vmatpush.bf16.msra.mxu0 0
      %705 = vmatpush.bf16.msra.mxu0 0
      %706 = vmatpush.bf16.msra.mxu0 0
      %707 = vmatpush.bf16.msra.mxu0 0
      %708 = vmatpush.bf16.msra.mxu0 0
      %709 = vmatpush.bf16.msra.mxu0 %v700
      %710 = vmatmul.bf16.gmra.mxu0 %v663
      %v711 = vpop.f32.mrf.mxu0
      %v712 = vadd.f32 %v574, %v711
      %v713 = vpop.f32.mrf.mxu0
      %v714 = vadd.f32 %v576, %v713
      %715 = vmatmul.bf16.gmra.mxu0 %v665
      %v716 = vpop.f32.mrf.mxu0
      %v717 = vadd.f32 %v579, %v716
      %v718 = vpop.f32.mrf.mxu0
      %v719 = vadd.f32 %v581, %v718
      %720 = vmatmul.bf16.gmra.mxu0 %v667
      %v721 = vpop.f32.mrf.mxu0
      %v722 = vadd.f32 %v584, %v721
      %v723 = vpop.f32.mrf.mxu0
      %v724 = vadd.f32 %v586, %v723
      %725 = vmatmul.bf16.gmra.mxu0 %v669
      %v726 = vpop.f32.mrf.mxu0
      %v727 = vadd.f32 %v589, %v726
      %v728 = vpop.f32.mrf.mxu0
      %v729 = vadd.f32 %v591, %v728
      %730 = vmatmul.bf16.gmra.mxu0 %v671
      %v731 = vpop.f32.mrf.mxu0
      %v732 = vadd.f32 %v594, %v731
      %v733 = vpop.f32.mrf.mxu0
      %v734 = vadd.f32 %v596, %v733
      %735 = vmatmul.bf16.gmra.mxu0 %v673
      %v736 = vpop.f32.mrf.mxu0
      %v737 = vadd.f32 %v599, %v736
      %v738 = vpop.f32.mrf.mxu0
      %v739 = vadd.f32 %v601, %v738
      %740 = vmatmul.bf16.gmra.mxu0 %v675
      %v741 = vpop.f32.mrf.mxu0
      %v742 = vadd.f32 %v604, %v741
      %v743 = vpop.f32.mrf.mxu0
      %v744 = vadd.f32 %v606, %v743
      %745 = vmatmul.bf16.gmra.mxu0 %v677
      %v746 = vpop.f32.mrf.mxu0
      %v747 = vadd.f32 %v609, %v746
      %v748 = vpop.f32.mrf.mxu0
      %v749 = vadd.f32 %v611, %v748
      %750 = vmatmul.bf16.gmra.mxu0 %v679
      %v751 = vpop.f32.mrf.mxu0
      %v752 = vadd.f32 %v614, %v751
      %v753 = vpop.f32.mrf.mxu0
      %v754 = vadd.f32 %v616, %v753
      %755 = vmatmul.bf16.gmra.mxu0 %v681
      %v756 = vpop.f32.mrf.mxu0
      %v757 = vadd.f32 %v619, %v756
      %v758 = vpop.f32.mrf.mxu0
      %v759 = vadd.f32 %v621, %v758
      %760 = vmatmul.bf16.gmra.mxu0 %v683
      %v761 = vpop.f32.mrf.mxu0
      %v762 = vadd.f32 %v624, %v761
      %v763 = vpop.f32.mrf.mxu0
      %v764 = vadd.f32 %v626, %v763
      %765 = vmatmul.bf16.gmra.mxu0 %v685
      %v766 = vpop.f32.mrf.mxu0
      %v767 = vadd.f32 %v629, %v766
      %v768 = vpop.f32.mrf.mxu0
      %v769 = vadd.f32 %v631, %v768
      %770 = vmatmul.bf16.gmra.mxu0 %v687
      %v771 = vpop.f32.mrf.mxu0
      %v772 = vadd.f32 %v634, %v771
      %v773 = vpop.f32.mrf.mxu0
      %v774 = vadd.f32 %v636, %v773
      %775 = vmatmul.bf16.gmra.mxu0 %v689
      %v776 = vpop.f32.mrf.mxu0
      %v777 = vadd.f32 %v639, %v776
      %v778 = vpop.f32.mrf.mxu0
      %v779 = vadd.f32 %v641, %v778
      %780 = vmatmul.bf16.gmra.mxu0 %v691
      %v781 = vpop.f32.mrf.mxu0
      %v782 = vadd.f32 %v644, %v781
      %v783 = vpop.f32.mrf.mxu0
      %v784 = vadd.f32 %v646, %v783
      %785 = vmatmul.bf16.gmra.mxu0 %v693
      %v786 = vpop.f32.mrf.mxu0
      %v787 = vadd.f32 %v649, %v786
      %v788 = vpop.f32.mrf.mxu0
      %v789 = vadd.f32 %v651, %v788
      %790 = vmatmul.bf16.gmra.mxu0 %v695
      %v791 = vpop.f32.mrf.mxu0
      %v792 = vadd.f32 %v654, %v791
      %v793 = vpop.f32.mrf.mxu0
      %v794 = vadd.f32 %v656, %v793
      %795 = vmatmul.bf16.gmra.mxu0 %v697
      %v796 = vpop.f32.mrf.mxu0
      %v797 = vadd.f32 %v659, %v796
      %v798 = vpop.f32.mrf.mxu0
      %v799 = vadd.f32 %v661, %v798
      %800 = vdwg.mxu0
      %v801 = vld [vmem:[%s206] sm:$0xe]
      %s802 = scalar_lea.vmem %s210, 4
      %v803 = vld [vmem:[%s802] sm:$0x3]
      %v805 = vunpack.c.l.b16 %v801
      %v806 = vpack.c.b16 %v301, %v805
      %vm807 = vcmask 1046528
      %v808 = vrot.slane %v806, 1
      %v809 = vrot.slane %v338, 1
      %v810 = vsel %vm807, %v808, %v809
      %v811 = vrot.slane %v339, 1
      %v812 = vsel %vm807, %v809, %v811
      %v813 = vrot.slane %v340, 1
      %v814 = vsel %vm807, %v811, %v813
      %v815 = vrot.slane %v341, 1
      %v816 = vsel %vm807, %v813, %v815
      %v817 = vrot.slane %v342, 1
      %v818 = vsel %vm807, %v815, %v817
      %v819 = vrot.slane %v343, 1
      %v820 = vsel %vm807, %v817, %v819
      %v821 = vrot.slane %v344, 1
      %v822 = vsel %vm807, %v819, %v821
      %v823 = vrot.slane %v345, 1
      %v824 = vsel %vm807, %v821, %v823
      %v825 = vrot.slane %v346, 1
      %v826 = vsel %vm807, %v823, %v825
      %v827 = vrot.slane %v347, 1
      %v828 = vsel %vm807, %v825, %v827
      %v829 = vrot.slane %v348, 1
      %v830 = vsel %vm807, %v827, %v829
      %v831 = vrot.slane %v349, 1
      %v832 = vsel %vm807, %v829, %v831
      %v833 = vrot.slane %v350, 1
      %v834 = vsel %vm807, %v831, %v833
      %v835 = vrot.slane %v351, 1
      %v836 = vsel %vm807, %v833, %v835
      %v837 = vrot.slane %v352, 1
      %v838 = vsel %vm807, %v835, %v837
      %v839 = vrot.slane %v353, 1
      %v840 = vsel %vm807, %v837, %v839
      %v841 = vrot.slane %v354, 1
      %v842 = vsel %vm807, %v839, %v841
      %v843 = vrot.slane %v355, 1
      %v844 = vsel %vm807, %v841, %v843
      %v846 = vsel %vm505, %v810, 0
      %v849 = vsel %vm505, %v812, 0
      %v852 = vsel %vm505, %v814, 0
      %v855 = vsel %vm505, %v816, 0
      %v858 = vsel %vm505, %v818, 0
      %v861 = vsel %vm505, %v820, 0
      %v864 = vsel %vm505, %v822, 0
      %v867 = vsel %vm505, %v824, 0
      %v870 = vsel %vm505, %v826, 0
      %v873 = vsel %vm505, %v828, 0
      %v876 = vsel %vm505, %v830, 0
      %v879 = vsel %vm505, %v832, 0
      %v882 = vsel %vm505, %v834, 0
      %v885 = vsel %vm505, %v836, 0
      %v888 = vsel %vm505, %v838, 0
      %v891 = vsel %vm505, %v840, 0
      %v894 = vsel %vm505, %v842, 0
      %v897 = vsel %vm505, %v844, 0
      %v900 = vsel %vm560, %v803, 0
      %902 = vmatpush.bf16.msra.mxu0 0
      %903 = vmatpush.bf16.msra.mxu0 0
      %904 = vmatpush.bf16.msra.mxu0 0
      %905 = vmatpush.bf16.msra.mxu0 0
      %906 = vmatpush.bf16.msra.mxu0 0
      %907 = vmatpush.bf16.msra.mxu0 0
      %908 = vmatpush.bf16.msra.mxu0 0
      %909 = vmatpush.bf16.msra.mxu0 %v900
      %910 = vmatmul.bf16.gmra.mxu0 %v846
      %v911 = vpop.f32.mrf.mxu0
      %v912 = vadd.f32 0.0, %v911
      %v913 = vpop.f32.mrf.mxu0
      %v914 = vadd.f32 0.0, %v913
      %915 = vmatmul.bf16.gmra.mxu0 %v849
      %v916 = vpop.f32.mrf.mxu0
      %v917 = vadd.f32 0.0, %v916
      %v918 = vpop.f32.mrf.mxu0
      %v919 = vadd.f32 0.0, %v918
      %920 = vmatmul.bf16.gmra.mxu0 %v852
      %v921 = vpop.f32.mrf.mxu0
      %v922 = vadd.f32 0.0, %v921
      %v923 = vpop.f32.mrf.mxu0
      %v924 = vadd.f32 0.0, %v923
      %925 = vmatmul.bf16.gmra.mxu0 %v855
      %v926 = vpop.f32.mrf.mxu0
      %v927 = vadd.f32 0.0, %v926
      %v928 = vpop.f32.mrf.mxu0
      %v929 = vadd.f32 0.0, %v928
      %930 = vmatmul.bf16.gmra.mxu0 %v858
      %v931 = vpop.f32.mrf.mxu0
      %v932 = vadd.f32 0.0, %v931
      %v933 = vpop.f32.mrf.mxu0
      %v934 = vadd.f32 0.0, %v933
      %935 = vmatmul.bf16.gmra.mxu0 %v861
      %v936 = vpop.f32.mrf.mxu0
      %v937 = vadd.f32 0.0, %v936
      %v938 = vpop.f32.mrf.mxu0
      %v939 = vadd.f32 0.0, %v938
      %940 = vmatmul.bf16.gmra.mxu0 %v864
      %v941 = vpop.f32.mrf.mxu0
      %v942 = vadd.f32 0.0, %v941
      %v943 = vpop.f32.mrf.mxu0
      %v944 = vadd.f32 0.0, %v943
      %945 = vmatmul.bf16.gmra.mxu0 %v867
      %v946 = vpop.f32.mrf.mxu0
      %v947 = vadd.f32 0.0, %v946
      %v948 = vpop.f32.mrf.mxu0
      %v949 = vadd.f32 0.0, %v948
      %950 = vmatmul.bf16.gmra.mxu0 %v870
      %v951 = vpop.f32.mrf.mxu0
      %v952 = vadd.f32 0.0, %v951
      %v953 = vpop.f32.mrf.mxu0
      %v954 = vadd.f32 0.0, %v953
      %955 = vmatmul.bf16.gmra.mxu0 %v873
      %v956 = vpop.f32.mrf.mxu0
      %v957 = vadd.f32 0.0, %v956
      %v958 = vpop.f32.mrf.mxu0
      %v959 = vadd.f32 0.0, %v958
      %960 = vmatmul.bf16.gmra.mxu0 %v876
      %v961 = vpop.f32.mrf.mxu0
      %v962 = vadd.f32 0.0, %v961
      %v963 = vpop.f32.mrf.mxu0
      %v964 = vadd.f32 0.0, %v963
      %965 = vmatmul.bf16.gmra.mxu0 %v879
      %v966 = vpop.f32.mrf.mxu0
      %v967 = vadd.f32 0.0, %v966
      %v968 = vpop.f32.mrf.mxu0
      %v969 = vadd.f32 0.0, %v968
      %970 = vmatmul.bf16.gmra.mxu0 %v882
      %v971 = vpop.f32.mrf.mxu0
      %v972 = vadd.f32 0.0, %v971
      %v973 = vpop.f32.mrf.mxu0
      %v974 = vadd.f32 0.0, %v973
      %975 = vmatmul.bf16.gmra.mxu0 %v885
      %v976 = vpop.f32.mrf.mxu0
      %v977 = vadd.f32 0.0, %v976
      %v978 = vpop.f32.mrf.mxu0
      %v979 = vadd.f32 0.0, %v978
      %980 = vmatmul.bf16.gmra.mxu0 %v888
      %v981 = vpop.f32.mrf.mxu0
      %v982 = vadd.f32 0.0, %v981
      %v983 = vpop.f32.mrf.mxu0
      %v984 = vadd.f32 0.0, %v983
      %985 = vmatmul.bf16.gmra.mxu0 %v891
      %v986 = vpop.f32.mrf.mxu0
      %v987 = vadd.f32 0.0, %v986
      %v988 = vpop.f32.mrf.mxu0
      %v989 = vadd.f32 0.0, %v988
      %990 = vmatmul.bf16.gmra.mxu0 %v894
      %v991 = vpop.f32.mrf.mxu0
      %v992 = vadd.f32 0.0, %v991
      %v993 = vpop.f32.mrf.mxu0
      %v994 = vadd.f32 0.0, %v993
      %995 = vmatmul.bf16.gmra.mxu0 %v897
      %v996 = vpop.f32.mrf.mxu0
      %v997 = vadd.f32 0.0, %v996
      %v998 = vpop.f32.mrf.mxu0
      %v999 = vadd.f32 0.0, %v998
      %1000 = vdwg.mxu0
      %v1001 = vadd.f32 %v712, %v912
      %v1002 = vadd.f32 %v714, %v914
      %v1003 = vadd.f32 %v717, %v917
      %v1004 = vadd.f32 %v719, %v919
      %v1005 = vadd.f32 %v722, %v922
      %v1006 = vadd.f32 %v724, %v924
      %v1007 = vadd.f32 %v727, %v927
      %v1008 = vadd.f32 %v729, %v929
      %v1009 = vadd.f32 %v732, %v932
      %v1010 = vadd.f32 %v734, %v934
      %v1011 = vadd.f32 %v737, %v937
      %v1012 = vadd.f32 %v739, %v939
      %v1013 = vadd.f32 %v742, %v942
      %v1014 = vadd.f32 %v744, %v944
      %v1015 = vadd.f32 %v747, %v947
      %v1016 = vadd.f32 %v749, %v949
      %v1017 = vadd.f32 %v752, %v952
      %v1018 = vadd.f32 %v754, %v954
      %v1019 = vadd.f32 %v757, %v957
      %v1020 = vadd.f32 %v759, %v959
      %v1021 = vadd.f32 %v762, %v962
      %v1022 = vadd.f32 %v764, %v964
      %v1023 = vadd.f32 %v767, %v967
      %v1024 = vadd.f32 %v769, %v969
      %v1025 = vadd.f32 %v772, %v972
      %v1026 = vadd.f32 %v774, %v974
      %v1027 = vadd.f32 %v777, %v977
      %v1028 = vadd.f32 %v779, %v979
      %v1029 = vadd.f32 %v782, %v982
      %v1030 = vadd.f32 %v784, %v984
      %v1031 = vadd.f32 %v787, %v987
      %v1032 = vadd.f32 %v789, %v989
      %v1033 = vadd.f32 %v792, %v992
      %v1034 = vadd.f32 %v794, %v994
      %v1035 = vadd.f32 %v797, %v997
      %v1036 = vadd.f32 %v799, %v999
      %v1037 = vld [vmem:[%s206 + $0x8] sm:$0xe]
      %v1038 = vld [vmem:[%s206 + $0xc] sm:$0xf]
      %v1039 = vld [vmem:[%s206 + $0x10] sm:$0xf]
      %v1040 = vld [vmem:[%s206 + $0x14] sm:$0xf]
      %v1041 = vld [vmem:[%s206 + $0x18] sm:$0xf]
      %v1042 = vld [vmem:[%s206 + $0x1c] sm:$0xf]
      %v1043 = vld [vmem:[%s206 + $0x20] sm:$0xf]
      %v1044 = vld [vmem:[%s206 + $0x24] sm:$0xf]
      %v1045 = vld [vmem:[%s206 + $0x28] sm:$0xf]
      %v1046 = vld [vmem:[%s206 + $0x2c] sm:$0xf]
      %v1047 = vld [vmem:[%s206 + $0x30] sm:$0xf]
      %v1048 = vld [vmem:[%s206 + $0x34] sm:$0xf]
      %v1049 = vld [vmem:[%s206 + $0x38] sm:$0xf]
      %v1050 = vld [vmem:[%s206 + $0x3c] sm:$0xf]
      %v1051 = vld [vmem:[%s206 + $0x40] sm:$0xf]
      %v1052 = vld [vmem:[%s206 + $0x44] sm:$0xf]
      %v1053 = vld [vmem:[%s206 + $0x48] sm:$0xf]
      %v1054 = vld [vmem:[%s206 + $0x4c] sm:$0xf]
      %v1055 = vld [vmem:[%s206 + $0x50] sm:$0xf]
      %v1056 = vld [vmem:[%s206 + $0x54] sm:$0xf]
      %v1057 = vld [vmem:[%s206 + $0x58] sm:$0xf]
      %v1058 = vld [vmem:[%s206 + $0x5c] sm:$0xf]
      %v1059 = vld [vmem:[%s206 + $0x60] sm:$0xf]
      %v1060 = vld [vmem:[%s206 + $0x64] sm:$0xf]
      %v1061 = vld [vmem:[%s206 + $0x68] sm:$0xf]
      %v1062 = vld [vmem:[%s206 + $0x6c] sm:$0xf]
      %v1063 = vld [vmem:[%s206 + $0x70] sm:$0xf]
      %v1064 = vld [vmem:[%s206 + $0x74] sm:$0xf]
      %v1065 = vld [vmem:[%s206 + $0x78] sm:$0xf]
      %v1066 = vld [vmem:[%s206 + $0x7c] sm:$0xf]
      %v1067 = vld [vmem:[%s206 + $0x80] sm:$0xf]
      %v1068 = vld [vmem:[%s206 + $0x84] sm:$0xf]
      %v1069 = vld [vmem:[%s206 + $0x88] sm:$0xf]
      %v1070 = vld [vmem:[%s206 + $0x8c] sm:$0xf]
      %v1071 = vld [vmem:[%s206 + $0x90] sm:$0xf]
      %v1072 = vld [vmem:[%s206 + $0x94] sm:$0xf]
      %v1073 = vld [vmem:[%s206 + $0x98] sm:$0x1]
      %s1074 = scalar_lea.vmem %s210, 6
      %v1075 = vld [vmem:[%s1074] sm:$0x3]
      %v1113 = vunpack.c.l.b16 %v1037
      %v1114 = vunpack.c.l.b16 %v1038
      %v1115 = vunpack.c.l.b16 %v1039
      %v1116 = vunpack.c.l.b16 %v1040
      %v1117 = vunpack.c.l.b16 %v1041
      %v1118 = vunpack.c.l.b16 %v1042
      %v1119 = vunpack.c.l.b16 %v1043
      %v1120 = vunpack.c.l.b16 %v1044
      %v1121 = vunpack.c.l.b16 %v1045
      %v1122 = vunpack.c.l.b16 %v1046
      %v1123 = vunpack.c.l.b16 %v1047
      %v1124 = vunpack.c.l.b16 %v1048
      %v1125 = vunpack.c.l.b16 %v1049
      %v1126 = vunpack.c.l.b16 %v1050
      %v1127 = vunpack.c.l.b16 %v1051
      %v1128 = vunpack.c.l.b16 %v1052
      %v1129 = vunpack.c.l.b16 %v1053
      %v1130 = vunpack.c.l.b16 %v1054
      %v1131 = vunpack.c.l.b16 %v1055
      %v1132 = vunpack.c.l.b16 %v1056
      %v1133 = vunpack.c.l.b16 %v1057
      %v1134 = vunpack.c.l.b16 %v1058
      %v1135 = vunpack.c.l.b16 %v1059
      %v1136 = vunpack.c.l.b16 %v1060
      %v1137 = vunpack.c.l.b16 %v1061
      %v1138 = vunpack.c.l.b16 %v1062
      %v1139 = vunpack.c.l.b16 %v1063
      %v1140 = vunpack.c.l.b16 %v1064
      %v1141 = vunpack.c.l.b16 %v1065
      %v1142 = vunpack.c.l.b16 %v1066
      %v1143 = vunpack.c.l.b16 %v1067
      %v1144 = vunpack.c.l.b16 %v1068
      %v1145 = vunpack.c.l.b16 %v1069
      %v1146 = vunpack.c.l.b16 %v1070
      %v1147 = vunpack.c.l.b16 %v1071
      %v1148 = vunpack.c.l.b16 %v1072
      %v1149 = vunpack.c.l.b16 %v1073
      %v1150 = vpack.c.b16 %v1114, %v1113
      %v1151 = vpack.c.b16 %v1116, %v1115
      %v1152 = vpack.c.b16 %v1118, %v1117
      %v1153 = vpack.c.b16 %v1120, %v1119
      %v1154 = vpack.c.b16 %v1122, %v1121
      %v1155 = vpack.c.b16 %v1124, %v1123
      %v1156 = vpack.c.b16 %v1126, %v1125
      %v1157 = vpack.c.b16 %v1128, %v1127
      %v1158 = vpack.c.b16 %v1130, %v1129
      %v1159 = vpack.c.b16 %v1132, %v1131
      %v1160 = vpack.c.b16 %v1134, %v1133
      %v1161 = vpack.c.b16 %v1136, %v1135
      %v1162 = vpack.c.b16 %v1138, %v1137
      %v1163 = vpack.c.b16 %v1140, %v1139
      %v1164 = vpack.c.b16 %v1142, %v1141
      %v1165 = vpack.c.b16 %v1144, %v1143
      %v1166 = vpack.c.b16 %v1146, %v1145
      %v1167 = vpack.c.b16 %v1148, %v1147
      %v1168 = vpack.c.b16 %v1149, %v1149
      %v1169 = vrot.slane %v1150, 1
      %v1170 = vrot.slane %v1151, 1
      %v1171 = vsel %vm807, %v1169, %v1170
      %v1172 = vrot.slane %v1152, 1
      %v1173 = vsel %vm807, %v1170, %v1172
      %v1174 = vrot.slane %v1153, 1
      %v1175 = vsel %vm807, %v1172, %v1174
      %v1176 = vrot.slane %v1154, 1
      %v1177 = vsel %vm807, %v1174, %v1176
      %v1178 = vrot.slane %v1155, 1
      %v1179 = vsel %vm807, %v1176, %v1178
      %v1180 = vrot.slane %v1156, 1
      %v1181 = vsel %vm807, %v1178, %v1180
      %v1182 = vrot.slane %v1157, 1
      %v1183 = vsel %vm807, %v1180, %v1182
      %v1184 = vrot.slane %v1158, 1
      %v1185 = vsel %vm807, %v1182, %v1184
      %v1186 = vrot.slane %v1159, 1
      %v1187 = vsel %vm807, %v1184, %v1186
      %v1188 = vrot.slane %v1160, 1
      %v1189 = vsel %vm807, %v1186, %v1188
      %v1190 = vrot.slane %v1161, 1
      %v1191 = vsel %vm807, %v1188, %v1190
      %v1192 = vrot.slane %v1162, 1
      %v1193 = vsel %vm807, %v1190, %v1192
      %v1194 = vrot.slane %v1163, 1
      %v1195 = vsel %vm807, %v1192, %v1194
      %v1196 = vrot.slane %v1164, 1
      %v1197 = vsel %vm807, %v1194, %v1196
      %v1198 = vrot.slane %v1165, 1
      %v1199 = vsel %vm807, %v1196, %v1198
      %v1200 = vrot.slane %v1166, 1
      %v1201 = vsel %vm807, %v1198, %v1200
      %v1202 = vrot.slane %v1167, 1
      %v1203 = vsel %vm807, %v1200, %v1202
      %v1204 = vrot.slane %v1168, 1
      %v1205 = vsel %vm807, %v1202, %v1204
      %v1207 = vsel %vm505, %v1171, 0
      %v1210 = vsel %vm505, %v1173, 0
      %v1213 = vsel %vm505, %v1175, 0
      %v1216 = vsel %vm505, %v1177, 0
      %v1219 = vsel %vm505, %v1179, 0
      %v1222 = vsel %vm505, %v1181, 0
      %v1225 = vsel %vm505, %v1183, 0
      %v1228 = vsel %vm505, %v1185, 0
      %v1231 = vsel %vm505, %v1187, 0
      %v1234 = vsel %vm505, %v1189, 0
      %v1237 = vsel %vm505, %v1191, 0
      %v1240 = vsel %vm505, %v1193, 0
      %v1243 = vsel %vm505, %v1195, 0
      %v1246 = vsel %vm505, %v1197, 0
      %v1249 = vsel %vm505, %v1199, 0
      %v1252 = vsel %vm505, %v1201, 0
      %v1255 = vsel %vm505, %v1203, 0
      %v1258 = vsel %vm505, %v1205, 0
      %v1261 = vsel %vm560, %v1075, 0
      %1263 = vmatpush.bf16.msra.mxu0 0
      %1264 = vmatpush.bf16.msra.mxu0 0
      %1265 = vmatpush.bf16.msra.mxu0 0
      %1266 = vmatpush.bf16.msra.mxu0 0
      %1267 = vmatpush.bf16.msra.mxu0 0
      %1268 = vmatpush.bf16.msra.mxu0 0
      %1269 = vmatpush.bf16.msra.mxu0 0
      %1270 = vmatpush.bf16.msra.mxu0 %v1261
      %1271 = vmatmul.bf16.gmra.mxu0 %v1207
      %v1272 = vpop.f32.mrf.mxu0
      %v1273 = vadd.f32 0.0, %v1272
      %v1274 = vpop.f32.mrf.mxu0
      %v1275 = vadd.f32 0.0, %v1274
      %1276 = vmatmul.bf16.gmra.mxu0 %v1210
      %v1277 = vpop.f32.mrf.mxu0
      %v1278 = vadd.f32 0.0, %v1277
      %v1279 = vpop.f32.mrf.mxu0
      %v1280 = vadd.f32 0.0, %v1279
      %1281 = vmatmul.bf16.gmra.mxu0 %v1213
      %v1282 = vpop.f32.mrf.mxu0
      %v1283 = vadd.f32 0.0, %v1282
      %v1284 = vpop.f32.mrf.mxu0
      %v1285 = vadd.f32 0.0, %v1284
      %1286 = vmatmul.bf16.gmra.mxu0 %v1216
      %v1287 = vpop.f32.mrf.mxu0
      %v1288 = vadd.f32 0.0, %v1287
      %v1289 = vpop.f32.mrf.mxu0
      %v1290 = vadd.f32 0.0, %v1289
      %1291 = vmatmul.bf16.gmra.mxu0 %v1219
      %v1292 = vpop.f32.mrf.mxu0
      %v1293 = vadd.f32 0.0, %v1292
      %v1294 = vpop.f32.mrf.mxu0
      %v1295 = vadd.f32 0.0, %v1294
      %1296 = vmatmul.bf16.gmra.mxu0 %v1222
      %v1297 = vpop.f32.mrf.mxu0
      %v1298 = vadd.f32 0.0, %v1297
      %v1299 = vpop.f32.mrf.mxu0
      %v1300 = vadd.f32 0.0, %v1299
      %1301 = vmatmul.bf16.gmra.mxu0 %v1225
      %v1302 = vpop.f32.mrf.mxu0
      %v1303 = vadd.f32 0.0, %v1302
      %v1304 = vpop.f32.mrf.mxu0
      %v1305 = vadd.f32 0.0, %v1304
      %1306 = vmatmul.bf16.gmra.mxu0 %v1228
      %v1307 = vpop.f32.mrf.mxu0
      %v1308 = vadd.f32 0.0, %v1307
      %v1309 = vpop.f32.mrf.mxu0
      %v1310 = vadd.f32 0.0, %v1309
      %1311 = vmatmul.bf16.gmra.mxu0 %v1231
      %v1312 = vpop.f32.mrf.mxu0
      %v1313 = vadd.f32 0.0, %v1312
      %v1314 = vpop.f32.mrf.mxu0
      %v1315 = vadd.f32 0.0, %v1314
      %1316 = vmatmul.bf16.gmra.mxu0 %v1234
      %v1317 = vpop.f32.mrf.mxu0
      %v1318 = vadd.f32 0.0, %v1317
      %v1319 = vpop.f32.mrf.mxu0
      %v1320 = vadd.f32 0.0, %v1319
      %1321 = vmatmul.bf16.gmra.mxu0 %v1237
      %v1322 = vpop.f32.mrf.mxu0
      %v1323 = vadd.f32 0.0, %v1322
      %v1324 = vpop.f32.mrf.mxu0
      %v1325 = vadd.f32 0.0, %v1324
      %1326 = vmatmul.bf16.gmra.mxu0 %v1240
      %v1327 = vpop.f32.mrf.mxu0
      %v1328 = vadd.f32 0.0, %v1327
      %v1329 = vpop.f32.mrf.mxu0
      %v1330 = vadd.f32 0.0, %v1329
      %1331 = vmatmul.bf16.gmra.mxu0 %v1243
      %v1332 = vpop.f32.mrf.mxu0
      %v1333 = vadd.f32 0.0, %v1332
      %v1334 = vpop.f32.mrf.mxu0
      %v1335 = vadd.f32 0.0, %v1334
      %1336 = vmatmul.bf16.gmra.mxu0 %v1246
      %v1337 = vpop.f32.mrf.mxu0
      %v1338 = vadd.f32 0.0, %v1337
      %v1339 = vpop.f32.mrf.mxu0
      %v1340 = vadd.f32 0.0, %v1339
      %1341 = vmatmul.bf16.gmra.mxu0 %v1249
      %v1342 = vpop.f32.mrf.mxu0
      %v1343 = vadd.f32 0.0, %v1342
      %v1344 = vpop.f32.mrf.mxu0
      %v1345 = vadd.f32 0.0, %v1344
      %1346 = vmatmul.bf16.gmra.mxu0 %v1252
      %v1347 = vpop.f32.mrf.mxu0
      %v1348 = vadd.f32 0.0, %v1347
      %v1349 = vpop.f32.mrf.mxu0
      %v1350 = vadd.f32 0.0, %v1349
      %1351 = vmatmul.bf16.gmra.mxu0 %v1255
      %v1352 = vpop.f32.mrf.mxu0
      %v1353 = vadd.f32 0.0, %v1352
      %v1354 = vpop.f32.mrf.mxu0
      %v1355 = vadd.f32 0.0, %v1354
      %1356 = vmatmul.bf16.gmra.mxu0 %v1258
      %v1357 = vpop.f32.mrf.mxu0
      %v1358 = vadd.f32 0.0, %v1357
      %v1359 = vpop.f32.mrf.mxu0
      %v1360 = vadd.f32 0.0, %v1359
      %1361 = vdwg.mxu0
      %v1362 = vadd.f32 %v1001, %v1273
      %v1363 = vadd.f32 %v1002, %v1275
      %v1364 = vadd.f32 %v1003, %v1278
      %v1365 = vadd.f32 %v1004, %v1280
      %v1366 = vadd.f32 %v1005, %v1283
      %v1367 = vadd.f32 %v1006, %v1285
      %v1368 = vadd.f32 %v1007, %v1288
      %v1369 = vadd.f32 %v1008, %v1290
      %v1370 = vadd.f32 %v1009, %v1293
      %v1371 = vadd.f32 %v1010, %v1295
      %v1372 = vadd.f32 %v1011, %v1298
      %v1373 = vadd.f32 %v1012, %v1300
      %v1374 = vadd.f32 %v1013, %v1303
      %v1375 = vadd.f32 %v1014, %v1305
      %v1376 = vadd.f32 %v1015, %v1308
      %v1377 = vadd.f32 %v1016, %v1310
      %v1378 = vadd.f32 %v1017, %v1313
      %v1379 = vadd.f32 %v1018, %v1315
      %v1380 = vadd.f32 %v1019, %v1318
      %v1381 = vadd.f32 %v1020, %v1320
      %v1382 = vadd.f32 %v1021, %v1323
      %v1383 = vadd.f32 %v1022, %v1325
      %v1384 = vadd.f32 %v1023, %v1328
      %v1385 = vadd.f32 %v1024, %v1330
      %v1386 = vadd.f32 %v1025, %v1333
      %v1387 = vadd.f32 %v1026, %v1335
      %v1388 = vadd.f32 %v1027, %v1338
      %v1389 = vadd.f32 %v1028, %v1340
      %v1390 = vadd.f32 %v1029, %v1343
      %v1391 = vadd.f32 %v1030, %v1345
      %v1392 = vadd.f32 %v1031, %v1348
      %v1393 = vadd.f32 %v1032, %v1350
      %v1394 = vadd.f32 %v1033, %v1353
      %v1395 = vadd.f32 %v1034, %v1355
      %v1396 = vadd.f32 %v1035, %v1358
      %v1397 = vadd.f32 %v1036, %v1360
      %v1398 = vld [vmem:[%s206 + $0x98] sm:$0x3]
      %s1399 = scalar_lea.vmem %s210, 8
      %v1400 = vld [vmem:[%s1399] sm:$0x3]
      %v1402 = vunpack.c.l.b16 %v1398
      %v1403 = vpack.c.b16 %v1402, %v1402
      %vm1404 = vsmask.f32 6400
      %v1406 = vshrl.u32 %v1150, 16
      %v1408 = vrot.slane %v1406, 1
      %v1409 = vshll.u32 %v1150, 16
      %v1411 = vrot.slane %v1409, 2
      %v1412 = vor.u32 %v1408, %v1411
      %v1414 = vshrl.u32 %v1151, 16
      %v1416 = vrot.slane %v1414, 1
      %v1417 = vshll.u32 %v1151, 16
      %v1419 = vrot.slane %v1417, 2
      %v1420 = vor.u32 %v1416, %v1419
      %v1421 = vsel %vm1404, %v1412, %v1420
      %v1423 = vshrl.u32 %v1152, 16
      %v1425 = vrot.slane %v1423, 1
      %v1426 = vshll.u32 %v1152, 16
      %v1428 = vrot.slane %v1426, 2
      %v1429 = vor.u32 %v1425, %v1428
      %v1430 = vsel %vm1404, %v1420, %v1429
      %v1432 = vshrl.u32 %v1153, 16
      %v1434 = vrot.slane %v1432, 1
      %v1435 = vshll.u32 %v1153, 16
      %v1437 = vrot.slane %v1435, 2
      %v1438 = vor.u32 %v1434, %v1437
      %v1439 = vsel %vm1404, %v1429, %v1438
      %v1441 = vshrl.u32 %v1154, 16
      %v1443 = vrot.slane %v1441, 1
      %v1444 = vshll.u32 %v1154, 16
      %v1446 = vrot.slane %v1444, 2
      %v1447 = vor.u32 %v1443, %v1446
      %v1448 = vsel %vm1404, %v1438, %v1447
      %v1450 = vshrl.u32 %v1155, 16
      %v1452 = vrot.slane %v1450, 1
      %v1453 = vshll.u32 %v1155, 16
      %v1455 = vrot.slane %v1453, 2
      %v1456 = vor.u32 %v1452, %v1455
      %v1457 = vsel %vm1404, %v1447, %v1456
      %v1459 = vshrl.u32 %v1156, 16
      %v1461 = vrot.slane %v1459, 1
      %v1462 = vshll.u32 %v1156, 16
      %v1464 = vrot.slane %v1462, 2
      %v1465 = vor.u32 %v1461, %v1464
      %v1466 = vsel %vm1404, %v1456, %v1465
      %v1468 = vshrl.u32 %v1157, 16
      %v1470 = vrot.slane %v1468, 1
      %v1471 = vshll.u32 %v1157, 16
      %v1473 = vrot.slane %v1471, 2
      %v1474 = vor.u32 %v1470, %v1473
      %v1475 = vsel %vm1404, %v1465, %v1474
      %v1477 = vshrl.u32 %v1158, 16
      %v1479 = vrot.slane %v1477, 1
      %v1480 = vshll.u32 %v1158, 16
      %v1482 = vrot.slane %v1480, 2
      %v1483 = vor.u32 %v1479, %v1482
      %v1484 = vsel %vm1404, %v1474, %v1483
      %v1486 = vshrl.u32 %v1159, 16
      %v1488 = vrot.slane %v1486, 1
      %v1489 = vshll.u32 %v1159, 16
      %v1491 = vrot.slane %v1489, 2
      %v1492 = vor.u32 %v1488, %v1491
      %v1493 = vsel %vm1404, %v1483, %v1492
      %v1495 = vshrl.u32 %v1160, 16
      %v1497 = vrot.slane %v1495, 1
      %v1498 = vshll.u32 %v1160, 16
      %v1500 = vrot.slane %v1498, 2
      %v1501 = vor.u32 %v1497, %v1500
      %v1502 = vsel %vm1404, %v1492, %v1501
      %v1504 = vshrl.u32 %v1161, 16
      %v1506 = vrot.slane %v1504, 1
      %v1507 = vshll.u32 %v1161, 16
      %v1509 = vrot.slane %v1507, 2
      %v1510 = vor.u32 %v1506, %v1509
      %v1511 = vsel %vm1404, %v1501, %v1510
      %v1513 = vshrl.u32 %v1162, 16
      %v1515 = vrot.slane %v1513, 1
      %v1516 = vshll.u32 %v1162, 16
      %v1518 = vrot.slane %v1516, 2
      %v1519 = vor.u32 %v1515, %v1518
      %v1520 = vsel %vm1404, %v1510, %v1519
      %v1522 = vshrl.u32 %v1163, 16
      %v1524 = vrot.slane %v1522, 1
      %v1525 = vshll.u32 %v1163, 16
      %v1527 = vrot.slane %v1525, 2
      %v1528 = vor.u32 %v1524, %v1527
      %v1529 = vsel %vm1404, %v1519, %v1528
      %v1531 = vshrl.u32 %v1164, 16
      %v1533 = vrot.slane %v1531, 1
      %v1534 = vshll.u32 %v1164, 16
      %v1536 = vrot.slane %v1534, 2
      %v1537 = vor.u32 %v1533, %v1536
      %v1538 = vsel %vm1404, %v1528, %v1537
      %v1540 = vshrl.u32 %v1165, 16
      %v1542 = vrot.slane %v1540, 1
      %v1543 = vshll.u32 %v1165, 16
      %v1545 = vrot.slane %v1543, 2
      %v1546 = vor.u32 %v1542, %v1545
      %v1547 = vsel %vm1404, %v1537, %v1546
      %v1549 = vshrl.u32 %v1166, 16
      %v1551 = vrot.slane %v1549, 1
      %v1552 = vshll.u32 %v1166, 16
      %v1554 = vrot.slane %v1552, 2
      %v1555 = vor.u32 %v1551, %v1554
      %v1556 = vsel %vm1404, %v1546, %v1555
      %v1558 = vshrl.u32 %v1167, 16
      %v1560 = vrot.slane %v1558, 1
      %v1561 = vshll.u32 %v1167, 16
      %v1563 = vrot.slane %v1561, 2
      %v1564 = vor.u32 %v1560, %v1563
      %v1565 = vsel %vm1404, %v1555, %v1564
      %v1567 = vshrl.u32 %v1403, 16
      %v1569 = vrot.slane %v1567, 1
      %v1570 = vshll.u32 %v1403, 16
      %v1572 = vrot.slane %v1570, 2
      %v1573 = vor.u32 %v1569, %v1572
      %v1574 = vsel %vm1404, %v1564, %v1573
      %v1576 = vsel %vm505, %v1421, 0
      %v1579 = vsel %vm505, %v1430, 0
      %v1582 = vsel %vm505, %v1439, 0
      %v1585 = vsel %vm505, %v1448, 0
      %v1588 = vsel %vm505, %v1457, 0
      %v1591 = vsel %vm505, %v1466, 0
      %v1594 = vsel %vm505, %v1475, 0
      %v1597 = vsel %vm505, %v1484, 0
      %v1600 = vsel %vm505, %v1493, 0
      %v1603 = vsel %vm505, %v1502, 0
      %v1606 = vsel %vm505, %v1511, 0
      %v1609 = vsel %vm505, %v1520, 0
      %v1612 = vsel %vm505, %v1529, 0
      %v1615 = vsel %vm505, %v1538, 0
      %v1618 = vsel %vm505, %v1547, 0
      %v1621 = vsel %vm505, %v1556, 0
      %v1624 = vsel %vm505, %v1565, 0
      %v1627 = vsel %vm505, %v1574, 0
      %v1630 = vsel %vm560, %v1400, 0
      %1632 = vmatpush.bf16.msra.mxu0 0
      %1633 = vmatpush.bf16.msra.mxu0 0
      %1634 = vmatpush.bf16.msra.mxu0 0
      %1635 = vmatpush.bf16.msra.mxu0 0
      %1636 = vmatpush.bf16.msra.mxu0 0
      %1637 = vmatpush.bf16.msra.mxu0 0
      %1638 = vmatpush.bf16.msra.mxu0 0
      %1639 = vmatpush.bf16.msra.mxu0 %v1630
      %1640 = vmatmul.bf16.gmra.mxu0 %v1576
      %v1641 = vpop.f32.mrf.mxu0
      %v1642 = vadd.f32 0.0, %v1641
      %v1643 = vpop.f32.mrf.mxu0
      %v1644 = vadd.f32 0.0, %v1643
      %1645 = vmatmul.bf16.gmra.mxu0 %v1579
      %v1646 = vpop.f32.mrf.mxu0
      %v1647 = vadd.f32 0.0, %v1646
      %v1648 = vpop.f32.mrf.mxu0
      %v1649 = vadd.f32 0.0, %v1648
      %1650 = vmatmul.bf16.gmra.mxu0 %v1582
      %v1651 = vpop.f32.mrf.mxu0
      %v1652 = vadd.f32 0.0, %v1651
      %v1653 = vpop.f32.mrf.mxu0
      %v1654 = vadd.f32 0.0, %v1653
      %1655 = vmatmul.bf16.gmra.mxu0 %v1585
      %v1656 = vpop.f32.mrf.mxu0
      %v1657 = vadd.f32 0.0, %v1656
      %v1658 = vpop.f32.mrf.mxu0
      %v1659 = vadd.f32 0.0, %v1658
      %1660 = vmatmul.bf16.gmra.mxu0 %v1588
      %v1661 = vpop.f32.mrf.mxu0
      %v1662 = vadd.f32 0.0, %v1661
      %v1663 = vpop.f32.mrf.mxu0
      %v1664 = vadd.f32 0.0, %v1663
      %1665 = vmatmul.bf16.gmra.mxu0 %v1591
      %v1666 = vpop.f32.mrf.mxu0
      %v1667 = vadd.f32 0.0, %v1666
      %v1668 = vpop.f32.mrf.mxu0
      %v1669 = vadd.f32 0.0, %v1668
      %1670 = vmatmul.bf16.gmra.mxu0 %v1594
      %v1671 = vpop.f32.mrf.mxu0
      %v1672 = vadd.f32 0.0, %v1671
      %v1673 = vpop.f32.mrf.mxu0
      %v1674 = vadd.f32 0.0, %v1673
      %1675 = vmatmul.bf16.gmra.mxu0 %v1597
      %v1676 = vpop.f32.mrf.mxu0
      %v1677 = vadd.f32 0.0, %v1676
      %v1678 = vpop.f32.mrf.mxu0
      %v1679 = vadd.f32 0.0, %v1678
      %1680 = vmatmul.bf16.gmra.mxu0 %v1600
      %v1681 = vpop.f32.mrf.mxu0
      %v1682 = vadd.f32 0.0, %v1681
      %v1683 = vpop.f32.mrf.mxu0
      %v1684 = vadd.f32 0.0, %v1683
      %1685 = vmatmul.bf16.gmra.mxu0 %v1603
      %v1686 = vpop.f32.mrf.mxu0
      %v1687 = vadd.f32 0.0, %v1686
      %v1688 = vpop.f32.mrf.mxu0
      %v1689 = vadd.f32 0.0, %v1688
      %1690 = vmatmul.bf16.gmra.mxu0 %v1606
      %v1691 = vpop.f32.mrf.mxu0
      %v1692 = vadd.f32 0.0, %v1691
      %v1693 = vpop.f32.mrf.mxu0
      %v1694 = vadd.f32 0.0, %v1693
      %1695 = vmatmul.bf16.gmra.mxu0 %v1609
      %v1696 = vpop.f32.mrf.mxu0
      %v1697 = vadd.f32 0.0, %v1696
      %v1698 = vpop.f32.mrf.mxu0
      %v1699 = vadd.f32 0.0, %v1698
      %1700 = vmatmul.bf16.gmra.mxu0 %v1612
      %v1701 = vpop.f32.mrf.mxu0
      %v1702 = vadd.f32 0.0, %v1701
      %v1703 = vpop.f32.mrf.mxu0
      %v1704 = vadd.f32 0.0, %v1703
      %1705 = vmatmul.bf16.gmra.mxu0 %v1615
      %v1706 = vpop.f32.mrf.mxu0
      %v1707 = vadd.f32 0.0, %v1706
      %v1708 = vpop.f32.mrf.mxu0
      %v1709 = vadd.f32 0.0, %v1708
      %1710 = vmatmul.bf16.gmra.mxu0 %v1618
      %v1711 = vpop.f32.mrf.mxu0
      %v1712 = vadd.f32 0.0, %v1711
      %v1713 = vpop.f32.mrf.mxu0
      %v1714 = vadd.f32 0.0, %v1713
      %1715 = vmatmul.bf16.gmra.mxu0 %v1621
      %v1716 = vpop.f32.mrf.mxu0
      %v1717 = vadd.f32 0.0, %v1716
      %v1718 = vpop.f32.mrf.mxu0
      %v1719 = vadd.f32 0.0, %v1718
      %1720 = vmatmul.bf16.gmra.mxu0 %v1624
      %v1721 = vpop.f32.mrf.mxu0
      %v1722 = vadd.f32 0.0, %v1721
      %v1723 = vpop.f32.mrf.mxu0
      %v1724 = vadd.f32 0.0, %v1723
      %1725 = vmatmul.bf16.gmra.mxu0 %v1627
      %v1726 = vpop.f32.mrf.mxu0
      %v1727 = vadd.f32 0.0, %v1726
      %v1728 = vpop.f32.mrf.mxu0
      %v1729 = vadd.f32 0.0, %v1728
      %1730 = vdwg.mxu0
      %v1731 = vadd.f32 %v1362, %v1642
      %v1732 = vadd.f32 %v1363, %v1644
      %v1733 = vadd.f32 %v1364, %v1647
      %v1734 = vadd.f32 %v1365, %v1649
      %v1735 = vadd.f32 %v1366, %v1652
      %v1736 = vadd.f32 %v1367, %v1654
      %v1737 = vadd.f32 %v1368, %v1657
      %v1738 = vadd.f32 %v1369, %v1659
      %v1739 = vadd.f32 %v1370, %v1662
      %v1740 = vadd.f32 %v1371, %v1664
      %v1741 = vadd.f32 %v1372, %v1667
      %v1742 = vadd.f32 %v1373, %v1669
      %v1743 = vadd.f32 %v1374, %v1672
      %v1744 = vadd.f32 %v1375, %v1674
      %v1745 = vadd.f32 %v1376, %v1677
      %v1746 = vadd.f32 %v1377, %v1679
      %v1747 = vadd.f32 %v1378, %v1682
      %v1748 = vadd.f32 %v1379, %v1684
      %v1749 = vadd.f32 %v1380, %v1687
      %v1750 = vadd.f32 %v1381, %v1689
      %v1751 = vadd.f32 %v1382, %v1692
      %v1752 = vadd.f32 %v1383, %v1694
      %v1753 = vadd.f32 %v1384, %v1697
      %v1754 = vadd.f32 %v1385, %v1699
      %v1755 = vadd.f32 %v1386, %v1702
      %v1756 = vadd.f32 %v1387, %v1704
      %v1757 = vadd.f32 %v1388, %v1707
      %v1758 = vadd.f32 %v1389, %v1709
      %v1759 = vadd.f32 %v1390, %v1712
      %v1760 = vadd.f32 %v1391, %v1714
      %v1761 = vadd.f32 %v1392, %v1717
      %v1762 = vadd.f32 %v1393, %v1719
      %v1763 = vadd.f32 %v1394, %v1722
      %v1764 = vadd.f32 %v1395, %v1724
      %v1765 = vadd.f32 %v1396, %v1727
      %v1766 = vadd.f32 %v1397, %v1729
      %v1767 = vld [vmem:[%s206 + $0x8] sm:$0xc]
      %s1768 = scalar_lea.vmem %s210, 10
      %v1769 = vld [vmem:[%s1768] sm:$0x3]
      %v1771 = vunpack.c.l.b16 %v1767
      %v1772 = vpack.c.b16 %v1114, %v1771
      %vm1773 = vcmask 1045504
      %v1774 = vrot.slane %v1772, 2
      %v1775 = vrot.slane %v1151, 2
      %v1776 = vsel %vm1773, %v1774, %v1775
      %v1777 = vrot.slane %v1152, 2
      %v1778 = vsel %vm1773, %v1775, %v1777
      %v1779 = vrot.slane %v1153, 2
      %v1780 = vsel %vm1773, %v1777, %v1779
      %v1781 = vrot.slane %v1154, 2
      %v1782 = vsel %vm1773, %v1779, %v1781
      %v1783 = vrot.slane %v1155, 2
      %v1784 = vsel %vm1773, %v1781, %v1783
      %v1785 = vrot.slane %v1156, 2
      %v1786 = vsel %vm1773, %v1783, %v1785
      %v1787 = vrot.slane %v1157, 2
      %v1788 = vsel %vm1773, %v1785, %v1787
      %v1789 = vrot.slane %v1158, 2
      %v1790 = vsel %vm1773, %v1787, %v1789
      %v1791 = vrot.slane %v1159, 2
      %v1792 = vsel %vm1773, %v1789, %v1791
      %v1793 = vrot.slane %v1160, 2
      %v1794 = vsel %vm1773, %v1791, %v1793
      %v1795 = vrot.slane %v1161, 2
      %v1796 = vsel %vm1773, %v1793, %v1795
      %v1797 = vrot.slane %v1162, 2
      %v1798 = vsel %vm1773, %v1795, %v1797
      %v1799 = vrot.slane %v1163, 2
      %v1800 = vsel %vm1773, %v1797, %v1799
      %v1801 = vrot.slane %v1164, 2
      %v1802 = vsel %vm1773, %v1799, %v1801
      %v1803 = vrot.slane %v1165, 2
      %v1804 = vsel %vm1773, %v1801, %v1803
      %v1805 = vrot.slane %v1166, 2
      %v1806 = vsel %vm1773, %v1803, %v1805
      %v1807 = vrot.slane %v1167, 2
      %v1808 = vsel %vm1773, %v1805, %v1807
      %v1809 = vrot.slane %v1403, 2
      %v1810 = vsel %vm1773, %v1807, %v1809
      %v1812 = vsel %vm505, %v1776, 0
      %v1815 = vsel %vm505, %v1778, 0
      %v1818 = vsel %vm505, %v1780, 0
      %v1821 = vsel %vm505, %v1782, 0
      %v1824 = vsel %vm505, %v1784, 0
      %v1827 = vsel %vm505, %v1786, 0
      %v1830 = vsel %vm505, %v1788, 0
      %v1833 = vsel %vm505, %v1790, 0
      %v1836 = vsel %vm505, %v1792, 0
      %v1839 = vsel %vm505, %v1794, 0
      %v1842 = vsel %vm505, %v1796, 0
      %v1845 = vsel %vm505, %v1798, 0
      %v1848 = vsel %vm505, %v1800, 0
      %v1851 = vsel %vm505, %v1802, 0
      %v1854 = vsel %vm505, %v1804, 0
      %v1857 = vsel %vm505, %v1806, 0
      %v1860 = vsel %vm505, %v1808, 0
      %v1863 = vsel %vm505, %v1810, 0
      %v1866 = vsel %vm560, %v1769, 0
      %1868 = vmatpush.bf16.msra.mxu0 0
      %1869 = vmatpush.bf16.msra.mxu0 0
      %1870 = vmatpush.bf16.msra.mxu0 0
      %1871 = vmatpush.bf16.msra.mxu0 0
      %1872 = vmatpush.bf16.msra.mxu0 0
      %1873 = vmatpush.bf16.msra.mxu0 0
      %1874 = vmatpush.bf16.msra.mxu0 0
      %1875 = vmatpush.bf16.msra.mxu0 %v1866
      %1876 = vmatmul.bf16.gmra.mxu0 %v1812
      %v1877 = vpop.f32.mrf.mxu0
      %v1878 = vadd.f32 0.0, %v1877
      %v1879 = vpop.f32.mrf.mxu0
      %v1880 = vadd.f32 0.0, %v1879
      %1881 = vmatmul.bf16.gmra.mxu0 %v1815
      %v1882 = vpop.f32.mrf.mxu0
      %v1883 = vadd.f32 0.0, %v1882
      %v1884 = vpop.f32.mrf.mxu0
      %v1885 = vadd.f32 0.0, %v1884
      %1886 = vmatmul.bf16.gmra.mxu0 %v1818
      %v1887 = vpop.f32.mrf.mxu0
      %v1888 = vadd.f32 0.0, %v1887
      %v1889 = vpop.f32.mrf.mxu0
      %v1890 = vadd.f32 0.0, %v1889
      %1891 = vmatmul.bf16.gmra.mxu0 %v1821
      %v1892 = vpop.f32.mrf.mxu0
      %v1893 = vadd.f32 0.0, %v1892
      %v1894 = vpop.f32.mrf.mxu0
      %v1895 = vadd.f32 0.0, %v1894
      %1896 = vmatmul.bf16.gmra.mxu0 %v1824
      %v1897 = vpop.f32.mrf.mxu0
      %v1898 = vadd.f32 0.0, %v1897
      %v1899 = vpop.f32.mrf.mxu0
      %v1900 = vadd.f32 0.0, %v1899
      %1901 = vmatmul.bf16.gmra.mxu0 %v1827
      %v1902 = vpop.f32.mrf.mxu0
      %v1903 = vadd.f32 0.0, %v1902
      %v1904 = vpop.f32.mrf.mxu0
      %v1905 = vadd.f32 0.0, %v1904
      %1906 = vmatmul.bf16.gmra.mxu0 %v1830
      %v1907 = vpop.f32.mrf.mxu0
      %v1908 = vadd.f32 0.0, %v1907
      %v1909 = vpop.f32.mrf.mxu0
      %v1910 = vadd.f32 0.0, %v1909
      %1911 = vmatmul.bf16.gmra.mxu0 %v1833
      %v1912 = vpop.f32.mrf.mxu0
      %v1913 = vadd.f32 0.0, %v1912
      %v1914 = vpop.f32.mrf.mxu0
      %v1915 = vadd.f32 0.0, %v1914
      %1916 = vmatmul.bf16.gmra.mxu0 %v1836
      %v1917 = vpop.f32.mrf.mxu0
      %v1918 = vadd.f32 0.0, %v1917
      %v1919 = vpop.f32.mrf.mxu0
      %v1920 = vadd.f32 0.0, %v1919
      %1921 = vmatmul.bf16.gmra.mxu0 %v1839
      %v1922 = vpop.f32.mrf.mxu0
      %v1923 = vadd.f32 0.0, %v1922
      %v1924 = vpop.f32.mrf.mxu0
      %v1925 = vadd.f32 0.0, %v1924
      %1926 = vmatmul.bf16.gmra.mxu0 %v1842
      %v1927 = vpop.f32.mrf.mxu0
      %v1928 = vadd.f32 0.0, %v1927
      %v1929 = vpop.f32.mrf.mxu0
      %v1930 = vadd.f32 0.0, %v1929
      %1931 = vmatmul.bf16.gmra.mxu0 %v1845
      %v1932 = vpop.f32.mrf.mxu0
      %v1933 = vadd.f32 0.0, %v1932
      %v1934 = vpop.f32.mrf.mxu0
      %v1935 = vadd.f32 0.0, %v1934
      %1936 = vmatmul.bf16.gmra.mxu0 %v1848
      %v1937 = vpop.f32.mrf.mxu0
      %v1938 = vadd.f32 0.0, %v1937
      %v1939 = vpop.f32.mrf.mxu0
      %v1940 = vadd.f32 0.0, %v1939
      %1941 = vmatmul.bf16.gmra.mxu0 %v1851
      %v1942 = vpop.f32.mrf.mxu0
      %v1943 = vadd.f32 0.0, %v1942
      %v1944 = vpop.f32.mrf.mxu0
      %v1945 = vadd.f32 0.0, %v1944
      %1946 = vmatmul.bf16.gmra.mxu0 %v1854
      %v1947 = vpop.f32.mrf.mxu0
      %v1948 = vadd.f32 0.0, %v1947
      %v1949 = vpop.f32.mrf.mxu0
      %v1950 = vadd.f32 0.0, %v1949
      %1951 = vmatmul.bf16.gmra.mxu0 %v1857
      %v1952 = vpop.f32.mrf.mxu0
      %v1953 = vadd.f32 0.0, %v1952
      %v1954 = vpop.f32.mrf.mxu0
      %v1955 = vadd.f32 0.0, %v1954
      %1956 = vmatmul.bf16.gmra.mxu0 %v1860
      %v1957 = vpop.f32.mrf.mxu0
      %v1958 = vadd.f32 0.0, %v1957
      %v1959 = vpop.f32.mrf.mxu0
      %v1960 = vadd.f32 0.0, %v1959
      %1961 = vmatmul.bf16.gmra.mxu0 %v1863
      %v1962 = vpop.f32.mrf.mxu0
      %v1963 = vadd.f32 0.0, %v1962
      %v1964 = vpop.f32.mrf.mxu0
      %v1965 = vadd.f32 0.0, %v1964
      %1966 = vdwg.mxu0
      %v1967 = vadd.f32 %v1731, %v1878
      %v1968 = vadd.f32 %v1732, %v1880
      %v1969 = vadd.f32 %v1733, %v1883
      %v1970 = vadd.f32 %v1734, %v1885
      %v1971 = vadd.f32 %v1735, %v1888
      %v1972 = vadd.f32 %v1736, %v1890
      %v1973 = vadd.f32 %v1737, %v1893
      %v1974 = vadd.f32 %v1738, %v1895
      %v1975 = vadd.f32 %v1739, %v1898
      %v1976 = vadd.f32 %v1740, %v1900
      %v1977 = vadd.f32 %v1741, %v1903
      %v1978 = vadd.f32 %v1742, %v1905
      %v1979 = vadd.f32 %v1743, %v1908
      %v1980 = vadd.f32 %v1744, %v1910
      %v1981 = vadd.f32 %v1745, %v1913
      %v1982 = vadd.f32 %v1746, %v1915
      %v1983 = vadd.f32 %v1747, %v1918
      %v1984 = vadd.f32 %v1748, %v1920
      %v1985 = vadd.f32 %v1749, %v1923
      %v1986 = vadd.f32 %v1750, %v1925
      %v1987 = vadd.f32 %v1751, %v1928
      %v1988 = vadd.f32 %v1752, %v1930
      %v1989 = vadd.f32 %v1753, %v1933
      %v1990 = vadd.f32 %v1754, %v1935
      %v1991 = vadd.f32 %v1755, %v1938
      %v1992 = vadd.f32 %v1756, %v1940
      %v1993 = vadd.f32 %v1757, %v1943
      %v1994 = vadd.f32 %v1758, %v1945
      %v1995 = vadd.f32 %v1759, %v1948
      %v1996 = vadd.f32 %v1760, %v1950
      %v1997 = vadd.f32 %v1761, %v1953
      %v1998 = vadd.f32 %v1762, %v1955
      %v1999 = vadd.f32 %v1763, %v1958
      %v2000 = vadd.f32 %v1764, %v1960
      %v2001 = vadd.f32 %v1765, %v1963
      %v2002 = vadd.f32 %v1766, %v1965
      %v2003 = vld [vmem:[%s206 + $0x10] sm:$0xc]
      %v2004 = vld [vmem:[%s206 + $0x14] sm:$0xf]
      %v2005 = vld [vmem:[%s206 + $0x18] sm:$0xf]
      %v2006 = vld [vmem:[%s206 + $0x1c] sm:$0xf]
      %v2007 = vld [vmem:[%s206 + $0x20] sm:$0xf]
      %v2008 = vld [vmem:[%s206 + $0x24] sm:$0xf]
      %v2009 = vld [vmem:[%s206 + $0x28] sm:$0xf]
      %v2010 = vld [vmem:[%s206 + $0x2c] sm:$0xf]
      %v2011 = vld [vmem:[%s206 + $0x30] sm:$0xf]
      %v2012 = vld [vmem:[%s206 + $0x34] sm:$0xf]
      %v2013 = vld [vmem:[%s206 + $0x38] sm:$0xf]
      %v2014 = vld [vmem:[%s206 + $0x3c] sm:$0xf]
      %v2015 = vld [vmem:[%s206 + $0x40] sm:$0xf]
      %v2016 = vld [vmem:[%s206 + $0x44] sm:$0xf]
      %v2017 = vld [vmem:[%s206 + $0x48] sm:$0xf]
      %v2018 = vld [vmem:[%s206 + $0x4c] sm:$0xf]
      %v2019 = vld [vmem:[%s206 + $0x50] sm:$0xf]
      %v2020 = vld [vmem:[%s206 + $0x54] sm:$0xf]
      %v2021 = vld [vmem:[%s206 + $0x58] sm:$0xf]
      %v2022 = vld [vmem:[%s206 + $0x5c] sm:$0xf]
      %v2023 = vld [vmem:[%s206 + $0x60] sm:$0xf]
      %v2024 = vld [vmem:[%s206 + $0x64] sm:$0xf]
      %v2025 = vld [vmem:[%s206 + $0x68] sm:$0xf]
      %v2026 = vld [vmem:[%s206 + $0x6c] sm:$0xf]
      %v2027 = vld [vmem:[%s206 + $0x70] sm:$0xf]
      %v2028 = vld [vmem:[%s206 + $0x74] sm:$0xf]
      %v2029 = vld [vmem:[%s206 + $0x78] sm:$0xf]
      %v2030 = vld [vmem:[%s206 + $0x7c] sm:$0xf]
      %v2031 = vld [vmem:[%s206 + $0x80] sm:$0xf]
      %v2032 = vld [vmem:[%s206 + $0x84] sm:$0xf]
      %v2033 = vld [vmem:[%s206 + $0x88] sm:$0xf]
      %v2034 = vld [vmem:[%s206 + $0x8c] sm:$0xf]
      %v2035 = vld [vmem:[%s206 + $0x90] sm:$0xf]
      %v2036 = vld [vmem:[%s206 + $0x94] sm:$0xf]
      %v2037 = vld [vmem:[%s206 + $0x98] sm:$0xf]
      %v2038 = vld [vmem:[%s206 + $0x9c] sm:$0xf]
      %v2039 = vld [vmem:[%s206 + $0xa0] sm:$0x3]
      %s2040 = scalar_lea.vmem %s210, 12
      %v2041 = vld [vmem:[%s2040] sm:$0x3]
      %v2079 = vunpack.c.l.b16 %v2003
      %v2080 = vunpack.c.l.b16 %v2004
      %v2081 = vunpack.c.l.b16 %v2005
      %v2082 = vunpack.c.l.b16 %v2006
      %v2083 = vunpack.c.l.b16 %v2007
      %v2084 = vunpack.c.l.b16 %v2008
      %v2085 = vunpack.c.l.b16 %v2009
      %v2086 = vunpack.c.l.b16 %v2010
      %v2087 = vunpack.c.l.b16 %v2011
      %v2088 = vunpack.c.l.b16 %v2012
      %v2089 = vunpack.c.l.b16 %v2013
      %v2090 = vunpack.c.l.b16 %v2014
      %v2091 = vunpack.c.l.b16 %v2015
      %v2092 = vunpack.c.l.b16 %v2016
      %v2093 = vunpack.c.l.b16 %v2017
      %v2094 = vunpack.c.l.b16 %v2018
      %v2095 = vunpack.c.l.b16 %v2019
      %v2096 = vunpack.c.l.b16 %v2020
      %v2097 = vunpack.c.l.b16 %v2021
      %v2098 = vunpack.c.l.b16 %v2022
      %v2099 = vunpack.c.l.b16 %v2023
      %v2100 = vunpack.c.l.b16 %v2024
      %v2101 = vunpack.c.l.b16 %v2025
      %v2102 = vunpack.c.l.b16 %v2026
      %v2103 = vunpack.c.l.b16 %v2027
      %v2104 = vunpack.c.l.b16 %v2028
      %v2105 = vunpack.c.l.b16 %v2029
      %v2106 = vunpack.c.l.b16 %v2030
      %v2107 = vunpack.c.l.b16 %v2031
      %v2108 = vunpack.c.l.b16 %v2032
      %v2109 = vunpack.c.l.b16 %v2033
      %v2110 = vunpack.c.l.b16 %v2034
      %v2111 = vunpack.c.l.b16 %v2035
      %v2112 = vunpack.c.l.b16 %v2036
      %v2113 = vunpack.c.l.b16 %v2037
      %v2114 = vunpack.c.l.b16 %v2038
      %v2115 = vunpack.c.l.b16 %v2039
      %v2116 = vpack.c.b16 %v2080, %v2079
      %v2117 = vpack.c.b16 %v2082, %v2081
      %v2118 = vpack.c.b16 %v2084, %v2083
      %v2119 = vpack.c.b16 %v2086, %v2085
      %v2120 = vpack.c.b16 %v2088, %v2087
      %v2121 = vpack.c.b16 %v2090, %v2089
      %v2122 = vpack.c.b16 %v2092, %v2091
      %v2123 = vpack.c.b16 %v2094, %v2093
      %v2124 = vpack.c.b16 %v2096, %v2095
      %v2125 = vpack.c.b16 %v2098, %v2097
      %v2126 = vpack.c.b16 %v2100, %v2099
      %v2127 = vpack.c.b16 %v2102, %v2101
      %v2128 = vpack.c.b16 %v2104, %v2103
      %v2129 = vpack.c.b16 %v2106, %v2105
      %v2130 = vpack.c.b16 %v2108, %v2107
      %v2131 = vpack.c.b16 %v2110, %v2109
      %v2132 = vpack.c.b16 %v2112, %v2111
      %v2133 = vpack.c.b16 %v2114, %v2113
      %v2134 = vpack.c.b16 %v2115, %v2115
      %v2135 = vrot.slane %v2116, 2
      %v2136 = vrot.slane %v2117, 2
      %v2137 = vsel %vm1773, %v2135, %v2136
      %v2138 = vrot.slane %v2118, 2
      %v2139 = vsel %vm1773, %v2136, %v2138
      %v2140 = vrot.slane %v2119, 2
      %v2141 = vsel %vm1773, %v2138, %v2140
      %v2142 = vrot.slane %v2120, 2
      %v2143 = vsel %vm1773, %v2140, %v2142
      %v2144 = vrot.slane %v2121, 2
      %v2145 = vsel %vm1773, %v2142, %v2144
      %v2146 = vrot.slane %v2122, 2
      %v2147 = vsel %vm1773, %v2144, %v2146
      %v2148 = vrot.slane %v2123, 2
      %v2149 = vsel %vm1773, %v2146, %v2148
      %v2150 = vrot.slane %v2124, 2
      %v2151 = vsel %vm1773, %v2148, %v2150
      %v2152 = vrot.slane %v2125, 2
      %v2153 = vsel %vm1773, %v2150, %v2152
      %v2154 = vrot.slane %v2126, 2
      %v2155 = vsel %vm1773, %v2152, %v2154
      %v2156 = vrot.slane %v2127, 2
      %v2157 = vsel %vm1773, %v2154, %v2156
      %v2158 = vrot.slane %v2128, 2
      %v2159 = vsel %vm1773, %v2156, %v2158
      %v2160 = vrot.slane %v2129, 2
      %v2161 = vsel %vm1773, %v2158, %v2160
      %v2162 = vrot.slane %v2130, 2
      %v2163 = vsel %vm1773, %v2160, %v2162
      %v2164 = vrot.slane %v2131, 2
      %v2165 = vsel %vm1773, %v2162, %v2164
      %v2166 = vrot.slane %v2132, 2
      %v2167 = vsel %vm1773, %v2164, %v2166
      %v2168 = vrot.slane %v2133, 2
      %v2169 = vsel %vm1773, %v2166, %v2168
      %v2170 = vrot.slane %v2134, 2
      %v2171 = vsel %vm1773, %v2168, %v2170
      %v2173 = vsel %vm505, %v2137, 0
      %v2176 = vsel %vm505, %v2139, 0
      %v2179 = vsel %vm505, %v2141, 0
      %v2182 = vsel %vm505, %v2143, 0
      %v2185 = vsel %vm505, %v2145, 0
      %v2188 = vsel %vm505, %v2147, 0
      %v2191 = vsel %vm505, %v2149, 0
      %v2194 = vsel %vm505, %v2151, 0
      %v2197 = vsel %vm505, %v2153, 0
      %v2200 = vsel %vm505, %v2155, 0
      %v2203 = vsel %vm505, %v2157, 0
      %v2206 = vsel %vm505, %v2159, 0
      %v2209 = vsel %vm505, %v2161, 0
      %v2212 = vsel %vm505, %v2163, 0
      %v2215 = vsel %vm505, %v2165, 0
      %v2218 = vsel %vm505, %v2167, 0
      %v2221 = vsel %vm505, %v2169, 0
      %v2224 = vsel %vm505, %v2171, 0
      %v2227 = vsel %vm560, %v2041, 0
      %2229 = vmatpush.bf16.msra.mxu0 0
      %2230 = vmatpush.bf16.msra.mxu0 0
      %2231 = vmatpush.bf16.msra.mxu0 0
      %2232 = vmatpush.bf16.msra.mxu0 0
      %2233 = vmatpush.bf16.msra.mxu0 0
      %2234 = vmatpush.bf16.msra.mxu0 0
      %2235 = vmatpush.bf16.msra.mxu0 0
      %2236 = vmatpush.bf16.msra.mxu0 %v2227
      %2237 = vmatmul.bf16.gmra.mxu0 %v2173
      %v2238 = vpop.f32.mrf.mxu0
      %v2239 = vadd.f32 0.0, %v2238
      %v2240 = vpop.f32.mrf.mxu0
      %v2241 = vadd.f32 0.0, %v2240
      %2242 = vmatmul.bf16.gmra.mxu0 %v2176
      %v2243 = vpop.f32.mrf.mxu0
      %v2244 = vadd.f32 0.0, %v2243
      %v2245 = vpop.f32.mrf.mxu0
      %v2246 = vadd.f32 0.0, %v2245
      %2247 = vmatmul.bf16.gmra.mxu0 %v2179
      %v2248 = vpop.f32.mrf.mxu0
      %v2249 = vadd.f32 0.0, %v2248
      %v2250 = vpop.f32.mrf.mxu0
      %v2251 = vadd.f32 0.0, %v2250
      %2252 = vmatmul.bf16.gmra.mxu0 %v2182
      %v2253 = vpop.f32.mrf.mxu0
      %v2254 = vadd.f32 0.0, %v2253
      %v2255 = vpop.f32.mrf.mxu0
      %v2256 = vadd.f32 0.0, %v2255
      %2257 = vmatmul.bf16.gmra.mxu0 %v2185
      %v2258 = vpop.f32.mrf.mxu0
      %v2259 = vadd.f32 0.0, %v2258
      %v2260 = vpop.f32.mrf.mxu0
      %v2261 = vadd.f32 0.0, %v2260
      %2262 = vmatmul.bf16.gmra.mxu0 %v2188
      %v2263 = vpop.f32.mrf.mxu0
      %v2264 = vadd.f32 0.0, %v2263
      %v2265 = vpop.f32.mrf.mxu0
      %v2266 = vadd.f32 0.0, %v2265
      %2267 = vmatmul.bf16.gmra.mxu0 %v2191
      %v2268 = vpop.f32.mrf.mxu0
      %v2269 = vadd.f32 0.0, %v2268
      %v2270 = vpop.f32.mrf.mxu0
      %v2271 = vadd.f32 0.0, %v2270
      %2272 = vmatmul.bf16.gmra.mxu0 %v2194
      %v2273 = vpop.f32.mrf.mxu0
      %v2274 = vadd.f32 0.0, %v2273
      %v2275 = vpop.f32.mrf.mxu0
      %v2276 = vadd.f32 0.0, %v2275
      %2277 = vmatmul.bf16.gmra.mxu0 %v2197
      %v2278 = vpop.f32.mrf.mxu0
      %v2279 = vadd.f32 0.0, %v2278
      %v2280 = vpop.f32.mrf.mxu0
      %v2281 = vadd.f32 0.0, %v2280
      %2282 = vmatmul.bf16.gmra.mxu0 %v2200
      %v2283 = vpop.f32.mrf.mxu0
      %v2284 = vadd.f32 0.0, %v2283
      %v2285 = vpop.f32.mrf.mxu0
      %v2286 = vadd.f32 0.0, %v2285
      %2287 = vmatmul.bf16.gmra.mxu0 %v2203
      %v2288 = vpop.f32.mrf.mxu0
      %v2289 = vadd.f32 0.0, %v2288
      %v2290 = vpop.f32.mrf.mxu0
      %v2291 = vadd.f32 0.0, %v2290
      %2292 = vmatmul.bf16.gmra.mxu0 %v2206
      %v2293 = vpop.f32.mrf.mxu0
      %v2294 = vadd.f32 0.0, %v2293
      %v2295 = vpop.f32.mrf.mxu0
      %v2296 = vadd.f32 0.0, %v2295
      %2297 = vmatmul.bf16.gmra.mxu0 %v2209
      %v2298 = vpop.f32.mrf.mxu0
      %v2299 = vadd.f32 0.0, %v2298
      %v2300 = vpop.f32.mrf.mxu0
      %v2301 = vadd.f32 0.0, %v2300
      %2302 = vmatmul.bf16.gmra.mxu0 %v2212
      %v2303 = vpop.f32.mrf.mxu0
      %v2304 = vadd.f32 0.0, %v2303
      %v2305 = vpop.f32.mrf.mxu0
      %v2306 = vadd.f32 0.0, %v2305
      %2307 = vmatmul.bf16.gmra.mxu0 %v2215
      %v2308 = vpop.f32.mrf.mxu0
      %v2309 = vadd.f32 0.0, %v2308
      %v2310 = vpop.f32.mrf.mxu0
      %v2311 = vadd.f32 0.0, %v2310
      %2312 = vmatmul.bf16.gmra.mxu0 %v2218
      %v2313 = vpop.f32.mrf.mxu0
      %v2314 = vadd.f32 0.0, %v2313
      %v2315 = vpop.f32.mrf.mxu0
      %v2316 = vadd.f32 0.0, %v2315
      %2317 = vmatmul.bf16.gmra.mxu0 %v2221
      %v2318 = vpop.f32.mrf.mxu0
      %v2319 = vadd.f32 0.0, %v2318
      %v2320 = vpop.f32.mrf.mxu0
      %v2321 = vadd.f32 0.0, %v2320
      %2322 = vmatmul.bf16.gmra.mxu0 %v2224
      %v2323 = vpop.f32.mrf.mxu0
      %v2324 = vadd.f32 0.0, %v2323
      %v2325 = vpop.f32.mrf.mxu0
      %v2326 = vadd.f32 0.0, %v2325
      %2327 = vdwg.mxu0
      %v2328 = vadd.f32 %v1967, %v2239
      %v2329 = vadd.f32 %v1968, %v2241
      %v2330 = vadd.f32 %v1969, %v2244
      %v2331 = vadd.f32 %v1970, %v2246
      %v2332 = vadd.f32 %v1971, %v2249
      %v2333 = vadd.f32 %v1972, %v2251
      %v2334 = vadd.f32 %v1973, %v2254
      %v2335 = vadd.f32 %v1974, %v2256
      %v2336 = vadd.f32 %v1975, %v2259
      %v2337 = vadd.f32 %v1976, %v2261
      %v2338 = vadd.f32 %v1977, %v2264
      %v2339 = vadd.f32 %v1978, %v2266
      %v2340 = vadd.f32 %v1979, %v2269
      %v2341 = vadd.f32 %v1980, %v2271
      %v2342 = vadd.f32 %v1981, %v2274
      %v2343 = vadd.f32 %v1982, %v2276
      %v2344 = vadd.f32 %v1983, %v2279
      %v2345 = vadd.f32 %v1984, %v2281
      %v2346 = vadd.f32 %v1985, %v2284
      %v2347 = vadd.f32 %v1986, %v2286
      %v2348 = vadd.f32 %v1987, %v2289
      %v2349 = vadd.f32 %v1988, %v2291
      %v2350 = vadd.f32 %v1989, %v2294
      %v2351 = vadd.f32 %v1990, %v2296
      %v2352 = vadd.f32 %v1991, %v2299
      %v2353 = vadd.f32 %v1992, %v2301
      %v2354 = vadd.f32 %v1993, %v2304
      %v2355 = vadd.f32 %v1994, %v2306
      %v2356 = vadd.f32 %v1995, %v2309
      %v2357 = vadd.f32 %v1996, %v2311
      %v2358 = vadd.f32 %v1997, %v2314
      %v2359 = vadd.f32 %v1998, %v2316
      %v2360 = vadd.f32 %v1999, %v2319
      %v2361 = vadd.f32 %v2000, %v2321
      %v2362 = vadd.f32 %v2001, %v2324
      %v2363 = vadd.f32 %v2002, %v2326
      %v2364 = vld [vmem:[%s206 + $0xa0] sm:$0x7]
      %s2365 = scalar_lea.vmem %s210, 14
      %v2366 = vld [vmem:[%s2365] sm:$0x3]
      %v2368 = vunpack.c.l.b16 %v2364
      %v2369 = vpack.c.b16 %v2368, %v2368
      %vm2370 = vsmask.f32 5376
      %v2372 = vshrl.u32 %v2116, 16
      %v2374 = vrot.slane %v2372, 2
      %v2375 = vshll.u32 %v2116, 16
      %v2377 = vrot.slane %v2375, 3
      %v2378 = vor.u32 %v2374, %v2377
      %v2380 = vshrl.u32 %v2117, 16
      %v2382 = vrot.slane %v2380, 2
      %v2383 = vshll.u32 %v2117, 16
      %v2385 = vrot.slane %v2383, 3
      %v2386 = vor.u32 %v2382, %v2385
      %v2387 = vsel %vm2370, %v2378, %v2386
      %v2389 = vshrl.u32 %v2118, 16
      %v2391 = vrot.slane %v2389, 2
      %v2392 = vshll.u32 %v2118, 16
      %v2394 = vrot.slane %v2392, 3
      %v2395 = vor.u32 %v2391, %v2394
      %v2396 = vsel %vm2370, %v2386, %v2395
      %v2398 = vshrl.u32 %v2119, 16
      %v2400 = vrot.slane %v2398, 2
      %v2401 = vshll.u32 %v2119, 16
      %v2403 = vrot.slane %v2401, 3
      %v2404 = vor.u32 %v2400, %v2403
      %v2405 = vsel %vm2370, %v2395, %v2404
      %v2407 = vshrl.u32 %v2120, 16
      %v2409 = vrot.slane %v2407, 2
      %v2410 = vshll.u32 %v2120, 16
      %v2412 = vrot.slane %v2410, 3
      %v2413 = vor.u32 %v2409, %v2412
      %v2414 = vsel %vm2370, %v2404, %v2413
      %v2416 = vshrl.u32 %v2121, 16
      %v2418 = vrot.slane %v2416, 2
      %v2419 = vshll.u32 %v2121, 16
      %v2421 = vrot.slane %v2419, 3
      %v2422 = vor.u32 %v2418, %v2421
      %v2423 = vsel %vm2370, %v2413, %v2422
      %v2425 = vshrl.u32 %v2122, 16
      %v2427 = vrot.slane %v2425, 2
      %v2428 = vshll.u32 %v2122, 16
      %v2430 = vrot.slane %v2428, 3
      %v2431 = vor.u32 %v2427, %v2430
      %v2432 = vsel %vm2370, %v2422, %v2431
      %v2434 = vshrl.u32 %v2123, 16
      %v2436 = vrot.slane %v2434, 2
      %v2437 = vshll.u32 %v2123, 16
      %v2439 = vrot.slane %v2437, 3
      %v2440 = vor.u32 %v2436, %v2439
      %v2441 = vsel %vm2370, %v2431, %v2440
      %v2443 = vshrl.u32 %v2124, 16
      %v2445 = vrot.slane %v2443, 2
      %v2446 = vshll.u32 %v2124, 16
      %v2448 = vrot.slane %v2446, 3
      %v2449 = vor.u32 %v2445, %v2448
      %v2450 = vsel %vm2370, %v2440, %v2449
      %v2452 = vshrl.u32 %v2125, 16
      %v2454 = vrot.slane %v2452, 2
      %v2455 = vshll.u32 %v2125, 16
      %v2457 = vrot.slane %v2455, 3
      %v2458 = vor.u32 %v2454, %v2457
      %v2459 = vsel %vm2370, %v2449, %v2458
      %v2461 = vshrl.u32 %v2126, 16
      %v2463 = vrot.slane %v2461, 2
      %v2464 = vshll.u32 %v2126, 16
      %v2466 = vrot.slane %v2464, 3
      %v2467 = vor.u32 %v2463, %v2466
      %v2468 = vsel %vm2370, %v2458, %v2467
      %v2470 = vshrl.u32 %v2127, 16
      %v2472 = vrot.slane %v2470, 2
      %v2473 = vshll.u32 %v2127, 16
      %v2475 = vrot.slane %v2473, 3
      %v2476 = vor.u32 %v2472, %v2475
      %v2477 = vsel %vm2370, %v2467, %v2476
      %v2479 = vshrl.u32 %v2128, 16
      %v2481 = vrot.slane %v2479, 2
      %v2482 = vshll.u32 %v2128, 16
      %v2484 = vrot.slane %v2482, 3
      %v2485 = vor.u32 %v2481, %v2484
      %v2486 = vsel %vm2370, %v2476, %v2485
      %v2488 = vshrl.u32 %v2129, 16
      %v2490 = vrot.slane %v2488, 2
      %v2491 = vshll.u32 %v2129, 16
      %v2493 = vrot.slane %v2491, 3
      %v2494 = vor.u32 %v2490, %v2493
      %v2495 = vsel %vm2370, %v2485, %v2494
      %v2497 = vshrl.u32 %v2130, 16
      %v2499 = vrot.slane %v2497, 2
      %v2500 = vshll.u32 %v2130, 16
      %v2502 = vrot.slane %v2500, 3
      %v2503 = vor.u32 %v2499, %v2502
      %v2504 = vsel %vm2370, %v2494, %v2503
      %v2506 = vshrl.u32 %v2131, 16
      %v2508 = vrot.slane %v2506, 2
      %v2509 = vshll.u32 %v2131, 16
      %v2511 = vrot.slane %v2509, 3
      %v2512 = vor.u32 %v2508, %v2511
      %v2513 = vsel %vm2370, %v2503, %v2512
      %v2515 = vshrl.u32 %v2132, 16
      %v2517 = vrot.slane %v2515, 2
      %v2518 = vshll.u32 %v2132, 16
      %v2520 = vrot.slane %v2518, 3
      %v2521 = vor.u32 %v2517, %v2520
      %v2522 = vsel %vm2370, %v2512, %v2521
      %v2524 = vshrl.u32 %v2133, 16
      %v2526 = vrot.slane %v2524, 2
      %v2527 = vshll.u32 %v2133, 16
      %v2529 = vrot.slane %v2527, 3
      %v2530 = vor.u32 %v2526, %v2529
      %v2531 = vsel %vm2370, %v2521, %v2530
      %v2533 = vshrl.u32 %v2369, 16
      %v2535 = vrot.slane %v2533, 2
      %v2536 = vshll.u32 %v2369, 16
      %v2538 = vrot.slane %v2536, 3
      %v2539 = vor.u32 %v2535, %v2538
      %v2540 = vsel %vm2370, %v2530, %v2539
      %v2542 = vsel %vm505, %v2387, 0
      %v2545 = vsel %vm505, %v2396, 0
      %v2548 = vsel %vm505, %v2405, 0
      %v2551 = vsel %vm505, %v2414, 0
      %v2554 = vsel %vm505, %v2423, 0
      %v2557 = vsel %vm505, %v2432, 0
      %v2560 = vsel %vm505, %v2441, 0
      %v2563 = vsel %vm505, %v2450, 0
      %v2566 = vsel %vm505, %v2459, 0
      %v2569 = vsel %vm505, %v2468, 0
      %v2572 = vsel %vm505, %v2477, 0
      %v2575 = vsel %vm505, %v2486, 0
      %v2578 = vsel %vm505, %v2495, 0
      %v2581 = vsel %vm505, %v2504, 0
      %v2584 = vsel %vm505, %v2513, 0
      %v2587 = vsel %vm505, %v2522, 0
      %v2590 = vsel %vm505, %v2531, 0
      %v2593 = vsel %vm505, %v2540, 0
      %v2596 = vsel %vm560, %v2366, 0
      %2598 = vmatpush.bf16.msra.mxu0 0
      %2599 = vmatpush.bf16.msra.mxu0 0
      %2600 = vmatpush.bf16.msra.mxu0 0
      %2601 = vmatpush.bf16.msra.mxu0 0
      %2602 = vmatpush.bf16.msra.mxu0 0
      %2603 = vmatpush.bf16.msra.mxu0 0
      %2604 = vmatpush.bf16.msra.mxu0 0
      %2605 = vmatpush.bf16.msra.mxu0 %v2596
      %2606 = vmatmul.bf16.gmra.mxu0 %v2542
      %v2607 = vpop.f32.mrf.mxu0
      %v2608 = vadd.f32 0.0, %v2607
      %v2609 = vpop.f32.mrf.mxu0
      %v2610 = vadd.f32 0.0, %v2609
      %2611 = vmatmul.bf16.gmra.mxu0 %v2545
      %v2612 = vpop.f32.mrf.mxu0
      %v2613 = vadd.f32 0.0, %v2612
      %v2614 = vpop.f32.mrf.mxu0
      %v2615 = vadd.f32 0.0, %v2614
      %2616 = vmatmul.bf16.gmra.mxu0 %v2548
      %v2617 = vpop.f32.mrf.mxu0
      %v2618 = vadd.f32 0.0, %v2617
      %v2619 = vpop.f32.mrf.mxu0
      %v2620 = vadd.f32 0.0, %v2619
      %2621 = vmatmul.bf16.gmra.mxu0 %v2551
      %v2622 = vpop.f32.mrf.mxu0
      %v2623 = vadd.f32 0.0, %v2622
      %v2624 = vpop.f32.mrf.mxu0
      %v2625 = vadd.f32 0.0, %v2624
      %2626 = vmatmul.bf16.gmra.mxu0 %v2554
      %v2627 = vpop.f32.mrf.mxu0
      %v2628 = vadd.f32 0.0, %v2627
      %v2629 = vpop.f32.mrf.mxu0
      %v2630 = vadd.f32 0.0, %v2629
      %2631 = vmatmul.bf16.gmra.mxu0 %v2557
      %v2632 = vpop.f32.mrf.mxu0
      %v2633 = vadd.f32 0.0, %v2632
      %v2634 = vpop.f32.mrf.mxu0
      %v2635 = vadd.f32 0.0, %v2634
      %2636 = vmatmul.bf16.gmra.mxu0 %v2560
      %v2637 = vpop.f32.mrf.mxu0
      %v2638 = vadd.f32 0.0, %v2637
      %v2639 = vpop.f32.mrf.mxu0
      %v2640 = vadd.f32 0.0, %v2639
      %2641 = vmatmul.bf16.gmra.mxu0 %v2563
      %v2642 = vpop.f32.mrf.mxu0
      %v2643 = vadd.f32 0.0, %v2642
      %v2644 = vpop.f32.mrf.mxu0
      %v2645 = vadd.f32 0.0, %v2644
      %2646 = vmatmul.bf16.gmra.mxu0 %v2566
      %v2647 = vpop.f32.mrf.mxu0
      %v2648 = vadd.f32 0.0, %v2647
      %v2649 = vpop.f32.mrf.mxu0
      %v2650 = vadd.f32 0.0, %v2649
      %2651 = vmatmul.bf16.gmra.mxu0 %v2569
      %v2652 = vpop.f32.mrf.mxu0
      %v2653 = vadd.f32 0.0, %v2652
      %v2654 = vpop.f32.mrf.mxu0
      %v2655 = vadd.f32 0.0, %v2654
      %2656 = vmatmul.bf16.gmra.mxu0 %v2572
      %v2657 = vpop.f32.mrf.mxu0
      %v2658 = vadd.f32 0.0, %v2657
      %v2659 = vpop.f32.mrf.mxu0
      %v2660 = vadd.f32 0.0, %v2659
      %2661 = vmatmul.bf16.gmra.mxu0 %v2575
      %v2662 = vpop.f32.mrf.mxu0
      %v2663 = vadd.f32 0.0, %v2662
      %v2664 = vpop.f32.mrf.mxu0
      %v2665 = vadd.f32 0.0, %v2664
      %2666 = vmatmul.bf16.gmra.mxu0 %v2578
      %v2667 = vpop.f32.mrf.mxu0
      %v2668 = vadd.f32 0.0, %v2667
      %v2669 = vpop.f32.mrf.mxu0
      %v2670 = vadd.f32 0.0, %v2669
      %2671 = vmatmul.bf16.gmra.mxu0 %v2581
      %v2672 = vpop.f32.mrf.mxu0
      %v2673 = vadd.f32 0.0, %v2672
      %v2674 = vpop.f32.mrf.mxu0
      %v2675 = vadd.f32 0.0, %v2674
      %2676 = vmatmul.bf16.gmra.mxu0 %v2584
      %v2677 = vpop.f32.mrf.mxu0
      %v2678 = vadd.f32 0.0, %v2677
      %v2679 = vpop.f32.mrf.mxu0
      %v2680 = vadd.f32 0.0, %v2679
      %2681 = vmatmul.bf16.gmra.mxu0 %v2587
      %v2682 = vpop.f32.mrf.mxu0
      %v2683 = vadd.f32 0.0, %v2682
      %v2684 = vpop.f32.mrf.mxu0
      %v2685 = vadd.f32 0.0, %v2684
      %2686 = vmatmul.bf16.gmra.mxu0 %v2590
      %v2687 = vpop.f32.mrf.mxu0
      %v2688 = vadd.f32 0.0, %v2687
      %v2689 = vpop.f32.mrf.mxu0
      %v2690 = vadd.f32 0.0, %v2689
      %2691 = vmatmul.bf16.gmra.mxu0 %v2593
      %v2692 = vpop.f32.mrf.mxu0
      %v2693 = vadd.f32 0.0, %v2692
      %v2694 = vpop.f32.mrf.mxu0
      %v2695 = vadd.f32 0.0, %v2694
      %2696 = vdwg.mxu0
      %v2697 = vadd.f32 %v2328, %v2608
      %v2698 = vadd.f32 %v2329, %v2610
      %v2699 = vadd.f32 %v2330, %v2613
      %v2700 = vadd.f32 %v2331, %v2615
      %v2701 = vadd.f32 %v2332, %v2618
      %v2702 = vadd.f32 %v2333, %v2620
      %v2703 = vadd.f32 %v2334, %v2623
      %v2704 = vadd.f32 %v2335, %v2625
      %v2705 = vadd.f32 %v2336, %v2628
      %v2706 = vadd.f32 %v2337, %v2630
      %v2707 = vadd.f32 %v2338, %v2633
      %v2708 = vadd.f32 %v2339, %v2635
      %v2709 = vadd.f32 %v2340, %v2638
      %v2710 = vadd.f32 %v2341, %v2640
      %v2711 = vadd.f32 %v2342, %v2643
      %v2712 = vadd.f32 %v2343, %v2645
      %v2713 = vadd.f32 %v2344, %v2648
      %v2714 = vadd.f32 %v2345, %v2650
      %v2715 = vadd.f32 %v2346, %v2653
      %v2716 = vadd.f32 %v2347, %v2655
      %v2717 = vadd.f32 %v2348, %v2658
      %v2718 = vadd.f32 %v2349, %v2660
      %v2719 = vadd.f32 %v2350, %v2663
      %v2720 = vadd.f32 %v2351, %v2665
      %v2721 = vadd.f32 %v2352, %v2668
      %v2722 = vadd.f32 %v2353, %v2670
      %v2723 = vadd.f32 %v2354, %v2673
      %v2724 = vadd.f32 %v2355, %v2675
      %v2725 = vadd.f32 %v2356, %v2678
      %v2726 = vadd.f32 %v2357, %v2680
      %v2727 = vadd.f32 %v2358, %v2683
      %v2728 = vadd.f32 %v2359, %v2685
      %v2729 = vadd.f32 %v2360, %v2688
      %v2730 = vadd.f32 %v2361, %v2690
      %v2731 = vadd.f32 %v2362, %v2693
      %v2732 = vadd.f32 %v2363, %v2695
      %v2733 = vld [vmem:[%s206 + $0x10] sm:$0x8]
      %s2734 = scalar_lea.vmem %s210, 16
      %v2735 = vld [vmem:[%s2734] sm:$0x3]
      %v2737 = vunpack.c.l.b16 %v2733
      %v2738 = vpack.c.b16 %v2080, %v2737
      %vm2739 = vcmask 1044480
      %v2740 = vrot.slane %v2738, 3
      %v2741 = vrot.slane %v2117, 3
      %v2742 = vsel %vm2739, %v2740, %v2741
      %v2743 = vrot.slane %v2118, 3
      %v2744 = vsel %vm2739, %v2741, %v2743
      %v2745 = vrot.slane %v2119, 3
      %v2746 = vsel %vm2739, %v2743, %v2745
      %v2747 = vrot.slane %v2120, 3
      %v2748 = vsel %vm2739, %v2745, %v2747
      %v2749 = vrot.slane %v2121, 3
      %v2750 = vsel %vm2739, %v2747, %v2749
      %v2751 = vrot.slane %v2122, 3
      %v2752 = vsel %vm2739, %v2749, %v2751
      %v2753 = vrot.slane %v2123, 3
      %v2754 = vsel %vm2739, %v2751, %v2753
      %v2755 = vrot.slane %v2124, 3
      %v2756 = vsel %vm2739, %v2753, %v2755
      %v2757 = vrot.slane %v2125, 3
      %v2758 = vsel %vm2739, %v2755, %v2757
      %v2759 = vrot.slane %v2126, 3
      %v2760 = vsel %vm2739, %v2757, %v2759
      %v2761 = vrot.slane %v2127, 3
      %v2762 = vsel %vm2739, %v2759, %v2761
      %v2763 = vrot.slane %v2128, 3
      %v2764 = vsel %vm2739, %v2761, %v2763
      %v2765 = vrot.slane %v2129, 3
      %v2766 = vsel %vm2739, %v2763, %v2765
      %v2767 = vrot.slane %v2130, 3
      %v2768 = vsel %vm2739, %v2765, %v2767
      %v2769 = vrot.slane %v2131, 3
      %v2770 = vsel %vm2739, %v2767, %v2769
      %v2771 = vrot.slane %v2132, 3
      %v2772 = vsel %vm2739, %v2769, %v2771
      %v2773 = vrot.slane %v2133, 3
      %v2774 = vsel %vm2739, %v2771, %v2773
      %v2775 = vrot.slane %v2369, 3
      %v2776 = vsel %vm2739, %v2773, %v2775
      %v2778 = vsel %vm505, %v2742, 0
      %v2781 = vsel %vm505, %v2744, 0
      %v2784 = vsel %vm505, %v2746, 0
      %v2787 = vsel %vm505, %v2748, 0
      %v2790 = vsel %vm505, %v2750, 0
      %v2793 = vsel %vm505, %v2752, 0
      %v2796 = vsel %vm505, %v2754, 0
      %v2799 = vsel %vm505, %v2756, 0
      %v2802 = vsel %vm505, %v2758, 0
      %v2805 = vsel %vm505, %v2760, 0
      %v2808 = vsel %vm505, %v2762, 0
      %v2811 = vsel %vm505, %v2764, 0
      %v2814 = vsel %vm505, %v2766, 0
      %v2817 = vsel %vm505, %v2768, 0
      %v2820 = vsel %vm505, %v2770, 0
      %v2823 = vsel %vm505, %v2772, 0
      %v2826 = vsel %vm505, %v2774, 0
      %v2829 = vsel %vm505, %v2776, 0
      %v2832 = vsel %vm560, %v2735, 0
      %2834 = vmatpush.bf16.msra.mxu0 0
      %2835 = vmatpush.bf16.msra.mxu0 0
      %2836 = vmatpush.bf16.msra.mxu0 0
      %2837 = vmatpush.bf16.msra.mxu0 0
      %2838 = vmatpush.bf16.msra.mxu0 0
      %2839 = vmatpush.bf16.msra.mxu0 0
      %2840 = vmatpush.bf16.msra.mxu0 0
      %2841 = vmatpush.bf16.msra.mxu0 %v2832
      %2842 = vmatmul.bf16.gmra.mxu0 %v2778
      %v2843 = vpop.f32.mrf.mxu0
      %v2844 = vadd.f32 0.0, %v2843
      %v2845 = vpop.f32.mrf.mxu0
      %v2846 = vadd.f32 0.0, %v2845
      %2847 = vmatmul.bf16.gmra.mxu0 %v2781
      %v2848 = vpop.f32.mrf.mxu0
      %v2849 = vadd.f32 0.0, %v2848
      %v2850 = vpop.f32.mrf.mxu0
      %v2851 = vadd.f32 0.0, %v2850
      %2852 = vmatmul.bf16.gmra.mxu0 %v2784
      %v2853 = vpop.f32.mrf.mxu0
      %v2854 = vadd.f32 0.0, %v2853
      %v2855 = vpop.f32.mrf.mxu0
      %v2856 = vadd.f32 0.0, %v2855
      %2857 = vmatmul.bf16.gmra.mxu0 %v2787
      %v2858 = vpop.f32.mrf.mxu0
      %v2859 = vadd.f32 0.0, %v2858
      %v2860 = vpop.f32.mrf.mxu0
      %v2861 = vadd.f32 0.0, %v2860
      %2862 = vmatmul.bf16.gmra.mxu0 %v2790
      %v2863 = vpop.f32.mrf.mxu0
      %v2864 = vadd.f32 0.0, %v2863
      %v2865 = vpop.f32.mrf.mxu0
      %v2866 = vadd.f32 0.0, %v2865
      %2867 = vmatmul.bf16.gmra.mxu0 %v2793
      %v2868 = vpop.f32.mrf.mxu0
      %v2869 = vadd.f32 0.0, %v2868
      %v2870 = vpop.f32.mrf.mxu0
      %v2871 = vadd.f32 0.0, %v2870
      %2872 = vmatmul.bf16.gmra.mxu0 %v2796
      %v2873 = vpop.f32.mrf.mxu0
      %v2874 = vadd.f32 0.0, %v2873
      %v2875 = vpop.f32.mrf.mxu0
      %v2876 = vadd.f32 0.0, %v2875
      %2877 = vmatmul.bf16.gmra.mxu0 %v2799
      %v2878 = vpop.f32.mrf.mxu0
      %v2879 = vadd.f32 0.0, %v2878
      %v2880 = vpop.f32.mrf.mxu0
      %v2881 = vadd.f32 0.0, %v2880
      %2882 = vmatmul.bf16.gmra.mxu0 %v2802
      %v2883 = vpop.f32.mrf.mxu0
      %v2884 = vadd.f32 0.0, %v2883
      %v2885 = vpop.f32.mrf.mxu0
      %v2886 = vadd.f32 0.0, %v2885
      %2887 = vmatmul.bf16.gmra.mxu0 %v2805
      %v2888 = vpop.f32.mrf.mxu0
      %v2889 = vadd.f32 0.0, %v2888
      %v2890 = vpop.f32.mrf.mxu0
      %v2891 = vadd.f32 0.0, %v2890
      %2892 = vmatmul.bf16.gmra.mxu0 %v2808
      %v2893 = vpop.f32.mrf.mxu0
      %v2894 = vadd.f32 0.0, %v2893
      %v2895 = vpop.f32.mrf.mxu0
      %v2896 = vadd.f32 0.0, %v2895
      %2897 = vmatmul.bf16.gmra.mxu0 %v2811
      %v2898 = vpop.f32.mrf.mxu0
      %v2899 = vadd.f32 0.0, %v2898
      %v2900 = vpop.f32.mrf.mxu0
      %v2901 = vadd.f32 0.0, %v2900
      %2902 = vmatmul.bf16.gmra.mxu0 %v2814
      %v2903 = vpop.f32.mrf.mxu0
      %v2904 = vadd.f32 0.0, %v2903
      %v2905 = vpop.f32.mrf.mxu0
      %v2906 = vadd.f32 0.0, %v2905
      %2907 = vmatmul.bf16.gmra.mxu0 %v2817
      %v2908 = vpop.f32.mrf.mxu0
      %v2909 = vadd.f32 0.0, %v2908
      %v2910 = vpop.f32.mrf.mxu0
      %v2911 = vadd.f32 0.0, %v2910
      %2912 = vmatmul.bf16.gmra.mxu0 %v2820
      %v2913 = vpop.f32.mrf.mxu0
      %v2914 = vadd.f32 0.0, %v2913
      %v2915 = vpop.f32.mrf.mxu0
      %v2916 = vadd.f32 0.0, %v2915
      %2917 = vmatmul.bf16.gmra.mxu0 %v2823
      %v2918 = vpop.f32.mrf.mxu0
      %v2919 = vadd.f32 0.0, %v2918
      %v2920 = vpop.f32.mrf.mxu0
      %v2921 = vadd.f32 0.0, %v2920
      %2922 = vmatmul.bf16.gmra.mxu0 %v2826
      %v2923 = vpop.f32.mrf.mxu0
      %v2924 = vadd.f32 0.0, %v2923
      %v2925 = vpop.f32.mrf.mxu0
      %v2926 = vadd.f32 0.0, %v2925
      %2927 = vmatmul.bf16.gmra.mxu0 %v2829
      %v2928 = vpop.f32.mrf.mxu0
      %v2929 = vadd.f32 0.0, %v2928
      %v2930 = vpop.f32.mrf.mxu0
      %v2931 = vadd.f32 0.0, %v2930
      %2932 = vdwg.mxu0
      %v2933 = vadd.f32 %v2697, %v2844
      %v2934 = vadd.f32 %v2698, %v2846
      %v2935 = vadd.f32 %v2699, %v2849
      %v2936 = vadd.f32 %v2700, %v2851
      %v2937 = vadd.f32 %v2701, %v2854
      %v2938 = vadd.f32 %v2702, %v2856
      %v2939 = vadd.f32 %v2703, %v2859
      %v2940 = vadd.f32 %v2704, %v2861
      %v2941 = vadd.f32 %v2705, %v2864
      %v2942 = vadd.f32 %v2706, %v2866
      %v2943 = vadd.f32 %v2707, %v2869
      %v2944 = vadd.f32 %v2708, %v2871
      %v2945 = vadd.f32 %v2709, %v2874
      %v2946 = vadd.f32 %v2710, %v2876
      %v2947 = vadd.f32 %v2711, %v2879
      %v2948 = vadd.f32 %v2712, %v2881
      %v2949 = vadd.f32 %v2713, %v2884
      %v2950 = vadd.f32 %v2714, %v2886
      %v2951 = vadd.f32 %v2715, %v2889
      %v2952 = vadd.f32 %v2716, %v2891
      %v2953 = vadd.f32 %v2717, %v2894
      %v2954 = vadd.f32 %v2718, %v2896
      %v2955 = vadd.f32 %v2719, %v2899
      %v2956 = vadd.f32 %v2720, %v2901
      %v2957 = vadd.f32 %v2721, %v2904
      %v2958 = vadd.f32 %v2722, %v2906
      %v2959 = vadd.f32 %v2723, %v2909
      %v2960 = vadd.f32 %v2724, %v2911
      %v2961 = vadd.f32 %v2725, %v2914
      %v2962 = vadd.f32 %v2726, %v2916
      %v2963 = vadd.f32 %v2727, %v2919
      %v2964 = vadd.f32 %v2728, %v2921
      %v2965 = vadd.f32 %v2729, %v2924
      %v2966 = vadd.f32 %v2730, %v2926
      %v2967 = vadd.f32 %v2731, %v2929
      %v2968 = vadd.f32 %v2732, %v2931
      %v2969 = vld [vmem:[%s213] sm:$0x1]
      %v2971 = vperm.slane %v2969, 0
      %v2973 = vadd.f32 %v2933, %v2971
      %v2974 = vadd.f32 %v2934, %v2971
      %v2975 = vadd.f32 %v2935, %v2971
      %v2976 = vadd.f32 %v2936, %v2971
      %v2977 = vadd.f32 %v2937, %v2971
      %v2978 = vadd.f32 %v2938, %v2971
      %v2979 = vadd.f32 %v2939, %v2971
      %v2980 = vadd.f32 %v2940, %v2971
      %v2981 = vadd.f32 %v2941, %v2971
      %v2982 = vadd.f32 %v2942, %v2971
      %v2983 = vadd.f32 %v2943, %v2971
      %v2984 = vadd.f32 %v2944, %v2971
      %v2985 = vadd.f32 %v2945, %v2971
      %v2986 = vadd.f32 %v2946, %v2971
      %v2987 = vadd.f32 %v2947, %v2971
      %v2988 = vadd.f32 %v2948, %v2971
      %v2989 = vadd.f32 %v2949, %v2971
      %v2990 = vadd.f32 %v2950, %v2971
      %v2991 = vadd.f32 %v2951, %v2971
      %v2992 = vadd.f32 %v2952, %v2971
      %v2993 = vadd.f32 %v2953, %v2971
      %v2994 = vadd.f32 %v2954, %v2971
      %v2995 = vadd.f32 %v2955, %v2971
      %v2996 = vadd.f32 %v2956, %v2971
      %v2997 = vadd.f32 %v2957, %v2971
      %v2998 = vadd.f32 %v2958, %v2971
      %v2999 = vadd.f32 %v2959, %v2971
      %v3000 = vadd.f32 %v2960, %v2971
      %v3001 = vadd.f32 %v2961, %v2971
      %v3002 = vadd.f32 %v2962, %v2971
      %v3003 = vadd.f32 %v2963, %v2971
      %v3004 = vadd.f32 %v2964, %v2971
      %v3005 = vadd.f32 %v2965, %v2971
      %v3006 = vadd.f32 %v2966, %v2971
      %v3007 = vadd.f32 %v2967, %v2971
      %v3008 = vadd.f32 %v2968, %v2971
      %v3009 = vmax.f32 %v2973, 0.0
      %v3010 = vmax.f32 %v2974, 0.0
      %v3011 = vmax.f32 %v2975, 0.0
      %v3012 = vmax.f32 %v2976, 0.0
      %v3013 = vmax.f32 %v2977, 0.0
      %v3014 = vmax.f32 %v2978, 0.0
      %v3015 = vmax.f32 %v2979, 0.0
      %v3016 = vmax.f32 %v2980, 0.0
      %v3017 = vmax.f32 %v2981, 0.0
      %v3018 = vmax.f32 %v2982, 0.0
      %v3019 = vmax.f32 %v2983, 0.0
      %v3020 = vmax.f32 %v2984, 0.0
      %v3021 = vmax.f32 %v2985, 0.0
      %v3022 = vmax.f32 %v2986, 0.0
      %v3023 = vmax.f32 %v2987, 0.0
      %v3024 = vmax.f32 %v2988, 0.0
      %v3025 = vmax.f32 %v2989, 0.0
      %v3026 = vmax.f32 %v2990, 0.0
      %v3027 = vmax.f32 %v2991, 0.0
      %v3028 = vmax.f32 %v2992, 0.0
      %v3029 = vmax.f32 %v2993, 0.0
      %v3030 = vmax.f32 %v2994, 0.0
      %v3031 = vmax.f32 %v2995, 0.0
      %v3032 = vmax.f32 %v2996, 0.0
      %v3033 = vmax.f32 %v2997, 0.0
      %v3034 = vmax.f32 %v2998, 0.0
      %v3035 = vmax.f32 %v2999, 0.0
      %v3036 = vmax.f32 %v3000, 0.0
      %v3037 = vmax.f32 %v3001, 0.0
      %v3038 = vmax.f32 %v3002, 0.0
      %v3039 = vmax.f32 %v3003, 0.0
      %v3040 = vmax.f32 %v3004, 0.0
      %v3041 = vmax.f32 %v3005, 0.0
      %v3042 = vmax.f32 %v3006, 0.0
      %v3043 = vmax.f32 %v3007, 0.0
      %v3044 = vmax.f32 %v3008, 0.0
      %v3081 = vrot.slane %v3009, 2
      %v3082 = vrot.slane %v3009, 4
      %v3083 = vrot.slane %v3009, 6
      %v3084 = vrot.slane %v3010, 2
      %v3085 = vrot.slane %v3010, 4
      %v3086 = vrot.slane %v3010, 6
      %v3087 = vrot.slane %v3011, 2
      %v3088 = vrot.slane %v3011, 4
      %v3089 = vrot.slane %v3011, 6
      %v3090 = vrot.slane %v3012, 2
      %v3091 = vrot.slane %v3012, 4
      %v3092 = vrot.slane %v3012, 6
      %v3093 = vrot.slane %v3013, 4
      %v3094 = vrot.slane %v3013, 6
      %v3095 = vrot.slane %v3014, 2
      %v3096 = vrot.slane %v3014, 4
      %v3097 = vrot.slane %v3014, 6
      %v3098 = vrot.slane %v3015, 2
      %v3099 = vrot.slane %v3015, 6
      %v3100 = vrot.slane %v3016, 2
      %v3101 = vrot.slane %v3016, 4
      %v3102 = vrot.slane %v3016, 6
      %v3103 = vrot.slane %v3017, 2
      %v3104 = vrot.slane %v3017, 4
      %v3105 = vrot.slane %v3018, 2
      %v3106 = vrot.slane %v3018, 4
      %v3107 = vrot.slane %v3018, 6
      %v3108 = vrot.slane %v3019, 2
      %v3109 = vrot.slane %v3019, 4
      %v3110 = vrot.slane %v3019, 6
      %v3111 = vrot.slane %v3020, 2
      %v3112 = vrot.slane %v3020, 4
      %v3113 = vrot.slane %v3020, 6
      %v3114 = vrot.slane %v3021, 2
      %v3115 = vrot.slane %v3021, 4
      %v3116 = vrot.slane %v3021, 6
      %v3117 = vrot.slane %v3022, 4
      %v3118 = vrot.slane %v3022, 6
      %v3119 = vrot.slane %v3023, 2
      %v3120 = vrot.slane %v3023, 4
      %v3121 = vrot.slane %v3023, 6
      %v3122 = vrot.slane %v3024, 2
      %v3123 = vrot.slane %v3024, 6
      %v3124 = vrot.slane %v3025, 2
      %v3125 = vrot.slane %v3025, 4
      %v3126 = vrot.slane %v3025, 6
      %v3127 = vrot.slane %v3026, 2
      %v3128 = vrot.slane %v3026, 4
      %v3129 = vrot.slane %v3027, 2
      %v3130 = vrot.slane %v3027, 4
      %v3131 = vrot.slane %v3027, 6
      %v3132 = vrot.slane %v3028, 2
      %v3133 = vrot.slane %v3028, 4
      %v3134 = vrot.slane %v3028, 6
      %v3135 = vrot.slane %v3029, 2
      %v3136 = vrot.slane %v3029, 4
      %v3137 = vrot.slane %v3029, 6
      %v3138 = vrot.slane %v3030, 2
      %v3139 = vrot.slane %v3030, 4
      %v3140 = vrot.slane %v3030, 6
      %v3141 = vrot.slane %v3031, 4
      %v3142 = vrot.slane %v3031, 6
      %v3143 = vrot.slane %v3032, 2
      %v3144 = vrot.slane %v3032, 4
      %v3145 = vrot.slane %v3032, 6
      %v3146 = vrot.slane %v3033, 2
      %v3147 = vrot.slane %v3033, 6
      %v3148 = vrot.slane %v3034, 2
      %v3149 = vrot.slane %v3034, 4
      %v3150 = vrot.slane %v3034, 6
      %v3151 = vrot.slane %v3035, 2
      %v3152 = vrot.slane %v3035, 4
      %v3153 = vrot.slane %v3036, 2
      %v3154 = vrot.slane %v3036, 4
      %v3155 = vrot.slane %v3036, 6
      %v3156 = vrot.slane %v3037, 2
      %v3157 = vrot.slane %v3037, 4
      %v3158 = vrot.slane %v3037, 6
      %v3159 = vrot.slane %v3038, 2
      %v3160 = vrot.slane %v3038, 4
      %v3161 = vrot.slane %v3038, 6
      %v3162 = vrot.slane %v3039, 2
      %v3163 = vrot.slane %v3039, 4
      %v3164 = vrot.slane %v3039, 6
      %v3165 = vrot.slane %v3040, 4
      %v3166 = vrot.slane %v3040, 6
      %v3167 = vrot.slane %v3041, 2
      %v3168 = vrot.slane %v3041, 4
      %v3169 = vrot.slane %v3041, 6
      %v3170 = vrot.slane %v3042, 2
      %v3171 = vrot.slane %v3042, 6
      %v3172 = vrot.slane %v3043, 2
      %v3173 = vrot.slane %v3043, 4
      %v3174 = vrot.slane %v3043, 6
      %v3175 = vrot.slane %v3044, 2
      %v3176 = vrot.slane %v3044, 4
      %3177 = vst [vmem:[#allocation1] ss:$4 sm:$0xff] %v3009
      %s3178 = scalar_lea.vmem [#allocation1], 1
      %3179 = vst [vmem:[%s3178] ss:$4 sm:$0xff] %v3081
      %s3180 = scalar_lea.vmem [#allocation1], 2
      %3181 = vst [vmem:[%s3180] ss:$4 sm:$0xff] %v3082
      %s3182 = scalar_lea.vmem [#allocation1], 3
      %3183 = vst [vmem:[%s3182] ss:$4 sm:$0xff] %v3083
      %s3184 = scalar_lea.vmem [#allocation1], 32
      %3185 = vst [vmem:[%s3184] ss:$4 sm:$0xff] %v3010
      %s3186 = scalar_lea.vmem [#allocation1], 33
      %3187 = vst [vmem:[%s3186] ss:$4 sm:$0xff] %v3084
      %s3188 = scalar_lea.vmem [#allocation1], 34
      %3189 = vst [vmem:[%s3188] ss:$4 sm:$0xff] %v3085
      %s3190 = scalar_lea.vmem [#allocation1], 35
      %3191 = vst [vmem:[%s3190] ss:$4 sm:$0xff] %v3086
      %v3192 = vld.sshfl [vmem:[#allocation1] sm:$0xff pattern:$0x73625140]
      %v3193 = vld.sshfl [vmem:[#allocation1 + $0x20] sm:$0xff pattern:$0x73625140]
      %3194 = vst [vmem:[#allocation1] ss:$4 sm:$0xff] %v3087
      %3195 = vst [vmem:[%s3178] ss:$4 sm:$0xff] %v3088
      %3196 = vst [vmem:[%s3180] ss:$4 sm:$0xff] %v3089
      %3197 = vst [vmem:[%s3182] ss:$4 sm:$0xff] %v3012
      %3198 = vst [vmem:[%s3184] ss:$4 sm:$0xff] %v3090
      %3199 = vst [vmem:[%s3186] ss:$4 sm:$0xff] %v3091
      %3200 = vst [vmem:[%s3188] ss:$4 sm:$0xff] %v3092
      %3201 = vst [vmem:[%s3190] ss:$4 sm:$0xff] %v3013
      %v3202 = vld.sshfl [vmem:[#allocation1] sm:$0xff pattern:$0x73625140]
      %v3203 = vld.sshfl [vmem:[#allocation1 + $0x20] sm:$0xff pattern:$0x73625140]
      %3204 = vst [vmem:[#allocation1] ss:$4 sm:$0xff] %v3093
      %3205 = vst [vmem:[%s3178] ss:$4 sm:$0xff] %v3094
      %3206 = vst [vmem:[%s3180] ss:$4 sm:$0xff] %v3014
      %3207 = vst [vmem:[%s3182] ss:$4 sm:$0xff] %v3095
      %3208 = vst [vmem:[%s3184] ss:$4 sm:$0xff] %v3096
      %3209 = vst [vmem:[%s3186] ss:$4 sm:$0xff] %v3097
      %3210 = vst [vmem:[%s3188] ss:$4 sm:$0xff] %v3015
      %3211 = vst [vmem:[%s3190] ss:$4 sm:$0xff] %v3098
      %v3212 = vld.sshfl [vmem:[#allocation1] sm:$0xff pattern:$0x73625140]
      %v3213 = vld.sshfl [vmem:[#allocation1 + $0x20] sm:$0xff pattern:$0x73625140]
      %3214 = vst [vmem:[#allocation1] ss:$4 sm:$0xff] %v3099
      %3215 = vst [vmem:[%s3178] ss:$4 sm:$0xff] %v3016
      %3216 = vst [vmem:[%s3180] ss:$4 sm:$0xff] %v3100
      %3217 = vst [vmem:[%s3182] ss:$4 sm:$0xff] %v3101
      %3218 = vst [vmem:[%s3184] ss:$4 sm:$0xff] %v3102
      %3219 = vst [vmem:[%s3186] ss:$4 sm:$0xff] %v3017
      %3220 = vst [vmem:[%s3188] ss:$4 sm:$0xff] %v3103
      %3221 = vst [vmem:[%s3190] ss:$4 sm:$0xff] %v3104
      %v3222 = vld.sshfl [vmem:[#allocation1] sm:$0xff pattern:$0x73625140]
      %v3223 = vld.sshfl [vmem:[#allocation1 + $0x20] sm:$0xff pattern:$0x73625140]
      %3224 = vst [vmem:[#allocation1] ss:$4 sm:$0xff] %v3018
      %3225 = vst [vmem:[%s3178] ss:$4 sm:$0xff] %v3105
      %3226 = vst [vmem:[%s3180] ss:$4 sm:$0xff] %v3106
      %3227 = vst [vmem:[%s3182] ss:$4 sm:$0xff] %v3107
      %3228 = vst [vmem:[%s3184] ss:$4 sm:$0xff] %v3019
      %3229 = vst [vmem:[%s3186] ss:$4 sm:$0xff] %v3108
      %3230 = vst [vmem:[%s3188] ss:$4 sm:$0xff] %v3109
      %3231 = vst [vmem:[%s3190] ss:$4 sm:$0xff] %v3110
      %v3232 = vld.sshfl [vmem:[#allocation1] sm:$0xff pattern:$0x73625140]
      %v3233 = vld.sshfl [vmem:[#allocation1 + $0x20] sm:$0xff pattern:$0x73625140]
      %3234 = vst [vmem:[#allocation1] ss:$4 sm:$0xff] %v3111
      %3235 = vst [vmem:[%s3178] ss:$4 sm:$0xff] %v3112
      %3236 = vst [vmem:[%s3180] ss:$4 sm:$0xff] %v3113
      %3237 = vst [vmem:[%s3182] ss:$4 sm:$0xff] %v3021
      %3238 = vst [vmem:[%s3184] ss:$4 sm:$0xff] %v3114
      %3239 = vst [vmem:[%s3186] ss:$4 sm:$0xff] %v3115
      %3240 = vst [vmem:[%s3188] ss:$4 sm:$0xff] %v3116
      %3241 = vst [vmem:[%s3190] ss:$4 sm:$0xff] %v3022
      %v3242 = vld.sshfl [vmem:[#allocation1] sm:$0xff pattern:$0x73625140]
      %v3243 = vld.sshfl [vmem:[#allocation1 + $0x20] sm:$0xff pattern:$0x73625140]
      %3244 = vst [vmem:[#allocation1] ss:$4 sm:$0xff] %v3117
      %3245 = vst [vmem:[%s3178] ss:$4 sm:$0xff] %v3118
      %3246 = vst [vmem:[%s3180] ss:$4 sm:$0xff] %v3023
      %3247 = vst [vmem:[%s3182] ss:$4 sm:$0xff] %v3119
      %3248 = vst [vmem:[%s3184] ss:$4 sm:$0xff] %v3120
      %3249 = vst [vmem:[%s3186] ss:$4 sm:$0xff] %v3121
      %3250 = vst [vmem:[%s3188] ss:$4 sm:$0xff] %v3024
      %3251 = vst [vmem:[%s3190] ss:$4 sm:$0xff] %v3122
      %v3252 = vld.sshfl [vmem:[#allocation1] sm:$0xff pattern:$0x73625140]
      %v3253 = vld.sshfl [vmem:[#allocation1 + $0x20] sm:$0xff pattern:$0x73625140]
      %3254 = vst [vmem:[#allocation1] ss:$4 sm:$0xff] %v3123
      %3255 = vst [vmem:[%s3178] ss:$4 sm:$0xff] %v3025
      %3256 = vst [vmem:[%s3180] ss:$4 sm:$0xff] %v3124
      %3257 = vst [vmem:[%s3182] ss:$4 sm:$0xff] %v3125
      %3258 = vst [vmem:[%s3184] ss:$4 sm:$0xff] %v3126
      %3259 = vst [vmem:[%s3186] ss:$4 sm:$0xff] %v3026
      %3260 = vst [vmem:[%s3188] ss:$4 sm:$0xff] %v3127
      %3261 = vst [vmem:[%s3190] ss:$4 sm:$0xff] %v3128
      %v3262 = vld.sshfl [vmem:[#allocation1] sm:$0xff pattern:$0x73625140]
      %v3263 = vld.sshfl [vmem:[#allocation1 + $0x20] sm:$0xff pattern:$0x73625140]
      %3264 = vst [vmem:[#allocation1] ss:$4 sm:$0xff] %v3027
      %3265 = vst [vmem:[%s3178] ss:$4 sm:$0xff] %v3129
      %3266 = vst [vmem:[%s3180] ss:$4 sm:$0xff] %v3130
      %3267 = vst [vmem:[%s3182] ss:$4 sm:$0xff] %v3131
      %3268 = vst [vmem:[%s3184] ss:$4 sm:$0xff] %v3028
      %3269 = vst [vmem:[%s3186] ss:$4 sm:$0xff] %v3132
      %3270 = vst [vmem:[%s3188] ss:$4 sm:$0xff] %v3133
      %3271 = vst [vmem:[%s3190] ss:$4 sm:$0xff] %v3134
      %v3272 = vld.sshfl [vmem:[#allocation1] sm:$0xff pattern:$0x73625140]
      %v3273 = vld.sshfl [vmem:[#allocation1 + $0x20] sm:$0xff pattern:$0x73625140]
      %3274 = vst [vmem:[#allocation1] ss:$4 sm:$0xff] %v3135
      %3275 = vst [vmem:[%s3178] ss:$4 sm:$0xff] %v3136
      %3276 = vst [vmem:[%s3180] ss:$4 sm:$0xff] %v3137
      %3277 = vst [vmem:[%s3182] ss:$4 sm:$0xff] %v3030
      %3278 = vst [vmem:[%s3184] ss:$4 sm:$0xff] %v3138
      %3279 = vst [vmem:[%s3186] ss:$4 sm:$0xff] %v3139
      %3280 = vst [vmem:[%s3188] ss:$4 sm:$0xff] %v3140
      %3281 = vst [vmem:[%s3190] ss:$4 sm:$0xff] %v3031
      %v3282 = vld.sshfl [vmem:[#allocation1] sm:$0xff pattern:$0x73625140]
      %v3283 = vld.sshfl [vmem:[#allocation1 + $0x20] sm:$0xff pattern:$0x73625140]
      %3284 = vst [vmem:[#allocation1] ss:$4 sm:$0xff] %v3141
      %3285 = vst [vmem:[%s3178] ss:$4 sm:$0xff] %v3142
      %3286 = vst [vmem:[%s3180] ss:$4 sm:$0xff] %v3032
      %3287 = vst [vmem:[%s3182] ss:$4 sm:$0xff] %v3143
      %3288 = vst [vmem:[%s3184] ss:$4 sm:$0xff] %v3144
      %3289 = vst [vmem:[%s3186] ss:$4 sm:$0xff] %v3145
      %3290 = vst [vmem:[%s3188] ss:$4 sm:$0xff] %v3033
      %3291 = vst [vmem:[%s3190] ss:$4 sm:$0xff] %v3146
      %v3292 = vld.sshfl [vmem:[#allocation1] sm:$0xff pattern:$0x73625140]
      %v3293 = vld.sshfl [vmem:[#allocation1 + $0x20] sm:$0xff pattern:$0x73625140]
      %3294 = vst [vmem:[#allocation1] ss:$4 sm:$0xff] %v3147
      %3295 = vst [vmem:[%s3178] ss:$4 sm:$0xff] %v3034
      %3296 = vst [vmem:[%s3180] ss:$4 sm:$0xff] %v3148
      %3297 = vst [vmem:[%s3182] ss:$4 sm:$0xff] %v3149
      %3298 = vst [vmem:[%s3184] ss:$4 sm:$0xff] %v3150
      %3299 = vst [vmem:[%s3186] ss:$4 sm:$0xff] %v3035
      %3300 = vst [vmem:[%s3188] ss:$4 sm:$0xff] %v3151
      %3301 = vst [vmem:[%s3190] ss:$4 sm:$0xff] %v3152
      %v3302 = vld.sshfl [vmem:[#allocation1] sm:$0xff pattern:$0x73625140]
      %v3303 = vld.sshfl [vmem:[#allocation1 + $0x20] sm:$0xff pattern:$0x73625140]
      %3304 = vst [vmem:[#allocation1] ss:$4 sm:$0xff] %v3036
      %3305 = vst [vmem:[%s3178] ss:$4 sm:$0xff] %v3153
      %3306 = vst [vmem:[%s3180] ss:$4 sm:$0xff] %v3154
      %3307 = vst [vmem:[%s3182] ss:$4 sm:$0xff] %v3155
      %3308 = vst [vmem:[%s3184] ss:$4 sm:$0xff] %v3037
      %3309 = vst [vmem:[%s3186] ss:$4 sm:$0xff] %v3156
      %3310 = vst [vmem:[%s3188] ss:$4 sm:$0xff] %v3157
      %3311 = vst [vmem:[%s3190] ss:$4 sm:$0xff] %v3158
      %v3312 = vld.sshfl [vmem:[#allocation1] sm:$0xff pattern:$0x73625140]
      %v3313 = vld.sshfl [vmem:[#allocation1 + $0x20] sm:$0xff pattern:$0x73625140]
      %3314 = vst [vmem:[#allocation1] ss:$4 sm:$0xff] %v3159
      %3315 = vst [vmem:[%s3178] ss:$4 sm:$0xff] %v3160
      %3316 = vst [vmem:[%s3180] ss:$4 sm:$0xff] %v3161
      %3317 = vst [vmem:[%s3182] ss:$4 sm:$0xff] %v3039
      %3318 = vst [vmem:[%s3184] ss:$4 sm:$0xff] %v3162
      %3319 = vst [vmem:[%s3186] ss:$4 sm:$0xff] %v3163
      %3320 = vst [vmem:[%s3188] ss:$4 sm:$0xff] %v3164
      %3321 = vst [vmem:[%s3190] ss:$4 sm:$0xff] %v3040
      %v3322 = vld.sshfl [vmem:[#allocation1] sm:$0xff pattern:$0x73625140]
      %v3323 = vld.sshfl [vmem:[#allocation1 + $0x20] sm:$0xff pattern:$0x73625140]
      %3324 = vst [vmem:[#allocation1] ss:$4 sm:$0xff] %v3165
      %3325 = vst [vmem:[%s3178] ss:$4 sm:$0xff] %v3166
      %3326 = vst [vmem:[%s3180] ss:$4 sm:$0xff] %v3041
      %3327 = vst [vmem:[%s3182] ss:$4 sm:$0xff] %v3167
      %3328 = vst [vmem:[%s3184] ss:$4 sm:$0xff] %v3168
      %3329 = vst [vmem:[%s3186] ss:$4 sm:$0xff] %v3169
      %3330 = vst [vmem:[%s3188] ss:$4 sm:$0xff] %v3042
      %3331 = vst [vmem:[%s3190] ss:$4 sm:$0xff] %v3170
      %v3332 = vld.sshfl [vmem:[#allocation1] sm:$0xff pattern:$0x73625140]
      %v3333 = vld.sshfl [vmem:[#allocation1 + $0x20] sm:$0xff pattern:$0x73625140]
      %3334 = vst [vmem:[#allocation1] ss:$4 sm:$0xff] %v3171
      %3335 = vst [vmem:[%s3178] ss:$4 sm:$0xff] %v3043
      %3336 = vst [vmem:[%s3180] ss:$4 sm:$0xff] %v3172
      %3337 = vst [vmem:[%s3182] ss:$4 sm:$0xff] %v3173
      %3338 = vst [vmem:[%s3184] ss:$4 sm:$0xff] %v3174
      %3339 = vst [vmem:[%s3186] ss:$4 sm:$0xff] %v3044
      %3340 = vst [vmem:[%s3188] ss:$4 sm:$0xff] %v3175
      %3341 = vst [vmem:[%s3190] ss:$4 sm:$0xff] %v3176
      %v3342 = vld.sshfl [vmem:[#allocation1] sm:$0xff pattern:$0x73625140]
      %v3343 = vld.sshfl [vmem:[#allocation1 + $0x20] sm:$0xff pattern:$0x73625140]
      %vm3376 = vcmask 64512
      %3377 = vst.msk [vmem:[%s221] sm:$0xff] %vm3376, %v3192
      %3378 = vst.msk [vmem:[%s221 + $0x8] sm:$0xff] %vm3376, %v3193
      %3379 = vst.msk [vmem:[%s221 + $0x10] sm:$0xff] %vm3376, %v3202
      %3380 = vst.msk [vmem:[%s221 + $0x18] sm:$0xff] %vm3376, %v3203
      %3381 = vst.msk [vmem:[%s221 + $0x20] sm:$0xff] %vm3376, %v3212
      %3382 = vst.msk [vmem:[%s221 + $0x28] sm:$0xff] %vm3376, %v3213
      %3383 = vst.msk [vmem:[%s221 + $0x30] sm:$0xff] %vm3376, %v3222
      %3384 = vst.msk [vmem:[%s221 + $0x38] sm:$0xff] %vm3376, %v3223
      %3385 = vst.msk [vmem:[%s221 + $0x40] sm:$0xff] %vm3376, %v3232
      %3386 = vst.msk [vmem:[%s221 + $0x48] sm:$0xff] %vm3376, %v3233
      %3387 = vst.msk [vmem:[%s221 + $0x50] sm:$0xff] %vm3376, %v3242
      %3388 = vst.msk [vmem:[%s221 + $0x58] sm:$0xff] %vm3376, %v3243
      %3389 = vst.msk [vmem:[%s221 + $0x60] sm:$0xff] %vm3376, %v3252
      %3390 = vst.msk [vmem:[%s221 + $0x68] sm:$0xff] %vm3376, %v3253
      %3391 = vst.msk [vmem:[%s221 + $0x70] sm:$0xff] %vm3376, %v3262
      %3392 = vst.msk [vmem:[%s221 + $0x78] sm:$0xff] %vm3376, %v3263
      %3393 = vst.msk [vmem:[%s221 + $0x80] sm:$0xff] %vm3376, %v3272
      %3394 = vst.msk [vmem:[%s221 + $0x88] sm:$0xff] %vm3376, %v3273
      %3395 = vst.msk [vmem:[%s221 + $0x90] sm:$0xff] %vm3376, %v3282
      %3396 = vst.msk [vmem:[%s221 + $0x98] sm:$0xff] %vm3376, %v3283
      %3397 = vst.msk [vmem:[%s221 + $0xa0] sm:$0xff] %vm3376, %v3292
      %3398 = vst.msk [vmem:[%s221 + $0xa8] sm:$0xff] %vm3376, %v3293
      %3399 = vst.msk [vmem:[%s221 + $0xb0] sm:$0xff] %vm3376, %v3302
      %3400 = vst.msk [vmem:[%s221 + $0xb8] sm:$0xff] %vm3376, %v3303
      %3401 = vst.msk [vmem:[%s221 + $0xc0] sm:$0xff] %vm3376, %v3312
      %3402 = vst.msk [vmem:[%s221 + $0xc8] sm:$0xff] %vm3376, %v3313
      %3403 = vst.msk [vmem:[%s221 + $0xd0] sm:$0xff] %vm3376, %v3322
      %3404 = vst.msk [vmem:[%s221 + $0xd8] sm:$0xff] %vm3376, %v3323
      %3405 = vst.msk [vmem:[%s221 + $0xe0] sm:$0xff] %vm3376, %v3332
      %3406 = vst.msk [vmem:[%s221 + $0xe8] sm:$0xff] %vm3376, %v3333
      %3407 = vst.msk [vmem:[%s221 + $0xf0] sm:$0xff] %vm3376, %v3342
      %3408 = vst.msk [vmem:[%s221 + $0xf8] sm:$0xff] %vm3376, %v3343
      %p3409 = scmp.lt.s32.totalorder %s18, 1
      %s3410 = scalar_select %p3409, %s18, 1
      %p3411 = scmp.lt.s32.totalorder %s19, 0
      %s3412 = scalar_select %p3411, %s19, 0
      %s3413 = smul.addr %s3410, 32
      %s3414 = sadd.s32 %s3412, %s3413
      %s3415 = smul.addr %s3414, 8
      %s3416 = scalar_lea.vmem %s3, %s3415
      // Predicated region
      $region33: #{vgg_forward.2} parent=31 // pred_check
        %p3417 = pneg %p124
      $region34: #{vgg_forward.2} parent=31 // pred_check_branch
        %3419 = sbr.rel (%p3417) target = $region36
      $region35: #{vgg_forward.2} parent=31 // pred_region
        _
      $region36: #{vgg_forward.2} parent=31 // pred_fallthru
        _
    $region32: #{vgg_forward.2} parent=5 // pred_fallthru
      _
    %p3420 = scmp.le.s32.totalorder 2, %s9
    // Predicated region
    $region37: #{vgg_forward.2} parent=5 // pred_check
      %p3421 = pneg %p3420
    $region38: #{vgg_forward.2} parent=5 // pred_check_branch
      %3423 = sbr.rel (%p3421) target = $region40
    $region39: #{vgg_forward.2} parent=5 // pred_region
      %s3424 = ssub.s32 %s9, 2
      // Predicated region
      $region41: #{vgg_forward.2} parent=39 // pred_check
        %p3425 = pneg %p130
      $region42: #{vgg_forward.2} parent=39 // pred_check_branch
        %3427 = sbr.rel (%p3425) target = $region44
      $region43: #{vgg_forward.2} parent=39 // pred_region
        %p3428 = scmp.lt.s32.totalorder %s20, 1
        %s3429 = scalar_select %p3428, %s20, 1
        %p3430 = scmp.lt.s32.totalorder %s21, 0
        %s3431 = scalar_select %p3430, %s21, 0
        %s3432 = smul.addr %s3429, 32
        %s3433 = sadd.s32 %s3431, %s3432
        %s3434 = smul.addr %s3433, 8
        %s3435 = scalar_lea.vmem %s3, %s3434
      $region44: #{vgg_forward.2} parent=39 // pred_fallthru
        _
    $region40: #{vgg_forward.2} parent=5 // pred_fallthru
      _
  $region6: #{vgg_forward.2} parent=0 // loop_footer
    %s13 = sadd.s32 1, %s9
  $region7: #{vgg_forward.2} parent=0 // loop_footer_branch
    %8 = sbr.rel target = $region3
  $region8: #{vgg_forward.2} parent=0 // loop_exit
    _

</llo_original>
